<compile_context>
chip_gen: v5e
topology: v5e:2x2
jax: 0.10.0
libtpu: 0.0.40
codegen_flags: <defaults>
</compile_context>

<pallas_src>
import functools

import numpy as np
import jax
import jax.numpy as jnp
from jax import lax
from jax.experimental import pallas as pl
from jax.experimental.pallas import tpu as pltpu

LEAKY_SLOPE = 0.01   # nn.LeakyReLU() default
GN_EPS = 1e-5        # nn.GroupNorm default


def find_group_number(channels, min_group_channels=4, max_group_channels=32):
    for num_groups in range(channels, 0, -1):
        gc = channels // num_groups
        if channels % num_groups == 0 and gc >= min_group_channels and gc <= max_group_channels:
            return num_groups
    return 1


def bilinear_matrix(in_size, out_size):
    """align_corners=True bilinear interpolation matrix (out_size, in_size)."""
    a = np.zeros((out_size, in_size), np.float32)
    if out_size == 1 or in_size == 1:
        a[:, 0] = 1.0
        return a
    scale = (in_size - 1) / (out_size - 1)
    for i in range(out_size):
        src = i * scale
        i0 = min(int(np.floor(src)), in_size - 1)
        frac = src - i0
        a[i, i0] += 1.0 - frac
        if i0 + 1 < in_size:
            a[i, i0 + 1] += frac
        else:
            a[i, i0] += frac
    return a


def _const_spec(shape):
    nd = len(shape)
    return pl.BlockSpec(shape, lambda *_, _nd=nd: (0,) * _nd)


# ---------------------------------------------------------------------------
# Kernel 1: separable bilinear x2 upsample (align_corners=True)
# ---------------------------------------------------------------------------
def _bilinear_up_kernel(x_ref, bh_ref, bwt_ref, o_ref):
    x = x_ref[0, 0]                                                    # (H, W) f32
    t = jnp.dot(bh_ref[...], x, preferred_element_type=jnp.float32)   # (2H, W)
    o_ref[0, 0] = jnp.dot(t, bwt_ref[...], preferred_element_type=jnp.float32)  # (2H, 2W)


def _bilinear_upsample_x2(x_nchw):
    n, c, h, w = x_nchw.shape
    h2, w2 = 2 * h, 2 * w
    bh = jnp.asarray(bilinear_matrix(h, h2))          # (2H, H)
    bwt = jnp.asarray(bilinear_matrix(w, w2).T)        # (W, 2W)
    return pl.pallas_call(
        _bilinear_up_kernel,
        out_shape=jax.ShapeDtypeStruct((n, c, h2, w2), jnp.float32),
        grid=(n, c),
        in_specs=[
            pl.BlockSpec((1, 1, h, w), lambda i, j: (i, j, 0, 0)),
            pl.BlockSpec((h2, h), lambda i, j: (0, 0)),
            pl.BlockSpec((w, w2), lambda i, j: (0, 0)),
        ],
        out_specs=pl.BlockSpec((1, 1, h2, w2), lambda i, j: (i, j, 0, 0)),
        compiler_params=pltpu.CompilerParams(
            dimension_semantics=("parallel", "parallel"),
            vmem_limit_bytes=32 * 1024 * 1024),
    )(x_nchw.astype(jnp.float32), bh, bwt)


# ---------------------------------------------------------------------------
# Kernel 2 helpers (run inside the fused kernel)
# ---------------------------------------------------------------------------
def _gn_leaky(z, bias, gamma, beta, gsum, vmask, inv_count):
    """conv-bias + GroupNorm + LeakyReLU on a (C, L) channels-major tile.

    z:      (C, L) f32 conv accumulator (pad columns hold garbage)
    bias/gamma/beta: (C, 1) f32;   gsum: (C, C) same-group indicator
    vmask:  (1, L) f32, 1.0 on valid pixels / 0.0 on the 2 pad columns per row
    inv_count: 1 / (group_channels * H * W)
    Two-pass mean/variance in f32 (avoids E[x^2]-E[x]^2 cancellation).
    """
    z = z + bias
    s = jnp.sum(z * vmask, axis=1, keepdims=True)                               # (C, 1)
    mean = jnp.dot(gsum, s, preferred_element_type=jnp.float32) * inv_count     # group mean
    d = (z - mean) * vmask                                                      # centered, pad -> 0
    ss = jnp.sum(d * d, axis=1, keepdims=True)
    var = jnp.dot(gsum, ss, preferred_element_type=jnp.float32) * inv_count
    out = d * lax.rsqrt(var + GN_EPS) * gamma + beta
    out = jnp.where(out >= 0.0, out, LEAKY_SLOPE * out)
    return out * vmask                                                          # keep pads exactly 0


def _conv3x3_taps(canvas_ref, w_ref, cs, wp, l):
    """3x3 conv (pad=1) as 9 tap matmuls over the zero-padded flat canvas.

    canvas_ref: (>=cs, (H+2)*(W+2)+2) f32 VMEM canvas, padded layout
    w_ref:      (9, Cout, cs) bf16 tap-major weights
    Output accumulated in f32; MXU operands are bf16.
    """
    cout = w_ref.shape[1]
    acc = jnp.zeros((cout, l), jnp.float32)
    for ky in range(3):
        for kx in range(3):
            off = ky * wp + kx
            xs = canvas_ref[0:cs, off:off + l].astype(jnp.bfloat16)   # (cs, L)
            acc = acc + jnp.dot(w_ref[ky * 3 + kx], xs,
                                preferred_element_type=jnp.float32)
    return acc


# ---------------------------------------------------------------------------
# Kernel 2: fused 1x1-conv/GN/act + concat + skip + main block + residual
# ---------------------------------------------------------------------------
def _fused_block_kernel(bu_ref, ab_ref, w1_ref, wsk_ref, wm1_ref, wm2_ref,
                        aff_ref, gsum_ref, vmask_ref, out_ref, canvas_ref,
                        *, wp, inv_count):
    cout = out_ref.shape[1]
    l = out_ref.shape[2]
    lo, hi = wp + 1, wp + 1 + l

    gsum = gsum_ref[...]
    vmask = vmask_ref[...]

    # Zero the padded canvas once; borders stay zero for every conv stage.
    canvas_ref[...] = jnp.zeros(canvas_ref.shape, canvas_ref.dtype)

    # ---- UpBlock tail: 1x1 conv -> GroupNorm -> LeakyReLU on upsampled `below`
    z = jnp.dot(w1_ref[...], bu_ref[0], preferred_element_type=jnp.float32)     # (Cout, L)
    below_up = _gn_leaky(z, aff_ref[0, 0], aff_ref[0, 1], aff_ref[0, 2],
                         gsum, vmask, inv_count)

    # ---- merge_mode='concat': [below_up ; above] written into the canvas interior
    canvas_ref[0:cout, lo:hi] = below_up
    canvas_ref[cout:2 * cout, lo:hi] = ab_ref[0] * vmask

    # ---- Skip block: 3x3 conv (2*Cout -> Cout) -> GN -> act
    z = _conv3x3_taps(canvas_ref, wsk_ref, 2 * cout, wp, l)
    x_skip = _gn_leaky(z, aff_ref[1, 0], aff_ref[1, 1], aff_ref[1, 2],
                       gsum, vmask, inv_count)

    # ---- Main processing block: two (3x3 conv -> GN -> act)
    canvas_ref[0:cout, lo:hi] = x_skip
    z = _conv3x3_taps(canvas_ref, wm1_ref, cout, wp, l)
    x = _gn_leaky(z, aff_ref[2, 0], aff_ref[2, 1], aff_ref[2, 2],
                  gsum, vmask, inv_count)

    canvas_ref[0:cout, lo:hi] = x
    z = _conv3x3_taps(canvas_ref, wm2_ref, cout, wp, l)
    x = _gn_leaky(z, aff_ref[3, 0], aff_ref[3, 1], aff_ref[3, 2],
                  gsum, vmask, inv_count)

    # ---- residual add
    # TODO(synk): nn.Dropout(0.5) is stochastic in train mode; eval-mode identity here
    # (training parity would use pltpu.prng_seed / prng_random_bits).
    out_ref[0] = x + x_skip


# ---------------------------------------------------------------------------
# Forward pass (matches UpConvolutionBlock.forward with default args)
# ---------------------------------------------------------------------------
@jax.jit
def up_convolution_block_forward(params, below_nchw, above_nchw):
    n, cin, h, w = below_nchw.shape
    cout = params["up_w"].shape[0]
    h2, w2 = 2 * h, 2 * w
    wp = w2 + 2                 # padded row width used by the flat canvas layout
    l = h2 * wp                 # flattened spatial length (incl. 2 pad columns per row)

    # --- Pallas kernel 1: separable bilinear x2 (align_corners=True, as in the module)
    below_up = _bilinear_upsample_x2(below_nchw)                   # (N, Cin, 2H, 2W) f32

    # --- glue: layout plumbing only (2 zero columns per row, flatten to (N, C, L))
    def to_flat(x):
        return jnp.pad(x, ((0, 0), (0, 0), (0, 0), (0, 2))).reshape(n, x.shape[1], l)

    bu = to_flat(below_up).astype(jnp.bfloat16)                    # 1x1-conv operand (bf16 MXU)
    ab = to_flat(above_nchw.astype(jnp.float32))

    def taps(wt):  # (Cout, Cs, 3, 3) -> (9, Cout, Cs) tap-major, bf16 MXU operand
        co, cs = wt.shape[0], wt.shape[1]
        return jnp.transpose(wt, (2, 3, 0, 1)).reshape(9, co, cs).astype(jnp.bfloat16)

    w1 = params["up_w"].reshape(cout, cin).astype(jnp.bfloat16)
    wsk, wm1, wm2 = taps(params["skip_w"]), taps(params["m1_w"]), taps(params["m2_w"])

    affine = jnp.stack([
        jnp.stack([params[p + "_b"], params[p + "_gamma"], params[p + "_beta"]], axis=0)
        for p in ("up", "skip", "m1", "m2")], axis=0).reshape(4, 3, cout, 1).astype(jnp.float32)

    n_groups = find_group_number(cout)
    gch = cout // n_groups
    gsum = jnp.asarray((np.arange(cout)[:, None] // gch ==
                        np.arange(cout)[None, :] // gch).astype(np.float32))      # (C, C)
    vmask = jnp.asarray((np.arange(l) % wp < w2).astype(np.float32)).reshape(1, l)
    inv_count = 1.0 / float(gch * h2 * w2)

    # TODO(synk): for large H*W, tile the L axis (grid axis marked "arbitrary") with a
    # two-pass GroupNorm (accumulate stats per tile, finalize with pl.when) so blocks fit
    # v7x's 64 MiB VMEM; at these sizes one block per sample fits comfortably.
    kernel = functools.partial(_fused_block_kernel, wp=wp, inv_count=inv_count)
    out_flat = pl.pallas_call(
        kernel,
        out_shape=jax.ShapeDtypeStruct((n, cout, l), jnp.float32),
        grid=(n,),
        in_specs=[
            pl.BlockSpec((1, cin, l), lambda i: (i, 0, 0)),
            pl.BlockSpec((1, cout, l), lambda i: (i, 0, 0)),
            _const_spec(w1.shape),
            _const_spec(wsk.shape),
            _const_spec(wm1.shape),
            _const_spec(wm2.shape),
            _const_spec(affine.shape),
            _const_spec(gsum.shape),
            _const_spec(vmask.shape),
        ],
        out_specs=pl.BlockSpec((1, cout, l), lambda i: (i, 0, 0)),
        scratch_shapes=[pltpu.VMEM((2 * cout, (h2 + 2) * wp + 2), jnp.float32)],
        compiler_params=pltpu.CompilerParams(
            dimension_semantics=("parallel",),
            vmem_limit_bytes=32 * 1024 * 1024),
    )(bu, ab, w1, wsk, wm1, wm2, affine, gsum, vmask)

    # glue: drop the 2 pad columns per row -> NCHW
    return out_flat.reshape(n, cout, h2, wp)[:, :, :, :w2]


# ---------------------------------------------------------------------------
# Parameters (deterministic) and a pure-JAX reference for validation
# ---------------------------------------------------------------------------
def make_params(key, in_channels, out_channels):
    ks = jax.random.split(key, 16)

    def winit(k, shape, scale=0.1):
        return (scale * jax.random.normal(k, shape)).astype(jnp.float32)

    def ginit(k):
        return (1.0 + 0.1 * jax.random.normal(k, (out_channels,))).astype(jnp.float32)

    return {
        "up_w": winit(ks[0], (out_channels, in_channels, 1, 1)),
        "up_b": winit(ks[1], (out_channels,), 0.05),
        "up_gamma": ginit(ks[2]), "up_beta": winit(ks[3], (out_channels,), 0.05),
        "skip_w": winit(ks[4], (out_channels, 2 * out_channels, 3, 3)),
        "skip_b": winit(ks[5], (out_channels,), 0.05),
        "skip_gamma": ginit(ks[6]), "skip_beta": winit(ks[7], (out_channels,), 0.05),
        "m1_w": winit(ks[8], (out_channels, out_channels, 3, 3)),
        "m1_b": winit(ks[9], (out_channels,), 0.05),
        "m1_gamma": ginit(ks[10]), "m1_beta": winit(ks[11], (out_channels,), 0.05),
        "m2_w": winit(ks[12], (out_channels, out_channels, 3, 3)),
        "m2_b": winit(ks[13], (out_channels,), 0.05),
        "m2_gamma": ginit(ks[14]), "m2_beta": winit(ks[15], (out_channels,), 0.05),
    }


def _reference_forward(params, below, above):
    cout = params["up_w"].shape[0]
    n_groups = find_group_number(cout)

    def gn_act(x, gamma, beta):
        n_, c_, h_, w_ = x.shape
        xg = x.reshape(n_, n_groups, c_ // n_groups, h_, w_)
        mean = xg.mean(axis=(2, 3, 4), keepdims=True)
        var = ((xg - mean) ** 2).mean(axis=(2, 3, 4), keepdims=True)
        xn = ((xg - mean) / jnp.sqrt(var + GN_EPS)).reshape(n_, c_, h_, w_)
        y = xn * gamma.reshape(1, -1, 1, 1) + beta.reshape(1, -1, 1, 1)
        return jnp.where(y >= 0, y, LEAKY_SLOPE * y)

    def conv(x, wgt, b, pad):
        y = lax.conv_general_dilated(
            x, wgt, (1, 1), [(pad, pad), (pad, pad)],
            dimension_numbers=("NCHW", "OIHW", "NCHW"),
            precision=lax.Precision.HIGHEST)
        return y + b.reshape(1, -1, 1, 1)

    n, cin, h, w = below.shape
    bh = jnp.asarray(bilinear_matrix(h, 2 * h))
    bw = jnp.asarray(bilinear_matrix(w, 2 * w))
    up = jnp.einsum("ph,nchw,qw->ncpq", bh, below, bw, precision=lax.Precision.HIGHEST)
    x = gn_act(conv(up, params["up_w"], params["up_b"], 0),
               params["up_gamma"], params["up_beta"])
    x = jnp.concatenate([x, above], axis=1)
    x_skip = gn_act(conv(x, params["skip_w"], params["skip_b"], 1),
                    params["skip_gamma"], params["skip_beta"])
    x = gn_act(conv(x_skip, params["m1_w"], params["m1_b"], 1),
               params["m1_gamma"], params["m1_beta"])
    x = gn_act(conv(x, params["m2_w"], params["m2_b"], 1),
               params["m2_gamma"], params["m2_beta"])
    return x + x_skip


# ---------------------------------------------------------------------------
if __name__ == "__main__":
    key = jax.random.PRNGKey(0)
    in_channels, out_channels = 8, 8
    N, H_low, W_low = 2, 16, 16
    H_hi, W_hi = 2 * H_low, 2 * W_low

    k_below, k_above, k_params = jax.random.split(key, 3)
    below = jax.random.normal(k_below, (N, in_channels, H_low, W_low), jnp.float32)
    above = jax.random.normal(k_above, (N, out_channels, H_hi, W_hi), jnp.float32)
    params = make_params(k_params, in_channels, out_channels)

    out = jax.block_until_ready(up_convolution_block_forward(params, below, above))
    assert out.shape == (N, out_channels, H_hi, W_hi), out.shape
    assert bool(jnp.all(jnp.isfinite(out)))

    ref = jax.block_until_ready(_reference_forward(params, below, above))
    max_err = float(jnp.max(jnp.abs(out - ref)))
    assert max_err < 0.25, f"max abs err vs reference: {max_err}"

    print("KERNEL_OK")
</pallas_src>

<mosaic_0001>
module attributes {stable_mosaic.version = 11 : i64} {
  func.func @_bilinear_up_kernel(%arg0: i32, %arg1: i32, %arg2: memref<1x1x16x16xf32, #tpu.memory_space<vmem>>, %arg3: memref<32x16xf32, #tpu.memory_space<vmem>>, %arg4: memref<16x32xf32, #tpu.memory_space<vmem>>, %arg5: memref<1x1x32x32xf32, #tpu.memory_space<vmem>>) attributes {dimension_semantics = [#tpu.dimension_semantics<parallel>, #tpu.dimension_semantics<parallel>], iteration_bounds = array<i64: 2, 8>, scalar_prefetch = 0 : i64, scratch_operands = 0 : i64, tpu.core_type = #tpu.core_type<tc>, window_params = [{transform_indices = @transform_0, window_bounds = array<i64: 1, 1, 16, 16>}, {pipeline_mode = #tpu.pipeline_mode<synchronous>, transform_indices = @transform_1, window_bounds = array<i64: 32, 16>}, {pipeline_mode = #tpu.pipeline_mode<synchronous>, transform_indices = @transform_2, window_bounds = array<i64: 16, 32>}, {transform_indices = @transform_3, window_bounds = array<i64: 1, 1, 32, 32>}]} {
    %c0 = arith.constant 0 : index
    %c0_0 = arith.constant 0 : index
    %c0_1 = arith.constant 0 : index
    %c0_2 = arith.constant 0 : index
    %0 = vector.load %arg2[%c0, %c0_0, %c0_1, %c0_2] : memref<1x1x16x16xf32, #tpu.memory_space<vmem>>, vector<1x1x16x16xf32>
    %1 = vector.shape_cast %0 : vector<1x1x16x16xf32> to vector<16x16xf32>
    %c0_3 = arith.constant 0 : index
    %c0_4 = arith.constant 0 : index
    %2 = vector.load %arg3[%c0_3, %c0_4] : memref<32x16xf32, #tpu.memory_space<vmem>>, vector<32x16xf32>
    %cst = arith.constant dense<0.000000e+00> : vector<32x16xf32>
    %3 = tpu.matmul %2, %1, %cst {dimension_numbers = #tpu.dot_dimension_numbers<[1], [0], [0], [1], [0, 0, 1, 1], [], []>} : vector<32x16xf32>, vector<16x16xf32>, vector<32x16xf32> -> vector<32x16xf32>
    %c0_5 = arith.constant 0 : index
    %c0_6 = arith.constant 0 : index
    %4 = vector.load %arg4[%c0_5, %c0_6] : memref<16x32xf32, #tpu.memory_space<vmem>>, vector<16x32xf32>
    %cst_7 = arith.constant dense<0.000000e+00> : vector<32x32xf32>
    %5 = tpu.matmul %3, %4, %cst_7 {dimension_numbers = #tpu.dot_dimension_numbers<[1], [0], [0], [1], [0, 0, 1, 1], [], []>} : vector<32x16xf32>, vector<16x32xf32>, vector<32x32xf32> -> vector<32x32xf32>
    %c0_8 = arith.constant 0 : index
    %c0_9 = arith.constant 0 : index
    %c0_10 = arith.constant 0 : index
    %c0_11 = arith.constant 0 : index
    %6 = vector.load %arg5[%c0_8, %c0_9, %c0_10, %c0_11] : memref<1x1x32x32xf32, #tpu.memory_space<vmem>>, vector<1x1x32x32xf32>
    %7 = vector.shape_cast %6 : vector<1x1x32x32xf32> to vector<32x32xf32>
    %8 = vector.shape_cast %5 : vector<32x32xf32> to vector<1x1x32x32xf32>
    tpu.vector_store %arg5[%c0_8, %c0_9, %c0_10, %c0_11], %8 {strides = array<i32>} : memref<1x1x32x32xf32, #tpu.memory_space<vmem>>, vector<1x1x32x32xf32>,
    return
  }
  func.func @transform_0(%arg0: i32, %arg1: i32) -> (i32, i32, i32, i32) {
    %c0_i32 = arith.constant 0 : i32
    %c0_i32_0 = arith.constant 0 : i32
    %c0_i32_1 = arith.constant 0 : i32
    return %arg0, %arg1, %c0_i32, %c0_i32_0 : i32, i32, i32, i32
  }
  func.func @transform_1(%arg0: i32, %arg1: i32) -> (i32, i32) {
    %c0_i32 = arith.constant 0 : i32
    %c0_i32_0 = arith.constant 0 : i32
    %c0_i32_1 = arith.constant 0 : i32
    return %c0_i32, %c0_i32_0 : i32, i32
  }
  func.func @transform_2(%arg0: i32, %arg1: i32) -> (i32, i32) {
    %c0_i32 = arith.constant 0 : i32
    %c0_i32_0 = arith.constant 0 : i32
    %c0_i32_1 = arith.constant 0 : i32
    return %c0_i32, %c0_i32_0 : i32, i32
  }
  func.func @transform_3(%arg0: i32, %arg1: i32) -> (i32, i32, i32, i32) {
    %c0_i32 = arith.constant 0 : i32
    %c0_i32_0 = arith.constant 0 : i32
    %c0_i32_1 = arith.constant 0 : i32
    return %arg0, %arg1, %c0_i32, %c0_i32_0 : i32, i32, i32, i32
  }
}

module attributes {stable_mosaic.version = 11 : i64} {
  func.func @_fused_block_kernel(%arg0: i32, %arg1: memref<1x8x1088xbf16, #tpu.memory_space<vmem>>, %arg2: memref<1x8x1088xf32, #tpu.memory_space<vmem>>, %arg3: memref<8x8xbf16, #tpu.memory_space<vmem>>, %arg4: memref<9x8x16xbf16, #tpu.memory_space<vmem>>, %arg5: memref<9x8x8xbf16, #tpu.memory_space<vmem>>, %arg6: memref<9x8x8xbf16, #tpu.memory_space<vmem>>, %arg7: memref<4x3x8x1xf32, #tpu.memory_space<vmem>>, %arg8: memref<8x8xf32, #tpu.memory_space<vmem>>, %arg9: memref<1x1088xf32, #tpu.memory_space<vmem>>, %arg10: memref<1x8x1088xf32, #tpu.memory_space<vmem>>, %arg11: memref<16x1158xf32, #tpu.memory_space<vmem>>) attributes {dimension_semantics = [#tpu.dimension_semantics<parallel>], iteration_bounds = array<i64: 2>, scalar_prefetch = 0 : i64, scratch_operands = 1 : i64, tpu.core_type = #tpu.core_type<tc>, window_params = [{transform_indices = @transform_0, window_bounds = array<i64: 1, 8, 1088>}, {transform_indices = @transform_1, window_bounds = array<i64: 1, 8, 1088>}, {pipeline_mode = #tpu.pipeline_mode<synchronous>, transform_indices = @transform_2, window_bounds = array<i64: 8, 8>}, {pipeline_mode = #tpu.pipeline_mode<synchronous>, transform_indices = @transform_3, window_bounds = array<i64: 9, 8, 16>}, {pipeline_mode = #tpu.pipeline_mode<synchronous>, transform_indices = @transform_4, window_bounds = array<i64: 9, 8, 8>}, {pipeline_mode = #tpu.pipeline_mode<synchronous>, transform_indices = @transform_5, window_bounds = array<i64: 9, 8, 8>}, {pipeline_mode = #tpu.pipeline_mode<synchronous>, transform_indices = @transform_6, window_bounds = array<i64: 4, 3, 8, 1>}, {pipeline_mode = #tpu.pipeline_mode<synchronous>, transform_indices = @transform_7, window_bounds = array<i64: 8, 8>}, {pipeline_mode = #tpu.pipeline_mode<synchronous>, transform_indices = @transform_8, window_bounds = array<i64: 1, 1088>}, {transform_indices = @transform_9, window_bounds = array<i64: 1, 8, 1088>}]} {
    %c0 = arith.constant 0 : index
    %c0_0 = arith.constant 0 : index
    %0 = vector.load %arg8[%c0, %c0_0] : memref<8x8xf32, #tpu.memory_space<vmem>>, vector<8x8xf32>
    %c0_1 = arith.constant 0 : index
    %c0_2 = arith.constant 0 : index
    %1 = vector.load %arg9[%c0_1, %c0_2] : memref<1x1088xf32, #tpu.memory_space<vmem>>, vector<1x1088xf32>
    %cst = arith.constant 0.000000e+00 : f32
    %2 = vector.broadcast %cst : f32 to vector<16x1158xf32>
    %c0_3 = arith.constant 0 : index
    %c0_4 = arith.constant 0 : index
    %3 = vector.load %arg11[%c0_3, %c0_4] : memref<16x1158xf32, #tpu.memory_space<vmem>>, vector<16x1158xf32>
    tpu.vector_store %arg11[%c0_3, %c0_4], %2 {strides = array<i32>} : memref<16x1158xf32, #tpu.memory_space<vmem>>, vector<16x1158xf32>,
    %c0_5 = arith.constant 0 : index
    %c0_6 = arith.constant 0 : index
    %4 = vector.load %arg3[%c0_5, %c0_6] : memref<8x8xbf16, #tpu.memory_space<vmem>>, vector<8x8xbf16>
    %c0_7 = arith.constant 0 : index
    %c0_8 = arith.constant 0 : index
    %c0_9 = arith.constant 0 : index
    %5 = vector.load %arg1[%c0_7, %c0_8, %c0_9] : memref<1x8x1088xbf16, #tpu.memory_space<vmem>>, vector<1x8x1088xbf16>
    %6 = vector.shape_cast %5 : vector<1x8x1088xbf16> to vector<8x1088xbf16>
    %cst_10 = arith.constant dense<0.000000e+00> : vector<8x1088xf32>
    %7 = tpu.matmul %4, %6, %cst_10 {dimension_numbers = #tpu.dot_dimension_numbers<[1], [0], [0], [1], [0, 0, 1, 1], [], []>} : vector<8x8xbf16>, vector<8x1088xbf16>, vector<8x1088xf32> -> vector<8x1088xf32>
    %c0_11 = arith.constant 0 : index
    %c0_12 = arith.constant 0 : index
    %c0_13 = arith.constant 0 : index
    %c0_14 = arith.constant 0 : index
    %8 = vector.load %arg7[%c0_11, %c0_12, %c0_13, %c0_14] : memref<4x3x8x1xf32, #tpu.memory_space<vmem>>, vector<1x1x8x1xf32>
    %9 = vector.shape_cast %8 : vector<1x1x8x1xf32> to vector<8x1xf32>
    %c0_15 = arith.constant 0 : index
    %c1 = arith.constant 1 : index
    %c0_16 = arith.constant 0 : index
    %c0_17 = arith.constant 0 : index
    %10 = vector.load %arg7[%c0_15, %c1, %c0_16, %c0_17] : memref<4x3x8x1xf32, #tpu.memory_space<vmem>>, vector<1x1x8x1xf32>
    %11 = vector.shape_cast %10 : vector<1x1x8x1xf32> to vector<8x1xf32>
    %c0_18 = arith.constant 0 : index
    %c2 = arith.constant 2 : index
    %c0_19 = arith.constant 0 : index
    %c0_20 = arith.constant 0 : index
    %12 = vector.load %arg7[%c0_18, %c2, %c0_19, %c0_20] : memref<4x3x8x1xf32, #tpu.memory_space<vmem>>, vector<1x1x8x1xf32>
    %13 = vector.shape_cast %12 : vector<1x1x8x1xf32> to vector<8x1xf32>
    %14 = vector.broadcast %9 : vector<8x1xf32> to vector<8x1088xf32>
    %15 = arith.addf %7, %14 : vector<8x1088xf32>
    %16 = vector.broadcast %1 : vector<1x1088xf32> to vector<8x1088xf32>
    %17 = arith.mulf %15, %16 : vector<8x1088xf32>
    %cst_21 = arith.constant dense<0.000000e+00> : vector<8xf32>
    %18 = vector.multi_reduction <add>, %17, %cst_21 [1] : vector<8x1088xf32> to vector<8xf32>
    %19 = vector.shape_cast %18 : vector<8xf32> to vector<8x1xf32>
    %cst_22 = arith.constant dense<0.000000e+00> : vector<8x1xf32>
    %20 = tpu.matmul %0, %19, %cst_22 {dimension_numbers = #tpu.dot_dimension_numbers<[1], [0], [0], [1], [0, 0, 1, 1], [], []>} : vector<8x8xf32>, vector<8x1xf32>, vector<8x1xf32> -> vector<8x1xf32>
    %cst_23 = arith.constant 2.44140625E-4 : f32
    %21 = vector.broadcast %cst_23 : f32 to vector<8x1xf32>
    %22 = arith.mulf %20, %21 : vector<8x1xf32>
    %23 = vector.broadcast %22 : vector<8x1xf32> to vector<8x1088xf32>
    %24 = arith.subf %15, %23 : vector<8x1088xf32>
    %25 = vector.broadcast %1 : vector<1x1088xf32> to vector<8x1088xf32>
    %26 = arith.mulf %24, %25 : vector<8x1088xf32>
    %27 = arith.mulf %26, %26 : vector<8x1088xf32>
    %cst_24 = arith.constant dense<0.000000e+00> : vector<8xf32>
    %28 = vector.multi_reduction <add>, %27, %cst_24 [1] : vector<8x1088xf32> to vector<8xf32>
    %29 = vector.shape_cast %28 : vector<8xf32> to vector<8x1xf32>
    %cst_25 = arith.constant dense<0.000000e+00> : vector<8x1xf32>
    %30 = tpu.matmul %0, %29, %cst_25 {dimension_numbers = #tpu.dot_dimension_numbers<[1], [0], [0], [1], [0, 0, 1, 1], [], []>} : vector<8x8xf32>, vector<8x1xf32>, vector<8x1xf32> -> vector<8x1xf32>
    %cst_26 = arith.constant 2.44140625E-4 : f32
    %31 = vector.broadcast %cst_26 : f32 to vector<8x1xf32>
    %32 = arith.mulf %30, %31 : vector<8x1xf32>
    %cst_27 = arith.constant 9.99999974E-6 : f32
    %33 = vector.broadcast %cst_27 : f32 to vector<8x1xf32>
    %34 = arith.addf %32, %33 : vector<8x1xf32>
    %35 = math.rsqrt %34 : vector<8x1xf32>
    %36 = vector.broadcast %35 : vector<8x1xf32> to vector<8x1088xf32>
    %37 = arith.mulf %26, %36 : vector<8x1088xf32>
    %38 = vector.broadcast %11 : vector<8x1xf32> to vector<8x1088xf32>
    %39 = arith.mulf %37, %38 : vector<8x1088xf32>
    %40 = vector.broadcast %13 : vector<8x1xf32> to vector<8x1088xf32>
    %41 = arith.addf %39, %40 : vector<8x1088xf32>
    %cst_28 = arith.constant 0.000000e+00 : f32
    %42 = vector.broadcast %cst_28 : f32 to vector<8x1088xf32>
    %43 = arith.cmpf oge, %41, %42 : vector<8x1088xf32>
    %cst_29 = arith.constant 0.00999999977 : f32
    %44 = vector.broadcast %cst_29 : f32 to vector<8x1088xf32>
    %45 = arith.mulf %44, %41 : vector<8x1088xf32>
    %46 = arith.select %43, %41, %45 : vector<8x1088xi1>, vector<8x1088xf32>
    %47 = vector.broadcast %1 : vector<1x1088xf32> to vector<8x1088xf32>
    %48 = arith.mulf %46, %47 : vector<8x1088xf32>
    %c0_30 = arith.constant 0 : index
    %c35 = arith.constant 35 : index
    %49 = vector.load %arg11[%c0_30, %c35] : memref<16x1158xf32, #tpu.memory_space<vmem>>, vector<8x1088xf32>
    tpu.vector_store %arg11[%c0_30, %c35], %48 {strides = array<i32>} : memref<16x1158xf32, #tpu.memory_space<vmem>>, vector<8x1088xf32>,
    %c0_31 = arith.constant 0 : index
    %c0_32 = arith.constant 0 : index
    %c0_33 = arith.constant 0 : index
    %50 = vector.load %arg2[%c0_31, %c0_32, %c0_33] : memref<1x8x1088xf32, #tpu.memory_space<vmem>>, vector<1x8x1088xf32>
    %51 = vector.shape_cast %50 : vector<1x8x1088xf32> to vector<8x1088xf32>
    %52 = vector.broadcast %1 : vector<1x1088xf32> to vector<8x1088xf32>
    %53 = arith.mulf %51, %52 : vector<8x1088xf32>
    %c8 = arith.constant 8 : index
    %c35_34 = arith.constant 35 : index
    %54 = vector.load %arg11[%c8, %c35_34] : memref<16x1158xf32, #tpu.memory_space<vmem>>, vector<8x1088xf32>
    tpu.vector_store %arg11[%c8, %c35_34], %53 {strides = array<i32>} : memref<16x1158xf32, #tpu.memory_space<vmem>>, vector<8x1088xf32>,
    %cst_35 = arith.constant 0.000000e+00 : f32
    %55 = vector.broadcast %cst_35 : f32 to vector<8x1088xf32>
    %c0_36 = arith.constant 0 : index
    %c0_37 = arith.constant 0 : index
    %56 = vector.load %arg11[%c0_36, %c0_37] : memref<16x1158xf32, #tpu.memory_space<vmem>>, vector<16x1088xf32>
    %57 = arith.truncf %56 : vector<16x1088xf32> to vector<16x1088xbf16>
    %c0_38 = arith.constant 0 : index
    %c0_39 = arith.constant 0 : index
    %c0_40 = arith.constant 0 : index
    %58 = vector.load %arg4[%c0_38, %c0_39, %c0_40] : memref<9x8x16xbf16, #tpu.memory_space<vmem>>, vector<1x8x16xbf16>
    %59 = vector.shape_cast %58 : vector<1x8x16xbf16> to vector<8x16xbf16>
    %cst_41 = arith.constant dense<0.000000e+00> : vector<8x1088xf32>
    %60 = tpu.matmul %59, %57, %cst_41 {dimension_numbers = #tpu.dot_dimension_numbers<[1], [0], [0], [1], [0, 0, 1, 1], [], []>} : vector<8x16xbf16>, vector<16x1088xbf16>, vector<8x1088xf32> -> vector<8x1088xf32>
    %61 = arith.addf %55, %60 : vector<8x1088xf32>
    %c0_42 = arith.constant 0 : index
    %c1_43 = arith.constant 1 : index
    %62 = vector.load %arg11[%c0_42, %c1_43] : memref<16x1158xf32, #tpu.memory_space<vmem>>, vector<16x1088xf32>
    %63 = arith.truncf %62 : vector<16x1088xf32> to vector<16x1088xbf16>
    %c1_44 = arith.constant 1 : index
    %c0_45 = arith.constant 0 : index
    %c0_46 = arith.constant 0 : index
    %64 = vector.load %arg4[%c1_44, %c0_45, %c0_46] : memref<9x8x16xbf16, #tpu.memory_space<vmem>>, vector<1x8x16xbf16>
    %65 = vector.shape_cast %64 : vector<1x8x16xbf16> to vector<8x16xbf16>
    %cst_47 = arith.constant dense<0.000000e+00> : vector<8x1088xf32>
    %66 = tpu.matmul %65, %63, %cst_47 {dimension_numbers = #tpu.dot_dimension_numbers<[1], [0], [0], [1], [0, 0, 1, 1], [], []>} : vector<8x16xbf16>, vector<16x1088xbf16>, vector<8x1088xf32> -> vector<8x1088xf32>
    %67 = arith.addf %61, %66 : vector<8x1088xf32>
    %c0_48 = arith.constant 0 : index
    %c2_49 = arith.constant 2 : index
    %68 = vector.load %arg11[%c0_48, %c2_49] : memref<16x1158xf32, #tpu.memory_space<vmem>>, vector<16x1088xf32>
    %69 = arith.truncf %68 : vector<16x1088xf32> to vector<16x1088xbf16>
    %c2_50 = arith.constant 2 : index
    %c0_51 = arith.constant 0 : index
    %c0_52 = arith.constant 0 : index
    %70 = vector.load %arg4[%c2_50, %c0_51, %c0_52] : memref<9x8x16xbf16, #tpu.memory_space<vmem>>, vector<1x8x16xbf16>
    %71 = vector.shape_cast %70 : vector<1x8x16xbf16> to vector<8x16xbf16>
    %cst_53 = arith.constant dense<0.000000e+00> : vector<8x1088xf32>
    %72 = tpu.matmul %71, %69, %cst_53 {dimension_numbers = #tpu.dot_dimension_numbers<[1], [0], [0], [1], [0, 0, 1, 1], [], []>} : vector<8x16xbf16>, vector<16x1088xbf16>, vector<8x1088xf32> -> vector<8x1088xf32>
    %73 = arith.addf %67, %72 : vector<8x1088xf32>
    %c0_54 = arith.constant 0 : index
    %c34 = arith.constant 34 : index
    %74 = vector.load %arg11[%c0_54, %c34] : memref<16x1158xf32, #tpu.memory_space<vmem>>, vector<16x1088xf32>
    %75 = arith.truncf %74 : vector<16x1088xf32> to vector<16x1088xbf16>
    %c3 = arith.constant 3 : index
    %c0_55 = arith.constant 0 : index
    %c0_56 = arith.constant 0 : index
    %76 = vector.load %arg4[%c3, %c0_55, %c0_56] : memref<9x8x16xbf16, #tpu.memory_space<vmem>>, vector<1x8x16xbf16>
    %77 = vector.shape_cast %76 : vector<1x8x16xbf16> to vector<8x16xbf16>
    %cst_57 = arith.constant dense<0.000000e+00> : vector<8x1088xf32>
    %78 = tpu.matmul %77, %75, %cst_57 {dimension_numbers = #tpu.dot_dimension_numbers<[1], [0], [0], [1], [0, 0, 1, 1], [], []>} : vector<8x16xbf16>, vector<16x1088xbf16>, vector<8x1088xf32> -> vector<8x1088xf32>
    %79 = arith.addf %73, %78 : vector<8x1088xf32>
    %c0_58 = arith.constant 0 : index
    %c35_59 = arith.constant 35 : index
    %80 = vector.load %arg11[%c0_58, %c35_59] : memref<16x1158xf32, #tpu.memory_space<vmem>>, vector<16x1088xf32>
    %81 = arith.truncf %80 : vector<16x1088xf32> to vector<16x1088xbf16>
    %c4 = arith.constant 4 : index
    %c0_60 = arith.constant 0 : index
    %c0_61 = arith.constant 0 : index
    %82 = vector.load %arg4[%c4, %c0_60, %c0_61] : memref<9x8x16xbf16, #tpu.memory_space<vmem>>, vector<1x8x16xbf16>
    %83 = vector.shape_cast %82 : vector<1x8x16xbf16> to vector<8x16xbf16>
    %cst_62 = arith.constant dense<0.000000e+00> : vector<8x1088xf32>
    %84 = tpu.matmul %83, %81, %cst_62 {dimension_numbers = #tpu.dot_dimension_numbers<[1], [0], [0], [1], [0, 0, 1, 1], [], []>} : vector<8x16xbf16>, vector<16x1088xbf16>, vector<8x1088xf32> -> vector<8x1088xf32>
    %85 = arith.addf %79, %84 : vector<8x1088xf32>
    %c0_63 = arith.constant 0 : index
    %c36 = arith.constant 36 : index
    %86 = vector.load %arg11[%c0_63, %c36] : memref<16x1158xf32, #tpu.memory_space<vmem>>, vector<16x1088xf32>
    %87 = arith.truncf %86 : vector<16x1088xf32> to vector<16x1088xbf16>
    %c5 = arith.constant 5 : index
    %c0_64 = arith.constant 0 : index
    %c0_65 = arith.constant 0 : index
    %88 = vector.load %arg4[%c5, %c0_64, %c0_65] : memref<9x8x16xbf16, #tpu.memory_space<vmem>>, vector<1x8x16xbf16>
    %89 = vector.shape_cast %88 : vector<1x8x16xbf16> to vector<8x16xbf16>
    %cst_66 = arith.constant dense<0.000000e+00> : vector<8x1088xf32>
    %90 = tpu.matmul %89, %87, %cst_66 {dimension_numbers = #tpu.dot_dimension_numbers<[1], [0], [0], [1], [0, 0, 1, 1], [], []>} : vector<8x16xbf16>, vector<16x1088xbf16>, vector<8x1088xf32> -> vector<8x1088xf32>
    %91 = arith.addf %85, %90 : vector<8x1088xf32>
    %c0_67 = arith.constant 0 : index
    %c68 = arith.constant 68 : index
    %92 = vector.load %arg11[%c0_67, %c68] : memref<16x1158xf32, #tpu.memory_space<vmem>>, vector<16x1088xf32>
    %93 = arith.truncf %92 : vector<16x1088xf32> to vector<16x1088xbf16>
    %c6 = arith.constant 6 : index
    %c0_68 = arith.constant 0 : index
    %c0_69 = arith.constant 0 : index
    %94 = vector.load %arg4[%c6, %c0_68, %c0_69] : memref<9x8x16xbf16, #tpu.memory_space<vmem>>, vector<1x8x16xbf16>
    %95 = vector.shape_cast %94 : vector<1x8x16xbf16> to vector<8x16xbf16>
    %cst_70 = arith.constant dense<0.000000e+00> : vector<8x1088xf32>
    %96 = tpu.matmul %95, %93, %cst_70 {dimension_numbers = #tpu.dot_dimension_numbers<[1], [0], [0], [1], [0, 0, 1, 1], [], []>} : vector<8x16xbf16>, vector<16x1088xbf16>, vector<8x1088xf32> -> vector<8x1088xf32>
    %97 = arith.addf %91, %96 : vector<8x1088xf32>
    %c0_71 = arith.constant 0 : index
    %c69 = arith.constant 69 : index
    %98 = vector.load %arg11[%c0_71, %c69] : memref<16x1158xf32, #tpu.memory_space<vmem>>, vector<16x1088xf32>
    %99 = arith.truncf %98 : vector<16x1088xf32> to vector<16x1088xbf16>
    %c7 = arith.constant 7 : index
    %c0_72 = arith.constant 0 : index
    %c0_73 = arith.constant 0 : index
    %100 = vector.load %arg4[%c7, %c0_72, %c0_73] : memref<9x8x16xbf16, #tpu.memory_space<vmem>>, vector<1x8x16xbf16>
    %101 = vector.shape_cast %100 : vector<1x8x16xbf16> to vector<8x16xbf16>
    %cst_74 = arith.constant dense<0.000000e+00> : vector<8x1088xf32>
    %102 = tpu.matmul %101, %99, %cst_74 {dimension_numbers = #tpu.dot_dimension_numbers<[1], [0], [0], [1], [0, 0, 1, 1], [], []>} : vector<8x16xbf16>, vector<16x1088xbf16>, vector<8x1088xf32> -> vector<8x1088xf32>
    %103 = arith.addf %97, %102 : vector<8x1088xf32>
    %c0_75 = arith.constant 0 : index
    %c70 = arith.constant 70 : index
    %104 = vector.load %arg11[%c0_75, %c70] : memref<16x1158xf32, #tpu.memory_space<vmem>>, vector<16x1088xf32>
    %105 = arith.truncf %104 : vector<16x1088xf32> to vector<16x1088xbf16>
    %c8_76 = arith.constant 8 : index
    %c0_77 = arith.constant 0 : index
    %c0_78 = arith.constant 0 : index
    %106 = vector.load %arg4[%c8_76, %c0_77, %c0_78] : memref<9x8x16xbf16, #tpu.memory_space<vmem>>, vector<1x8x16xbf16>
    %107 = vector.shape_cast %106 : vector<1x8x16xbf16> to vector<8x16xbf16>
    %cst_79 = arith.constant dense<0.000000e+00> : vector<8x1088xf32>
    %108 = tpu.matmul %107, %105, %cst_79 {dimension_numbers = #tpu.dot_dimension_numbers<[1], [0], [0], [1], [0, 0, 1, 1], [], []>} : vector<8x16xbf16>, vector<16x1088xbf16>, vector<8x1088xf32> -> vector<8x1088xf32>
    %109 = arith.addf %103, %108 : vector<8x1088xf32>
    %c1_80 = arith.constant 1 : index
    %c0_81 = arith.constant 0 : index
    %c0_82 = arith.constant 0 : index
    %c0_83 = arith.constant 0 : index
    %110 = vector.load %arg7[%c1_80, %c0_81, %c0_82, %c0_83] : memref<4x3x8x1xf32, #tpu.memory_space<vmem>>, vector<1x1x8x1xf32>
    %111 = vector.shape_cast %110 : vector<1x1x8x1xf32> to vector<8x1xf32>
    %c1_84 = arith.constant 1 : index
    %c1_85 = arith.constant 1 : index
    %c0_86 = arith.constant 0 : index
    %c0_87 = arith.constant 0 : index
    %112 = vector.load %arg7[%c1_84, %c1_85, %c0_86, %c0_87] : memref<4x3x8x1xf32, #tpu.memory_space<vmem>>, vector<1x1x8x1xf32>
    %113 = vector.shape_cast %112 : vector<1x1x8x1xf32> to vector<8x1xf32>
    %c1_88 = arith.constant 1 : index
    %c2_89 = arith.constant 2 : index
    %c0_90 = arith.constant 0 : index
    %c0_91 = arith.constant 0 : index
    %114 = vector.load %arg7[%c1_88, %c2_89, %c0_90, %c0_91] : memref<4x3x8x1xf32, #tpu.memory_space<vmem>>, vector<1x1x8x1xf32>
    %115 = vector.shape_cast %114 : vector<1x1x8x1xf32> to vector<8x1xf32>
    %116 = vector.broadcast %111 : vector<8x1xf32> to vector<8x1088xf32>
    %117 = arith.addf %109, %116 : vector<8x1088xf32>
    %118 = vector.broadcast %1 : vector<1x1088xf32> to vector<8x1088xf32>
    %119 = arith.mulf %117, %118 : vector<8x1088xf32>
    %cst_92 = arith.constant dense<0.000000e+00> : vector<8xf32>
    %120 = vector.multi_reduction <add>, %119, %cst_92 [1] : vector<8x1088xf32> to vector<8xf32>
    %121 = vector.shape_cast %120 : vector<8xf32> to vector<8x1xf32>
    %cst_93 = arith.constant dense<0.000000e+00> : vector<8x1xf32>
    %122 = tpu.matmul %0, %121, %cst_93 {dimension_numbers = #tpu.dot_dimension_numbers<[1], [0], [0], [1], [0, 0, 1, 1], [], []>} : vector<8x8xf32>, vector<8x1xf32>, vector<8x1xf32> -> vector<8x1xf32>
    %cst_94 = arith.constant 2.44140625E-4 : f32
    %123 = vector.broadcast %cst_94 : f32 to vector<8x1xf32>
    %124 = arith.mulf %122, %123 : vector<8x1xf32>
    %125 = vector.broadcast %124 : vector<8x1xf32> to vector<8x1088xf32>
    %126 = arith.subf %117, %125 : vector<8x1088xf32>
    %127 = vector.broadcast %1 : vector<1x1088xf32> to vector<8x1088xf32>
    %128 = arith.mulf %126, %127 : vector<8x1088xf32>
    %129 = arith.mulf %128, %128 : vector<8x1088xf32>
    %cst_95 = arith.constant dense<0.000000e+00> : vector<8xf32>
    %130 = vector.multi_reduction <add>, %129, %cst_95 [1] : vector<8x1088xf32> to vector<8xf32>
    %131 = vector.shape_cast %130 : vector<8xf32> to vector<8x1xf32>
    %cst_96 = arith.constant dense<0.000000e+00> : vector<8x1xf32>
    %132 = tpu.matmul %0, %131, %cst_96 {dimension_numbers = #tpu.dot_dimension_numbers<[1], [0], [0], [1], [0, 0, 1, 1], [], []>} : vector<8x8xf32>, vector<8x1xf32>, vector<8x1xf32> -> vector<8x1xf32>
    %cst_97 = arith.constant 2.44140625E-4 : f32
    %133 = vector.broadcast %cst_97 : f32 to vector<8x1xf32>
    %134 = arith.mulf %132, %133 : vector<8x1xf32>
    %cst_98 = arith.constant 9.99999974E-6 : f32
    %135 = vector.broadcast %cst_98 : f32 to vector<8x1xf32>
    %136 = arith.addf %134, %135 : vector<8x1xf32>
    %137 = math.rsqrt %136 : vector<8x1xf32>
    %138 = vector.broadcast %137 : vector<8x1xf32> to vector<8x1088xf32>
    %139 = arith.mulf %128, %138 : vector<8x1088xf32>
    %140 = vector.broadcast %113 : vector<8x1xf32> to vector<8x1088xf32>
    %141 = arith.mulf %139, %140 : vector<8x1088xf32>
    %142 = vector.broadcast %115 : vector<8x1xf32> to vector<8x1088xf32>
    %143 = arith.addf %141, %142 : vector<8x1088xf32>
    %cst_99 = arith.constant 0.000000e+00 : f32
    %144 = vector.broadcast %cst_99 : f32 to vector<8x1088xf32>
    %145 = arith.cmpf oge, %143, %144 : vector<8x1088xf32>
    %cst_100 = arith.constant 0.00999999977 : f32
    %146 = vector.broadcast %cst_100 : f32 to vector<8x1088xf32>
    %147 = arith.mulf %146, %143 : vector<8x1088xf32>
    %148 = arith.select %145, %143, %147 : vector<8x1088xi1>, vector<8x1088xf32>
    %149 = vector.broadcast %1 : vector<1x1088xf32> to vector<8x1088xf32>
    %150 = arith.mulf %148, %149 : vector<8x1088xf32>
    %c0_101 = arith.constant 0 : index
    %c35_102 = arith.constant 35 : index
    %151 = vector.load %arg11[%c0_101, %c35_102] : memref<16x1158xf32, #tpu.memory_space<vmem>>, vector<8x1088xf32>
    tpu.vector_store %arg11[%c0_101, %c35_102], %150 {strides = array<i32>} : memref<16x1158xf32, #tpu.memory_space<vmem>>, vector<8x1088xf32>,
    %cst_103 = arith.constant 0.000000e+00 : f32
    %152 = vector.broadcast %cst_103 : f32 to vector<8x1088xf32>
    %c0_104 = arith.constant 0 : index
    %c0_105 = arith.constant 0 : index
    %153 = vector.load %arg11[%c0_104, %c0_105] : memref<16x1158xf32, #tpu.memory_space<vmem>>, vector<8x1088xf32>
    %154 = arith.truncf %153 : vector<8x1088xf32> to vector<8x1088xbf16>
    %c0_106 = arith.constant 0 : index
    %c0_107 = arith.constant 0 : index
    %c0_108 = arith.constant 0 : index
    %155 = vector.load %arg5[%c0_106, %c0_107, %c0_108] : memref<9x8x8xbf16, #tpu.memory_space<vmem>>, vector<1x8x8xbf16>
    %156 = vector.shape_cast %155 : vector<1x8x8xbf16> to vector<8x8xbf16>
    %cst_109 = arith.constant dense<0.000000e+00> : vector<8x1088xf32>
    %157 = tpu.matmul %156, %154, %cst_109 {dimension_numbers = #tpu.dot_dimension_numbers<[1], [0], [0], [1], [0, 0, 1, 1], [], []>} : vector<8x8xbf16>, vector<8x1088xbf16>, vector<8x1088xf32> -> vector<8x1088xf32>
    %158 = arith.addf %152, %157 : vector<8x1088xf32>
    %c0_110 = arith.constant 0 : index
    %c1_111 = arith.constant 1 : index
    %159 = vector.load %arg11[%c0_110, %c1_111] : memref<16x1158xf32, #tpu.memory_space<vmem>>, vector<8x1088xf32>
    %160 = arith.truncf %159 : vector<8x1088xf32> to vector<8x1088xbf16>
    %c1_112 = arith.constant 1 : index
    %c0_113 = arith.constant 0 : index
    %c0_114 = arith.constant 0 : index
    %161 = vector.load %arg5[%c1_112, %c0_113, %c0_114] : memref<9x8x8xbf16, #tpu.memory_space<vmem>>, vector<1x8x8xbf16>
    %162 = vector.shape_cast %161 : vector<1x8x8xbf16> to vector<8x8xbf16>
    %cst_115 = arith.constant dense<0.000000e+00> : vector<8x1088xf32>
    %163 = tpu.matmul %162, %160, %cst_115 {dimension_numbers = #tpu.dot_dimension_numbers<[1], [0], [0], [1], [0, 0, 1, 1], [], []>} : vector<8x8xbf16>, vector<8x1088xbf16>, vector<8x1088xf32> -> vector<8x1088xf32>
    %164 = arith.addf %158, %163 : vector<8x1088xf32>
    %c0_116 = arith.constant 0 : index
    %c2_117 = arith.constant 2 : index
    %165 = vector.load %arg11[%c0_116, %c2_117] : memref<16x1158xf32, #tpu.memory_space<vmem>>, vector<8x1088xf32>
    %166 = arith.truncf %165 : vector<8x1088xf32> to vector<8x1088xbf16>
    %c2_118 = arith.constant 2 : index
    %c0_119 = arith.constant 0 : index
    %c0_120 = arith.constant 0 : index
    %167 = vector.load %arg5[%c2_118, %c0_119, %c0_120] : memref<9x8x8xbf16, #tpu.memory_space<vmem>>, vector<1x8x8xbf16>
    %168 = vector.shape_cast %167 : vector<1x8x8xbf16> to vector<8x8xbf16>
    %cst_121 = arith.constant dense<0.000000e+00> : vector<8x1088xf32>
    %169 = tpu.matmul %168, %166, %cst_121 {dimension_numbers = #tpu.dot_dimension_numbers<[1], [0], [0], [1], [0, 0, 1, 1], [], []>} : vector<8x8xbf16>, vector<8x1088xbf16>, vector<8x1088xf32> -> vector<8x1088xf32>
    %170 = arith.addf %164, %169 : vector<8x1088xf32>
    %c0_122 = arith.constant 0 : index
    %c34_123 = arith.constant 34 : index
    %171 = vector.load %arg11[%c0_122, %c34_123] : memref<16x1158xf32, #tpu.memory_space<vmem>>, vector<8x1088xf32>
    %172 = arith.truncf %171 : vector<8x1088xf32> to vector<8x1088xbf16>
    %c3_124 = arith.constant 3 : index
    %c0_125 = arith.constant 0 : index
    %c0_126 = arith.constant 0 : index
    %173 = vector.load %arg5[%c3_124, %c0_125, %c0_126] : memref<9x8x8xbf16, #tpu.memory_space<vmem>>, vector<1x8x8xbf16>
    %174 = vector.shape_cast %173 : vector<1x8x8xbf16> to vector<8x8xbf16>
    %cst_127 = arith.constant dense<0.000000e+00> : vector<8x1088xf32>
    %175 = tpu.matmul %174, %172, %cst_127 {dimension_numbers = #tpu.dot_dimension_numbers<[1], [0], [0], [1], [0, 0, 1, 1], [], []>} : vector<8x8xbf16>, vector<8x1088xbf16>, vector<8x1088xf32> -> vector<8x1088xf32>
    %176 = arith.addf %170, %175 : vector<8x1088xf32>
    %c0_128 = arith.constant 0 : index
    %c35_129 = arith.constant 35 : index
    %177 = vector.load %arg11[%c0_128, %c35_129] : memref<16x1158xf32, #tpu.memory_space<vmem>>, vector<8x1088xf32>
    %178 = arith.truncf %177 : vector<8x1088xf32> to vector<8x1088xbf16>
    %c4_130 = arith.constant 4 : index
    %c0_131 = arith.constant 0 : index
    %c0_132 = arith.constant 0 : index
    %179 = vector.load %arg5[%c4_130, %c0_131, %c0_132] : memref<9x8x8xbf16, #tpu.memory_space<vmem>>, vector<1x8x8xbf16>
    %180 = vector.shape_cast %179 : vector<1x8x8xbf16> to vector<8x8xbf16>
    %cst_133 = arith.constant dense<0.000000e+00> : vector<8x1088xf32>
    %181 = tpu.matmul %180, %178, %cst_133 {dimension_numbers = #tpu.dot_dimension_numbers<[1], [0], [0], [1], [0, 0, 1, 1], [], []>} : vector<8x8xbf16>, vector<8x1088xbf16>, vector<8x1088xf32> -> vector<8x1088xf32>
    %182 = arith.addf %176, %181 : vector<8x1088xf32>
    %c0_134 = arith.constant 0 : index
    %c36_135 = arith.constant 36 : index
    %183 = vector.load %arg11[%c0_134, %c36_135] : memref<16x1158xf32, #tpu.memory_space<vmem>>, vector<8x1088xf32>
    %184 = arith.truncf %183 : vector<8x1088xf32> to vector<8x1088xbf16>
    %c5_136 = arith.constant 5 : index
    %c0_137 = arith.constant 0 : index
    %c0_138 = arith.constant 0 : index
    %185 = vector.load %arg5[%c5_136, %c0_137, %c0_138] : memref<9x8x8xbf16, #tpu.memory_space<vmem>>, vector<1x8x8xbf16>
    %186 = vector.shape_cast %185 : vector<1x8x8xbf16> to vector<8x8xbf16>
    %cst_139 = arith.constant dense<0.000000e+00> : vector<8x1088xf32>
    %187 = tpu.matmul %186, %184, %cst_139 {dimension_numbers = #tpu.dot_dimension_numbers<[1], [0], [0], [1], [0, 0, 1, 1], [], []>} : vector<8x8xbf16>, vector<8x1088xbf16>, vector<8x1088xf32> -> vector<8x1088xf32>
    %188 = arith.addf %182, %187 : vector<8x1088xf32>
    %c0_140 = arith.constant 0 : index
    %c68_141 = arith.constant 68 : index
    %189 = vector.load %arg11[%c0_140, %c68_141] : memref<16x1158xf32, #tpu.memory_space<vmem>>, vector<8x1088xf32>
    %190 = arith.truncf %189 : vector<8x1088xf32> to vector<8x1088xbf16>
    %c6_142 = arith.constant 6 : index
    %c0_143 = arith.constant 0 : index
    %c0_144 = arith.constant 0 : index
    %191 = vector.load %arg5[%c6_142, %c0_143, %c0_144] : memref<9x8x8xbf16, #tpu.memory_space<vmem>>, vector<1x8x8xbf16>
    %192 = vector.shape_cast %191 : vector<1x8x8xbf16> to vector<8x8xbf16>
    %cst_145 = arith.constant dense<0.000000e+00> : vector<8x1088xf32>
    %193 = tpu.matmul %192, %190, %cst_145 {dimension_numbers = #tpu.dot_dimension_numbers<[1], [0], [0], [1], [0, 0, 1, 1], [], []>} : vector<8x8xbf16>, vector<8x1088xbf16>, vector<8x1088xf32> -> vector<8x1088xf32>
    %194 = arith.addf %188, %193 : vector<8x1088xf32>
    %c0_146 = arith.constant 0 : index
    %c69_147 = arith.constant 69 : index
    %195 = vector.load %arg11[%c0_146, %c69_147] : memref<16x1158xf32, #tpu.memory_space<vmem>>, vector<8x1088xf32>
    %196 = arith.truncf %195 : vector<8x1088xf32> to vector<8x1088xbf16>
    %c7_148 = arith.constant 7 : index
    %c0_149 = arith.constant 0 : index
    %c0_150 = arith.constant 0 : index
    %197 = vector.load %arg5[%c7_148, %c0_149, %c0_150] : memref<9x8x8xbf16, #tpu.memory_space<vmem>>, vector<1x8x8xbf16>
    %198 = vector.shape_cast %197 : vector<1x8x8xbf16> to vector<8x8xbf16>
    %cst_151 = arith.constant dense<0.000000e+00> : vector<8x1088xf32>
    %199 = tpu.matmul %198, %196, %cst_151 {dimension_numbers = #tpu.dot_dimension_numbers<[1], [0], [0], [1], [0, 0, 1, 1], [], []>} : vector<8x8xbf16>, vector<8x1088xbf16>, vector<8x1088xf32> -> vector<8x1088xf32>
    %200 = arith.addf %194, %199 : vector<8x1088xf32>
    %c0_152 = arith.constant 0 : index
    %c70_153 = arith.constant 70 : index
    %201 = vector.load %arg11[%c0_152, %c70_153] : memref<16x1158xf32, #tpu.memory_space<vmem>>, vector<8x1088xf32>
    %202 = arith.truncf %201 : vector<8x1088xf32> to vector<8x1088xbf16>
    %c8_154 = arith.constant 8 : index
    %c0_155 = arith.constant 0 : index
    %c0_156 = arith.constant 0 : index
    %203 = vector.load %arg5[%c8_154, %c0_155, %c0_156] : memref<9x8x8xbf16, #tpu.memory_space<vmem>>, vector<1x8x8xbf16>
    %204 = vector.shape_cast %203 : vector<1x8x8xbf16> to vector<8x8xbf16>
    %cst_157 = arith.constant dense<0.000000e+00> : vector<8x1088xf32>
    %205 = tpu.matmul %204, %202, %cst_157 {dimension_numbers = #tpu.dot_dimension_numbers<[1], [0], [0], [1], [0, 0, 1, 1], [], []>} : vector<8x8xbf16>, vector<8x1088xbf16>, vector<8x1088xf32> -> vector<8x1088xf32>
    %206 = arith.addf %200, %205 : vector<8x1088xf32>
    %c2_158 = arith.constant 2 : index
    %c0_159 = arith.constant 0 : index
    %c0_160 = arith.constant 0 : index
    %c0_161 = arith.constant 0 : index
    %207 = vector.load %arg7[%c2_158, %c0_159, %c0_160, %c0_161] : memref<4x3x8x1xf32, #tpu.memory_space<vmem>>, vector<1x1x8x1xf32>
    %208 = vector.shape_cast %207 : vector<1x1x8x1xf32> to vector<8x1xf32>
    %c2_162 = arith.constant 2 : index
    %c1_163 = arith.constant 1 : index
    %c0_164 = arith.constant 0 : index
    %c0_165 = arith.constant 0 : index
    %209 = vector.load %arg7[%c2_162, %c1_163, %c0_164, %c0_165] : memref<4x3x8x1xf32, #tpu.memory_space<vmem>>, vector<1x1x8x1xf32>
    %210 = vector.shape_cast %209 : vector<1x1x8x1xf32> to vector<8x1xf32>
    %c2_166 = arith.constant 2 : index
    %c2_167 = arith.constant 2 : index
    %c0_168 = arith.constant 0 : index
    %c0_169 = arith.constant 0 : index
    %211 = vector.load %arg7[%c2_166, %c2_167, %c0_168, %c0_169] : memref<4x3x8x1xf32, #tpu.memory_space<vmem>>, vector<1x1x8x1xf32>
    %212 = vector.shape_cast %211 : vector<1x1x8x1xf32> to vector<8x1xf32>
    %213 = vector.broadcast %208 : vector<8x1xf32> to vector<8x1088xf32>
    %214 = arith.addf %206, %213 : vector<8x1088xf32>
    %215 = vector.broadcast %1 : vector<1x1088xf32> to vector<8x1088xf32>
    %216 = arith.mulf %214, %215 : vector<8x1088xf32>
    %cst_170 = arith.constant dense<0.000000e+00> : vector<8xf32>
    %217 = vector.multi_reduction <add>, %216, %cst_170 [1] : vector<8x1088xf32> to vector<8xf32>
    %218 = vector.shape_cast %217 : vector<8xf32> to vector<8x1xf32>
    %cst_171 = arith.constant dense<0.000000e+00> : vector<8x1xf32>
    %219 = tpu.matmul %0, %218, %cst_171 {dimension_numbers = #tpu.dot_dimension_numbers<[1], [0], [0], [1], [0, 0, 1, 1], [], []>} : vector<8x8xf32>, vector<8x1xf32>, vector<8x1xf32> -> vector<8x1xf32>
    %cst_172 = arith.constant 2.44140625E-4 : f32
    %220 = vector.broadcast %cst_172 : f32 to vector<8x1xf32>
    %221 = arith.mulf %219, %220 : vector<8x1xf32>
    %222 = vector.broadcast %221 : vector<8x1xf32> to vector<8x1088xf32>
    %223 = arith.subf %214, %222 : vector<8x1088xf32>
    %224 = vector.broadcast %1 : vector<1x1088xf32> to vector<8x1088xf32>
    %225 = arith.mulf %223, %224 : vector<8x1088xf32>
    %226 = arith.mulf %225, %225 : vector<8x1088xf32>
    %cst_173 = arith.constant dense<0.000000e+00> : vector<8xf32>
    %227 = vector.multi_reduction <add>, %226, %cst_173 [1] : vector<8x1088xf32> to vector<8xf32>
    %228 = vector.shape_cast %227 : vector<8xf32> to vector<8x1xf32>
    %cst_174 = arith.constant dense<0.000000e+00> : vector<8x1xf32>
    %229 = tpu.matmul %0, %228, %cst_174 {dimension_numbers = #tpu.dot_dimension_numbers<[1], [0], [0], [1], [0, 0, 1, 1], [], []>} : vector<8x8xf32>, vector<8x1xf32>, vector<8x1xf32> -> vector<8x1xf32>
    %cst_175 = arith.constant 2.44140625E-4 : f32
    %230 = vector.broadcast %cst_175 : f32 to vector<8x1xf32>
    %231 = arith.mulf %229, %230 : vector<8x1xf32>
    %cst_176 = arith.constant 9.99999974E-6 : f32
    %232 = vector.broadcast %cst_176 : f32 to vector<8x1xf32>
    %233 = arith.addf %231, %232 : vector<8x1xf32>
    %234 = math.rsqrt %233 : vector<8x1xf32>
    %235 = vector.broadcast %234 : vector<8x1xf32> to vector<8x1088xf32>
    %236 = arith.mulf %225, %235 : vector<8x1088xf32>
    %237 = vector.broadcast %210 : vector<8x1xf32> to vector<8x1088xf32>
    %238 = arith.mulf %236, %237 : vector<8x1088xf32>
    %239 = vector.broadcast %212 : vector<8x1xf32> to vector<8x1088xf32>
    %240 = arith.addf %238, %239 : vector<8x1088xf32>
    %cst_177 = arith.constant 0.000000e+00 : f32
    %241 = vector.broadcast %cst_177 : f32 to vector<8x1088xf32>
    %242 = arith.cmpf oge, %240, %241 : vector<8x1088xf32>
    %cst_178 = arith.constant 0.00999999977 : f32
    %243 = vector.broadcast %cst_178 : f32 to vector<8x1088xf32>
    %244 = arith.mulf %243, %240 : vector<8x1088xf32>
    %245 = arith.select %242, %240, %244 : vector<8x1088xi1>, vector<8x1088xf32>
    %246 = vector.broadcast %1 : vector<1x1088xf32> to vector<8x1088xf32>
    %247 = arith.mulf %245, %246 : vector<8x1088xf32>
    %c0_179 = arith.constant 0 : index
    %c35_180 = arith.constant 35 : index
    %248 = vector.load %arg11[%c0_179, %c35_180] : memref<16x1158xf32, #tpu.memory_space<vmem>>, vector<8x1088xf32>
    tpu.vector_store %arg11[%c0_179, %c35_180], %247 {strides = array<i32>} : memref<16x1158xf32, #tpu.memory_space<vmem>>, vector<8x1088xf32>,
    %cst_181 = arith.constant 0.000000e+00 : f32
    %249 = vector.broadcast %cst_181 : f32 to vector<8x1088xf32>
    %c0_182 = arith.constant 0 : index
    %c0_183 = arith.constant 0 : index
    %250 = vector.load %arg11[%c0_182, %c0_183] : memref<16x1158xf32, #tpu.memory_space<vmem>>, vector<8x1088xf32>
    %251 = arith.truncf %250 : vector<8x1088xf32> to vector<8x1088xbf16>
    %c0_184 = arith.constant 0 : index
    %c0_185 = arith.constant 0 : index
    %c0_186 = arith.constant 0 : index
    %252 = vector.load %arg6[%c0_184, %c0_185, %c0_186] : memref<9x8x8xbf16, #tpu.memory_space<vmem>>, vector<1x8x8xbf16>
    %253 = vector.shape_cast %252 : vector<1x8x8xbf16> to vector<8x8xbf16>
    %cst_187 = arith.constant dense<0.000000e+00> : vector<8x1088xf32>
    %254 = tpu.matmul %253, %251, %cst_187 {dimension_numbers = #tpu.dot_dimension_numbers<[1], [0], [0], [1], [0, 0, 1, 1], [], []>} : vector<8x8xbf16>, vector<8x1088xbf16>, vector<8x1088xf32> -> vector<8x1088xf32>
    %255 = arith.addf %249, %254 : vector<8x1088xf32>
    %c0_188 = arith.constant 0 : index
    %c1_189 = arith.constant 1 : index
    %256 = vector.load %arg11[%c0_188, %c1_189] : memref<16x1158xf32, #tpu.memory_space<vmem>>, vector<8x1088xf32>
    %257 = arith.truncf %256 : vector<8x1088xf32> to vector<8x1088xbf16>
    %c1_190 = arith.constant 1 : index
    %c0_191 = arith.constant 0 : index
    %c0_192 = arith.constant 0 : index
    %258 = vector.load %arg6[%c1_190, %c0_191, %c0_192] : memref<9x8x8xbf16, #tpu.memory_space<vmem>>, vector<1x8x8xbf16>
    %259 = vector.shape_cast %258 : vector<1x8x8xbf16> to vector<8x8xbf16>
    %cst_193 = arith.constant dense<0.000000e+00> : vector<8x1088xf32>
    %260 = tpu.matmul %259, %257, %cst_193 {dimension_numbers = #tpu.dot_dimension_numbers<[1], [0], [0], [1], [0, 0, 1, 1], [], []>} : vector<8x8xbf16>, vector<8x1088xbf16>, vector<8x1088xf32> -> vector<8x1088xf32>
    %261 = arith.addf %255, %260 : vector<8x1088xf32>
    %c0_194 = arith.constant 0 : index
    %c2_195 = arith.constant 2 : index
    %262 = vector.load %arg11[%c0_194, %c2_195] : memref<16x1158xf32, #tpu.memory_space<vmem>>, vector<8x1088xf32>
    %263 = arith.truncf %262 : vector<8x1088xf32> to vector<8x1088xbf16>
    %c2_196 = arith.constant 2 : index
    %c0_197 = arith.constant 0 : index
    %c0_198 = arith.constant 0 : index
    %264 = vector.load %arg6[%c2_196, %c0_197, %c0_198] : memref<9x8x8xbf16, #tpu.memory_space<vmem>>, vector<1x8x8xbf16>
    %265 = vector.shape_cast %264 : vector<1x8x8xbf16> to vector<8x8xbf16>
    %cst_199 = arith.constant dense<0.000000e+00> : vector<8x1088xf32>
    %266 = tpu.matmul %265, %263, %cst_199 {dimension_numbers = #tpu.dot_dimension_numbers<[1], [0], [0], [1], [0, 0, 1, 1], [], []>} : vector<8x8xbf16>, vector<8x1088xbf16>, vector<8x1088xf32> -> vector<8x1088xf32>
    %267 = arith.addf %261, %266 : vector<8x1088xf32>
    %c0_200 = arith.constant 0 : index
    %c34_201 = arith.constant 34 : index
    %268 = vector.load %arg11[%c0_200, %c34_201] : memref<16x1158xf32, #tpu.memory_space<vmem>>, vector<8x1088xf32>
    %269 = arith.truncf %268 : vector<8x1088xf32> to vector<8x1088xbf16>
    %c3_202 = arith.constant 3 : index
    %c0_203 = arith.constant 0 : index
    %c0_204 = arith.constant 0 : index
    %270 = vector.load %arg6[%c3_202, %c0_203, %c0_204] : memref<9x8x8xbf16, #tpu.memory_space<vmem>>, vector<1x8x8xbf16>
    %271 = vector.shape_cast %270 : vector<1x8x8xbf16> to vector<8x8xbf16>
    %cst_205 = arith.constant dense<0.000000e+00> : vector<8x1088xf32>
    %272 = tpu.matmul %271, %269, %cst_205 {dimension_numbers = #tpu.dot_dimension_numbers<[1], [0], [0], [1], [0, 0, 1, 1], [], []>} : vector<8x8xbf16>, vector<8x1088xbf16>, vector<8x1088xf32> -> vector<8x1088xf32>
    %273 = arith.addf %267, %272 : vector<8x1088xf32>
    %c0_206 = arith.constant 0 : index
    %c35_207 = arith.constant 35 : index
    %274 = vector.load %arg11[%c0_206, %c35_207] : memref<16x1158xf32, #tpu.memory_space<vmem>>, vector<8x1088xf32>
    %275 = arith.truncf %274 : vector<8x1088xf32> to vector<8x1088xbf16>
    %c4_208 = arith.constant 4 : index
    %c0_209 = arith.constant 0 : index
    %c0_210 = arith.constant 0 : index
    %276 = vector.load %arg6[%c4_208, %c0_209, %c0_210] : memref<9x8x8xbf16, #tpu.memory_space<vmem>>, vector<1x8x8xbf16>
    %277 = vector.shape_cast %276 : vector<1x8x8xbf16> to vector<8x8xbf16>
    %cst_211 = arith.constant dense<0.000000e+00> : vector<8x1088xf32>
    %278 = tpu.matmul %277, %275, %cst_211 {dimension_numbers = #tpu.dot_dimension_numbers<[1], [0], [0], [1], [0, 0, 1, 1], [], []>} : vector<8x8xbf16>, vector<8x1088xbf16>, vector<8x1088xf32> -> vector<8x1088xf32>
    %279 = arith.addf %273, %278 : vector<8x1088xf32>
    %c0_212 = arith.constant 0 : index
    %c36_213 = arith.constant 36 : index
    %280 = vector.load %arg11[%c0_212, %c36_213] : memref<16x1158xf32, #tpu.memory_space<vmem>>, vector<8x1088xf32>
    %281 = arith.truncf %280 : vector<8x1088xf32> to vector<8x1088xbf16>
    %c5_214 = arith.constant 5 : index
    %c0_215 = arith.constant 0 : index
    %c0_216 = arith.constant 0 : index
    %282 = vector.load %arg6[%c5_214, %c0_215, %c0_216] : memref<9x8x8xbf16, #tpu.memory_space<vmem>>, vector<1x8x8xbf16>
    %283 = vector.shape_cast %282 : vector<1x8x8xbf16> to vector<8x8xbf16>
    %cst_217 = arith.constant dense<0.000000e+00> : vector<8x1088xf32>
    %284 = tpu.matmul %283, %281, %cst_217 {dimension_numbers = #tpu.dot_dimension_numbers<[1], [0], [0], [1], [0, 0, 1, 1], [], []>} : vector<8x8xbf16>, vector<8x1088xbf16>, vector<8x1088xf32> -> vector<8x1088xf32>
    %285 = arith.addf %279, %284 : vector<8x1088xf32>
    %c0_218 = arith.constant 0 : index
    %c68_219 = arith.constant 68 : index
    %286 = vector.load %arg11[%c0_218, %c68_219] : memref<16x1158xf32, #tpu.memory_space<vmem>>, vector<8x1088xf32>
    %287 = arith.truncf %286 : vector<8x1088xf32> to vector<8x1088xbf16>
    %c6_220 = arith.constant 6 : index
    %c0_221 = arith.constant 0 : index
    %c0_222 = arith.constant 0 : index
    %288 = vector.load %arg6[%c6_220, %c0_221, %c0_222] : memref<9x8x8xbf16, #tpu.memory_space<vmem>>, vector<1x8x8xbf16>
    %289 = vector.shape_cast %288 : vector<1x8x8xbf16> to vector<8x8xbf16>
    %cst_223 = arith.constant dense<0.000000e+00> : vector<8x1088xf32>
    %290 = tpu.matmul %289, %287, %cst_223 {dimension_numbers = #tpu.dot_dimension_numbers<[1], [0], [0], [1], [0, 0, 1, 1], [], []>} : vector<8x8xbf16>, vector<8x1088xbf16>, vector<8x1088xf32> -> vector<8x1088xf32>
    %291 = arith.addf %285, %290 : vector<8x1088xf32>
    %c0_224 = arith.constant 0 : index
    %c69_225 = arith.constant 69 : index
    %292 = vector.load %arg11[%c0_224, %c69_225] : memref<16x1158xf32, #tpu.memory_space<vmem>>, vector<8x1088xf32>
    %293 = arith.truncf %292 : vector<8x1088xf32> to vector<8x1088xbf16>
    %c7_226 = arith.constant 7 : index
    %c0_227 = arith.constant 0 : index
    %c0_228 = arith.constant 0 : index
    %294 = vector.load %arg6[%c7_226, %c0_227, %c0_228] : memref<9x8x8xbf16, #tpu.memory_space<vmem>>, vector<1x8x8xbf16>
    %295 = vector.shape_cast %294 : vector<1x8x8xbf16> to vector<8x8xbf16>
    %cst_229 = arith.constant dense<0.000000e+00> : vector<8x1088xf32>
    %296 = tpu.matmul %295, %293, %cst_229 {dimension_numbers = #tpu.dot_dimension_numbers<[1], [0], [0], [1], [0, 0, 1, 1], [], []>} : vector<8x8xbf16>, vector<8x1088xbf16>, vector<8x1088xf32> -> vector<8x1088xf32>
    %297 = arith.addf %291, %296 : vector<8x1088xf32>
    %c0_230 = arith.constant 0 : index
    %c70_231 = arith.constant 70 : index
    %298 = vector.load %arg11[%c0_230, %c70_231] : memref<16x1158xf32, #tpu.memory_space<vmem>>, vector<8x1088xf32>
    %299 = arith.truncf %298 : vector<8x1088xf32> to vector<8x1088xbf16>
    %c8_232 = arith.constant 8 : index
    %c0_233 = arith.constant 0 : index
    %c0_234 = arith.constant 0 : index
    %300 = vector.load %arg6[%c8_232, %c0_233, %c0_234] : memref<9x8x8xbf16, #tpu.memory_space<vmem>>, vector<1x8x8xbf16>
    %301 = vector.shape_cast %300 : vector<1x8x8xbf16> to vector<8x8xbf16>
    %cst_235 = arith.constant dense<0.000000e+00> : vector<8x1088xf32>
    %302 = tpu.matmul %301, %299, %cst_235 {dimension_numbers = #tpu.dot_dimension_numbers<[1], [0], [0], [1], [0, 0, 1, 1], [], []>} : vector<8x8xbf16>, vector<8x1088xbf16>, vector<8x1088xf32> -> vector<8x1088xf32>
    %303 = arith.addf %297, %302 : vector<8x1088xf32>
    %c3_236 = arith.constant 3 : index
    %c0_237 = arith.constant 0 : index
    %c0_238 = arith.constant 0 : index
    %c0_239 = arith.constant 0 : index
    %304 = vector.load %arg7[%c3_236, %c0_237, %c0_238, %c0_239] : memref<4x3x8x1xf32, #tpu.memory_space<vmem>>, vector<1x1x8x1xf32>
    %305 = vector.shape_cast %304 : vector<1x1x8x1xf32> to vector<8x1xf32>
    %c3_240 = arith.constant 3 : index
    %c1_241 = arith.constant 1 : index
    %c0_242 = arith.constant 0 : index
    %c0_243 = arith.constant 0 : index
    %306 = vector.load %arg7[%c3_240, %c1_241, %c0_242, %c0_243] : memref<4x3x8x1xf32, #tpu.memory_space<vmem>>, vector<1x1x8x1xf32>
    %307 = vector.shape_cast %306 : vector<1x1x8x1xf32> to vector<8x1xf32>
    %c3_244 = arith.constant 3 : index
    %c2_245 = arith.constant 2 : index
    %c0_246 = arith.constant 0 : index
    %c0_247 = arith.constant 0 : index
    %308 = vector.load %arg7[%c3_244, %c2_245, %c0_246, %c0_247] : memref<4x3x8x1xf32, #tpu.memory_space<vmem>>, vector<1x1x8x1xf32>
    %309 = vector.shape_cast %308 : vector<1x1x8x1xf32> to vector<8x1xf32>
    %310 = vector.broadcast %305 : vector<8x1xf32> to vector<8x1088xf32>
    %311 = arith.addf %303, %310 : vector<8x1088xf32>
    %312 = vector.broadcast %1 : vector<1x1088xf32> to vector<8x1088xf32>
    %313 = arith.mulf %311, %312 : vector<8x1088xf32>
    %cst_248 = arith.constant dense<0.000000e+00> : vector<8xf32>
    %314 = vector.multi_reduction <add>, %313, %cst_248 [1] : vector<8x1088xf32> to vector<8xf32>
    %315 = vector.shape_cast %314 : vector<8xf32> to vector<8x1xf32>
    %cst_249 = arith.constant dense<0.000000e+00> : vector<8x1xf32>
    %316 = tpu.matmul %0, %315, %cst_249 {dimension_numbers = #tpu.dot_dimension_numbers<[1], [0], [0], [1], [0, 0, 1, 1], [], []>} : vector<8x8xf32>, vector<8x1xf32>, vector<8x1xf32> -> vector<8x1xf32>
    %cst_250 = arith.constant 2.44140625E-4 : f32
    %317 = vector.broadcast %cst_250 : f32 to vector<8x1xf32>
    %318 = arith.mulf %316, %317 : vector<8x1xf32>
    %319 = vector.broadcast %318 : vector<8x1xf32> to vector<8x1088xf32>
    %320 = arith.subf %311, %319 : vector<8x1088xf32>
    %321 = vector.broadcast %1 : vector<1x1088xf32> to vector<8x1088xf32>
    %322 = arith.mulf %320, %321 : vector<8x1088xf32>
    %323 = arith.mulf %322, %322 : vector<8x1088xf32>
    %cst_251 = arith.constant dense<0.000000e+00> : vector<8xf32>
    %324 = vector.multi_reduction <add>, %323, %cst_251 [1] : vector<8x1088xf32> to vector<8xf32>
    %325 = vector.shape_cast %324 : vector<8xf32> to vector<8x1xf32>
    %cst_252 = arith.constant dense<0.000000e+00> : vector<8x1xf32>
    %326 = tpu.matmul %0, %325, %cst_252 {dimension_numbers = #tpu.dot_dimension_numbers<[1], [0], [0], [1], [0, 0, 1, 1], [], []>} : vector<8x8xf32>, vector<8x1xf32>, vector<8x1xf32> -> vector<8x1xf32>
    %cst_253 = arith.constant 2.44140625E-4 : f32
    %327 = vector.broadcast %cst_253 : f32 to vector<8x1xf32>
    %328 = arith.mulf %326, %327 : vector<8x1xf32>
    %cst_254 = arith.constant 9.99999974E-6 : f32
    %329 = vector.broadcast %cst_254 : f32 to vector<8x1xf32>
    %330 = arith.addf %328, %329 : vector<8x1xf32>
    %331 = math.rsqrt %330 : vector<8x1xf32>
    %332 = vector.broadcast %331 : vector<8x1xf32> to vector<8x1088xf32>
    %333 = arith.mulf %322, %332 : vector<8x1088xf32>
    %334 = vector.broadcast %307 : vector<8x1xf32> to vector<8x1088xf32>
    %335 = arith.mulf %333, %334 : vector<8x1088xf32>
    %336 = vector.broadcast %309 : vector<8x1xf32> to vector<8x1088xf32>
    %337 = arith.addf %335, %336 : vector<8x1088xf32>
    %cst_255 = arith.constant 0.000000e+00 : f32
    %338 = vector.broadcast %cst_255 : f32 to vector<8x1088xf32>
    %339 = arith.cmpf oge, %337, %338 : vector<8x1088xf32>
    %cst_256 = arith.constant 0.00999999977 : f32
    %340 = vector.broadcast %cst_256 : f32 to vector<8x1088xf32>
    %341 = arith.mulf %340, %337 : vector<8x1088xf32>
    %342 = arith.select %339, %337, %341 : vector<8x1088xi1>, vector<8x1088xf32>
    %343 = vector.broadcast %1 : vector<1x1088xf32> to vector<8x1088xf32>
    %344 = arith.mulf %342, %343 : vector<8x1088xf32>
    %345 = arith.addf %344, %150 : vector<8x1088xf32>
    %c0_257 = arith.constant 0 : index
    %c0_258 = arith.constant 0 : index
    %c0_259 = arith.constant 0 : index
    %346 = vector.load %arg10[%c0_257, %c0_258, %c0_259] : memref<1x8x1088xf32, #tpu.memory_space<vmem>>, vector<1x8x1088xf32>
    %347 = vector.shape_cast %346 : vector<1x8x1088xf32> to vector<8x1088xf32>
    %348 = vector.shape_cast %345 : vector<8x1088xf32> to vector<1x8x1088xf32>
    tpu.vector_store %arg10[%c0_257, %c0_258, %c0_259], %348 {strides = array<i32>} : memref<1x8x1088xf32, #tpu.memory_space<vmem>>, vector<1x8x1088xf32>,
    return
  }
  func.func @transform_0(%arg0: i32) -> (i32, i32, i32) {
    %c0_i32 = arith.constant 0 : i32
    %c0_i32_0 = arith.constant 0 : i32
    %c0_i32_1 = arith.constant 0 : i32
    return %arg0, %c0_i32, %c0_i32_0 : i32, i32, i32
  }
  func.func @transform_1(%arg0: i32) -> (i32, i32, i32) {
    %c0_i32 = arith.constant 0 : i32
    %c0_i32_0 = arith.constant 0 : i32
    %c0_i32_1 = arith.constant 0 : i32
    return %arg0, %c0_i32, %c0_i32_0 : i32, i32, i32
  }
  func.func @transform_2(%arg0: i32) -> (i32, i32) {
    %c0_i32 = arith.constant 0 : i32
    %c0_i32_0 = arith.constant 0 : i32
    %c0_i32_1 = arith.constant 0 : i32
    return %c0_i32, %c0_i32_0 : i32, i32
  }
  func.func @transform_3(%arg0: i32) -> (i32, i32, i32) {
    %c0_i32 = arith.constant 0 : i32
    %c0_i32_0 = arith.constant 0 : i32
    %c0_i32_1 = arith.constant 0 : i32
    %c0_i32_2 = arith.constant 0 : i32
    return %c0_i32, %c0_i32_0, %c0_i32_1 : i32, i32, i32
  }
  func.func @transform_4(%arg0: i32) -> (i32, i32, i32) {
    %c0_i32 = arith.constant 0 : i32
    %c0_i32_0 = arith.constant 0 : i32
    %c0_i32_1 = arith.constant 0 : i32
    %c0_i32_2 = arith.constant 0 : i32
    return %c0_i32, %c0_i32_0, %c0_i32_1 : i32, i32, i32
  }
  func.func @transform_5(%arg0: i32) -> (i32, i32, i32) {
    %c0_i32 = arith.constant 0 : i32
    %c0_i32_0 = arith.constant 0 : i32
    %c0_i32_1 = arith.constant 0 : i32
    %c0_i32_2 = arith.constant 0 : i32
    return %c0_i32, %c0_i32_0, %c0_i32_1 : i32, i32, i32
  }
  func.func @transform_6(%arg0: i32) -> (i32, i32, i32, i32) {
    %c0_i32 = arith.constant 0 : i32
    %c0_i32_0 = arith.constant 0 : i32
    %c0_i32_1 = arith.constant 0 : i32
    %c0_i32_2 = arith.constant 0 : i32
    %c0_i32_3 = arith.constant 0 : i32
    return %c0_i32, %c0_i32_0, %c0_i32_1, %c0_i32_2 : i32, i32, i32, i32
  }
  func.func @transform_7(%arg0: i32) -> (i32, i32) {
    %c0_i32 = arith.constant 0 : i32
    %c0_i32_0 = arith.constant 0 : i32
    %c0_i32_1 = arith.constant 0 : i32
    return %c0_i32, %c0_i32_0 : i32, i32
  }
  func.func @transform_8(%arg0: i32) -> (i32, i32) {
    %c0_i32 = arith.constant 0 : i32
    %c0_i32_0 = arith.constant 0 : i32
    %c0_i32_1 = arith.constant 0 : i32
    return %c0_i32, %c0_i32_0 : i32, i32
  }
  func.func @transform_9(%arg0: i32) -> (i32, i32, i32) {
    %c0_i32 = arith.constant 0 : i32
    %c0_i32_0 = arith.constant 0 : i32
    %c0_i32_1 = arith.constant 0 : i32
    return %arg0, %c0_i32, %c0_i32_0 : i32, i32, i32
  }
}

</mosaic_0001>

<llo_original>
// kernel: up_convolution_block_forward.2
$region0: #{up_convolution_block_forward.2}
  #allocation0 [shape = 'u32[]', space=smem, size = 0x4, offset = 0x4, fixed_abs, tag = 'smem constant byte address 0x4 - core index']
  #allocation1 [shape = 'u32[72,128]{1,0:T(1,128)}', space=vmem, size = 0x9000, scoped, tag = 'internal scratch']
  %s0 = inlined_call_operand.hbm [shape: f32[2,8,16,16], index: 0, kind: input, shape index: {}]
  %s1 = inlined_call_operand.hbm [shape: f32[32,16], index: 1, kind: input, shape index: {}]
  %s2 = inlined_call_operand.vmem [shape: f32[16,32], index: 2, kind: input, shape index: {}]
  %s3 = inlined_call_operand.vmem [shape: f32[2,8,32,32], index: 3, kind: output, shape index: {}]
  %s4 = sld [smem:[#allocation0]]
  $region53: #{up_convolution_block_forward.2} parent=0
    _
  %s6 = ssub.s32 1, %s4
  %s7 = scalar_select 0, %s6, %s4
  $region1: #{up_convolution_block_forward.2} parent=0
    #allocation2 [shape = 'u8[16384]{0}', space=vmem, size = 0x4000, scoped, tag = 'input window, operand 0']
    #allocation3 [shape = 's32[2]{0}', space=sflag, size = 0x8, scoped, tag = 'scoped memory for up_convolution_block_forward.2']
    #allocation4 [shape = 'u8[16384]{0}', space=vmem, size = 0x4000, scoped, tag = 'input window, operand 1, single buffered']
    #allocation5 [shape = 's32[1]{0}', space=sflag, size = 0x4, scoped, tag = 'scoped memory for up_convolution_block_forward.2']
    %8 = vsyncpa [#allocation3], 0
    %s9 = scalar_lea.sflag [#allocation3], 1
    %10 = vsyncpa %s9, 0
    %11 = vsyncpa [#allocation5], 0
    loop: start=0, step=1, limit=18
    $region2: #{up_convolution_block_forward.2} parent=1 // loop_pre_header
      _
    $region3: #{up_convolution_block_forward.2} parent=1 // loop_header
      %s13 = sphi 0, %s17
      %p14 = scmp.ge.s32.totalorder %s13, 18
      %s20 = sphi 0, %s32
      %s21 = sphi 0, %s28
      %s22 = sphi 0, %s20
      %s23 = sphi 0, %s21
      %s24 = sphi 0, %s22
      %s25 = sphi 0, %s23
      %s37 = sphi 0, %s39
      %s40 = sphi 0, %s37
      %s41 = sphi 0, %s40
      %s57 = sphi 0, %s41
      %s61 = sphi 0, %s61
      %s63 = sphi 0, %s61
      %s64 = sphi 0, %s63
      %s78 = sphi 0, %s64
      %s82 = sphi 0, %s82
      %s84 = sphi 0, %s82
      %s85 = sphi 0, %s84
      %s99 = sphi 0, %s85
      %s107 = sphi 0, %s109
      %s110 = sphi 0, %s107
      %s111 = sphi 0, %s110
      %s127 = sphi 0, %s111
    $region4: #{up_convolution_block_forward.2} parent=1 // loop_header_branch
      %16 = sbr.rel (%p14) target = $region8
    $region5: #{up_convolution_block_forward.2} parent=1 // loop_body
      %s18 = ssub.s32 %s13, 1
      %s19 = ssub.s32 %s13, 2
      %s26 = sadd.s32 1, %s21
      %p27 = scmp.ge.s32.totalorder %s26, 8
      %s28 = scalar_select %p27, 0, %s26
      %s29 = sadd.s32 1, %s20
      %s30 = scalar_select %p27, %s29, %s20
      %p31 = scmp.ge.s32.totalorder %s30, 2
      %s32 = scalar_select %p31, 0, %s30
      %s33 = ssub.s32 %s20, %s32
      %s34 = ssub.s32 %s21, %s28
      %s35 = sor.u32 %s33, %s34
      %p36 = scmp.eq.s32.totalorder %s35, 0
      %s38 = sadd.s32 %s37, 1
      %s39 = scalar_select %p36, %s37, %s38
      %p42 = pneg %p36
      %p43 = scmp.eq.s32.totalorder %s13, 15
      %p44 = por %p42, %p43
      %p45 = scmp.ne.s32.totalorder %s37, %s40
      %p46 = scmp.eq.s32.totalorder %s13, 0
      %p47 = por %p45, %p46
      %p48 = scmp.ne.s32.totalorder %s37, %s40
      %p49 = scmp.eq.s32.totalorder %s18, 15
      %p50 = por %p48, %p49
      %p51 = scmp.ne.s32.totalorder %s40, %s41
      %p52 = scmp.eq.s32.totalorder %s18, 0
      %p53 = por %p51, %p52
      %p54 = scmp.ne.s32.totalorder %s40, %s41
      %p55 = scmp.eq.s32.totalorder %s19, 15
      %p56 = por %p54, %p55
      %p58 = scmp.ne.s32.totalorder %s41, %s57
      %p59 = scmp.eq.s32.totalorder %s19, 0
      %p60 = por %p58, %p59
      %s62 = sadd.s32 %s61, 1
      %p65 = scmp.eq.s32.totalorder %s13, 15
      %p66 = scmp.ne.s32.totalorder %s61, %s63
      %p67 = scmp.eq.s32.totalorder %s13, 0
      %p68 = por %p66, %p67
      %p69 = scmp.ne.s32.totalorder %s61, %s63
      %p70 = scmp.eq.s32.totalorder %s18, 15
      %p71 = por %p69, %p70
      %p72 = scmp.ne.s32.totalorder %s63, %s64
      %p73 = scmp.eq.s32.totalorder %s18, 0
      %p74 = por %p72, %p73
      %p75 = scmp.ne.s32.totalorder %s63, %s64
      %p76 = scmp.eq.s32.totalorder %s19, 15
      %p77 = por %p75, %p76
      %p79 = scmp.ne.s32.totalorder %s64, %s78
      %p80 = scmp.eq.s32.totalorder %s19, 0
      %p81 = por %p79, %p80
      %s83 = sadd.s32 %s82, 1
      %p86 = scmp.eq.s32.totalorder %s13, 15
      %p87 = scmp.ne.s32.totalorder %s82, %s84
      %p88 = scmp.eq.s32.totalorder %s13, 0
      %p89 = por %p87, %p88
      %p90 = scmp.ne.s32.totalorder %s82, %s84
      %p91 = scmp.eq.s32.totalorder %s18, 15
      %p92 = por %p90, %p91
      %p93 = scmp.ne.s32.totalorder %s84, %s85
      %p94 = scmp.eq.s32.totalorder %s18, 0
      %p95 = por %p93, %p94
      %p96 = scmp.ne.s32.totalorder %s84, %s85
      %p97 = scmp.eq.s32.totalorder %s19, 15
      %p98 = por %p96, %p97
      %p100 = scmp.ne.s32.totalorder %s85, %s99
      %p101 = scmp.eq.s32.totalorder %s19, 0
      %p102 = por %p100, %p101
      %s103 = ssub.s32 %s20, %s32
      %s104 = ssub.s32 %s21, %s28
      %s105 = sor.u32 %s103, %s104
      %p106 = scmp.eq.s32.totalorder %s105, 0
      %s108 = sadd.s32 %s107, 1
      %s109 = scalar_select %p106, %s107, %s108
      %p112 = pneg %p106
      %p113 = scmp.eq.s32.totalorder %s13, 15
      %p114 = por %p112, %p113
      %p115 = scmp.ne.s32.totalorder %s107, %s110
      %p116 = scmp.eq.s32.totalorder %s13, 0
      %p117 = por %p115, %p116
      %p118 = scmp.ne.s32.totalorder %s107, %s110
      %p119 = scmp.eq.s32.totalorder %s18, 15
      %p120 = por %p118, %p119
      %p121 = scmp.ne.s32.totalorder %s110, %s111
      %p122 = scmp.eq.s32.totalorder %s18, 0
      %p123 = por %p121, %p122
      %p124 = scmp.ne.s32.totalorder %s110, %s111
      %p125 = scmp.eq.s32.totalorder %s19, 15
      %p126 = por %p124, %p125
      %p128 = scmp.ne.s32.totalorder %s111, %s127
      %p129 = scmp.eq.s32.totalorder %s19, 0
      %p130 = por %p128, %p129
      %p131 = scmp.le.s32.totalorder 1, %s13
      %p132 = scmp.lt.s32.totalorder %s13, 17
      %p133 = pnand %p131, %p132
      %p134 = pneg %p133
      // Predicated region
      $region9: #{up_convolution_block_forward.2} parent=5 // pred_check
        _
      $region10: #{up_convolution_block_forward.2} parent=5 // pred_check_branch
        %136 = sbr.rel (%p133) target = $region12
      $region11: #{up_convolution_block_forward.2} parent=5 // pred_region
        %s137 = ssub.s32 %s13, 1
        // Predicated region
        $region13: #{up_convolution_block_forward.2} parent=11 // pred_check
          %p138 = pneg %p74
        $region14: #{up_convolution_block_forward.2} parent=11 // pred_check_branch
          %140 = sbr.rel (%p138) target = $region16
        $region15: #{up_convolution_block_forward.2} parent=11 // pred_region
          %142 = vsyncadd [#allocation5], 0
          %s143 = sshll.u32 %s1, 4
          %s144 = int_to_ptr.hbm [resolvable:$true] %s143
          %s145 = sshll.u32 [#allocation4], 4
          %s146 = int_to_ptr.vmem [resolvable:$true] %s145
          %151 = dma.hbm_to_vmem [thread:$0]  %s144, 512, %s146, [#allocation5], 128, 128, 8
        $region16: #{up_convolution_block_forward.2} parent=11 // pred_fallthru
          _
        // Predicated region
        $region17: #{up_convolution_block_forward.2} parent=11 // pred_check
          %p152 = pneg %p95
        $region18: #{up_convolution_block_forward.2} parent=11 // pred_check_branch
          %154 = sbr.rel (%p152) target = $region20
        $region19: #{up_convolution_block_forward.2} parent=11 // pred_region
          _
        $region20: #{up_convolution_block_forward.2} parent=11 // pred_fallthru
          _
      $region12: #{up_convolution_block_forward.2} parent=5 // pred_fallthru
        _
      %p155 = scmp.lt.s32.totalorder %s13, 16
      // Predicated region
      $region21: #{up_convolution_block_forward.2} parent=5 // pred_check
        %p156 = pneg %p155
      $region22: #{up_convolution_block_forward.2} parent=5 // pred_check_branch
        %158 = sbr.rel (%p156) target = $region24
      $region23: #{up_convolution_block_forward.2} parent=5 // pred_region
        // Predicated region
        $region25: #{up_convolution_block_forward.2} parent=23 // pred_check
          %p159 = pneg %p47
        $region26: #{up_convolution_block_forward.2} parent=23 // pred_check_branch
          %161 = sbr.rel (%p159) target = $region28
        $region27: #{up_convolution_block_forward.2} parent=23 // pred_region
          %s162 = sand.u32 %s37, 1
          %s163 = scalar_lea.sflag [#allocation3], %s162
          %s164 = sand.u32 %s37, 1
          %s165 = smul.addr %s164, 16
          %s166 = scalar_lea.vmem [#allocation2], %s165
          %168 = vsyncadd %s163, 0
          %s169 = smul.addr %s21, 2
          %s170 = smul.addr %s20, 16
          %s171 = sadd.s32 %s169, %s170
          %s172 = smul.addr %s171, 8
          %s173 = scalar_lea.hbm %s0, %s172
          %s174 = sshll.u32 %s173, 4
          %s175 = int_to_ptr.hbm [resolvable:$true] %s174
          %s176 = sshll.u32 %s166, 4
          %s177 = int_to_ptr.vmem [resolvable:$true] %s176
          %182 = dma.hbm_to_vmem [thread:$0]  %s175, 256, %s177, %s163, 128, 128, 8
        $region28: #{up_convolution_block_forward.2} parent=23 // pred_fallthru
          _
      $region24: #{up_convolution_block_forward.2} parent=5 // pred_fallthru
        _
      %p183 = scmp.le.s32.totalorder 1, %s13
      %p184 = scmp.lt.s32.totalorder %s13, 17
      %p185 = pnand %p183, %p184
      %p186 = pneg %p185
      // Predicated region
      $region29: #{up_convolution_block_forward.2} parent=5 // pred_check
        _
      $region30: #{up_convolution_block_forward.2} parent=5 // pred_check_branch
        %188 = sbr.rel (%p185) target = $region32
      $region31: #{up_convolution_block_forward.2} parent=5 // pred_region
        %s189 = ssub.s32 %s13, 1
        %s190 = sand.u32 %s40, 1
        %s191 = scalar_lea.sflag [#allocation3], %s190
        %s192 = sand.u32 %s40, 1
        %s193 = smul.addr %s192, 16
        %s194 = scalar_lea.vmem [#allocation2], %s193
        // Predicated region
        $region33: #{up_convolution_block_forward.2} parent=31 // pred_check
          %p195 = pneg %p53
        $region34: #{up_convolution_block_forward.2} parent=31 // pred_check_branch
          %197 = sbr.rel (%p195) target = $region36
        $region35: #{up_convolution_block_forward.2} parent=31 // pred_region
          %199 = dma.done %s191, 256
        $region36: #{up_convolution_block_forward.2} parent=31 // pred_fallthru
          _
        // Predicated region
        $region37: #{up_convolution_block_forward.2} parent=31 // pred_check
          %p200 = pneg %p74
        $region38: #{up_convolution_block_forward.2} parent=31 // pred_check_branch
          %202 = sbr.rel (%p200) target = $region40
        $region39: #{up_convolution_block_forward.2} parent=31 // pred_region
          %204 = dma.done [#allocation5], 512
        $region40: #{up_convolution_block_forward.2} parent=31 // pred_fallthru
          _
        %s205 = sand.u32 %s40, 1
        %s206 = scalar_lea.sflag [#allocation3], %s205
        %s207 = sand.u32 %s40, 1
        %s208 = smul.addr %s207, 16
        %s209 = scalar_lea.vmem [#allocation2], %s208
        %p210 = pneg %p53
        %p211 = pneg %p50
        %p212 = pneg %p74
        %p213 = pneg %p71
        %p214 = pneg %p95
        %p215 = pneg %p92
        %p216 = pneg %p123
        %p217 = pneg %p120
        %p218 = scmp.lt.s32.totalorder %s22, 1
        %s219 = scalar_select %p218, %s22, 1
        %p220 = scmp.lt.s32.totalorder %s23, 7
        %s221 = scalar_select %p220, %s23, 7
        %s222 = smul.addr %s221, 4
        %s223 = smul.addr %s219, 32
        %s224 = sadd.s32 %s222, %s223
        %s225 = smul.addr %s224, 8
        %s226 = scalar_lea.vmem %s3, %s225
        %p227 = scmp.lt.s32.totalorder %s22, 1
        %s228 = scalar_select %p227, %s22, 1
        %p229 = scmp.lt.s32.totalorder %s23, 7
        %s230 = scalar_select %p229, %s23, 7
        %s231 = smul.addr %s230, 4
        %s232 = smul.addr %s228, 32
        %s233 = sadd.s32 %s231, %s232
        %s234 = smul.addr %s233, 8
        %s235 = scalar_lea.vmem %s3, %s234
        %v236 = vld [vmem:[%s194] sm:$0xff]
        %v237 = vld [vmem:[%s194 + $0x8] sm:$0xff]
        %v238 = vld [vmem:[#allocation4] sm:$0xff]
        %v239 = vld [vmem:[#allocation4 + $0x8] sm:$0xff]
        %v240 = vld [vmem:[#allocation4 + $0x10] sm:$0xff]
        %v241 = vld [vmem:[#allocation4 + $0x18] sm:$0xff]
        %vm242 = vcmask 130048
        %v244 = vsel %vm242, %v238, 0
        %v247 = vsel %vm242, %v239, 0
        %v250 = vsel %vm242, %v240, 0
        %v253 = vsel %vm242, %v241, 0
        %255 = vmatpush.msra.mxu0 0.0
        %256 = vmatpush.msra.mxu0 0.0
        %257 = vmatpush.msra.mxu0 0.0
        %258 = vmatpush.msra.mxu0 0.0
        %259 = vmatpush.msra.mxu0 0.0
        %260 = vmatpush.msra.mxu0 0.0
        %261 = vmatpush.msra.mxu0 0.0
        %262 = vmatpush.msra.mxu0 0.0
        %263 = vmatpush.msra.mxu0 0.0
        %264 = vmatpush.msra.mxu0 0.0
        %265 = vmatpush.msra.mxu0 0.0
        %266 = vmatpush.msra.mxu0 0.0
        %267 = vmatpush.msra.mxu0 0.0
        %268 = vmatpush.msra.mxu0 0.0
        %269 = vmatpush.msra.mxu0 %v237
        %270 = vmatpush.msra.mxu0 %v236
        %271 = vmatmul.f32.gmra.mxu0 %v244
        %v272 = vpop.f32.mrf.mxu0
        %v273 = vadd.f32 0.0, %v272
        %274 = vmatmul.f32.gmra.mxu0 %v247
        %v275 = vpop.f32.mrf.mxu0
        %v276 = vadd.f32 0.0, %v275
        %277 = vmatmul.f32.gmra.mxu0 %v250
        %v278 = vpop.f32.mrf.mxu0
        %v279 = vadd.f32 0.0, %v278
        %280 = vmatmul.f32.gmra.mxu0 %v253
        %v281 = vpop.f32.mrf.mxu0
        %v282 = vadd.f32 0.0, %v281
        %283 = vdwg.mxu0
        %v284 = vld [vmem:[%s2] sm:$0xff]
        %v285 = vld [vmem:[%s2 + $0x8] sm:$0xff]
        %v287 = vsel %vm242, %v273, 0
        %v290 = vsel %vm242, %v276, 0
        %v293 = vsel %vm242, %v279, 0
        %v296 = vsel %vm242, %v282, 0
        %298 = vmatpush.msra.mxu0 0.0
        %299 = vmatpush.msra.mxu0 0.0
        %300 = vmatpush.msra.mxu0 0.0
        %301 = vmatpush.msra.mxu0 0.0
        %302 = vmatpush.msra.mxu0 0.0
        %303 = vmatpush.msra.mxu0 0.0
        %304 = vmatpush.msra.mxu0 0.0
        %305 = vmatpush.msra.mxu0 0.0
        %306 = vmatpush.msra.mxu0 0.0
        %307 = vmatpush.msra.mxu0 0.0
        %308 = vmatpush.msra.mxu0 0.0
        %309 = vmatpush.msra.mxu0 0.0
        %310 = vmatpush.msra.mxu0 0.0
        %311 = vmatpush.msra.mxu0 0.0
        %312 = vmatpush.msra.mxu0 %v285
        %313 = vmatpush.msra.mxu0 %v284
        %314 = vmatmul.f32.gmra.mxu0 %v287
        %v315 = vpop.f32.mrf.mxu0
        %v316 = vadd.f32 0.0, %v315
        %317 = vmatmul.f32.gmra.mxu0 %v290
        %v318 = vpop.f32.mrf.mxu0
        %v319 = vadd.f32 0.0, %v318
        %320 = vmatmul.f32.gmra.mxu0 %v293
        %v321 = vpop.f32.mrf.mxu0
        %v322 = vadd.f32 0.0, %v321
        %323 = vmatmul.f32.gmra.mxu0 %v296
        %v324 = vpop.f32.mrf.mxu0
        %v325 = vadd.f32 0.0, %v324
        %326 = vdwg.mxu0
        %vm327 = vcmask 261120
        %328 = vst.msk [vmem:[%s235] sm:$0xff] %vm327, %v316
        %329 = vst.msk [vmem:[%s235 + $0x8] sm:$0xff] %vm327, %v319
        %330 = vst.msk [vmem:[%s235 + $0x10] sm:$0xff] %vm327, %v322
        %331 = vst.msk [vmem:[%s235 + $0x18] sm:$0xff] %vm327, %v325
        %p332 = scmp.lt.s32.totalorder %s22, 1
        %s333 = scalar_select %p332, %s22, 1
        %p334 = scmp.lt.s32.totalorder %s23, 7
        %s335 = scalar_select %p334, %s23, 7
        %s336 = smul.addr %s335, 4
        %s337 = smul.addr %s333, 32
        %s338 = sadd.s32 %s336, %s337
        %s339 = smul.addr %s338, 8
        %s340 = scalar_lea.vmem %s3, %s339
        // Predicated region
        $region41: #{up_convolution_block_forward.2} parent=31 // pred_check
          %p341 = pneg %p120
        $region42: #{up_convolution_block_forward.2} parent=31 // pred_check_branch
          %343 = sbr.rel (%p341) target = $region44
        $region43: #{up_convolution_block_forward.2} parent=31 // pred_region
          _
        $region44: #{up_convolution_block_forward.2} parent=31 // pred_fallthru
          _
      $region32: #{up_convolution_block_forward.2} parent=5 // pred_fallthru
        _
      %p344 = scmp.le.s32.totalorder 2, %s13
      // Predicated region
      $region45: #{up_convolution_block_forward.2} parent=5 // pred_check
        %p345 = pneg %p344
      $region46: #{up_convolution_block_forward.2} parent=5 // pred_check_branch
        %347 = sbr.rel (%p345) target = $region48
      $region47: #{up_convolution_block_forward.2} parent=5 // pred_region
        %s348 = ssub.s32 %s13, 2
        // Predicated region
        $region49: #{up_convolution_block_forward.2} parent=47 // pred_check
          %p349 = pneg %p126
        $region50: #{up_convolution_block_forward.2} parent=47 // pred_check_branch
          %351 = sbr.rel (%p349) target = $region52
        $region51: #{up_convolution_block_forward.2} parent=47 // pred_region
          %p352 = scmp.lt.s32.totalorder %s24, 1
          %s353 = scalar_select %p352, %s24, 1
          %p354 = scmp.lt.s32.totalorder %s25, 7
          %s355 = scalar_select %p354, %s25, 7
          %s356 = smul.addr %s355, 4
          %s357 = smul.addr %s353, 32
          %s358 = sadd.s32 %s356, %s357
          %s359 = smul.addr %s358, 8
          %s360 = scalar_lea.vmem %s3, %s359
        $region52: #{up_convolution_block_forward.2} parent=47 // pred_fallthru
          _
      $region48: #{up_convolution_block_forward.2} parent=5 // pred_fallthru
        _
    $region6: #{up_convolution_block_forward.2} parent=1 // loop_footer
      %s17 = sadd.s32 1, %s13
    $region7: #{up_convolution_block_forward.2} parent=1 // loop_footer_branch
      %12 = sbr.rel target = $region3
    $region8: #{up_convolution_block_forward.2} parent=1 // loop_exit
      _
    %361 = vsyncpa [#allocation3], 1
    %s362 = scalar_lea.sflag [#allocation3], 1
    %363 = vsyncpa %s362, 1
    %364 = vsyncpa [#allocation5], 1

// kernel: up_convolution_block_forward.3
$region0: #{up_convolution_block_forward.3}
  #allocation0 [shape = 'u32[]', space=smem, size = 0x4, offset = 0x4, fixed_abs, tag = 'smem constant byte address 0x4 - core index']
  #allocation1 [shape = 'u32[72,128]{1,0:T(1,128)}', space=vmem, size = 0x9000, scoped, tag = 'internal scratch']
  #allocation2 [shape = 'f32[16,1158]{1,0:T(8,128)}', space=vmem, size = 0x14000, scoped, tag = 'scratch operand']
  %s0 = inlined_call_operand.vmem [shape: bf16[2,8,1088], index: 0, kind: input, shape index: {}]
  %s1 = inlined_call_operand.vmem [shape: f32[2,8,1088], index: 1, kind: input, shape index: {}]
  %s2 = inlined_call_operand.vmem [shape: bf16[8,8], index: 2, kind: input, shape index: {}]
  %s3 = inlined_call_operand.vmem [shape: bf16[9,8,16], index: 3, kind: input, shape index: {}]
  %s4 = inlined_call_operand.vmem [shape: bf16[9,8,8], index: 4, kind: input, shape index: {}]
  %s5 = inlined_call_operand.vmem [shape: bf16[9,8,8], index: 5, kind: input, shape index: {}]
  %s6 = inlined_call_operand.vmem [shape: f32[4,3,8,1], index: 6, kind: input, shape index: {}]
  %s7 = inlined_call_operand.vmem [shape: f32[8,8], index: 7, kind: input, shape index: {}]
  %s8 = inlined_call_operand.vmem [shape: f32[1,1088], index: 8, kind: input, shape index: {}]
  %s9 = inlined_call_operand.vmem [shape: f32[2,8,1088], index: 9, kind: output, shape index: {}]
  %s10 = sld [smem:[#allocation0]]
  $region69: #{up_convolution_block_forward.3} parent=0
    _
  %s12 = ssub.s32 1, %s10
  %s13 = scalar_select 0, %s12, %s10
  loop: start=0, step=1, limit=4
  $region2: #{up_convolution_block_forward.3} parent=0 // loop_pre_header
    _
  $region3: #{up_convolution_block_forward.3} parent=0 // loop_header
    %s15 = sphi 0, %s19
    %p16 = scmp.ge.s32.totalorder %s15, 4
    %s25 = sphi 0, %s27
    %s28 = sphi 0, %s25
    %s29 = sphi 0, %s28
    %s45 = sphi 0, %s29
    %s51 = sphi 0, %s53
    %s54 = sphi 0, %s51
    %s55 = sphi 0, %s54
    %s71 = sphi 0, %s55
    %s75 = sphi 0, %s75
    %s77 = sphi 0, %s75
    %s78 = sphi 0, %s77
    %s92 = sphi 0, %s78
    %s96 = sphi 0, %s96
    %s98 = sphi 0, %s96
    %s99 = sphi 0, %s98
    %s113 = sphi 0, %s99
    %s117 = sphi 0, %s117
    %s119 = sphi 0, %s117
    %s120 = sphi 0, %s119
    %s134 = sphi 0, %s120
    %s138 = sphi 0, %s138
    %s140 = sphi 0, %s138
    %s141 = sphi 0, %s140
    %s155 = sphi 0, %s141
    %s159 = sphi 0, %s159
    %s161 = sphi 0, %s159
    %s162 = sphi 0, %s161
    %s176 = sphi 0, %s162
    %s180 = sphi 0, %s180
    %s182 = sphi 0, %s180
    %s183 = sphi 0, %s182
    %s197 = sphi 0, %s183
    %s201 = sphi 0, %s201
    %s203 = sphi 0, %s201
    %s204 = sphi 0, %s203
    %s218 = sphi 0, %s204
    %s224 = sphi 0, %s226
    %s227 = sphi 0, %s224
    %s228 = sphi 0, %s227
    %s244 = sphi 0, %s228
  $region4: #{up_convolution_block_forward.3} parent=0 // loop_header_branch
    %18 = sbr.rel (%p16) target = $region8
  $region5: #{up_convolution_block_forward.3} parent=0 // loop_body
    %s20 = ssub.s32 %s15, 1
    %s21 = ssub.s32 %s15, 2
    %s22 = sadd.s32 %s15, 1
    %s23 = ssub.s32 %s15, %s22
    %p24 = scmp.eq.s32.totalorder %s23, 0
    %s26 = sadd.s32 %s25, 1
    %s27 = scalar_select %p24, %s25, %s26
    %p30 = pneg %p24
    %p31 = scmp.eq.s32.totalorder %s15, 1
    %p32 = por %p30, %p31
    %p33 = scmp.ne.s32.totalorder %s25, %s28
    %p34 = scmp.eq.s32.totalorder %s15, 0
    %p35 = por %p33, %p34
    %p36 = scmp.ne.s32.totalorder %s25, %s28
    %p37 = scmp.eq.s32.totalorder %s20, 1
    %p38 = por %p36, %p37
    %p39 = scmp.ne.s32.totalorder %s28, %s29
    %p40 = scmp.eq.s32.totalorder %s20, 0
    %p41 = por %p39, %p40
    %p42 = scmp.ne.s32.totalorder %s28, %s29
    %p43 = scmp.eq.s32.totalorder %s21, 1
    %p44 = por %p42, %p43
    %p46 = scmp.ne.s32.totalorder %s29, %s45
    %p47 = scmp.eq.s32.totalorder %s21, 0
    %p48 = por %p46, %p47
    %s49 = ssub.s32 %s15, %s22
    %p50 = scmp.eq.s32.totalorder %s49, 0
    %s52 = sadd.s32 %s51, 1
    %s53 = scalar_select %p50, %s51, %s52
    %p56 = pneg %p50
    %p57 = scmp.eq.s32.totalorder %s15, 1
    %p58 = por %p56, %p57
    %p59 = scmp.ne.s32.totalorder %s51, %s54
    %p60 = scmp.eq.s32.totalorder %s15, 0
    %p61 = por %p59, %p60
    %p62 = scmp.ne.s32.totalorder %s51, %s54
    %p63 = scmp.eq.s32.totalorder %s20, 1
    %p64 = por %p62, %p63
    %p65 = scmp.ne.s32.totalorder %s54, %s55
    %p66 = scmp.eq.s32.totalorder %s20, 0
    %p67 = por %p65, %p66
    %p68 = scmp.ne.s32.totalorder %s54, %s55
    %p69 = scmp.eq.s32.totalorder %s21, 1
    %p70 = por %p68, %p69
    %p72 = scmp.ne.s32.totalorder %s55, %s71
    %p73 = scmp.eq.s32.totalorder %s21, 0
    %p74 = por %p72, %p73
    %s76 = sadd.s32 %s75, 1
    %p79 = scmp.eq.s32.totalorder %s15, 1
    %p80 = scmp.ne.s32.totalorder %s75, %s77
    %p81 = scmp.eq.s32.totalorder %s15, 0
    %p82 = por %p80, %p81
    %p83 = scmp.ne.s32.totalorder %s75, %s77
    %p84 = scmp.eq.s32.totalorder %s20, 1
    %p85 = por %p83, %p84
    %p86 = scmp.ne.s32.totalorder %s77, %s78
    %p87 = scmp.eq.s32.totalorder %s20, 0
    %p88 = por %p86, %p87
    %p89 = scmp.ne.s32.totalorder %s77, %s78
    %p90 = scmp.eq.s32.totalorder %s21, 1
    %p91 = por %p89, %p90
    %p93 = scmp.ne.s32.totalorder %s78, %s92
    %p94 = scmp.eq.s32.totalorder %s21, 0
    %p95 = por %p93, %p94
    %s97 = sadd.s32 %s96, 1
    %p100 = scmp.eq.s32.totalorder %s15, 1
    %p101 = scmp.ne.s32.totalorder %s96, %s98
    %p102 = scmp.eq.s32.totalorder %s15, 0
    %p103 = por %p101, %p102
    %p104 = scmp.ne.s32.totalorder %s96, %s98
    %p105 = scmp.eq.s32.totalorder %s20, 1
    %p106 = por %p104, %p105
    %p107 = scmp.ne.s32.totalorder %s98, %s99
    %p108 = scmp.eq.s32.totalorder %s20, 0
    %p109 = por %p107, %p108
    %p110 = scmp.ne.s32.totalorder %s98, %s99
    %p111 = scmp.eq.s32.totalorder %s21, 1
    %p112 = por %p110, %p111
    %p114 = scmp.ne.s32.totalorder %s99, %s113
    %p115 = scmp.eq.s32.totalorder %s21, 0
    %p116 = por %p114, %p115
    %s118 = sadd.s32 %s117, 1
    %p121 = scmp.eq.s32.totalorder %s15, 1
    %p122 = scmp.ne.s32.totalorder %s117, %s119
    %p123 = scmp.eq.s32.totalorder %s15, 0
    %p124 = por %p122, %p123
    %p125 = scmp.ne.s32.totalorder %s117, %s119
    %p126 = scmp.eq.s32.totalorder %s20, 1
    %p127 = por %p125, %p126
    %p128 = scmp.ne.s32.totalorder %s119, %s120
    %p129 = scmp.eq.s32.totalorder %s20, 0
    %p130 = por %p128, %p129
    %p131 = scmp.ne.s32.totalorder %s119, %s120
    %p132 = scmp.eq.s32.totalorder %s21, 1
    %p133 = por %p131, %p132
    %p135 = scmp.ne.s32.totalorder %s120, %s134
    %p136 = scmp.eq.s32.totalorder %s21, 0
    %p137 = por %p135, %p136
    %s139 = sadd.s32 %s138, 1
    %p142 = scmp.eq.s32.totalorder %s15, 1
    %p143 = scmp.ne.s32.totalorder %s138, %s140
    %p144 = scmp.eq.s32.totalorder %s15, 0
    %p145 = por %p143, %p144
    %p146 = scmp.ne.s32.totalorder %s138, %s140
    %p147 = scmp.eq.s32.totalorder %s20, 1
    %p148 = por %p146, %p147
    %p149 = scmp.ne.s32.totalorder %s140, %s141
    %p150 = scmp.eq.s32.totalorder %s20, 0
    %p151 = por %p149, %p150
    %p152 = scmp.ne.s32.totalorder %s140, %s141
    %p153 = scmp.eq.s32.totalorder %s21, 1
    %p154 = por %p152, %p153
    %p156 = scmp.ne.s32.totalorder %s141, %s155
    %p157 = scmp.eq.s32.totalorder %s21, 0
    %p158 = por %p156, %p157
    %s160 = sadd.s32 %s159, 1
    %p163 = scmp.eq.s32.totalorder %s15, 1
    %p164 = scmp.ne.s32.totalorder %s159, %s161
    %p165 = scmp.eq.s32.totalorder %s15, 0
    %p166 = por %p164, %p165
    %p167 = scmp.ne.s32.totalorder %s159, %s161
    %p168 = scmp.eq.s32.totalorder %s20, 1
    %p169 = por %p167, %p168
    %p170 = scmp.ne.s32.totalorder %s161, %s162
    %p171 = scmp.eq.s32.totalorder %s20, 0
    %p172 = por %p170, %p171
    %p173 = scmp.ne.s32.totalorder %s161, %s162
    %p174 = scmp.eq.s32.totalorder %s21, 1
    %p175 = por %p173, %p174
    %p177 = scmp.ne.s32.totalorder %s162, %s176
    %p178 = scmp.eq.s32.totalorder %s21, 0
    %p179 = por %p177, %p178
    %s181 = sadd.s32 %s180, 1
    %p184 = scmp.eq.s32.totalorder %s15, 1
    %p185 = scmp.ne.s32.totalorder %s180, %s182
    %p186 = scmp.eq.s32.totalorder %s15, 0
    %p187 = por %p185, %p186
    %p188 = scmp.ne.s32.totalorder %s180, %s182
    %p189 = scmp.eq.s32.totalorder %s20, 1
    %p190 = por %p188, %p189
    %p191 = scmp.ne.s32.totalorder %s182, %s183
    %p192 = scmp.eq.s32.totalorder %s20, 0
    %p193 = por %p191, %p192
    %p194 = scmp.ne.s32.totalorder %s182, %s183
    %p195 = scmp.eq.s32.totalorder %s21, 1
    %p196 = por %p194, %p195
    %p198 = scmp.ne.s32.totalorder %s183, %s197
    %p199 = scmp.eq.s32.totalorder %s21, 0
    %p200 = por %p198, %p199
    %s202 = sadd.s32 %s201, 1
    %p205 = scmp.eq.s32.totalorder %s15, 1
    %p206 = scmp.ne.s32.totalorder %s201, %s203
    %p207 = scmp.eq.s32.totalorder %s15, 0
    %p208 = por %p206, %p207
    %p209 = scmp.ne.s32.totalorder %s201, %s203
    %p210 = scmp.eq.s32.totalorder %s20, 1
    %p211 = por %p209, %p210
    %p212 = scmp.ne.s32.totalorder %s203, %s204
    %p213 = scmp.eq.s32.totalorder %s20, 0
    %p214 = por %p212, %p213
    %p215 = scmp.ne.s32.totalorder %s203, %s204
    %p216 = scmp.eq.s32.totalorder %s21, 1
    %p217 = por %p215, %p216
    %p219 = scmp.ne.s32.totalorder %s204, %s218
    %p220 = scmp.eq.s32.totalorder %s21, 0
    %p221 = por %p219, %p220
    %s222 = ssub.s32 %s15, %s22
    %p223 = scmp.eq.s32.totalorder %s222, 0
    %s225 = sadd.s32 %s224, 1
    %s226 = scalar_select %p223, %s224, %s225
    %p229 = pneg %p223
    %p230 = scmp.eq.s32.totalorder %s15, 1
    %p231 = por %p229, %p230
    %p232 = scmp.ne.s32.totalorder %s224, %s227
    %p233 = scmp.eq.s32.totalorder %s15, 0
    %p234 = por %p232, %p233
    %p235 = scmp.ne.s32.totalorder %s224, %s227
    %p236 = scmp.eq.s32.totalorder %s20, 1
    %p237 = por %p235, %p236
    %p238 = scmp.ne.s32.totalorder %s227, %s228
    %p239 = scmp.eq.s32.totalorder %s20, 0
    %p240 = por %p238, %p239
    %p241 = scmp.ne.s32.totalorder %s227, %s228
    %p242 = scmp.eq.s32.totalorder %s21, 1
    %p243 = por %p241, %p242
    %p245 = scmp.ne.s32.totalorder %s228, %s244
    %p246 = scmp.eq.s32.totalorder %s21, 0
    %p247 = por %p245, %p246
    %p248 = scmp.le.s32.totalorder 1, %s15
    %p249 = scmp.lt.s32.totalorder %s15, 3
    %p250 = pnand %p248, %p249
    %p251 = pneg %p250
    // Predicated region
    $region9: #{up_convolution_block_forward.3} parent=5 // pred_check
      _
    $region10: #{up_convolution_block_forward.3} parent=5 // pred_check_branch
      %253 = sbr.rel (%p250) target = $region12
    $region11: #{up_convolution_block_forward.3} parent=5 // pred_region
      %s254 = ssub.s32 %s15, 1
      // Predicated region
      $region13: #{up_convolution_block_forward.3} parent=11 // pred_check
        %p255 = pneg %p88
      $region14: #{up_convolution_block_forward.3} parent=11 // pred_check_branch
        %257 = sbr.rel (%p255) target = $region16
      $region15: #{up_convolution_block_forward.3} parent=11 // pred_region
        _
      $region16: #{up_convolution_block_forward.3} parent=11 // pred_fallthru
        _
      // Predicated region
      $region17: #{up_convolution_block_forward.3} parent=11 // pred_check
        %p258 = pneg %p109
      $region18: #{up_convolution_block_forward.3} parent=11 // pred_check_branch
        %260 = sbr.rel (%p258) target = $region20
      $region19: #{up_convolution_block_forward.3} parent=11 // pred_region
        _
      $region20: #{up_convolution_block_forward.3} parent=11 // pred_fallthru
        _
      // Predicated region
      $region21: #{up_convolution_block_forward.3} parent=11 // pred_check
        %p261 = pneg %p130
      $region22: #{up_convolution_block_forward.3} parent=11 // pred_check_branch
        %263 = sbr.rel (%p261) target = $region24
      $region23: #{up_convolution_block_forward.3} parent=11 // pred_region
        _
      $region24: #{up_convolution_block_forward.3} parent=11 // pred_fallthru
        _
      // Predicated region
      $region25: #{up_convolution_block_forward.3} parent=11 // pred_check
        %p264 = pneg %p151
      $region26: #{up_convolution_block_forward.3} parent=11 // pred_check_branch
        %266 = sbr.rel (%p264) target = $region28
      $region27: #{up_convolution_block_forward.3} parent=11 // pred_region
        _
      $region28: #{up_convolution_block_forward.3} parent=11 // pred_fallthru
        _
      // Predicated region
      $region29: #{up_convolution_block_forward.3} parent=11 // pred_check
        %p267 = pneg %p172
      $region30: #{up_convolution_block_forward.3} parent=11 // pred_check_branch
        %269 = sbr.rel (%p267) target = $region32
      $region31: #{up_convolution_block_forward.3} parent=11 // pred_region
        _
      $region32: #{up_convolution_block_forward.3} parent=11 // pred_fallthru
        _
      // Predicated region
      $region33: #{up_convolution_block_forward.3} parent=11 // pred_check
        %p270 = pneg %p193
      $region34: #{up_convolution_block_forward.3} parent=11 // pred_check_branch
        %272 = sbr.rel (%p270) target = $region36
      $region35: #{up_convolution_block_forward.3} parent=11 // pred_region
        _
      $region36: #{up_convolution_block_forward.3} parent=11 // pred_fallthru
        _
      // Predicated region
      $region37: #{up_convolution_block_forward.3} parent=11 // pred_check
        %p273 = pneg %p214
      $region38: #{up_convolution_block_forward.3} parent=11 // pred_check_branch
        %275 = sbr.rel (%p273) target = $region40
      $region39: #{up_convolution_block_forward.3} parent=11 // pred_region
        _
      $region40: #{up_convolution_block_forward.3} parent=11 // pred_fallthru
        _
    $region12: #{up_convolution_block_forward.3} parent=5 // pred_fallthru
      _
    %p276 = scmp.lt.s32.totalorder %s15, 2
    // Predicated region
    $region41: #{up_convolution_block_forward.3} parent=5 // pred_check
      %p277 = pneg %p276
    $region42: #{up_convolution_block_forward.3} parent=5 // pred_check_branch
      %279 = sbr.rel (%p277) target = $region44
    $region43: #{up_convolution_block_forward.3} parent=5 // pred_region
      // Predicated region
      $region45: #{up_convolution_block_forward.3} parent=43 // pred_check
        %p280 = pneg %p35
      $region46: #{up_convolution_block_forward.3} parent=43 // pred_check_branch
        %282 = sbr.rel (%p280) target = $region48
      $region47: #{up_convolution_block_forward.3} parent=43 // pred_region
        %p283 = scmp.lt.s32.totalorder %s15, 1
        %s284 = scalar_select %p283, %s15, 1
        %s285 = smul.addr %s284, 9
        %s286 = smul.addr %s285, 4
        %s287 = scalar_lea.vmem %s0, %s286
      $region48: #{up_convolution_block_forward.3} parent=43 // pred_fallthru
        _
      // Predicated region
      $region49: #{up_convolution_block_forward.3} parent=43 // pred_check
        %p288 = pneg %p61
      $region50: #{up_convolution_block_forward.3} parent=43 // pred_check_branch
        %290 = sbr.rel (%p288) target = $region52
      $region51: #{up_convolution_block_forward.3} parent=43 // pred_region
        %p291 = scmp.lt.s32.totalorder %s15, 1
        %s292 = scalar_select %p291, %s15, 1
        %s293 = smul.addr %s292, 9
        %s294 = smul.addr %s293, 8
        %s295 = scalar_lea.vmem %s1, %s294
      $region52: #{up_convolution_block_forward.3} parent=43 // pred_fallthru
        _
    $region44: #{up_convolution_block_forward.3} parent=5 // pred_fallthru
      _
    %p296 = scmp.le.s32.totalorder 1, %s15
    %p297 = scmp.lt.s32.totalorder %s15, 3
    %p298 = pnand %p296, %p297
    %p299 = pneg %p298
    // Predicated region
    $region53: #{up_convolution_block_forward.3} parent=5 // pred_check
      _
    $region54: #{up_convolution_block_forward.3} parent=5 // pred_check_branch
      %301 = sbr.rel (%p298) target = $region56
    $region55: #{up_convolution_block_forward.3} parent=5 // pred_region
      %s302 = ssub.s32 %s15, 1
      %p303 = scmp.lt.s32.totalorder %s20, 1
      %s304 = scalar_select %p303, %s20, 1
      %s305 = smul.addr %s304, 9
      %s306 = smul.addr %s305, 4
      %s307 = scalar_lea.vmem %s0, %s306
      %p308 = pneg %p41
      %p309 = pneg %p38
      %p310 = scmp.lt.s32.totalorder %s20, 1
      %s311 = scalar_select %p310, %s20, 1
      %s312 = smul.addr %s311, 9
      %s313 = smul.addr %s312, 8
      %s314 = scalar_lea.vmem %s1, %s313
      %p315 = pneg %p67
      %p316 = pneg %p64
      %p317 = pneg %p88
      %p318 = pneg %p85
      %p319 = pneg %p109
      %p320 = pneg %p106
      %p321 = pneg %p130
      %p322 = pneg %p127
      %p323 = pneg %p151
      %p324 = pneg %p148
      %p325 = pneg %p172
      %p326 = pneg %p169
      %p327 = pneg %p193
      %p328 = pneg %p190
      %p329 = pneg %p214
      %p330 = pneg %p211
      %p331 = pneg %p240
      %p332 = pneg %p237
      %p333 = scmp.lt.s32.totalorder %s20, 1
      %s334 = scalar_select %p333, %s20, 1
      %s335 = smul.addr %s334, 9
      %s336 = smul.addr %s335, 8
      %s337 = scalar_lea.vmem %s9, %s336
      %p338 = scmp.lt.s32.totalorder %s20, 1
      %s339 = scalar_select %p338, %s20, 1
      %s340 = smul.addr %s339, 9
      %s341 = smul.addr %s340, 4
      %s342 = scalar_lea.vmem %s0, %s341
      %p343 = scmp.lt.s32.totalorder %s20, 1
      %s344 = scalar_select %p343, %s20, 1
      %s345 = smul.addr %s344, 9
      %s346 = smul.addr %s345, 8
      %s347 = scalar_lea.vmem %s1, %s346
      %p348 = scmp.lt.s32.totalorder %s20, 1
      %s349 = scalar_select %p348, %s20, 1
      %s350 = smul.addr %s349, 9
      %s351 = smul.addr %s350, 8
      %s352 = scalar_lea.vmem %s9, %s351
      %v354 = vld [vmem:[%s7] sm:$0xff]
      %v355 = vld [vmem:[%s8] sm:$0xff]
      %v356 = vld [vmem:[%s8 + $0x8] sm:$0x1]
      %357 = vst [vmem:[#allocation2] sm:$0xff] 0.0
      %358 = vst [vmem:[#allocation2 + $0x8] sm:$0xff] 0.0
      %359 = vst [vmem:[#allocation2 + $0x10] sm:$0xff] 0.0
      %360 = vst [vmem:[#allocation2 + $0x18] sm:$0xff] 0.0
      %361 = vst [vmem:[#allocation2 + $0x20] sm:$0xff] 0.0
      %362 = vst [vmem:[#allocation2 + $0x28] sm:$0xff] 0.0
      %363 = vst [vmem:[#allocation2 + $0x30] sm:$0xff] 0.0
      %364 = vst [vmem:[#allocation2 + $0x38] sm:$0xff] 0.0
      %365 = vst [vmem:[#allocation2 + $0x40] sm:$0xff] 0.0
      %vm366 = vcmask 48128
      %367 = vst.msk [vmem:[#allocation2 + $0x48] sm:$0xff] %vm366, 0.0
      %368 = vst [vmem:[#allocation2 + $0x50] sm:$0xff] 0.0
      %369 = vst [vmem:[#allocation2 + $0x58] sm:$0xff] 0.0
      %370 = vst [vmem:[#allocation2 + $0x60] sm:$0xff] 0.0
      %371 = vst [vmem:[#allocation2 + $0x68] sm:$0xff] 0.0
      %372 = vst [vmem:[#allocation2 + $0x70] sm:$0xff] 0.0
      %373 = vst [vmem:[#allocation2 + $0x78] sm:$0xff] 0.0
      %374 = vst [vmem:[#allocation2 + $0x80] sm:$0xff] 0.0
      %375 = vst [vmem:[#allocation2 + $0x88] sm:$0xff] 0.0
      %376 = vst [vmem:[#allocation2 + $0x90] sm:$0xff] 0.0
      %377 = vst.msk [vmem:[#allocation2 + $0x98] sm:$0xff] %vm366, 0.0
      %v378 = vld [vmem:[%s2] sm:$0xf]
      %v379 = vld [vmem:[%s342] sm:$0xff]
      %v380 = vld [vmem:[%s342 + $0x8] sm:$0xff]
      %v381 = vld [vmem:[%s342 + $0x10] sm:$0xff]
      %v382 = vld [vmem:[%s342 + $0x18] sm:$0xff]
      %v383 = vld [vmem:[%s342 + $0x20] sm:$0xf]
      %v384 = vld [vmem:[%s6] sm:$0xff]
      %s385 = scalar_lea.vmem %s6, 8
      %v386 = vld [vmem:[%s385] sm:$0xff]
      %s387 = scalar_lea.vmem %s6, 16
      %v388 = vld [vmem:[%s387] sm:$0xff]
      %390 = vset.pattern.permute.xlu0 0
      %391 = vperm.xlu0 %390, %v384
      %v392 = vpop.permute.xlu0 %391
      %v399 = vunpack.c.l.b16 %v379
      %v400 = vunpack.c.h.b16 %v379
      %v401 = vunpack.c.l.b16 %v380
      %v402 = vunpack.c.h.b16 %v380
      %v403 = vunpack.c.l.b16 %v381
      %v404 = vunpack.c.h.b16 %v381
      %v405 = vunpack.c.l.b16 %v382
      %v406 = vunpack.c.h.b16 %v382
      %v407 = vunpack.c.l.b16 %v383
      %v408 = vpack.c.b16 %v399, %v399
      %v409 = vpack.c.b16 %v400, %v400
      %v410 = vpack.c.b16 %v401, %v401
      %v411 = vpack.c.b16 %v402, %v402
      %v412 = vpack.c.b16 %v403, %v403
      %v413 = vpack.c.b16 %v404, %v404
      %v414 = vpack.c.b16 %v405, %v405
      %v415 = vpack.c.b16 %v406, %v406
      %v416 = vpack.c.b16 %v407, %v407
      %vm417 = vcmask 64512
      %v419 = vsel %vm417, %v378, 0
      %vm421 = vcmask 1043456
      %v423 = vsel %vm421, %v408, 0
      %v426 = vsel %vm421, %v409, 0
      %v429 = vsel %vm421, %v410, 0
      %v432 = vsel %vm421, %v411, 0
      %v435 = vsel %vm421, %v412, 0
      %v438 = vsel %vm421, %v413, 0
      %v441 = vsel %vm421, %v414, 0
      %v444 = vsel %vm421, %v415, 0
      %v447 = vsel %vm421, %v416, 0
      %449 = vmatpush.bf16.msra.mxu0 0
      %450 = vmatpush.bf16.msra.mxu0 0
      %451 = vmatpush.bf16.msra.mxu0 0
      %452 = vmatpush.bf16.msra.mxu0 0
      %453 = vmatpush.bf16.msra.mxu0 0
      %454 = vmatpush.bf16.msra.mxu0 0
      %455 = vmatpush.bf16.msra.mxu0 0
      %456 = vmatpush.bf16.msra.mxu0 %v423
      %457 = vmatmul.bf16.gmra.mxu0 %v419
      %v458 = vpop.f32.mrf.mxu0
      %v459 = vadd.f32 %v392, %v458
      %v460 = vpop.f32.mrf.mxu0
      %461 = vdwg.mxu0
      %462 = vmatpush.bf16.msra.mxu0 0
      %463 = vmatpush.bf16.msra.mxu0 0
      %464 = vmatpush.bf16.msra.mxu0 0
      %465 = vmatpush.bf16.msra.mxu0 0
      %466 = vmatpush.bf16.msra.mxu0 0
      %467 = vmatpush.bf16.msra.mxu0 0
      %468 = vmatpush.bf16.msra.mxu0 0
      %469 = vmatpush.bf16.msra.mxu0 %v426
      %470 = vmatmul.bf16.gmra.mxu0 %v419
      %v471 = vpop.f32.mrf.mxu0
      %v472 = vadd.f32 %v392, %v471
      %v473 = vpop.f32.mrf.mxu0
      %474 = vdwg.mxu0
      %475 = vmatpush.bf16.msra.mxu0 0
      %476 = vmatpush.bf16.msra.mxu0 0
      %477 = vmatpush.bf16.msra.mxu0 0
      %478 = vmatpush.bf16.msra.mxu0 0
      %479 = vmatpush.bf16.msra.mxu0 0
      %480 = vmatpush.bf16.msra.mxu0 0
      %481 = vmatpush.bf16.msra.mxu0 0
      %482 = vmatpush.bf16.msra.mxu0 %v429
      %483 = vmatmul.bf16.gmra.mxu0 %v419
      %v484 = vpop.f32.mrf.mxu0
      %v485 = vadd.f32 %v392, %v484
      %v486 = vpop.f32.mrf.mxu0
      %487 = vdwg.mxu0
      %488 = vmatpush.bf16.msra.mxu0 0
      %489 = vmatpush.bf16.msra.mxu0 0
      %490 = vmatpush.bf16.msra.mxu0 0
      %491 = vmatpush.bf16.msra.mxu0 0
      %492 = vmatpush.bf16.msra.mxu0 0
      %493 = vmatpush.bf16.msra.mxu0 0
      %494 = vmatpush.bf16.msra.mxu0 0
      %495 = vmatpush.bf16.msra.mxu0 %v432
      %496 = vmatmul.bf16.gmra.mxu0 %v419
      %v497 = vpop.f32.mrf.mxu0
      %v498 = vadd.f32 %v392, %v497
      %v499 = vpop.f32.mrf.mxu0
      %500 = vdwg.mxu0
      %501 = vmatpush.bf16.msra.mxu0 0
      %502 = vmatpush.bf16.msra.mxu0 0
      %503 = vmatpush.bf16.msra.mxu0 0
      %504 = vmatpush.bf16.msra.mxu0 0
      %505 = vmatpush.bf16.msra.mxu0 0
      %506 = vmatpush.bf16.msra.mxu0 0
      %507 = vmatpush.bf16.msra.mxu0 0
      %508 = vmatpush.bf16.msra.mxu0 %v435
      %509 = vmatmul.bf16.gmra.mxu0 %v419
      %v510 = vpop.f32.mrf.mxu0
      %v511 = vadd.f32 %v392, %v510
      %v512 = vpop.f32.mrf.mxu0
      %513 = vdwg.mxu0
      %514 = vmatpush.bf16.msra.mxu0 0
      %515 = vmatpush.bf16.msra.mxu0 0
      %516 = vmatpush.bf16.msra.mxu0 0
      %517 = vmatpush.bf16.msra.mxu0 0
      %518 = vmatpush.bf16.msra.mxu0 0
      %519 = vmatpush.bf16.msra.mxu0 0
      %520 = vmatpush.bf16.msra.mxu0 0
      %521 = vmatpush.bf16.msra.mxu0 %v438
      %522 = vmatmul.bf16.gmra.mxu0 %v419
      %v523 = vpop.f32.mrf.mxu0
      %v524 = vadd.f32 %v392, %v523
      %v525 = vpop.f32.mrf.mxu0
      %526 = vdwg.mxu0
      %527 = vmatpush.bf16.msra.mxu0 0
      %528 = vmatpush.bf16.msra.mxu0 0
      %529 = vmatpush.bf16.msra.mxu0 0
      %530 = vmatpush.bf16.msra.mxu0 0
      %531 = vmatpush.bf16.msra.mxu0 0
      %532 = vmatpush.bf16.msra.mxu0 0
      %533 = vmatpush.bf16.msra.mxu0 0
      %534 = vmatpush.bf16.msra.mxu0 %v441
      %535 = vmatmul.bf16.gmra.mxu0 %v419
      %v536 = vpop.f32.mrf.mxu0
      %v537 = vadd.f32 %v392, %v536
      %v538 = vpop.f32.mrf.mxu0
      %539 = vdwg.mxu0
      %540 = vmatpush.bf16.msra.mxu0 0
      %541 = vmatpush.bf16.msra.mxu0 0
      %542 = vmatpush.bf16.msra.mxu0 0
      %543 = vmatpush.bf16.msra.mxu0 0
      %544 = vmatpush.bf16.msra.mxu0 0
      %545 = vmatpush.bf16.msra.mxu0 0
      %546 = vmatpush.bf16.msra.mxu0 0
      %547 = vmatpush.bf16.msra.mxu0 %v444
      %548 = vmatmul.bf16.gmra.mxu0 %v419
      %v549 = vpop.f32.mrf.mxu0
      %v550 = vadd.f32 %v392, %v549
      %v551 = vpop.f32.mrf.mxu0
      %552 = vdwg.mxu0
      %553 = vmatpush.bf16.msra.mxu0 0
      %554 = vmatpush.bf16.msra.mxu0 0
      %555 = vmatpush.bf16.msra.mxu0 0
      %556 = vmatpush.bf16.msra.mxu0 0
      %557 = vmatpush.bf16.msra.mxu0 0
      %558 = vmatpush.bf16.msra.mxu0 0
      %559 = vmatpush.bf16.msra.mxu0 0
      %560 = vmatpush.bf16.msra.mxu0 %v447
      %561 = vmatmul.bf16.gmra.mxu0 %v419
      %v562 = vpop.f32.mrf.mxu0
      %v563 = vadd.f32 %v392, %v562
      %v564 = vpop.f32.mrf.mxu0
      %565 = vdwg.mxu0
      %v568 = vperm.slane %v355, 0
      %v569 = vperm.slane %v355, 1
      %v570 = vperm.slane %v355, 2
      %v571 = vperm.slane %v355, 3
      %v572 = vperm.slane %v355, 4
      %v573 = vperm.slane %v355, 5
      %v574 = vperm.slane %v355, 6
      %v575 = vperm.slane %v355, 7
      %v576 = vperm.slane %v356, 0
      %v586 = vmul.f32 %v459, %v568
      %v587 = vmul.f32 %v472, %v569
      %v588 = vmul.f32 %v485, %v570
      %v589 = vmul.f32 %v498, %v571
      %v590 = vmul.f32 %v511, %v572
      %v591 = vmul.f32 %v524, %v573
      %v592 = vmul.f32 %v537, %v574
      %v593 = vmul.f32 %v550, %v575
      %v594 = vmul.f32 %v563, %v576
      %v595 = vadd.f32 %v586, %v587
      %v596 = vadd.f32 %v595, %v588
      %v597 = vadd.f32 %v596, %v589
      %v598 = vadd.f32 %v597, %v590
      %v599 = vadd.f32 %v598, %v591
      %v600 = vadd.f32 %v599, %v592
      %v601 = vadd.f32 %v600, %v593
      %vm602 = vcmask 523264
      %v603 = vsel %vm602, %v594, 0.0
      %v604 = vadd.f32 %v601, %v603
      %605 = vadd.xlane.f32.xlu0 %v604
      %v606 = vpop.xlane.xlu0 %605
      %v608 = vsel %vm417, %v354, 0
      %610 = vmatpush.msra.mxu0 0.0
      %611 = vmatpush.msra.mxu0 0.0
      %612 = vmatpush.msra.mxu0 0.0
      %613 = vmatpush.msra.mxu0 0.0
      %614 = vmatpush.msra.mxu0 0.0
      %615 = vmatpush.msra.mxu0 0.0
      %616 = vmatpush.msra.mxu0 0.0
      %617 = vmatpush.msra.mxu0 0.0
      %618 = vmatpush.msra.mxu0 0.0
      %619 = vmatpush.msra.mxu0 0.0
      %620 = vmatpush.msra.mxu0 0.0
      %621 = vmatpush.msra.mxu0 0.0
      %622 = vmatpush.msra.mxu0 0.0
      %623 = vmatpush.msra.mxu0 0.0
      %624 = vmatpush.msra.mxu0 0.0
      %625 = vmatpush.msra.mxu0 %v606
      %626 = vmatmul.f32.gmra.mxu0 %v608
      %v627 = vpop.f32.mrf.mxu0
      %v628 = vadd.f32 0.0, %v627
      %629 = vdwg.mxu0
      %v630 = vmul.f32 %v628, 0.00024414063
      %632 = vset.pattern.permute.xlu0 0
      %633 = vperm.xlu0 %632, %v630
      %v634 = vpop.permute.xlu0 %633
      %v636 = vsub.f32 %v459, %v634
      %v637 = vsub.f32 %v472, %v634
      %v638 = vsub.f32 %v485, %v634
      %v639 = vsub.f32 %v498, %v634
      %v640 = vsub.f32 %v511, %v634
      %v641 = vsub.f32 %v524, %v634
      %v642 = vsub.f32 %v537, %v634
      %v643 = vsub.f32 %v550, %v634
      %v644 = vsub.f32 %v563, %v634
      %v645 = vmul.f32 %v636, %v568
      %v646 = vmul.f32 %v637, %v569
      %v647 = vmul.f32 %v638, %v570
      %v648 = vmul.f32 %v639, %v571
      %v649 = vmul.f32 %v640, %v572
      %v650 = vmul.f32 %v641, %v573
      %v651 = vmul.f32 %v642, %v574
      %v652 = vmul.f32 %v643, %v575
      %v653 = vmul.f32 %v644, %v576
      %v654 = vmul.f32 %v645, %v645
      %v655 = vmul.f32 %v646, %v646
      %v656 = vmul.f32 %v647, %v647
      %v657 = vmul.f32 %v648, %v648
      %v658 = vmul.f32 %v649, %v649
      %v659 = vmul.f32 %v650, %v650
      %v660 = vmul.f32 %v651, %v651
      %v661 = vmul.f32 %v652, %v652
      %v662 = vmul.f32 %v653, %v653
      %v663 = vadd.f32 %v654, %v655
      %v664 = vadd.f32 %v663, %v656
      %v665 = vadd.f32 %v664, %v657
      %v666 = vadd.f32 %v665, %v658
      %v667 = vadd.f32 %v666, %v659
      %v668 = vadd.f32 %v667, %v660
      %v669 = vadd.f32 %v668, %v661
      %v670 = vsel %vm602, %v662, 0.0
      %v671 = vadd.f32 %v669, %v670
      %672 = vadd.xlane.f32.xlu0 %v671
      %v673 = vpop.xlane.xlu0 %672
      %674 = vmatpush.msra.mxu0 0.0
      %675 = vmatpush.msra.mxu0 0.0
      %676 = vmatpush.msra.mxu0 0.0
      %677 = vmatpush.msra.mxu0 0.0
      %678 = vmatpush.msra.mxu0 0.0
      %679 = vmatpush.msra.mxu0 0.0
      %680 = vmatpush.msra.mxu0 0.0
      %681 = vmatpush.msra.mxu0 0.0
      %682 = vmatpush.msra.mxu0 0.0
      %683 = vmatpush.msra.mxu0 0.0
      %684 = vmatpush.msra.mxu0 0.0
      %685 = vmatpush.msra.mxu0 0.0
      %686 = vmatpush.msra.mxu0 0.0
      %687 = vmatpush.msra.mxu0 0.0
      %688 = vmatpush.msra.mxu0 0.0
      %689 = vmatpush.msra.mxu0 %v673
      %690 = vmatmul.f32.gmra.mxu0 %v608
      %v691 = vpop.f32.mrf.mxu0
      %v692 = vadd.f32 0.0, %v691
      %693 = vdwg.mxu0
      %v694 = vmul.f32 %v692, 0.00024414063
      %v695 = vadd.f32 %v694, 1e-05
      %v696 = vrsqrt.pop %v695
      %v697 = vmul.f32 %v696, %v695
      %v698 = vmul.f32 %v697, %v696
      %v699 = vmul.f32 0.5, %v698
      %v700 = vsub.f32 1.5, %v699
      %v701 = vmul.f32 %v696, %v700
      %vm702 = vweird.f32 %v695
      %vm703 = vweird.f32 %v696
      %vm704 = vmor %vm702, %vm703
      %v705 = vsel %vm704, %v696, %v701
      %707 = vset.pattern.permute.xlu0 0
      %708 = vperm.xlu0 %707, %v705
      %v709 = vpop.permute.xlu0 %708
      %v711 = vmul.f32 %v645, %v709
      %v712 = vmul.f32 %v646, %v709
      %v713 = vmul.f32 %v647, %v709
      %v714 = vmul.f32 %v648, %v709
      %v715 = vmul.f32 %v649, %v709
      %v716 = vmul.f32 %v650, %v709
      %v717 = vmul.f32 %v651, %v709
      %v718 = vmul.f32 %v652, %v709
      %v719 = vmul.f32 %v653, %v709
      %721 = vset.pattern.permute.xlu0 0
      %722 = vperm.xlu0 %721, %v386
      %v723 = vpop.permute.xlu0 %722
      %v725 = vmul.f32 %v711, %v723
      %v726 = vmul.f32 %v712, %v723
      %v727 = vmul.f32 %v713, %v723
      %v728 = vmul.f32 %v714, %v723
      %v729 = vmul.f32 %v715, %v723
      %v730 = vmul.f32 %v716, %v723
      %v731 = vmul.f32 %v717, %v723
      %v732 = vmul.f32 %v718, %v723
      %v733 = vmul.f32 %v719, %v723
      %735 = vset.pattern.permute.xlu0 0
      %736 = vperm.xlu0 %735, %v388
      %v737 = vpop.permute.xlu0 %736
      %v739 = vadd.f32 %v725, %v737
      %v740 = vadd.f32 %v726, %v737
      %v741 = vadd.f32 %v727, %v737
      %v742 = vadd.f32 %v728, %v737
      %v743 = vadd.f32 %v729, %v737
      %v744 = vadd.f32 %v730, %v737
      %v745 = vadd.f32 %v731, %v737
      %v746 = vadd.f32 %v732, %v737
      %v747 = vadd.f32 %v733, %v737
      %vm748 = vcmp.ge.f32.partialorder %v739, 0.0
      %vm749 = vcmp.ge.f32.partialorder %v740, 0.0
      %vm750 = vcmp.ge.f32.partialorder %v741, 0.0
      %vm751 = vcmp.ge.f32.partialorder %v742, 0.0
      %vm752 = vcmp.ge.f32.partialorder %v743, 0.0
      %vm753 = vcmp.ge.f32.partialorder %v744, 0.0
      %vm754 = vcmp.ge.f32.partialorder %v745, 0.0
      %vm755 = vcmp.ge.f32.partialorder %v746, 0.0
      %vm756 = vcmp.ge.f32.partialorder %v747, 0.0
      %v757 = vmul.f32 %v739, 0.01
      %v758 = vmul.f32 %v740, 0.01
      %v759 = vmul.f32 %v741, 0.01
      %v760 = vmul.f32 %v742, 0.01
      %v761 = vmul.f32 %v743, 0.01
      %v762 = vmul.f32 %v744, 0.01
      %v763 = vmul.f32 %v745, 0.01
      %v764 = vmul.f32 %v746, 0.01
      %v765 = vmul.f32 %v747, 0.01
      %v766 = vsel %vm748, %v739, %v757
      %v767 = vsel %vm749, %v740, %v758
      %v768 = vsel %vm750, %v741, %v759
      %v769 = vsel %vm751, %v742, %v760
      %v770 = vsel %vm752, %v743, %v761
      %v771 = vsel %vm753, %v744, %v762
      %v772 = vsel %vm754, %v745, %v763
      %v773 = vsel %vm755, %v746, %v764
      %v774 = vsel %vm756, %v747, %v765
      %v775 = vmul.f32 %v766, %v568
      %v776 = vmul.f32 %v767, %v569
      %v777 = vmul.f32 %v768, %v570
      %v778 = vmul.f32 %v769, %v571
      %v779 = vmul.f32 %v770, %v572
      %v780 = vmul.f32 %v771, %v573
      %v781 = vmul.f32 %v772, %v574
      %v782 = vmul.f32 %v773, %v575
      %v783 = vmul.f32 %v774, %v576
      %793 = vrot.lane.b32.xlu0 %v775, 35
      %v794 = vpop.permute.xlu0 %793
      %795 = vrot.lane.b32.xlu0 %v776, 35
      %v796 = vpop.permute.xlu0 %795
      %797 = vrot.lane.b32.xlu0 %v777, 35
      %v798 = vpop.permute.xlu0 %797
      %799 = vrot.lane.b32.xlu0 %v778, 35
      %v800 = vpop.permute.xlu0 %799
      %801 = vrot.lane.b32.xlu0 %v779, 35
      %v802 = vpop.permute.xlu0 %801
      %803 = vrot.lane.b32.xlu0 %v780, 35
      %v804 = vpop.permute.xlu0 %803
      %805 = vrot.lane.b32.xlu0 %v781, 35
      %v806 = vpop.permute.xlu0 %805
      %807 = vrot.lane.b32.xlu0 %v782, 35
      %v808 = vpop.permute.xlu0 %807
      %809 = vrot.lane.b32.xlu0 %v783, 35
      %v810 = vpop.permute.xlu0 %809
      %vm811 = vcmask 285696
      %v812 = vsel %vm811, %v794, %v796
      %v813 = vsel %vm811, %v796, %v798
      %v814 = vsel %vm811, %v798, %v800
      %v815 = vsel %vm811, %v800, %v802
      %v816 = vsel %vm811, %v802, %v804
      %v817 = vsel %vm811, %v804, %v806
      %v818 = vsel %vm811, %v806, %v808
      %v819 = vsel %vm811, %v808, %v810
      %vm829 = vcmask 1047832
      %830 = vst.msk [vmem:[#allocation2] sm:$0xff] %vm829, %v794
      %831 = vst [vmem:[#allocation2 + $0x8] sm:$0xff] %v812
      %832 = vst [vmem:[#allocation2 + $0x10] sm:$0xff] %v813
      %833 = vst [vmem:[#allocation2 + $0x18] sm:$0xff] %v814
      %834 = vst [vmem:[#allocation2 + $0x20] sm:$0xff] %v815
      %835 = vst [vmem:[#allocation2 + $0x28] sm:$0xff] %v816
      %836 = vst [vmem:[#allocation2 + $0x30] sm:$0xff] %v817
      %837 = vst [vmem:[#allocation2 + $0x38] sm:$0xff] %v818
      %vm838 = vcmask 809984
      %839 = vst.msk [vmem:[#allocation2 + $0x40] sm:$0xff] %vm838, %v819
      %v840 = vld [vmem:[%s347] sm:$0xff]
      %v841 = vld [vmem:[%s347 + $0x8] sm:$0xff]
      %v842 = vld [vmem:[%s347 + $0x10] sm:$0xff]
      %v843 = vld [vmem:[%s347 + $0x18] sm:$0xff]
      %v844 = vld [vmem:[%s347 + $0x20] sm:$0xff]
      %v845 = vld [vmem:[%s347 + $0x28] sm:$0xff]
      %v846 = vld [vmem:[%s347 + $0x30] sm:$0xff]
      %v847 = vld [vmem:[%s347 + $0x38] sm:$0xff]
      %v848 = vld [vmem:[%s347 + $0x40] sm:$0xff]
      %v849 = vmul.f32 %v840, %v568
      %v850 = vmul.f32 %v841, %v569
      %v851 = vmul.f32 %v842, %v570
      %v852 = vmul.f32 %v843, %v571
      %v853 = vmul.f32 %v844, %v572
      %v854 = vmul.f32 %v845, %v573
      %v855 = vmul.f32 %v846, %v574
      %v856 = vmul.f32 %v847, %v575
      %v857 = vmul.f32 %v848, %v576
      %867 = vrot.lane.b32.xlu0 %v849, 35
      %v868 = vpop.permute.xlu0 %867
      %869 = vrot.lane.b32.xlu0 %v850, 35
      %v870 = vpop.permute.xlu0 %869
      %871 = vrot.lane.b32.xlu0 %v851, 35
      %v872 = vpop.permute.xlu0 %871
      %873 = vrot.lane.b32.xlu0 %v852, 35
      %v874 = vpop.permute.xlu0 %873
      %875 = vrot.lane.b32.xlu0 %v853, 35
      %v876 = vpop.permute.xlu0 %875
      %877 = vrot.lane.b32.xlu0 %v854, 35
      %v878 = vpop.permute.xlu0 %877
      %879 = vrot.lane.b32.xlu0 %v855, 35
      %v880 = vpop.permute.xlu0 %879
      %881 = vrot.lane.b32.xlu0 %v856, 35
      %v882 = vpop.permute.xlu0 %881
      %883 = vrot.lane.b32.xlu0 %v857, 35
      %v884 = vpop.permute.xlu0 %883
      %v885 = vsel %vm811, %v868, %v870
      %v886 = vsel %vm811, %v870, %v872
      %v887 = vsel %vm811, %v872, %v874
      %v888 = vsel %vm811, %v874, %v876
      %v889 = vsel %vm811, %v876, %v878
      %v890 = vsel %vm811, %v878, %v880
      %v891 = vsel %vm811, %v880, %v882
      %v892 = vsel %vm811, %v882, %v884
      %902 = vst.msk [vmem:[#allocation2 + $0x50] sm:$0xff] %vm829, %v868
      %903 = vst [vmem:[#allocation2 + $0x58] sm:$0xff] %v885
      %904 = vst [vmem:[#allocation2 + $0x60] sm:$0xff] %v886
      %905 = vst [vmem:[#allocation2 + $0x68] sm:$0xff] %v887
      %906 = vst [vmem:[#allocation2 + $0x70] sm:$0xff] %v888
      %907 = vst [vmem:[#allocation2 + $0x78] sm:$0xff] %v889
      %908 = vst [vmem:[#allocation2 + $0x80] sm:$0xff] %v890
      %909 = vst [vmem:[#allocation2 + $0x88] sm:$0xff] %v891
      %910 = vst.msk [vmem:[#allocation2 + $0x90] sm:$0xff] %vm838, %v892
      %v911 = vld [vmem:[#allocation2] sm:$0xff]
      %v912 = vld [vmem:[#allocation2 + $0x8] sm:$0xff]
      %v913 = vld [vmem:[#allocation2 + $0x10] sm:$0xff]
      %v914 = vld [vmem:[#allocation2 + $0x18] sm:$0xff]
      %v915 = vld [vmem:[#allocation2 + $0x20] sm:$0xff]
      %v916 = vld [vmem:[#allocation2 + $0x28] sm:$0xff]
      %v917 = vld [vmem:[#allocation2 + $0x30] sm:$0xff]
      %v918 = vld [vmem:[#allocation2 + $0x38] sm:$0xff]
      %v919 = vld [vmem:[#allocation2 + $0x40] sm:$0xff]
      %v920 = vld [vmem:[#allocation2 + $0x50] sm:$0xff]
      %v921 = vld [vmem:[#allocation2 + $0x58] sm:$0xff]
      %v922 = vld [vmem:[#allocation2 + $0x60] sm:$0xff]
      %v923 = vld [vmem:[#allocation2 + $0x68] sm:$0xff]
      %v924 = vld [vmem:[#allocation2 + $0x70] sm:$0xff]
      %v925 = vld [vmem:[#allocation2 + $0x78] sm:$0xff]
      %v926 = vld [vmem:[#allocation2 + $0x80] sm:$0xff]
      %v927 = vld [vmem:[#allocation2 + $0x88] sm:$0xff]
      %v928 = vld [vmem:[#allocation2 + $0x90] sm:$0xff]
      %v929 = vpack.c.bf16 %v920, %v911
      %v930 = vpack.c.bf16 %v921, %v912
      %v931 = vpack.c.bf16 %v922, %v913
      %v932 = vpack.c.bf16 %v923, %v914
      %v933 = vpack.c.bf16 %v924, %v915
      %v934 = vpack.c.bf16 %v925, %v916
      %v935 = vpack.c.bf16 %v926, %v917
      %v936 = vpack.c.bf16 %v927, %v918
      %v937 = vpack.c.bf16 %v928, %v919
      %v938 = vld [vmem:[%s3] sm:$0xf]
      %s939 = scalar_lea.vmem %s3, 4
      %v940 = vld [vmem:[%s939] sm:$0xf]
      %950 = vrot.lane.b32.xlu0 %v929, 127
      %v951 = vpop.permute.xlu0 %950
      %952 = vrot.lane.b32.xlu0 %v930, 127
      %v953 = vpop.permute.xlu0 %952
      %954 = vrot.lane.b32.xlu0 %v931, 127
      %v955 = vpop.permute.xlu0 %954
      %956 = vrot.lane.b32.xlu0 %v932, 127
      %v957 = vpop.permute.xlu0 %956
      %958 = vrot.lane.b32.xlu0 %v933, 127
      %v959 = vpop.permute.xlu0 %958
      %960 = vrot.lane.b32.xlu0 %v934, 127
      %v961 = vpop.permute.xlu0 %960
      %962 = vrot.lane.b32.xlu0 %v935, 127
      %v963 = vpop.permute.xlu0 %962
      %964 = vrot.lane.b32.xlu0 %v936, 127
      %v965 = vpop.permute.xlu0 %964
      %966 = vrot.lane.b32.xlu0 %v937, 127
      %v967 = vpop.permute.xlu0 %966
      %vm968 = vcmask 1039360
      %v969 = vsel %vm968, %v951, %v953
      %v970 = vsel %vm968, %v953, %v955
      %v971 = vsel %vm968, %v955, %v957
      %v972 = vsel %vm968, %v957, %v959
      %v973 = vsel %vm968, %v959, %v961
      %v974 = vsel %vm968, %v961, %v963
      %v975 = vsel %vm968, %v963, %v965
      %v976 = vsel %vm968, %v965, %v967
      %vm986 = vcmask 130048
      %v988 = vsel %vm986, %v940, 0
      %990 = vmatpush.bf16.msra.mxu0 0
      %991 = vmatpush.bf16.msra.mxu0 0
      %992 = vmatpush.bf16.msra.mxu0 0
      %993 = vmatpush.bf16.msra.mxu0 0
      %994 = vmatpush.bf16.msra.mxu0 0
      %995 = vmatpush.bf16.msra.mxu0 0
      %996 = vmatpush.bf16.msra.mxu0 0
      %997 = vmatpush.bf16.msra.mxu0 %v969
      %998 = vmatmul.bf16.gmra.mxu0 %v988
      %v999 = vpop.f32.mrf.mxu0
      %v1000 = vadd.f32 0.0, %v999
      %v1001 = vpop.f32.mrf.mxu0
      %1002 = vdwg.mxu0
      %1003 = vmatpush.bf16.msra.mxu0 0
      %1004 = vmatpush.bf16.msra.mxu0 0
      %1005 = vmatpush.bf16.msra.mxu0 0
      %1006 = vmatpush.bf16.msra.mxu0 0
      %1007 = vmatpush.bf16.msra.mxu0 0
      %1008 = vmatpush.bf16.msra.mxu0 0
      %1009 = vmatpush.bf16.msra.mxu0 0
      %1010 = vmatpush.bf16.msra.mxu0 %v970
      %1011 = vmatmul.bf16.gmra.mxu0 %v988
      %v1012 = vpop.f32.mrf.mxu0
      %v1013 = vadd.f32 0.0, %v1012
      %v1014 = vpop.f32.mrf.mxu0
      %1015 = vdwg.mxu0
      %1016 = vmatpush.bf16.msra.mxu0 0
      %1017 = vmatpush.bf16.msra.mxu0 0
      %1018 = vmatpush.bf16.msra.mxu0 0
      %1019 = vmatpush.bf16.msra.mxu0 0
      %1020 = vmatpush.bf16.msra.mxu0 0
      %1021 = vmatpush.bf16.msra.mxu0 0
      %1022 = vmatpush.bf16.msra.mxu0 0
      %1023 = vmatpush.bf16.msra.mxu0 %v971
      %1024 = vmatmul.bf16.gmra.mxu0 %v988
      %v1025 = vpop.f32.mrf.mxu0
      %v1026 = vadd.f32 0.0, %v1025
      %v1027 = vpop.f32.mrf.mxu0
      %1028 = vdwg.mxu0
      %1029 = vmatpush.bf16.msra.mxu0 0
      %1030 = vmatpush.bf16.msra.mxu0 0
      %1031 = vmatpush.bf16.msra.mxu0 0
      %1032 = vmatpush.bf16.msra.mxu0 0
      %1033 = vmatpush.bf16.msra.mxu0 0
      %1034 = vmatpush.bf16.msra.mxu0 0
      %1035 = vmatpush.bf16.msra.mxu0 0
      %1036 = vmatpush.bf16.msra.mxu0 %v972
      %1037 = vmatmul.bf16.gmra.mxu0 %v988
      %v1038 = vpop.f32.mrf.mxu0
      %v1039 = vadd.f32 0.0, %v1038
      %v1040 = vpop.f32.mrf.mxu0
      %1041 = vdwg.mxu0
      %1042 = vmatpush.bf16.msra.mxu0 0
      %1043 = vmatpush.bf16.msra.mxu0 0
      %1044 = vmatpush.bf16.msra.mxu0 0
      %1045 = vmatpush.bf16.msra.mxu0 0
      %1046 = vmatpush.bf16.msra.mxu0 0
      %1047 = vmatpush.bf16.msra.mxu0 0
      %1048 = vmatpush.bf16.msra.mxu0 0
      %1049 = vmatpush.bf16.msra.mxu0 %v973
      %1050 = vmatmul.bf16.gmra.mxu0 %v988
      %v1051 = vpop.f32.mrf.mxu0
      %v1052 = vadd.f32 0.0, %v1051
      %v1053 = vpop.f32.mrf.mxu0
      %1054 = vdwg.mxu0
      %1055 = vmatpush.bf16.msra.mxu0 0
      %1056 = vmatpush.bf16.msra.mxu0 0
      %1057 = vmatpush.bf16.msra.mxu0 0
      %1058 = vmatpush.bf16.msra.mxu0 0
      %1059 = vmatpush.bf16.msra.mxu0 0
      %1060 = vmatpush.bf16.msra.mxu0 0
      %1061 = vmatpush.bf16.msra.mxu0 0
      %1062 = vmatpush.bf16.msra.mxu0 %v974
      %1063 = vmatmul.bf16.gmra.mxu0 %v988
      %v1064 = vpop.f32.mrf.mxu0
      %v1065 = vadd.f32 0.0, %v1064
      %v1066 = vpop.f32.mrf.mxu0
      %1067 = vdwg.mxu0
      %1068 = vmatpush.bf16.msra.mxu0 0
      %1069 = vmatpush.bf16.msra.mxu0 0
      %1070 = vmatpush.bf16.msra.mxu0 0
      %1071 = vmatpush.bf16.msra.mxu0 0
      %1072 = vmatpush.bf16.msra.mxu0 0
      %1073 = vmatpush.bf16.msra.mxu0 0
      %1074 = vmatpush.bf16.msra.mxu0 0
      %1075 = vmatpush.bf16.msra.mxu0 %v975
      %1076 = vmatmul.bf16.gmra.mxu0 %v988
      %v1077 = vpop.f32.mrf.mxu0
      %v1078 = vadd.f32 0.0, %v1077
      %v1079 = vpop.f32.mrf.mxu0
      %1080 = vdwg.mxu0
      %1081 = vmatpush.bf16.msra.mxu0 0
      %1082 = vmatpush.bf16.msra.mxu0 0
      %1083 = vmatpush.bf16.msra.mxu0 0
      %1084 = vmatpush.bf16.msra.mxu0 0
      %1085 = vmatpush.bf16.msra.mxu0 0
      %1086 = vmatpush.bf16.msra.mxu0 0
      %1087 = vmatpush.bf16.msra.mxu0 0
      %1088 = vmatpush.bf16.msra.mxu0 %v976
      %1089 = vmatmul.bf16.gmra.mxu0 %v988
      %v1090 = vpop.f32.mrf.mxu0
      %v1091 = vadd.f32 0.0, %v1090
      %v1092 = vpop.f32.mrf.mxu0
      %1093 = vdwg.mxu0
      %1094 = vmatpush.bf16.msra.mxu0 0
      %1095 = vmatpush.bf16.msra.mxu0 0
      %1096 = vmatpush.bf16.msra.mxu0 0
      %1097 = vmatpush.bf16.msra.mxu0 0
      %1098 = vmatpush.bf16.msra.mxu0 0
      %1099 = vmatpush.bf16.msra.mxu0 0
      %1100 = vmatpush.bf16.msra.mxu0 0
      %1101 = vmatpush.bf16.msra.mxu0 %v967
      %1102 = vmatmul.bf16.gmra.mxu0 %v988
      %v1103 = vpop.f32.mrf.mxu0
      %v1104 = vadd.f32 0.0, %v1103
      %v1105 = vpop.f32.mrf.mxu0
      %1106 = vdwg.mxu0
      %v1108 = vsel %vm986, %v938, 0
      %1110 = vmatpush.bf16.msra.mxu0 0
      %1111 = vmatpush.bf16.msra.mxu0 0
      %1112 = vmatpush.bf16.msra.mxu0 0
      %1113 = vmatpush.bf16.msra.mxu0 0
      %1114 = vmatpush.bf16.msra.mxu0 0
      %1115 = vmatpush.bf16.msra.mxu0 0
      %1116 = vmatpush.bf16.msra.mxu0 0
      %1117 = vmatpush.bf16.msra.mxu0 %v929
      %1118 = vmatmul.bf16.gmra.mxu0 %v1108
      %v1119 = vpop.f32.mrf.mxu0
      %v1120 = vadd.f32 %v1000, %v1119
      %v1121 = vpop.f32.mrf.mxu0
      %1122 = vdwg.mxu0
      %1123 = vmatpush.bf16.msra.mxu0 0
      %1124 = vmatpush.bf16.msra.mxu0 0
      %1125 = vmatpush.bf16.msra.mxu0 0
      %1126 = vmatpush.bf16.msra.mxu0 0
      %1127 = vmatpush.bf16.msra.mxu0 0
      %1128 = vmatpush.bf16.msra.mxu0 0
      %1129 = vmatpush.bf16.msra.mxu0 0
      %1130 = vmatpush.bf16.msra.mxu0 %v930
      %1131 = vmatmul.bf16.gmra.mxu0 %v1108
      %v1132 = vpop.f32.mrf.mxu0
      %v1133 = vadd.f32 %v1013, %v1132
      %v1134 = vpop.f32.mrf.mxu0
      %1135 = vdwg.mxu0
      %1136 = vmatpush.bf16.msra.mxu0 0
      %1137 = vmatpush.bf16.msra.mxu0 0
      %1138 = vmatpush.bf16.msra.mxu0 0
      %1139 = vmatpush.bf16.msra.mxu0 0
      %1140 = vmatpush.bf16.msra.mxu0 0
      %1141 = vmatpush.bf16.msra.mxu0 0
      %1142 = vmatpush.bf16.msra.mxu0 0
      %1143 = vmatpush.bf16.msra.mxu0 %v931
      %1144 = vmatmul.bf16.gmra.mxu0 %v1108
      %v1145 = vpop.f32.mrf.mxu0
      %v1146 = vadd.f32 %v1026, %v1145
      %v1147 = vpop.f32.mrf.mxu0
      %1148 = vdwg.mxu0
      %1149 = vmatpush.bf16.msra.mxu0 0
      %1150 = vmatpush.bf16.msra.mxu0 0
      %1151 = vmatpush.bf16.msra.mxu0 0
      %1152 = vmatpush.bf16.msra.mxu0 0
      %1153 = vmatpush.bf16.msra.mxu0 0
      %1154 = vmatpush.bf16.msra.mxu0 0
      %1155 = vmatpush.bf16.msra.mxu0 0
      %1156 = vmatpush.bf16.msra.mxu0 %v932
      %1157 = vmatmul.bf16.gmra.mxu0 %v1108
      %v1158 = vpop.f32.mrf.mxu0
      %v1159 = vadd.f32 %v1039, %v1158
      %v1160 = vpop.f32.mrf.mxu0
      %1161 = vdwg.mxu0
      %1162 = vmatpush.bf16.msra.mxu0 0
      %1163 = vmatpush.bf16.msra.mxu0 0
      %1164 = vmatpush.bf16.msra.mxu0 0
      %1165 = vmatpush.bf16.msra.mxu0 0
      %1166 = vmatpush.bf16.msra.mxu0 0
      %1167 = vmatpush.bf16.msra.mxu0 0
      %1168 = vmatpush.bf16.msra.mxu0 0
      %1169 = vmatpush.bf16.msra.mxu0 %v933
      %1170 = vmatmul.bf16.gmra.mxu0 %v1108
      %v1171 = vpop.f32.mrf.mxu0
      %v1172 = vadd.f32 %v1052, %v1171
      %v1173 = vpop.f32.mrf.mxu0
      %1174 = vdwg.mxu0
      %1175 = vmatpush.bf16.msra.mxu0 0
      %1176 = vmatpush.bf16.msra.mxu0 0
      %1177 = vmatpush.bf16.msra.mxu0 0
      %1178 = vmatpush.bf16.msra.mxu0 0
      %1179 = vmatpush.bf16.msra.mxu0 0
      %1180 = vmatpush.bf16.msra.mxu0 0
      %1181 = vmatpush.bf16.msra.mxu0 0
      %1182 = vmatpush.bf16.msra.mxu0 %v934
      %1183 = vmatmul.bf16.gmra.mxu0 %v1108
      %v1184 = vpop.f32.mrf.mxu0
      %v1185 = vadd.f32 %v1065, %v1184
      %v1186 = vpop.f32.mrf.mxu0
      %1187 = vdwg.mxu0
      %1188 = vmatpush.bf16.msra.mxu0 0
      %1189 = vmatpush.bf16.msra.mxu0 0
      %1190 = vmatpush.bf16.msra.mxu0 0
      %1191 = vmatpush.bf16.msra.mxu0 0
      %1192 = vmatpush.bf16.msra.mxu0 0
      %1193 = vmatpush.bf16.msra.mxu0 0
      %1194 = vmatpush.bf16.msra.mxu0 0
      %1195 = vmatpush.bf16.msra.mxu0 %v935
      %1196 = vmatmul.bf16.gmra.mxu0 %v1108
      %v1197 = vpop.f32.mrf.mxu0
      %v1198 = vadd.f32 %v1078, %v1197
      %v1199 = vpop.f32.mrf.mxu0
      %1200 = vdwg.mxu0
      %1201 = vmatpush.bf16.msra.mxu0 0
      %1202 = vmatpush.bf16.msra.mxu0 0
      %1203 = vmatpush.bf16.msra.mxu0 0
      %1204 = vmatpush.bf16.msra.mxu0 0
      %1205 = vmatpush.bf16.msra.mxu0 0
      %1206 = vmatpush.bf16.msra.mxu0 0
      %1207 = vmatpush.bf16.msra.mxu0 0
      %1208 = vmatpush.bf16.msra.mxu0 %v936
      %1209 = vmatmul.bf16.gmra.mxu0 %v1108
      %v1210 = vpop.f32.mrf.mxu0
      %v1211 = vadd.f32 %v1091, %v1210
      %v1212 = vpop.f32.mrf.mxu0
      %1213 = vdwg.mxu0
      %1214 = vmatpush.bf16.msra.mxu0 0
      %1215 = vmatpush.bf16.msra.mxu0 0
      %1216 = vmatpush.bf16.msra.mxu0 0
      %1217 = vmatpush.bf16.msra.mxu0 0
      %1218 = vmatpush.bf16.msra.mxu0 0
      %1219 = vmatpush.bf16.msra.mxu0 0
      %1220 = vmatpush.bf16.msra.mxu0 0
      %1221 = vmatpush.bf16.msra.mxu0 %v937
      %1222 = vmatmul.bf16.gmra.mxu0 %v1108
      %v1223 = vpop.f32.mrf.mxu0
      %v1224 = vadd.f32 %v1104, %v1223
      %v1225 = vpop.f32.mrf.mxu0
      %1226 = vdwg.mxu0
      %s1227 = scalar_lea.vmem %s3, 8
      %v1228 = vld [vmem:[%s1227] sm:$0xf]
      %1229 = vrot.lane.b32.xlu0 %v929, 126
      %v1230 = vpop.permute.xlu0 %1229
      %1231 = vrot.lane.b32.xlu0 %v930, 126
      %v1232 = vpop.permute.xlu0 %1231
      %1233 = vrot.lane.b32.xlu0 %v931, 126
      %v1234 = vpop.permute.xlu0 %1233
      %1235 = vrot.lane.b32.xlu0 %v932, 126
      %v1236 = vpop.permute.xlu0 %1235
      %1237 = vrot.lane.b32.xlu0 %v933, 126
      %v1238 = vpop.permute.xlu0 %1237
      %1239 = vrot.lane.b32.xlu0 %v934, 126
      %v1240 = vpop.permute.xlu0 %1239
      %1241 = vrot.lane.b32.xlu0 %v935, 126
      %v1242 = vpop.permute.xlu0 %1241
      %1243 = vrot.lane.b32.xlu0 %v936, 126
      %v1244 = vpop.permute.xlu0 %1243
      %1245 = vrot.lane.b32.xlu0 %v937, 126
      %v1246 = vpop.permute.xlu0 %1245
      %vm1247 = vcmask 1031168
      %v1248 = vsel %vm1247, %v1230, %v1232
      %v1249 = vsel %vm1247, %v1232, %v1234
      %v1250 = vsel %vm1247, %v1234, %v1236
      %v1251 = vsel %vm1247, %v1236, %v1238
      %v1252 = vsel %vm1247, %v1238, %v1240
      %v1253 = vsel %vm1247, %v1240, %v1242
      %v1254 = vsel %vm1247, %v1242, %v1244
      %v1255 = vsel %vm1247, %v1244, %v1246
      %v1266 = vsel %vm986, %v1228, 0
      %1268 = vmatpush.bf16.msra.mxu0 0
      %1269 = vmatpush.bf16.msra.mxu0 0
      %1270 = vmatpush.bf16.msra.mxu0 0
      %1271 = vmatpush.bf16.msra.mxu0 0
      %1272 = vmatpush.bf16.msra.mxu0 0
      %1273 = vmatpush.bf16.msra.mxu0 0
      %1274 = vmatpush.bf16.msra.mxu0 0
      %1275 = vmatpush.bf16.msra.mxu0 %v1248
      %1276 = vmatmul.bf16.gmra.mxu0 %v1266
      %v1277 = vpop.f32.mrf.mxu0
      %v1278 = vadd.f32 0.0, %v1277
      %v1279 = vpop.f32.mrf.mxu0
      %1280 = vdwg.mxu0
      %1281 = vmatpush.bf16.msra.mxu0 0
      %1282 = vmatpush.bf16.msra.mxu0 0
      %1283 = vmatpush.bf16.msra.mxu0 0
      %1284 = vmatpush.bf16.msra.mxu0 0
      %1285 = vmatpush.bf16.msra.mxu0 0
      %1286 = vmatpush.bf16.msra.mxu0 0
      %1287 = vmatpush.bf16.msra.mxu0 0
      %1288 = vmatpush.bf16.msra.mxu0 %v1249
      %1289 = vmatmul.bf16.gmra.mxu0 %v1266
      %v1290 = vpop.f32.mrf.mxu0
      %v1291 = vadd.f32 0.0, %v1290
      %v1292 = vpop.f32.mrf.mxu0
      %1293 = vdwg.mxu0
      %1294 = vmatpush.bf16.msra.mxu0 0
      %1295 = vmatpush.bf16.msra.mxu0 0
      %1296 = vmatpush.bf16.msra.mxu0 0
      %1297 = vmatpush.bf16.msra.mxu0 0
      %1298 = vmatpush.bf16.msra.mxu0 0
      %1299 = vmatpush.bf16.msra.mxu0 0
      %1300 = vmatpush.bf16.msra.mxu0 0
      %1301 = vmatpush.bf16.msra.mxu0 %v1250
      %1302 = vmatmul.bf16.gmra.mxu0 %v1266
      %v1303 = vpop.f32.mrf.mxu0
      %v1304 = vadd.f32 0.0, %v1303
      %v1305 = vpop.f32.mrf.mxu0
      %1306 = vdwg.mxu0
      %1307 = vmatpush.bf16.msra.mxu0 0
      %1308 = vmatpush.bf16.msra.mxu0 0
      %1309 = vmatpush.bf16.msra.mxu0 0
      %1310 = vmatpush.bf16.msra.mxu0 0
      %1311 = vmatpush.bf16.msra.mxu0 0
      %1312 = vmatpush.bf16.msra.mxu0 0
      %1313 = vmatpush.bf16.msra.mxu0 0
      %1314 = vmatpush.bf16.msra.mxu0 %v1251
      %1315 = vmatmul.bf16.gmra.mxu0 %v1266
      %v1316 = vpop.f32.mrf.mxu0
      %v1317 = vadd.f32 0.0, %v1316
      %v1318 = vpop.f32.mrf.mxu0
      %1319 = vdwg.mxu0
      %1320 = vmatpush.bf16.msra.mxu0 0
      %1321 = vmatpush.bf16.msra.mxu0 0
      %1322 = vmatpush.bf16.msra.mxu0 0
      %1323 = vmatpush.bf16.msra.mxu0 0
      %1324 = vmatpush.bf16.msra.mxu0 0
      %1325 = vmatpush.bf16.msra.mxu0 0
      %1326 = vmatpush.bf16.msra.mxu0 0
      %1327 = vmatpush.bf16.msra.mxu0 %v1252
      %1328 = vmatmul.bf16.gmra.mxu0 %v1266
      %v1329 = vpop.f32.mrf.mxu0
      %v1330 = vadd.f32 0.0, %v1329
      %v1331 = vpop.f32.mrf.mxu0
      %1332 = vdwg.mxu0
      %1333 = vmatpush.bf16.msra.mxu0 0
      %1334 = vmatpush.bf16.msra.mxu0 0
      %1335 = vmatpush.bf16.msra.mxu0 0
      %1336 = vmatpush.bf16.msra.mxu0 0
      %1337 = vmatpush.bf16.msra.mxu0 0
      %1338 = vmatpush.bf16.msra.mxu0 0
      %1339 = vmatpush.bf16.msra.mxu0 0
      %1340 = vmatpush.bf16.msra.mxu0 %v1253
      %1341 = vmatmul.bf16.gmra.mxu0 %v1266
      %v1342 = vpop.f32.mrf.mxu0
      %v1343 = vadd.f32 0.0, %v1342
      %v1344 = vpop.f32.mrf.mxu0
      %1345 = vdwg.mxu0
      %1346 = vmatpush.bf16.msra.mxu0 0
      %1347 = vmatpush.bf16.msra.mxu0 0
      %1348 = vmatpush.bf16.msra.mxu0 0
      %1349 = vmatpush.bf16.msra.mxu0 0
      %1350 = vmatpush.bf16.msra.mxu0 0
      %1351 = vmatpush.bf16.msra.mxu0 0
      %1352 = vmatpush.bf16.msra.mxu0 0
      %1353 = vmatpush.bf16.msra.mxu0 %v1254
      %1354 = vmatmul.bf16.gmra.mxu0 %v1266
      %v1355 = vpop.f32.mrf.mxu0
      %v1356 = vadd.f32 0.0, %v1355
      %v1357 = vpop.f32.mrf.mxu0
      %1358 = vdwg.mxu0
      %1359 = vmatpush.bf16.msra.mxu0 0
      %1360 = vmatpush.bf16.msra.mxu0 0
      %1361 = vmatpush.bf16.msra.mxu0 0
      %1362 = vmatpush.bf16.msra.mxu0 0
      %1363 = vmatpush.bf16.msra.mxu0 0
      %1364 = vmatpush.bf16.msra.mxu0 0
      %1365 = vmatpush.bf16.msra.mxu0 0
      %1366 = vmatpush.bf16.msra.mxu0 %v1255
      %1367 = vmatmul.bf16.gmra.mxu0 %v1266
      %v1368 = vpop.f32.mrf.mxu0
      %v1369 = vadd.f32 0.0, %v1368
      %v1370 = vpop.f32.mrf.mxu0
      %1371 = vdwg.mxu0
      %1372 = vmatpush.bf16.msra.mxu0 0
      %1373 = vmatpush.bf16.msra.mxu0 0
      %1374 = vmatpush.bf16.msra.mxu0 0
      %1375 = vmatpush.bf16.msra.mxu0 0
      %1376 = vmatpush.bf16.msra.mxu0 0
      %1377 = vmatpush.bf16.msra.mxu0 0
      %1378 = vmatpush.bf16.msra.mxu0 0
      %1379 = vmatpush.bf16.msra.mxu0 %v1246
      %1380 = vmatmul.bf16.gmra.mxu0 %v1266
      %v1381 = vpop.f32.mrf.mxu0
      %v1382 = vadd.f32 0.0, %v1381
      %v1383 = vpop.f32.mrf.mxu0
      %1384 = vdwg.mxu0
      %v1385 = vadd.f32 %v1120, %v1278
      %v1386 = vadd.f32 %v1133, %v1291
      %v1387 = vadd.f32 %v1146, %v1304
      %v1388 = vadd.f32 %v1159, %v1317
      %v1389 = vadd.f32 %v1172, %v1330
      %v1390 = vadd.f32 %v1185, %v1343
      %v1391 = vadd.f32 %v1198, %v1356
      %v1392 = vadd.f32 %v1211, %v1369
      %v1393 = vadd.f32 %v1224, %v1382
      %s1394 = scalar_lea.vmem %s3, 12
      %v1395 = vld [vmem:[%s1394] sm:$0xf]
      %1396 = vrot.lane.b32.xlu0 %v929, 94
      %v1397 = vpop.permute.xlu0 %1396
      %1398 = vrot.lane.b32.xlu0 %v930, 94
      %v1399 = vpop.permute.xlu0 %1398
      %1400 = vrot.lane.b32.xlu0 %v931, 94
      %v1401 = vpop.permute.xlu0 %1400
      %1402 = vrot.lane.b32.xlu0 %v932, 94
      %v1403 = vpop.permute.xlu0 %1402
      %1404 = vrot.lane.b32.xlu0 %v933, 94
      %v1405 = vpop.permute.xlu0 %1404
      %1406 = vrot.lane.b32.xlu0 %v934, 94
      %v1407 = vpop.permute.xlu0 %1406
      %1408 = vrot.lane.b32.xlu0 %v935, 94
      %v1409 = vpop.permute.xlu0 %1408
      %1410 = vrot.lane.b32.xlu0 %v936, 94
      %v1411 = vpop.permute.xlu0 %1410
      %1412 = vrot.lane.b32.xlu0 %v937, 94
      %v1413 = vpop.permute.xlu0 %1412
      %vm1414 = vcmask 769024
      %v1415 = vsel %vm1414, %v1397, %v1399
      %v1416 = vsel %vm1414, %v1399, %v1401
      %v1417 = vsel %vm1414, %v1401, %v1403
      %v1418 = vsel %vm1414, %v1403, %v1405
      %v1419 = vsel %vm1414, %v1405, %v1407
      %v1420 = vsel %vm1414, %v1407, %v1409
      %v1421 = vsel %vm1414, %v1409, %v1411
      %v1422 = vsel %vm1414, %v1411, %v1413
      %v1433 = vsel %vm986, %v1395, 0
      %1435 = vmatpush.bf16.msra.mxu0 0
      %1436 = vmatpush.bf16.msra.mxu0 0
      %1437 = vmatpush.bf16.msra.mxu0 0
      %1438 = vmatpush.bf16.msra.mxu0 0
      %1439 = vmatpush.bf16.msra.mxu0 0
      %1440 = vmatpush.bf16.msra.mxu0 0
      %1441 = vmatpush.bf16.msra.mxu0 0
      %1442 = vmatpush.bf16.msra.mxu0 %v1415
      %1443 = vmatmul.bf16.gmra.mxu0 %v1433
      %v1444 = vpop.f32.mrf.mxu0
      %v1445 = vadd.f32 0.0, %v1444
      %v1446 = vpop.f32.mrf.mxu0
      %1447 = vdwg.mxu0
      %1448 = vmatpush.bf16.msra.mxu0 0
      %1449 = vmatpush.bf16.msra.mxu0 0
      %1450 = vmatpush.bf16.msra.mxu0 0
      %1451 = vmatpush.bf16.msra.mxu0 0
      %1452 = vmatpush.bf16.msra.mxu0 0
      %1453 = vmatpush.bf16.msra.mxu0 0
      %1454 = vmatpush.bf16.msra.mxu0 0
      %1455 = vmatpush.bf16.msra.mxu0 %v1416
      %1456 = vmatmul.bf16.gmra.mxu0 %v1433
      %v1457 = vpop.f32.mrf.mxu0
      %v1458 = vadd.f32 0.0, %v1457
      %v1459 = vpop.f32.mrf.mxu0
      %1460 = vdwg.mxu0
      %1461 = vmatpush.bf16.msra.mxu0 0
      %1462 = vmatpush.bf16.msra.mxu0 0
      %1463 = vmatpush.bf16.msra.mxu0 0
      %1464 = vmatpush.bf16.msra.mxu0 0
      %1465 = vmatpush.bf16.msra.mxu0 0
      %1466 = vmatpush.bf16.msra.mxu0 0
      %1467 = vmatpush.bf16.msra.mxu0 0
      %1468 = vmatpush.bf16.msra.mxu0 %v1417
      %1469 = vmatmul.bf16.gmra.mxu0 %v1433
      %v1470 = vpop.f32.mrf.mxu0
      %v1471 = vadd.f32 0.0, %v1470
      %v1472 = vpop.f32.mrf.mxu0
      %1473 = vdwg.mxu0
      %1474 = vmatpush.bf16.msra.mxu0 0
      %1475 = vmatpush.bf16.msra.mxu0 0
      %1476 = vmatpush.bf16.msra.mxu0 0
      %1477 = vmatpush.bf16.msra.mxu0 0
      %1478 = vmatpush.bf16.msra.mxu0 0
      %1479 = vmatpush.bf16.msra.mxu0 0
      %1480 = vmatpush.bf16.msra.mxu0 0
      %1481 = vmatpush.bf16.msra.mxu0 %v1418
      %1482 = vmatmul.bf16.gmra.mxu0 %v1433
      %v1483 = vpop.f32.mrf.mxu0
      %v1484 = vadd.f32 0.0, %v1483
      %v1485 = vpop.f32.mrf.mxu0
      %1486 = vdwg.mxu0
      %1487 = vmatpush.bf16.msra.mxu0 0
      %1488 = vmatpush.bf16.msra.mxu0 0
      %1489 = vmatpush.bf16.msra.mxu0 0
      %1490 = vmatpush.bf16.msra.mxu0 0
      %1491 = vmatpush.bf16.msra.mxu0 0
      %1492 = vmatpush.bf16.msra.mxu0 0
      %1493 = vmatpush.bf16.msra.mxu0 0
      %1494 = vmatpush.bf16.msra.mxu0 %v1419
      %1495 = vmatmul.bf16.gmra.mxu0 %v1433
      %v1496 = vpop.f32.mrf.mxu0
      %v1497 = vadd.f32 0.0, %v1496
      %v1498 = vpop.f32.mrf.mxu0
      %1499 = vdwg.mxu0
      %1500 = vmatpush.bf16.msra.mxu0 0
      %1501 = vmatpush.bf16.msra.mxu0 0
      %1502 = vmatpush.bf16.msra.mxu0 0
      %1503 = vmatpush.bf16.msra.mxu0 0
      %1504 = vmatpush.bf16.msra.mxu0 0
      %1505 = vmatpush.bf16.msra.mxu0 0
      %1506 = vmatpush.bf16.msra.mxu0 0
      %1507 = vmatpush.bf16.msra.mxu0 %v1420
      %1508 = vmatmul.bf16.gmra.mxu0 %v1433
      %v1509 = vpop.f32.mrf.mxu0
      %v1510 = vadd.f32 0.0, %v1509
      %v1511 = vpop.f32.mrf.mxu0
      %1512 = vdwg.mxu0
      %1513 = vmatpush.bf16.msra.mxu0 0
      %1514 = vmatpush.bf16.msra.mxu0 0
      %1515 = vmatpush.bf16.msra.mxu0 0
      %1516 = vmatpush.bf16.msra.mxu0 0
      %1517 = vmatpush.bf16.msra.mxu0 0
      %1518 = vmatpush.bf16.msra.mxu0 0
      %1519 = vmatpush.bf16.msra.mxu0 0
      %1520 = vmatpush.bf16.msra.mxu0 %v1421
      %1521 = vmatmul.bf16.gmra.mxu0 %v1433
      %v1522 = vpop.f32.mrf.mxu0
      %v1523 = vadd.f32 0.0, %v1522
      %v1524 = vpop.f32.mrf.mxu0
      %1525 = vdwg.mxu0
      %1526 = vmatpush.bf16.msra.mxu0 0
      %1527 = vmatpush.bf16.msra.mxu0 0
      %1528 = vmatpush.bf16.msra.mxu0 0
      %1529 = vmatpush.bf16.msra.mxu0 0
      %1530 = vmatpush.bf16.msra.mxu0 0
      %1531 = vmatpush.bf16.msra.mxu0 0
      %1532 = vmatpush.bf16.msra.mxu0 0
      %1533 = vmatpush.bf16.msra.mxu0 %v1422
      %1534 = vmatmul.bf16.gmra.mxu0 %v1433
      %v1535 = vpop.f32.mrf.mxu0
      %v1536 = vadd.f32 0.0, %v1535
      %v1537 = vpop.f32.mrf.mxu0
      %1538 = vdwg.mxu0
      %1539 = vmatpush.bf16.msra.mxu0 0
      %1540 = vmatpush.bf16.msra.mxu0 0
      %1541 = vmatpush.bf16.msra.mxu0 0
      %1542 = vmatpush.bf16.msra.mxu0 0
      %1543 = vmatpush.bf16.msra.mxu0 0
      %1544 = vmatpush.bf16.msra.mxu0 0
      %1545 = vmatpush.bf16.msra.mxu0 0
      %1546 = vmatpush.bf16.msra.mxu0 %v1413
      %1547 = vmatmul.bf16.gmra.mxu0 %v1433
      %v1548 = vpop.f32.mrf.mxu0
      %v1549 = vadd.f32 0.0, %v1548
      %v1550 = vpop.f32.mrf.mxu0
      %1551 = vdwg.mxu0
      %v1552 = vadd.f32 %v1385, %v1445
      %v1553 = vadd.f32 %v1386, %v1458
      %v1554 = vadd.f32 %v1387, %v1471
      %v1555 = vadd.f32 %v1388, %v1484
      %v1556 = vadd.f32 %v1389, %v1497
      %v1557 = vadd.f32 %v1390, %v1510
      %v1558 = vadd.f32 %v1391, %v1523
      %v1559 = vadd.f32 %v1392, %v1536
      %v1560 = vadd.f32 %v1393, %v1549
      %s1561 = scalar_lea.vmem %s3, 16
      %v1562 = vld [vmem:[%s1561] sm:$0xf]
      %1563 = vrot.lane.b32.xlu0 %v929, 93
      %v1564 = vpop.permute.xlu0 %1563
      %1565 = vrot.lane.b32.xlu0 %v930, 93
      %v1566 = vpop.permute.xlu0 %1565
      %1567 = vrot.lane.b32.xlu0 %v931, 93
      %v1568 = vpop.permute.xlu0 %1567
      %1569 = vrot.lane.b32.xlu0 %v932, 93
      %v1570 = vpop.permute.xlu0 %1569
      %1571 = vrot.lane.b32.xlu0 %v933, 93
      %v1572 = vpop.permute.xlu0 %1571
      %1573 = vrot.lane.b32.xlu0 %v934, 93
      %v1574 = vpop.permute.xlu0 %1573
      %1575 = vrot.lane.b32.xlu0 %v935, 93
      %v1576 = vpop.permute.xlu0 %1575
      %1577 = vrot.lane.b32.xlu0 %v936, 93
      %v1578 = vpop.permute.xlu0 %1577
      %1579 = vrot.lane.b32.xlu0 %v937, 93
      %v1580 = vpop.permute.xlu0 %1579
      %vm1581 = vcmask 760832
      %v1582 = vsel %vm1581, %v1564, %v1566
      %v1583 = vsel %vm1581, %v1566, %v1568
      %v1584 = vsel %vm1581, %v1568, %v1570
      %v1585 = vsel %vm1581, %v1570, %v1572
      %v1586 = vsel %vm1581, %v1572, %v1574
      %v1587 = vsel %vm1581, %v1574, %v1576
      %v1588 = vsel %vm1581, %v1576, %v1578
      %v1589 = vsel %vm1581, %v1578, %v1580
      %v1600 = vsel %vm986, %v1562, 0
      %1602 = vmatpush.bf16.msra.mxu0 0
      %1603 = vmatpush.bf16.msra.mxu0 0
      %1604 = vmatpush.bf16.msra.mxu0 0
      %1605 = vmatpush.bf16.msra.mxu0 0
      %1606 = vmatpush.bf16.msra.mxu0 0
      %1607 = vmatpush.bf16.msra.mxu0 0
      %1608 = vmatpush.bf16.msra.mxu0 0
      %1609 = vmatpush.bf16.msra.mxu0 %v1582
      %1610 = vmatmul.bf16.gmra.mxu0 %v1600
      %v1611 = vpop.f32.mrf.mxu0
      %v1612 = vadd.f32 0.0, %v1611
      %v1613 = vpop.f32.mrf.mxu0
      %1614 = vdwg.mxu0
      %1615 = vmatpush.bf16.msra.mxu0 0
      %1616 = vmatpush.bf16.msra.mxu0 0
      %1617 = vmatpush.bf16.msra.mxu0 0
      %1618 = vmatpush.bf16.msra.mxu0 0
      %1619 = vmatpush.bf16.msra.mxu0 0
      %1620 = vmatpush.bf16.msra.mxu0 0
      %1621 = vmatpush.bf16.msra.mxu0 0
      %1622 = vmatpush.bf16.msra.mxu0 %v1583
      %1623 = vmatmul.bf16.gmra.mxu0 %v1600
      %v1624 = vpop.f32.mrf.mxu0
      %v1625 = vadd.f32 0.0, %v1624
      %v1626 = vpop.f32.mrf.mxu0
      %1627 = vdwg.mxu0
      %1628 = vmatpush.bf16.msra.mxu0 0
      %1629 = vmatpush.bf16.msra.mxu0 0
      %1630 = vmatpush.bf16.msra.mxu0 0
      %1631 = vmatpush.bf16.msra.mxu0 0
      %1632 = vmatpush.bf16.msra.mxu0 0
      %1633 = vmatpush.bf16.msra.mxu0 0
      %1634 = vmatpush.bf16.msra.mxu0 0
      %1635 = vmatpush.bf16.msra.mxu0 %v1584
      %1636 = vmatmul.bf16.gmra.mxu0 %v1600
      %v1637 = vpop.f32.mrf.mxu0
      %v1638 = vadd.f32 0.0, %v1637
      %v1639 = vpop.f32.mrf.mxu0
      %1640 = vdwg.mxu0
      %1641 = vmatpush.bf16.msra.mxu0 0
      %1642 = vmatpush.bf16.msra.mxu0 0
      %1643 = vmatpush.bf16.msra.mxu0 0
      %1644 = vmatpush.bf16.msra.mxu0 0
      %1645 = vmatpush.bf16.msra.mxu0 0
      %1646 = vmatpush.bf16.msra.mxu0 0
      %1647 = vmatpush.bf16.msra.mxu0 0
      %1648 = vmatpush.bf16.msra.mxu0 %v1585
      %1649 = vmatmul.bf16.gmra.mxu0 %v1600
      %v1650 = vpop.f32.mrf.mxu0
      %v1651 = vadd.f32 0.0, %v1650
      %v1652 = vpop.f32.mrf.mxu0
      %1653 = vdwg.mxu0
      %1654 = vmatpush.bf16.msra.mxu0 0
      %1655 = vmatpush.bf16.msra.mxu0 0
      %1656 = vmatpush.bf16.msra.mxu0 0
      %1657 = vmatpush.bf16.msra.mxu0 0
      %1658 = vmatpush.bf16.msra.mxu0 0
      %1659 = vmatpush.bf16.msra.mxu0 0
      %1660 = vmatpush.bf16.msra.mxu0 0
      %1661 = vmatpush.bf16.msra.mxu0 %v1586
      %1662 = vmatmul.bf16.gmra.mxu0 %v1600
      %v1663 = vpop.f32.mrf.mxu0
      %v1664 = vadd.f32 0.0, %v1663
      %v1665 = vpop.f32.mrf.mxu0
      %1666 = vdwg.mxu0
      %1667 = vmatpush.bf16.msra.mxu0 0
      %1668 = vmatpush.bf16.msra.mxu0 0
      %1669 = vmatpush.bf16.msra.mxu0 0
      %1670 = vmatpush.bf16.msra.mxu0 0
      %1671 = vmatpush.bf16.msra.mxu0 0
      %1672 = vmatpush.bf16.msra.mxu0 0
      %1673 = vmatpush.bf16.msra.mxu0 0
      %1674 = vmatpush.bf16.msra.mxu0 %v1587
      %1675 = vmatmul.bf16.gmra.mxu0 %v1600
      %v1676 = vpop.f32.mrf.mxu0
      %v1677 = vadd.f32 0.0, %v1676
      %v1678 = vpop.f32.mrf.mxu0
      %1679 = vdwg.mxu0
      %1680 = vmatpush.bf16.msra.mxu0 0
      %1681 = vmatpush.bf16.msra.mxu0 0
      %1682 = vmatpush.bf16.msra.mxu0 0
      %1683 = vmatpush.bf16.msra.mxu0 0
      %1684 = vmatpush.bf16.msra.mxu0 0
      %1685 = vmatpush.bf16.msra.mxu0 0
      %1686 = vmatpush.bf16.msra.mxu0 0
      %1687 = vmatpush.bf16.msra.mxu0 %v1588
      %1688 = vmatmul.bf16.gmra.mxu0 %v1600
      %v1689 = vpop.f32.mrf.mxu0
      %v1690 = vadd.f32 0.0, %v1689
      %v1691 = vpop.f32.mrf.mxu0
      %1692 = vdwg.mxu0
      %1693 = vmatpush.bf16.msra.mxu0 0
      %1694 = vmatpush.bf16.msra.mxu0 0
      %1695 = vmatpush.bf16.msra.mxu0 0
      %1696 = vmatpush.bf16.msra.mxu0 0
      %1697 = vmatpush.bf16.msra.mxu0 0
      %1698 = vmatpush.bf16.msra.mxu0 0
      %1699 = vmatpush.bf16.msra.mxu0 0
      %1700 = vmatpush.bf16.msra.mxu0 %v1589
      %1701 = vmatmul.bf16.gmra.mxu0 %v1600
      %v1702 = vpop.f32.mrf.mxu0
      %v1703 = vadd.f32 0.0, %v1702
      %v1704 = vpop.f32.mrf.mxu0
      %1705 = vdwg.mxu0
      %1706 = vmatpush.bf16.msra.mxu0 0
      %1707 = vmatpush.bf16.msra.mxu0 0
      %1708 = vmatpush.bf16.msra.mxu0 0
      %1709 = vmatpush.bf16.msra.mxu0 0
      %1710 = vmatpush.bf16.msra.mxu0 0
      %1711 = vmatpush.bf16.msra.mxu0 0
      %1712 = vmatpush.bf16.msra.mxu0 0
      %1713 = vmatpush.bf16.msra.mxu0 %v1580
      %1714 = vmatmul.bf16.gmra.mxu0 %v1600
      %v1715 = vpop.f32.mrf.mxu0
      %v1716 = vadd.f32 0.0, %v1715
      %v1717 = vpop.f32.mrf.mxu0
      %1718 = vdwg.mxu0
      %v1719 = vadd.f32 %v1552, %v1612
      %v1720 = vadd.f32 %v1553, %v1625
      %v1721 = vadd.f32 %v1554, %v1638
      %v1722 = vadd.f32 %v1555, %v1651
      %v1723 = vadd.f32 %v1556, %v1664
      %v1724 = vadd.f32 %v1557, %v1677
      %v1725 = vadd.f32 %v1558, %v1690
      %v1726 = vadd.f32 %v1559, %v1703
      %v1727 = vadd.f32 %v1560, %v1716
      %s1728 = scalar_lea.vmem %s3, 20
      %v1729 = vld [vmem:[%s1728] sm:$0xf]
      %1730 = vrot.lane.b32.xlu0 %v929, 92
      %v1731 = vpop.permute.xlu0 %1730
      %1732 = vrot.lane.b32.xlu0 %v930, 92
      %v1733 = vpop.permute.xlu0 %1732
      %1734 = vrot.lane.b32.xlu0 %v931, 92
      %v1735 = vpop.permute.xlu0 %1734
      %1736 = vrot.lane.b32.xlu0 %v932, 92
      %v1737 = vpop.permute.xlu0 %1736
      %1738 = vrot.lane.b32.xlu0 %v933, 92
      %v1739 = vpop.permute.xlu0 %1738
      %1740 = vrot.lane.b32.xlu0 %v934, 92
      %v1741 = vpop.permute.xlu0 %1740
      %1742 = vrot.lane.b32.xlu0 %v935, 92
      %v1743 = vpop.permute.xlu0 %1742
      %1744 = vrot.lane.b32.xlu0 %v936, 92
      %v1745 = vpop.permute.xlu0 %1744
      %1746 = vrot.lane.b32.xlu0 %v937, 92
      %v1747 = vpop.permute.xlu0 %1746
      %vm1748 = vcmask 752640
      %v1749 = vsel %vm1748, %v1731, %v1733
      %v1750 = vsel %vm1748, %v1733, %v1735
      %v1751 = vsel %vm1748, %v1735, %v1737
      %v1752 = vsel %vm1748, %v1737, %v1739
      %v1753 = vsel %vm1748, %v1739, %v1741
      %v1754 = vsel %vm1748, %v1741, %v1743
      %v1755 = vsel %vm1748, %v1743, %v1745
      %v1756 = vsel %vm1748, %v1745, %v1747
      %v1767 = vsel %vm986, %v1729, 0
      %1769 = vmatpush.bf16.msra.mxu0 0
      %1770 = vmatpush.bf16.msra.mxu0 0
      %1771 = vmatpush.bf16.msra.mxu0 0
      %1772 = vmatpush.bf16.msra.mxu0 0
      %1773 = vmatpush.bf16.msra.mxu0 0
      %1774 = vmatpush.bf16.msra.mxu0 0
      %1775 = vmatpush.bf16.msra.mxu0 0
      %1776 = vmatpush.bf16.msra.mxu0 %v1749
      %1777 = vmatmul.bf16.gmra.mxu0 %v1767
      %v1778 = vpop.f32.mrf.mxu0
      %v1779 = vadd.f32 0.0, %v1778
      %v1780 = vpop.f32.mrf.mxu0
      %1781 = vdwg.mxu0
      %1782 = vmatpush.bf16.msra.mxu0 0
      %1783 = vmatpush.bf16.msra.mxu0 0
      %1784 = vmatpush.bf16.msra.mxu0 0
      %1785 = vmatpush.bf16.msra.mxu0 0
      %1786 = vmatpush.bf16.msra.mxu0 0
      %1787 = vmatpush.bf16.msra.mxu0 0
      %1788 = vmatpush.bf16.msra.mxu0 0
      %1789 = vmatpush.bf16.msra.mxu0 %v1750
      %1790 = vmatmul.bf16.gmra.mxu0 %v1767
      %v1791 = vpop.f32.mrf.mxu0
      %v1792 = vadd.f32 0.0, %v1791
      %v1793 = vpop.f32.mrf.mxu0
      %1794 = vdwg.mxu0
      %1795 = vmatpush.bf16.msra.mxu0 0
      %1796 = vmatpush.bf16.msra.mxu0 0
      %1797 = vmatpush.bf16.msra.mxu0 0
      %1798 = vmatpush.bf16.msra.mxu0 0
      %1799 = vmatpush.bf16.msra.mxu0 0
      %1800 = vmatpush.bf16.msra.mxu0 0
      %1801 = vmatpush.bf16.msra.mxu0 0
      %1802 = vmatpush.bf16.msra.mxu0 %v1751
      %1803 = vmatmul.bf16.gmra.mxu0 %v1767
      %v1804 = vpop.f32.mrf.mxu0
      %v1805 = vadd.f32 0.0, %v1804
      %v1806 = vpop.f32.mrf.mxu0
      %1807 = vdwg.mxu0
      %1808 = vmatpush.bf16.msra.mxu0 0
      %1809 = vmatpush.bf16.msra.mxu0 0
      %1810 = vmatpush.bf16.msra.mxu0 0
      %1811 = vmatpush.bf16.msra.mxu0 0
      %1812 = vmatpush.bf16.msra.mxu0 0
      %1813 = vmatpush.bf16.msra.mxu0 0
      %1814 = vmatpush.bf16.msra.mxu0 0
      %1815 = vmatpush.bf16.msra.mxu0 %v1752
      %1816 = vmatmul.bf16.gmra.mxu0 %v1767
      %v1817 = vpop.f32.mrf.mxu0
      %v1818 = vadd.f32 0.0, %v1817
      %v1819 = vpop.f32.mrf.mxu0
      %1820 = vdwg.mxu0
      %1821 = vmatpush.bf16.msra.mxu0 0
      %1822 = vmatpush.bf16.msra.mxu0 0
      %1823 = vmatpush.bf16.msra.mxu0 0
      %1824 = vmatpush.bf16.msra.mxu0 0
      %1825 = vmatpush.bf16.msra.mxu0 0
      %1826 = vmatpush.bf16.msra.mxu0 0
      %1827 = vmatpush.bf16.msra.mxu0 0
      %1828 = vmatpush.bf16.msra.mxu0 %v1753
      %1829 = vmatmul.bf16.gmra.mxu0 %v1767
      %v1830 = vpop.f32.mrf.mxu0
      %v1831 = vadd.f32 0.0, %v1830
      %v1832 = vpop.f32.mrf.mxu0
      %1833 = vdwg.mxu0
      %1834 = vmatpush.bf16.msra.mxu0 0
      %1835 = vmatpush.bf16.msra.mxu0 0
      %1836 = vmatpush.bf16.msra.mxu0 0
      %1837 = vmatpush.bf16.msra.mxu0 0
      %1838 = vmatpush.bf16.msra.mxu0 0
      %1839 = vmatpush.bf16.msra.mxu0 0
      %1840 = vmatpush.bf16.msra.mxu0 0
      %1841 = vmatpush.bf16.msra.mxu0 %v1754
      %1842 = vmatmul.bf16.gmra.mxu0 %v1767
      %v1843 = vpop.f32.mrf.mxu0
      %v1844 = vadd.f32 0.0, %v1843
      %v1845 = vpop.f32.mrf.mxu0
      %1846 = vdwg.mxu0
      %1847 = vmatpush.bf16.msra.mxu0 0
      %1848 = vmatpush.bf16.msra.mxu0 0
      %1849 = vmatpush.bf16.msra.mxu0 0
      %1850 = vmatpush.bf16.msra.mxu0 0
      %1851 = vmatpush.bf16.msra.mxu0 0
      %1852 = vmatpush.bf16.msra.mxu0 0
      %1853 = vmatpush.bf16.msra.mxu0 0
      %1854 = vmatpush.bf16.msra.mxu0 %v1755
      %1855 = vmatmul.bf16.gmra.mxu0 %v1767
      %v1856 = vpop.f32.mrf.mxu0
      %v1857 = vadd.f32 0.0, %v1856
      %v1858 = vpop.f32.mrf.mxu0
      %1859 = vdwg.mxu0
      %1860 = vmatpush.bf16.msra.mxu0 0
      %1861 = vmatpush.bf16.msra.mxu0 0
      %1862 = vmatpush.bf16.msra.mxu0 0
      %1863 = vmatpush.bf16.msra.mxu0 0
      %1864 = vmatpush.bf16.msra.mxu0 0
      %1865 = vmatpush.bf16.msra.mxu0 0
      %1866 = vmatpush.bf16.msra.mxu0 0
      %1867 = vmatpush.bf16.msra.mxu0 %v1756
      %1868 = vmatmul.bf16.gmra.mxu0 %v1767
      %v1869 = vpop.f32.mrf.mxu0
      %v1870 = vadd.f32 0.0, %v1869
      %v1871 = vpop.f32.mrf.mxu0
      %1872 = vdwg.mxu0
      %1873 = vmatpush.bf16.msra.mxu0 0
      %1874 = vmatpush.bf16.msra.mxu0 0
      %1875 = vmatpush.bf16.msra.mxu0 0
      %1876 = vmatpush.bf16.msra.mxu0 0
      %1877 = vmatpush.bf16.msra.mxu0 0
      %1878 = vmatpush.bf16.msra.mxu0 0
      %1879 = vmatpush.bf16.msra.mxu0 0
      %1880 = vmatpush.bf16.msra.mxu0 %v1747
      %1881 = vmatmul.bf16.gmra.mxu0 %v1767
      %v1882 = vpop.f32.mrf.mxu0
      %v1883 = vadd.f32 0.0, %v1882
      %v1884 = vpop.f32.mrf.mxu0
      %1885 = vdwg.mxu0
      %v1886 = vadd.f32 %v1719, %v1779
      %v1887 = vadd.f32 %v1720, %v1792
      %v1888 = vadd.f32 %v1721, %v1805
      %v1889 = vadd.f32 %v1722, %v1818
      %v1890 = vadd.f32 %v1723, %v1831
      %v1891 = vadd.f32 %v1724, %v1844
      %v1892 = vadd.f32 %v1725, %v1857
      %v1893 = vadd.f32 %v1726, %v1870
      %v1894 = vadd.f32 %v1727, %v1883
      %v1895 = vld [vmem:[#allocation2] sm:$0xff]
      %v1896 = vld [vmem:[#allocation2 + $0x8] sm:$0xff]
      %v1897 = vld [vmem:[#allocation2 + $0x10] sm:$0xff]
      %v1898 = vld [vmem:[#allocation2 + $0x18] sm:$0xff]
      %v1899 = vld [vmem:[#allocation2 + $0x20] sm:$0xff]
      %v1900 = vld [vmem:[#allocation2 + $0x28] sm:$0xff]
      %v1901 = vld [vmem:[#allocation2 + $0x30] sm:$0xff]
      %v1902 = vld [vmem:[#allocation2 + $0x38] sm:$0xff]
      %v1903 = vld [vmem:[#allocation2 + $0x40] sm:$0xff]
      %v1904 = vld [vmem:[#allocation2 + $0x48] sm:$0xff]
      %v1905 = vld [vmem:[#allocation2 + $0x50] sm:$0xff]
      %v1906 = vld [vmem:[#allocation2 + $0x58] sm:$0xff]
      %v1907 = vld [vmem:[#allocation2 + $0x60] sm:$0xff]
      %v1908 = vld [vmem:[#allocation2 + $0x68] sm:$0xff]
      %v1909 = vld [vmem:[#allocation2 + $0x70] sm:$0xff]
      %v1910 = vld [vmem:[#allocation2 + $0x78] sm:$0xff]
      %v1911 = vld [vmem:[#allocation2 + $0x80] sm:$0xff]
      %v1912 = vld [vmem:[#allocation2 + $0x88] sm:$0xff]
      %v1913 = vld [vmem:[#allocation2 + $0x90] sm:$0xff]
      %v1914 = vld [vmem:[#allocation2 + $0x98] sm:$0xff]
      %v1915 = vpack.c.bf16 %v1905, %v1895
      %v1916 = vpack.c.bf16 %v1906, %v1896
      %v1917 = vpack.c.bf16 %v1907, %v1897
      %v1918 = vpack.c.bf16 %v1908, %v1898
      %v1919 = vpack.c.bf16 %v1909, %v1899
      %v1920 = vpack.c.bf16 %v1910, %v1900
      %v1921 = vpack.c.bf16 %v1911, %v1901
      %v1922 = vpack.c.bf16 %v1912, %v1902
      %v1923 = vpack.c.bf16 %v1913, %v1903
      %v1924 = vpack.c.bf16 %v1914, %v1904
      %s1925 = scalar_lea.vmem %s3, 24
      %v1926 = vld [vmem:[%s1925] sm:$0xf]
      %1937 = vrot.lane.b32.xlu0 %v1915, 60
      %v1938 = vpop.permute.xlu0 %1937
      %1939 = vrot.lane.b32.xlu0 %v1916, 60
      %v1940 = vpop.permute.xlu0 %1939
      %1941 = vrot.lane.b32.xlu0 %v1917, 60
      %v1942 = vpop.permute.xlu0 %1941
      %1943 = vrot.lane.b32.xlu0 %v1918, 60
      %v1944 = vpop.permute.xlu0 %1943
      %1945 = vrot.lane.b32.xlu0 %v1919, 60
      %v1946 = vpop.permute.xlu0 %1945
      %1947 = vrot.lane.b32.xlu0 %v1920, 60
      %v1948 = vpop.permute.xlu0 %1947
      %1949 = vrot.lane.b32.xlu0 %v1921, 60
      %v1950 = vpop.permute.xlu0 %1949
      %1951 = vrot.lane.b32.xlu0 %v1922, 60
      %v1952 = vpop.permute.xlu0 %1951
      %1953 = vrot.lane.b32.xlu0 %v1923, 60
      %v1954 = vpop.permute.xlu0 %1953
      %1955 = vrot.lane.b32.xlu0 %v1924, 60
      %v1956 = vpop.permute.xlu0 %1955
      %vm1957 = vcmask 490496
      %v1958 = vsel %vm1957, %v1938, %v1940
      %v1959 = vsel %vm1957, %v1940, %v1942
      %v1960 = vsel %vm1957, %v1942, %v1944
      %v1961 = vsel %vm1957, %v1944, %v1946
      %v1962 = vsel %vm1957, %v1946, %v1948
      %v1963 = vsel %vm1957, %v1948, %v1950
      %v1964 = vsel %vm1957, %v1950, %v1952
      %v1965 = vsel %vm1957, %v1952, %v1954
      %v1966 = vsel %vm1957, %v1954, %v1956
      %v1977 = vsel %vm986, %v1926, 0
      %1979 = vmatpush.bf16.msra.mxu0 0
      %1980 = vmatpush.bf16.msra.mxu0 0
      %1981 = vmatpush.bf16.msra.mxu0 0
      %1982 = vmatpush.bf16.msra.mxu0 0
      %1983 = vmatpush.bf16.msra.mxu0 0
      %1984 = vmatpush.bf16.msra.mxu0 0
      %1985 = vmatpush.bf16.msra.mxu0 0
      %1986 = vmatpush.bf16.msra.mxu0 %v1958
      %1987 = vmatmul.bf16.gmra.mxu0 %v1977
      %v1988 = vpop.f32.mrf.mxu0
      %v1989 = vadd.f32 0.0, %v1988
      %v1990 = vpop.f32.mrf.mxu0
      %1991 = vdwg.mxu0
      %1992 = vmatpush.bf16.msra.mxu0 0
      %1993 = vmatpush.bf16.msra.mxu0 0
      %1994 = vmatpush.bf16.msra.mxu0 0
      %1995 = vmatpush.bf16.msra.mxu0 0
      %1996 = vmatpush.bf16.msra.mxu0 0
      %1997 = vmatpush.bf16.msra.mxu0 0
      %1998 = vmatpush.bf16.msra.mxu0 0
      %1999 = vmatpush.bf16.msra.mxu0 %v1959
      %2000 = vmatmul.bf16.gmra.mxu0 %v1977
      %v2001 = vpop.f32.mrf.mxu0
      %v2002 = vadd.f32 0.0, %v2001
      %v2003 = vpop.f32.mrf.mxu0
      %2004 = vdwg.mxu0
      %2005 = vmatpush.bf16.msra.mxu0 0
      %2006 = vmatpush.bf16.msra.mxu0 0
      %2007 = vmatpush.bf16.msra.mxu0 0
      %2008 = vmatpush.bf16.msra.mxu0 0
      %2009 = vmatpush.bf16.msra.mxu0 0
      %2010 = vmatpush.bf16.msra.mxu0 0
      %2011 = vmatpush.bf16.msra.mxu0 0
      %2012 = vmatpush.bf16.msra.mxu0 %v1960
      %2013 = vmatmul.bf16.gmra.mxu0 %v1977
      %v2014 = vpop.f32.mrf.mxu0
      %v2015 = vadd.f32 0.0, %v2014
      %v2016 = vpop.f32.mrf.mxu0
      %2017 = vdwg.mxu0
      %2018 = vmatpush.bf16.msra.mxu0 0
      %2019 = vmatpush.bf16.msra.mxu0 0
      %2020 = vmatpush.bf16.msra.mxu0 0
      %2021 = vmatpush.bf16.msra.mxu0 0
      %2022 = vmatpush.bf16.msra.mxu0 0
      %2023 = vmatpush.bf16.msra.mxu0 0
      %2024 = vmatpush.bf16.msra.mxu0 0
      %2025 = vmatpush.bf16.msra.mxu0 %v1961
      %2026 = vmatmul.bf16.gmra.mxu0 %v1977
      %v2027 = vpop.f32.mrf.mxu0
      %v2028 = vadd.f32 0.0, %v2027
      %v2029 = vpop.f32.mrf.mxu0
      %2030 = vdwg.mxu0
      %2031 = vmatpush.bf16.msra.mxu0 0
      %2032 = vmatpush.bf16.msra.mxu0 0
      %2033 = vmatpush.bf16.msra.mxu0 0
      %2034 = vmatpush.bf16.msra.mxu0 0
      %2035 = vmatpush.bf16.msra.mxu0 0
      %2036 = vmatpush.bf16.msra.mxu0 0
      %2037 = vmatpush.bf16.msra.mxu0 0
      %2038 = vmatpush.bf16.msra.mxu0 %v1962
      %2039 = vmatmul.bf16.gmra.mxu0 %v1977
      %v2040 = vpop.f32.mrf.mxu0
      %v2041 = vadd.f32 0.0, %v2040
      %v2042 = vpop.f32.mrf.mxu0
      %2043 = vdwg.mxu0
      %2044 = vmatpush.bf16.msra.mxu0 0
      %2045 = vmatpush.bf16.msra.mxu0 0
      %2046 = vmatpush.bf16.msra.mxu0 0
      %2047 = vmatpush.bf16.msra.mxu0 0
      %2048 = vmatpush.bf16.msra.mxu0 0
      %2049 = vmatpush.bf16.msra.mxu0 0
      %2050 = vmatpush.bf16.msra.mxu0 0
      %2051 = vmatpush.bf16.msra.mxu0 %v1963
      %2052 = vmatmul.bf16.gmra.mxu0 %v1977
      %v2053 = vpop.f32.mrf.mxu0
      %v2054 = vadd.f32 0.0, %v2053
      %v2055 = vpop.f32.mrf.mxu0
      %2056 = vdwg.mxu0
      %2057 = vmatpush.bf16.msra.mxu0 0
      %2058 = vmatpush.bf16.msra.mxu0 0
      %2059 = vmatpush.bf16.msra.mxu0 0
      %2060 = vmatpush.bf16.msra.mxu0 0
      %2061 = vmatpush.bf16.msra.mxu0 0
      %2062 = vmatpush.bf16.msra.mxu0 0
      %2063 = vmatpush.bf16.msra.mxu0 0
      %2064 = vmatpush.bf16.msra.mxu0 %v1964
      %2065 = vmatmul.bf16.gmra.mxu0 %v1977
      %v2066 = vpop.f32.mrf.mxu0
      %v2067 = vadd.f32 0.0, %v2066
      %v2068 = vpop.f32.mrf.mxu0
      %2069 = vdwg.mxu0
      %2070 = vmatpush.bf16.msra.mxu0 0
      %2071 = vmatpush.bf16.msra.mxu0 0
      %2072 = vmatpush.bf16.msra.mxu0 0
      %2073 = vmatpush.bf16.msra.mxu0 0
      %2074 = vmatpush.bf16.msra.mxu0 0
      %2075 = vmatpush.bf16.msra.mxu0 0
      %2076 = vmatpush.bf16.msra.mxu0 0
      %2077 = vmatpush.bf16.msra.mxu0 %v1965
      %2078 = vmatmul.bf16.gmra.mxu0 %v1977
      %v2079 = vpop.f32.mrf.mxu0
      %v2080 = vadd.f32 0.0, %v2079
      %v2081 = vpop.f32.mrf.mxu0
      %2082 = vdwg.mxu0
      %2083 = vmatpush.bf16.msra.mxu0 0
      %2084 = vmatpush.bf16.msra.mxu0 0
      %2085 = vmatpush.bf16.msra.mxu0 0
      %2086 = vmatpush.bf16.msra.mxu0 0
      %2087 = vmatpush.bf16.msra.mxu0 0
      %2088 = vmatpush.bf16.msra.mxu0 0
      %2089 = vmatpush.bf16.msra.mxu0 0
      %2090 = vmatpush.bf16.msra.mxu0 %v1966
      %2091 = vmatmul.bf16.gmra.mxu0 %v1977
      %v2092 = vpop.f32.mrf.mxu0
      %v2093 = vadd.f32 0.0, %v2092
      %v2094 = vpop.f32.mrf.mxu0
      %2095 = vdwg.mxu0
      %v2096 = vadd.f32 %v1886, %v1989
      %v2097 = vadd.f32 %v1887, %v2002
      %v2098 = vadd.f32 %v1888, %v2015
      %v2099 = vadd.f32 %v1889, %v2028
      %v2100 = vadd.f32 %v1890, %v2041
      %v2101 = vadd.f32 %v1891, %v2054
      %v2102 = vadd.f32 %v1892, %v2067
      %v2103 = vadd.f32 %v1893, %v2080
      %v2104 = vadd.f32 %v1894, %v2093
      %s2105 = scalar_lea.vmem %s3, 28
      %v2106 = vld [vmem:[%s2105] sm:$0xf]
      %2107 = vrot.lane.b32.xlu0 %v1915, 59
      %v2108 = vpop.permute.xlu0 %2107
      %2109 = vrot.lane.b32.xlu0 %v1916, 59
      %v2110 = vpop.permute.xlu0 %2109
      %2111 = vrot.lane.b32.xlu0 %v1917, 59
      %v2112 = vpop.permute.xlu0 %2111
      %2113 = vrot.lane.b32.xlu0 %v1918, 59
      %v2114 = vpop.permute.xlu0 %2113
      %2115 = vrot.lane.b32.xlu0 %v1919, 59
      %v2116 = vpop.permute.xlu0 %2115
      %2117 = vrot.lane.b32.xlu0 %v1920, 59
      %v2118 = vpop.permute.xlu0 %2117
      %2119 = vrot.lane.b32.xlu0 %v1921, 59
      %v2120 = vpop.permute.xlu0 %2119
      %2121 = vrot.lane.b32.xlu0 %v1922, 59
      %v2122 = vpop.permute.xlu0 %2121
      %2123 = vrot.lane.b32.xlu0 %v1923, 59
      %v2124 = vpop.permute.xlu0 %2123
      %2125 = vrot.lane.b32.xlu0 %v1924, 59
      %v2126 = vpop.permute.xlu0 %2125
      %vm2127 = vcmask 482304
      %v2128 = vsel %vm2127, %v2108, %v2110
      %v2129 = vsel %vm2127, %v2110, %v2112
      %v2130 = vsel %vm2127, %v2112, %v2114
      %v2131 = vsel %vm2127, %v2114, %v2116
      %v2132 = vsel %vm2127, %v2116, %v2118
      %v2133 = vsel %vm2127, %v2118, %v2120
      %v2134 = vsel %vm2127, %v2120, %v2122
      %v2135 = vsel %vm2127, %v2122, %v2124
      %v2136 = vsel %vm2127, %v2124, %v2126
      %v2147 = vsel %vm986, %v2106, 0
      %2149 = vmatpush.bf16.msra.mxu0 0
      %2150 = vmatpush.bf16.msra.mxu0 0
      %2151 = vmatpush.bf16.msra.mxu0 0
      %2152 = vmatpush.bf16.msra.mxu0 0
      %2153 = vmatpush.bf16.msra.mxu0 0
      %2154 = vmatpush.bf16.msra.mxu0 0
      %2155 = vmatpush.bf16.msra.mxu0 0
      %2156 = vmatpush.bf16.msra.mxu0 %v2128
      %2157 = vmatmul.bf16.gmra.mxu0 %v2147
      %v2158 = vpop.f32.mrf.mxu0
      %v2159 = vadd.f32 0.0, %v2158
      %v2160 = vpop.f32.mrf.mxu0
      %2161 = vdwg.mxu0
      %2162 = vmatpush.bf16.msra.mxu0 0
      %2163 = vmatpush.bf16.msra.mxu0 0
      %2164 = vmatpush.bf16.msra.mxu0 0
      %2165 = vmatpush.bf16.msra.mxu0 0
      %2166 = vmatpush.bf16.msra.mxu0 0
      %2167 = vmatpush.bf16.msra.mxu0 0
      %2168 = vmatpush.bf16.msra.mxu0 0
      %2169 = vmatpush.bf16.msra.mxu0 %v2129
      %2170 = vmatmul.bf16.gmra.mxu0 %v2147
      %v2171 = vpop.f32.mrf.mxu0
      %v2172 = vadd.f32 0.0, %v2171
      %v2173 = vpop.f32.mrf.mxu0
      %2174 = vdwg.mxu0
      %2175 = vmatpush.bf16.msra.mxu0 0
      %2176 = vmatpush.bf16.msra.mxu0 0
      %2177 = vmatpush.bf16.msra.mxu0 0
      %2178 = vmatpush.bf16.msra.mxu0 0
      %2179 = vmatpush.bf16.msra.mxu0 0
      %2180 = vmatpush.bf16.msra.mxu0 0
      %2181 = vmatpush.bf16.msra.mxu0 0
      %2182 = vmatpush.bf16.msra.mxu0 %v2130
      %2183 = vmatmul.bf16.gmra.mxu0 %v2147
      %v2184 = vpop.f32.mrf.mxu0
      %v2185 = vadd.f32 0.0, %v2184
      %v2186 = vpop.f32.mrf.mxu0
      %2187 = vdwg.mxu0
      %2188 = vmatpush.bf16.msra.mxu0 0
      %2189 = vmatpush.bf16.msra.mxu0 0
      %2190 = vmatpush.bf16.msra.mxu0 0
      %2191 = vmatpush.bf16.msra.mxu0 0
      %2192 = vmatpush.bf16.msra.mxu0 0
      %2193 = vmatpush.bf16.msra.mxu0 0
      %2194 = vmatpush.bf16.msra.mxu0 0
      %2195 = vmatpush.bf16.msra.mxu0 %v2131
      %2196 = vmatmul.bf16.gmra.mxu0 %v2147
      %v2197 = vpop.f32.mrf.mxu0
      %v2198 = vadd.f32 0.0, %v2197
      %v2199 = vpop.f32.mrf.mxu0
      %2200 = vdwg.mxu0
      %2201 = vmatpush.bf16.msra.mxu0 0
      %2202 = vmatpush.bf16.msra.mxu0 0
      %2203 = vmatpush.bf16.msra.mxu0 0
      %2204 = vmatpush.bf16.msra.mxu0 0
      %2205 = vmatpush.bf16.msra.mxu0 0
      %2206 = vmatpush.bf16.msra.mxu0 0
      %2207 = vmatpush.bf16.msra.mxu0 0
      %2208 = vmatpush.bf16.msra.mxu0 %v2132
      %2209 = vmatmul.bf16.gmra.mxu0 %v2147
      %v2210 = vpop.f32.mrf.mxu0
      %v2211 = vadd.f32 0.0, %v2210
      %v2212 = vpop.f32.mrf.mxu0
      %2213 = vdwg.mxu0
      %2214 = vmatpush.bf16.msra.mxu0 0
      %2215 = vmatpush.bf16.msra.mxu0 0
      %2216 = vmatpush.bf16.msra.mxu0 0
      %2217 = vmatpush.bf16.msra.mxu0 0
      %2218 = vmatpush.bf16.msra.mxu0 0
      %2219 = vmatpush.bf16.msra.mxu0 0
      %2220 = vmatpush.bf16.msra.mxu0 0
      %2221 = vmatpush.bf16.msra.mxu0 %v2133
      %2222 = vmatmul.bf16.gmra.mxu0 %v2147
      %v2223 = vpop.f32.mrf.mxu0
      %v2224 = vadd.f32 0.0, %v2223
      %v2225 = vpop.f32.mrf.mxu0
      %2226 = vdwg.mxu0
      %2227 = vmatpush.bf16.msra.mxu0 0
      %2228 = vmatpush.bf16.msra.mxu0 0
      %2229 = vmatpush.bf16.msra.mxu0 0
      %2230 = vmatpush.bf16.msra.mxu0 0
      %2231 = vmatpush.bf16.msra.mxu0 0
      %2232 = vmatpush.bf16.msra.mxu0 0
      %2233 = vmatpush.bf16.msra.mxu0 0
      %2234 = vmatpush.bf16.msra.mxu0 %v2134
      %2235 = vmatmul.bf16.gmra.mxu0 %v2147
      %v2236 = vpop.f32.mrf.mxu0
      %v2237 = vadd.f32 0.0, %v2236
      %v2238 = vpop.f32.mrf.mxu0
      %2239 = vdwg.mxu0
      %2240 = vmatpush.bf16.msra.mxu0 0
      %2241 = vmatpush.bf16.msra.mxu0 0
      %2242 = vmatpush.bf16.msra.mxu0 0
      %2243 = vmatpush.bf16.msra.mxu0 0
      %2244 = vmatpush.bf16.msra.mxu0 0
      %2245 = vmatpush.bf16.msra.mxu0 0
      %2246 = vmatpush.bf16.msra.mxu0 0
      %2247 = vmatpush.bf16.msra.mxu0 %v2135
      %2248 = vmatmul.bf16.gmra.mxu0 %v2147
      %v2249 = vpop.f32.mrf.mxu0
      %v2250 = vadd.f32 0.0, %v2249
      %v2251 = vpop.f32.mrf.mxu0
      %2252 = vdwg.mxu0
      %2253 = vmatpush.bf16.msra.mxu0 0
      %2254 = vmatpush.bf16.msra.mxu0 0
      %2255 = vmatpush.bf16.msra.mxu0 0
      %2256 = vmatpush.bf16.msra.mxu0 0
      %2257 = vmatpush.bf16.msra.mxu0 0
      %2258 = vmatpush.bf16.msra.mxu0 0
      %2259 = vmatpush.bf16.msra.mxu0 0
      %2260 = vmatpush.bf16.msra.mxu0 %v2136
      %2261 = vmatmul.bf16.gmra.mxu0 %v2147
      %v2262 = vpop.f32.mrf.mxu0
      %v2263 = vadd.f32 0.0, %v2262
      %v2264 = vpop.f32.mrf.mxu0
      %2265 = vdwg.mxu0
      %v2266 = vadd.f32 %v2096, %v2159
      %v2267 = vadd.f32 %v2097, %v2172
      %v2268 = vadd.f32 %v2098, %v2185
      %v2269 = vadd.f32 %v2099, %v2198
      %v2270 = vadd.f32 %v2100, %v2211
      %v2271 = vadd.f32 %v2101, %v2224
      %v2272 = vadd.f32 %v2102, %v2237
      %v2273 = vadd.f32 %v2103, %v2250
      %v2274 = vadd.f32 %v2104, %v2263
      %s2275 = scalar_lea.vmem %s3, 32
      %v2276 = vld [vmem:[%s2275] sm:$0xf]
      %2277 = vrot.lane.b32.xlu0 %v1915, 58
      %v2278 = vpop.permute.xlu0 %2277
      %2279 = vrot.lane.b32.xlu0 %v1916, 58
      %v2280 = vpop.permute.xlu0 %2279
      %2281 = vrot.lane.b32.xlu0 %v1917, 58
      %v2282 = vpop.permute.xlu0 %2281
      %2283 = vrot.lane.b32.xlu0 %v1918, 58
      %v2284 = vpop.permute.xlu0 %2283
      %2285 = vrot.lane.b32.xlu0 %v1919, 58
      %v2286 = vpop.permute.xlu0 %2285
      %2287 = vrot.lane.b32.xlu0 %v1920, 58
      %v2288 = vpop.permute.xlu0 %2287
      %2289 = vrot.lane.b32.xlu0 %v1921, 58
      %v2290 = vpop.permute.xlu0 %2289
      %2291 = vrot.lane.b32.xlu0 %v1922, 58
      %v2292 = vpop.permute.xlu0 %2291
      %2293 = vrot.lane.b32.xlu0 %v1923, 58
      %v2294 = vpop.permute.xlu0 %2293
      %2295 = vrot.lane.b32.xlu0 %v1924, 58
      %v2296 = vpop.permute.xlu0 %2295
      %vm2297 = vcmask 474112
      %v2298 = vsel %vm2297, %v2278, %v2280
      %v2299 = vsel %vm2297, %v2280, %v2282
      %v2300 = vsel %vm2297, %v2282, %v2284
      %v2301 = vsel %vm2297, %v2284, %v2286
      %v2302 = vsel %vm2297, %v2286, %v2288
      %v2303 = vsel %vm2297, %v2288, %v2290
      %v2304 = vsel %vm2297, %v2290, %v2292
      %v2305 = vsel %vm2297, %v2292, %v2294
      %v2306 = vsel %vm2297, %v2294, %v2296
      %v2317 = vsel %vm986, %v2276, 0
      %2319 = vmatpush.bf16.msra.mxu0 0
      %2320 = vmatpush.bf16.msra.mxu0 0
      %2321 = vmatpush.bf16.msra.mxu0 0
      %2322 = vmatpush.bf16.msra.mxu0 0
      %2323 = vmatpush.bf16.msra.mxu0 0
      %2324 = vmatpush.bf16.msra.mxu0 0
      %2325 = vmatpush.bf16.msra.mxu0 0
      %2326 = vmatpush.bf16.msra.mxu0 %v2298
      %2327 = vmatmul.bf16.gmra.mxu0 %v2317
      %v2328 = vpop.f32.mrf.mxu0
      %v2329 = vadd.f32 0.0, %v2328
      %v2330 = vpop.f32.mrf.mxu0
      %2331 = vdwg.mxu0
      %2332 = vmatpush.bf16.msra.mxu0 0
      %2333 = vmatpush.bf16.msra.mxu0 0
      %2334 = vmatpush.bf16.msra.mxu0 0
      %2335 = vmatpush.bf16.msra.mxu0 0
      %2336 = vmatpush.bf16.msra.mxu0 0
      %2337 = vmatpush.bf16.msra.mxu0 0
      %2338 = vmatpush.bf16.msra.mxu0 0
      %2339 = vmatpush.bf16.msra.mxu0 %v2299
      %2340 = vmatmul.bf16.gmra.mxu0 %v2317
      %v2341 = vpop.f32.mrf.mxu0
      %v2342 = vadd.f32 0.0, %v2341
      %v2343 = vpop.f32.mrf.mxu0
      %2344 = vdwg.mxu0
      %2345 = vmatpush.bf16.msra.mxu0 0
      %2346 = vmatpush.bf16.msra.mxu0 0
      %2347 = vmatpush.bf16.msra.mxu0 0
      %2348 = vmatpush.bf16.msra.mxu0 0
      %2349 = vmatpush.bf16.msra.mxu0 0
      %2350 = vmatpush.bf16.msra.mxu0 0
      %2351 = vmatpush.bf16.msra.mxu0 0
      %2352 = vmatpush.bf16.msra.mxu0 %v2300
      %2353 = vmatmul.bf16.gmra.mxu0 %v2317
      %v2354 = vpop.f32.mrf.mxu0
      %v2355 = vadd.f32 0.0, %v2354
      %v2356 = vpop.f32.mrf.mxu0
      %2357 = vdwg.mxu0
      %2358 = vmatpush.bf16.msra.mxu0 0
      %2359 = vmatpush.bf16.msra.mxu0 0
      %2360 = vmatpush.bf16.msra.mxu0 0
      %2361 = vmatpush.bf16.msra.mxu0 0
      %2362 = vmatpush.bf16.msra.mxu0 0
      %2363 = vmatpush.bf16.msra.mxu0 0
      %2364 = vmatpush.bf16.msra.mxu0 0
      %2365 = vmatpush.bf16.msra.mxu0 %v2301
      %2366 = vmatmul.bf16.gmra.mxu0 %v2317
      %v2367 = vpop.f32.mrf.mxu0
      %v2368 = vadd.f32 0.0, %v2367
      %v2369 = vpop.f32.mrf.mxu0
      %2370 = vdwg.mxu0
      %2371 = vmatpush.bf16.msra.mxu0 0
      %2372 = vmatpush.bf16.msra.mxu0 0
      %2373 = vmatpush.bf16.msra.mxu0 0
      %2374 = vmatpush.bf16.msra.mxu0 0
      %2375 = vmatpush.bf16.msra.mxu0 0
      %2376 = vmatpush.bf16.msra.mxu0 0
      %2377 = vmatpush.bf16.msra.mxu0 0
      %2378 = vmatpush.bf16.msra.mxu0 %v2302
      %2379 = vmatmul.bf16.gmra.mxu0 %v2317
      %v2380 = vpop.f32.mrf.mxu0
      %v2381 = vadd.f32 0.0, %v2380
      %v2382 = vpop.f32.mrf.mxu0
      %2383 = vdwg.mxu0
      %2384 = vmatpush.bf16.msra.mxu0 0
      %2385 = vmatpush.bf16.msra.mxu0 0
      %2386 = vmatpush.bf16.msra.mxu0 0
      %2387 = vmatpush.bf16.msra.mxu0 0
      %2388 = vmatpush.bf16.msra.mxu0 0
      %2389 = vmatpush.bf16.msra.mxu0 0
      %2390 = vmatpush.bf16.msra.mxu0 0
      %2391 = vmatpush.bf16.msra.mxu0 %v2303
      %2392 = vmatmul.bf16.gmra.mxu0 %v2317
      %v2393 = vpop.f32.mrf.mxu0
      %v2394 = vadd.f32 0.0, %v2393
      %v2395 = vpop.f32.mrf.mxu0
      %2396 = vdwg.mxu0
      %2397 = vmatpush.bf16.msra.mxu0 0
      %2398 = vmatpush.bf16.msra.mxu0 0
      %2399 = vmatpush.bf16.msra.mxu0 0
      %2400 = vmatpush.bf16.msra.mxu0 0
      %2401 = vmatpush.bf16.msra.mxu0 0
      %2402 = vmatpush.bf16.msra.mxu0 0
      %2403 = vmatpush.bf16.msra.mxu0 0
      %2404 = vmatpush.bf16.msra.mxu0 %v2304
      %2405 = vmatmul.bf16.gmra.mxu0 %v2317
      %v2406 = vpop.f32.mrf.mxu0
      %v2407 = vadd.f32 0.0, %v2406
      %v2408 = vpop.f32.mrf.mxu0
      %2409 = vdwg.mxu0
      %2410 = vmatpush.bf16.msra.mxu0 0
      %2411 = vmatpush.bf16.msra.mxu0 0
      %2412 = vmatpush.bf16.msra.mxu0 0
      %2413 = vmatpush.bf16.msra.mxu0 0
      %2414 = vmatpush.bf16.msra.mxu0 0
      %2415 = vmatpush.bf16.msra.mxu0 0
      %2416 = vmatpush.bf16.msra.mxu0 0
      %2417 = vmatpush.bf16.msra.mxu0 %v2305
      %2418 = vmatmul.bf16.gmra.mxu0 %v2317
      %v2419 = vpop.f32.mrf.mxu0
      %v2420 = vadd.f32 0.0, %v2419
      %v2421 = vpop.f32.mrf.mxu0
      %2422 = vdwg.mxu0
      %2423 = vmatpush.bf16.msra.mxu0 0
      %2424 = vmatpush.bf16.msra.mxu0 0
      %2425 = vmatpush.bf16.msra.mxu0 0
      %2426 = vmatpush.bf16.msra.mxu0 0
      %2427 = vmatpush.bf16.msra.mxu0 0
      %2428 = vmatpush.bf16.msra.mxu0 0
      %2429 = vmatpush.bf16.msra.mxu0 0
      %2430 = vmatpush.bf16.msra.mxu0 %v2306
      %2431 = vmatmul.bf16.gmra.mxu0 %v2317
      %v2432 = vpop.f32.mrf.mxu0
      %v2433 = vadd.f32 0.0, %v2432
      %v2434 = vpop.f32.mrf.mxu0
      %2435 = vdwg.mxu0
      %v2436 = vadd.f32 %v2266, %v2329
      %v2437 = vadd.f32 %v2267, %v2342
      %v2438 = vadd.f32 %v2268, %v2355
      %v2439 = vadd.f32 %v2269, %v2368
      %v2440 = vadd.f32 %v2270, %v2381
      %v2441 = vadd.f32 %v2271, %v2394
      %v2442 = vadd.f32 %v2272, %v2407
      %v2443 = vadd.f32 %v2273, %v2420
      %v2444 = vadd.f32 %v2274, %v2433
      %s2445 = scalar_lea.vmem %s6, 24
      %v2446 = vld [vmem:[%s2445] sm:$0xff]
      %s2447 = scalar_lea.vmem %s6, 32
      %v2448 = vld [vmem:[%s2447] sm:$0xff]
      %s2449 = scalar_lea.vmem %s6, 40
      %v2450 = vld [vmem:[%s2449] sm:$0xff]
      %2452 = vset.pattern.permute.xlu0 0
      %2453 = vperm.xlu0 %2452, %v2446
      %v2454 = vpop.permute.xlu0 %2453
      %v2456 = vadd.f32 %v2436, %v2454
      %v2457 = vadd.f32 %v2437, %v2454
      %v2458 = vadd.f32 %v2438, %v2454
      %v2459 = vadd.f32 %v2439, %v2454
      %v2460 = vadd.f32 %v2440, %v2454
      %v2461 = vadd.f32 %v2441, %v2454
      %v2462 = vadd.f32 %v2442, %v2454
      %v2463 = vadd.f32 %v2443, %v2454
      %v2464 = vadd.f32 %v2444, %v2454
      %v2465 = vmul.f32 %v2456, %v568
      %v2466 = vmul.f32 %v2457, %v569
      %v2467 = vmul.f32 %v2458, %v570
      %v2468 = vmul.f32 %v2459, %v571
      %v2469 = vmul.f32 %v2460, %v572
      %v2470 = vmul.f32 %v2461, %v573
      %v2471 = vmul.f32 %v2462, %v574
      %v2472 = vmul.f32 %v2463, %v575
      %v2473 = vmul.f32 %v2464, %v576
      %v2474 = vadd.f32 %v2465, %v2466
      %v2475 = vadd.f32 %v2474, %v2467
      %v2476 = vadd.f32 %v2475, %v2468
      %v2477 = vadd.f32 %v2476, %v2469
      %v2478 = vadd.f32 %v2477, %v2470
      %v2479 = vadd.f32 %v2478, %v2471
      %v2480 = vadd.f32 %v2479, %v2472
      %v2481 = vsel %vm602, %v2473, 0.0
      %v2482 = vadd.f32 %v2480, %v2481
      %2483 = vadd.xlane.f32.xlu0 %v2482
      %v2484 = vpop.xlane.xlu0 %2483
      %2485 = vmatpush.msra.mxu0 0.0
      %2486 = vmatpush.msra.mxu0 0.0
      %2487 = vmatpush.msra.mxu0 0.0
      %2488 = vmatpush.msra.mxu0 0.0
      %2489 = vmatpush.msra.mxu0 0.0
      %2490 = vmatpush.msra.mxu0 0.0
      %2491 = vmatpush.msra.mxu0 0.0
      %2492 = vmatpush.msra.mxu0 0.0
      %2493 = vmatpush.msra.mxu0 0.0
      %2494 = vmatpush.msra.mxu0 0.0
      %2495 = vmatpush.msra.mxu0 0.0
      %2496 = vmatpush.msra.mxu0 0.0
      %2497 = vmatpush.msra.mxu0 0.0
      %2498 = vmatpush.msra.mxu0 0.0
      %2499 = vmatpush.msra.mxu0 0.0
      %2500 = vmatpush.msra.mxu0 %v2484
      %2501 = vmatmul.f32.gmra.mxu0 %v608
      %v2502 = vpop.f32.mrf.mxu0
      %v2503 = vadd.f32 0.0, %v2502
      %2504 = vdwg.mxu0
      %v2505 = vmul.f32 %v2503, 0.00024414063
      %2507 = vset.pattern.permute.xlu0 0
      %2508 = vperm.xlu0 %2507, %v2505
      %v2509 = vpop.permute.xlu0 %2508
      %v2511 = vsub.f32 %v2456, %v2509
      %v2512 = vsub.f32 %v2457, %v2509
      %v2513 = vsub.f32 %v2458, %v2509
      %v2514 = vsub.f32 %v2459, %v2509
      %v2515 = vsub.f32 %v2460, %v2509
      %v2516 = vsub.f32 %v2461, %v2509
      %v2517 = vsub.f32 %v2462, %v2509
      %v2518 = vsub.f32 %v2463, %v2509
      %v2519 = vsub.f32 %v2464, %v2509
      %v2520 = vmul.f32 %v2511, %v568
      %v2521 = vmul.f32 %v2512, %v569
      %v2522 = vmul.f32 %v2513, %v570
      %v2523 = vmul.f32 %v2514, %v571
      %v2524 = vmul.f32 %v2515, %v572
      %v2525 = vmul.f32 %v2516, %v573
      %v2526 = vmul.f32 %v2517, %v574
      %v2527 = vmul.f32 %v2518, %v575
      %v2528 = vmul.f32 %v2519, %v576
      %v2529 = vmul.f32 %v2520, %v2520
      %v2530 = vmul.f32 %v2521, %v2521
      %v2531 = vmul.f32 %v2522, %v2522
      %v2532 = vmul.f32 %v2523, %v2523
      %v2533 = vmul.f32 %v2524, %v2524
      %v2534 = vmul.f32 %v2525, %v2525
      %v2535 = vmul.f32 %v2526, %v2526
      %v2536 = vmul.f32 %v2527, %v2527
      %v2537 = vmul.f32 %v2528, %v2528
      %v2538 = vadd.f32 %v2529, %v2530
      %v2539 = vadd.f32 %v2538, %v2531
      %v2540 = vadd.f32 %v2539, %v2532
      %v2541 = vadd.f32 %v2540, %v2533
      %v2542 = vadd.f32 %v2541, %v2534
      %v2543 = vadd.f32 %v2542, %v2535
      %v2544 = vadd.f32 %v2543, %v2536
      %v2545 = vsel %vm602, %v2537, 0.0
      %v2546 = vadd.f32 %v2544, %v2545
      %2547 = vadd.xlane.f32.xlu0 %v2546
      %v2548 = vpop.xlane.xlu0 %2547
      %2549 = vmatpush.msra.mxu0 0.0
      %2550 = vmatpush.msra.mxu0 0.0
      %2551 = vmatpush.msra.mxu0 0.0
      %2552 = vmatpush.msra.mxu0 0.0
      %2553 = vmatpush.msra.mxu0 0.0
      %2554 = vmatpush.msra.mxu0 0.0
      %2555 = vmatpush.msra.mxu0 0.0
      %2556 = vmatpush.msra.mxu0 0.0
      %2557 = vmatpush.msra.mxu0 0.0
      %2558 = vmatpush.msra.mxu0 0.0
      %2559 = vmatpush.msra.mxu0 0.0
      %2560 = vmatpush.msra.mxu0 0.0
      %2561 = vmatpush.msra.mxu0 0.0
      %2562 = vmatpush.msra.mxu0 0.0
      %2563 = vmatpush.msra.mxu0 0.0
      %2564 = vmatpush.msra.mxu0 %v2548
      %2565 = vmatmul.f32.gmra.mxu0 %v608
      %v2566 = vpop.f32.mrf.mxu0
      %v2567 = vadd.f32 0.0, %v2566
      %2568 = vdwg.mxu0
      %v2569 = vmul.f32 %v2567, 0.00024414063
      %v2570 = vadd.f32 %v2569, 1e-05
      %v2571 = vrsqrt.pop %v2570
      %v2572 = vmul.f32 %v2571, %v2570
      %v2573 = vmul.f32 %v2572, %v2571
      %v2574 = vmul.f32 0.5, %v2573
      %v2575 = vsub.f32 1.5, %v2574
      %v2576 = vmul.f32 %v2571, %v2575
      %vm2577 = vweird.f32 %v2570
      %vm2578 = vweird.f32 %v2571
      %vm2579 = vmor %vm2577, %vm2578
      %v2580 = vsel %vm2579, %v2571, %v2576
      %2582 = vset.pattern.permute.xlu0 0
      %2583 = vperm.xlu0 %2582, %v2580
      %v2584 = vpop.permute.xlu0 %2583
      %v2586 = vmul.f32 %v2520, %v2584
      %v2587 = vmul.f32 %v2521, %v2584
      %v2588 = vmul.f32 %v2522, %v2584
      %v2589 = vmul.f32 %v2523, %v2584
      %v2590 = vmul.f32 %v2524, %v2584
      %v2591 = vmul.f32 %v2525, %v2584
      %v2592 = vmul.f32 %v2526, %v2584
      %v2593 = vmul.f32 %v2527, %v2584
      %v2594 = vmul.f32 %v2528, %v2584
      %2596 = vset.pattern.permute.xlu0 0
      %2597 = vperm.xlu0 %2596, %v2448
      %v2598 = vpop.permute.xlu0 %2597
      %v2600 = vmul.f32 %v2586, %v2598
      %v2601 = vmul.f32 %v2587, %v2598
      %v2602 = vmul.f32 %v2588, %v2598
      %v2603 = vmul.f32 %v2589, %v2598
      %v2604 = vmul.f32 %v2590, %v2598
      %v2605 = vmul.f32 %v2591, %v2598
      %v2606 = vmul.f32 %v2592, %v2598
      %v2607 = vmul.f32 %v2593, %v2598
      %v2608 = vmul.f32 %v2594, %v2598
      %2610 = vset.pattern.permute.xlu0 0
      %2611 = vperm.xlu0 %2610, %v2450
      %v2612 = vpop.permute.xlu0 %2611
      %v2614 = vadd.f32 %v2600, %v2612
      %v2615 = vadd.f32 %v2601, %v2612
      %v2616 = vadd.f32 %v2602, %v2612
      %v2617 = vadd.f32 %v2603, %v2612
      %v2618 = vadd.f32 %v2604, %v2612
      %v2619 = vadd.f32 %v2605, %v2612
      %v2620 = vadd.f32 %v2606, %v2612
      %v2621 = vadd.f32 %v2607, %v2612
      %v2622 = vadd.f32 %v2608, %v2612
      %vm2623 = vcmp.ge.f32.partialorder %v2614, 0.0
      %vm2624 = vcmp.ge.f32.partialorder %v2615, 0.0
      %vm2625 = vcmp.ge.f32.partialorder %v2616, 0.0
      %vm2626 = vcmp.ge.f32.partialorder %v2617, 0.0
      %vm2627 = vcmp.ge.f32.partialorder %v2618, 0.0
      %vm2628 = vcmp.ge.f32.partialorder %v2619, 0.0
      %vm2629 = vcmp.ge.f32.partialorder %v2620, 0.0
      %vm2630 = vcmp.ge.f32.partialorder %v2621, 0.0
      %vm2631 = vcmp.ge.f32.partialorder %v2622, 0.0
      %v2632 = vmul.f32 %v2614, 0.01
      %v2633 = vmul.f32 %v2615, 0.01
      %v2634 = vmul.f32 %v2616, 0.01
      %v2635 = vmul.f32 %v2617, 0.01
      %v2636 = vmul.f32 %v2618, 0.01
      %v2637 = vmul.f32 %v2619, 0.01
      %v2638 = vmul.f32 %v2620, 0.01
      %v2639 = vmul.f32 %v2621, 0.01
      %v2640 = vmul.f32 %v2622, 0.01
      %v2641 = vsel %vm2623, %v2614, %v2632
      %v2642 = vsel %vm2624, %v2615, %v2633
      %v2643 = vsel %vm2625, %v2616, %v2634
      %v2644 = vsel %vm2626, %v2617, %v2635
      %v2645 = vsel %vm2627, %v2618, %v2636
      %v2646 = vsel %vm2628, %v2619, %v2637
      %v2647 = vsel %vm2629, %v2620, %v2638
      %v2648 = vsel %vm2630, %v2621, %v2639
      %v2649 = vsel %vm2631, %v2622, %v2640
      %v2650 = vmul.f32 %v2641, %v568
      %v2651 = vmul.f32 %v2642, %v569
      %v2652 = vmul.f32 %v2643, %v570
      %v2653 = vmul.f32 %v2644, %v571
      %v2654 = vmul.f32 %v2645, %v572
      %v2655 = vmul.f32 %v2646, %v573
      %v2656 = vmul.f32 %v2647, %v574
      %v2657 = vmul.f32 %v2648, %v575
      %v2658 = vmul.f32 %v2649, %v576
      %2668 = vrot.lane.b32.xlu0 %v2650, 35
      %v2669 = vpop.permute.xlu0 %2668
      %2670 = vrot.lane.b32.xlu0 %v2651, 35
      %v2671 = vpop.permute.xlu0 %2670
      %2672 = vrot.lane.b32.xlu0 %v2652, 35
      %v2673 = vpop.permute.xlu0 %2672
      %2674 = vrot.lane.b32.xlu0 %v2653, 35
      %v2675 = vpop.permute.xlu0 %2674
      %2676 = vrot.lane.b32.xlu0 %v2654, 35
      %v2677 = vpop.permute.xlu0 %2676
      %2678 = vrot.lane.b32.xlu0 %v2655, 35
      %v2679 = vpop.permute.xlu0 %2678
      %2680 = vrot.lane.b32.xlu0 %v2656, 35
      %v2681 = vpop.permute.xlu0 %2680
      %2682 = vrot.lane.b32.xlu0 %v2657, 35
      %v2683 = vpop.permute.xlu0 %2682
      %2684 = vrot.lane.b32.xlu0 %v2658, 35
      %v2685 = vpop.permute.xlu0 %2684
      %v2686 = vsel %vm811, %v2669, %v2671
      %v2687 = vsel %vm811, %v2671, %v2673
      %v2688 = vsel %vm811, %v2673, %v2675
      %v2689 = vsel %vm811, %v2675, %v2677
      %v2690 = vsel %vm811, %v2677, %v2679
      %v2691 = vsel %vm811, %v2679, %v2681
      %v2692 = vsel %vm811, %v2681, %v2683
      %v2693 = vsel %vm811, %v2683, %v2685
      %2703 = vst.msk [vmem:[#allocation2] sm:$0xff] %vm829, %v2669
      %2704 = vst [vmem:[#allocation2 + $0x8] sm:$0xff] %v2686
      %2705 = vst [vmem:[#allocation2 + $0x10] sm:$0xff] %v2687
      %2706 = vst [vmem:[#allocation2 + $0x18] sm:$0xff] %v2688
      %2707 = vst [vmem:[#allocation2 + $0x20] sm:$0xff] %v2689
      %2708 = vst [vmem:[#allocation2 + $0x28] sm:$0xff] %v2690
      %2709 = vst [vmem:[#allocation2 + $0x30] sm:$0xff] %v2691
      %2710 = vst [vmem:[#allocation2 + $0x38] sm:$0xff] %v2692
      %2711 = vst.msk [vmem:[#allocation2 + $0x40] sm:$0xff] %vm838, %v2693
      %v2712 = vld [vmem:[#allocation2] sm:$0xff]
      %v2713 = vld [vmem:[#allocation2 + $0x8] sm:$0xff]
      %v2714 = vld [vmem:[#allocation2 + $0x10] sm:$0xff]
      %v2715 = vld [vmem:[#allocation2 + $0x18] sm:$0xff]
      %v2716 = vld [vmem:[#allocation2 + $0x20] sm:$0xff]
      %v2717 = vld [vmem:[#allocation2 + $0x28] sm:$0xff]
      %v2718 = vld [vmem:[#allocation2 + $0x30] sm:$0xff]
      %v2719 = vld [vmem:[#allocation2 + $0x38] sm:$0xff]
      %v2720 = vld [vmem:[#allocation2 + $0x40] sm:$0xff]
      %v2721 = vpack.c.bf16 %v2712, %v2712
      %v2722 = vpack.c.bf16 %v2713, %v2713
      %v2723 = vpack.c.bf16 %v2714, %v2714
      %v2724 = vpack.c.bf16 %v2715, %v2715
      %v2725 = vpack.c.bf16 %v2716, %v2716
      %v2726 = vpack.c.bf16 %v2717, %v2717
      %v2727 = vpack.c.bf16 %v2718, %v2718
      %v2728 = vpack.c.bf16 %v2719, %v2719
      %v2729 = vpack.c.bf16 %v2720, %v2720
      %v2730 = vld [vmem:[%s4] sm:$0xf]
      %s2731 = scalar_lea.vmem %s4, 4
      %v2732 = vld [vmem:[%s2731] sm:$0xf]
      %2742 = vrot.lane.b32.xlu0 %v2721, 127
      %v2743 = vpop.permute.xlu0 %2742
      %2744 = vrot.lane.b32.xlu0 %v2722, 127
      %v2745 = vpop.permute.xlu0 %2744
      %2746 = vrot.lane.b32.xlu0 %v2723, 127
      %v2747 = vpop.permute.xlu0 %2746
      %2748 = vrot.lane.b32.xlu0 %v2724, 127
      %v2749 = vpop.permute.xlu0 %2748
      %2750 = vrot.lane.b32.xlu0 %v2725, 127
      %v2751 = vpop.permute.xlu0 %2750
      %2752 = vrot.lane.b32.xlu0 %v2726, 127
      %v2753 = vpop.permute.xlu0 %2752
      %2754 = vrot.lane.b32.xlu0 %v2727, 127
      %v2755 = vpop.permute.xlu0 %2754
      %2756 = vrot.lane.b32.xlu0 %v2728, 127
      %v2757 = vpop.permute.xlu0 %2756
      %2758 = vrot.lane.b32.xlu0 %v2729, 127
      %v2759 = vpop.permute.xlu0 %2758
      %v2760 = vsel %vm968, %v2743, %v2745
      %v2761 = vsel %vm968, %v2745, %v2747
      %v2762 = vsel %vm968, %v2747, %v2749
      %v2763 = vsel %vm968, %v2749, %v2751
      %v2764 = vsel %vm968, %v2751, %v2753
      %v2765 = vsel %vm968, %v2753, %v2755
      %v2766 = vsel %vm968, %v2755, %v2757
      %v2767 = vsel %vm968, %v2757, %v2759
      %v2769 = vsel %vm417, %v2732, 0
      %v2772 = vsel %vm421, %v2760, 0
      %v2775 = vsel %vm421, %v2761, 0
      %v2778 = vsel %vm421, %v2762, 0
      %v2781 = vsel %vm421, %v2763, 0
      %v2784 = vsel %vm421, %v2764, 0
      %v2787 = vsel %vm421, %v2765, 0
      %v2790 = vsel %vm421, %v2766, 0
      %v2793 = vsel %vm421, %v2767, 0
      %v2796 = vsel %vm421, %v2759, 0
      %2798 = vmatpush.bf16.msra.mxu0 0
      %2799 = vmatpush.bf16.msra.mxu0 0
      %2800 = vmatpush.bf16.msra.mxu0 0
      %2801 = vmatpush.bf16.msra.mxu0 0
      %2802 = vmatpush.bf16.msra.mxu0 0
      %2803 = vmatpush.bf16.msra.mxu0 0
      %2804 = vmatpush.bf16.msra.mxu0 0
      %2805 = vmatpush.bf16.msra.mxu0 %v2772
      %2806 = vmatmul.bf16.gmra.mxu0 %v2769
      %v2807 = vpop.f32.mrf.mxu0
      %v2808 = vadd.f32 0.0, %v2807
      %v2809 = vpop.f32.mrf.mxu0
      %2810 = vdwg.mxu0
      %2811 = vmatpush.bf16.msra.mxu0 0
      %2812 = vmatpush.bf16.msra.mxu0 0
      %2813 = vmatpush.bf16.msra.mxu0 0
      %2814 = vmatpush.bf16.msra.mxu0 0
      %2815 = vmatpush.bf16.msra.mxu0 0
      %2816 = vmatpush.bf16.msra.mxu0 0
      %2817 = vmatpush.bf16.msra.mxu0 0
      %2818 = vmatpush.bf16.msra.mxu0 %v2775
      %2819 = vmatmul.bf16.gmra.mxu0 %v2769
      %v2820 = vpop.f32.mrf.mxu0
      %v2821 = vadd.f32 0.0, %v2820
      %v2822 = vpop.f32.mrf.mxu0
      %2823 = vdwg.mxu0
      %2824 = vmatpush.bf16.msra.mxu0 0
      %2825 = vmatpush.bf16.msra.mxu0 0
      %2826 = vmatpush.bf16.msra.mxu0 0
      %2827 = vmatpush.bf16.msra.mxu0 0
      %2828 = vmatpush.bf16.msra.mxu0 0
      %2829 = vmatpush.bf16.msra.mxu0 0
      %2830 = vmatpush.bf16.msra.mxu0 0
      %2831 = vmatpush.bf16.msra.mxu0 %v2778
      %2832 = vmatmul.bf16.gmra.mxu0 %v2769
      %v2833 = vpop.f32.mrf.mxu0
      %v2834 = vadd.f32 0.0, %v2833
      %v2835 = vpop.f32.mrf.mxu0
      %2836 = vdwg.mxu0
      %2837 = vmatpush.bf16.msra.mxu0 0
      %2838 = vmatpush.bf16.msra.mxu0 0
      %2839 = vmatpush.bf16.msra.mxu0 0
      %2840 = vmatpush.bf16.msra.mxu0 0
      %2841 = vmatpush.bf16.msra.mxu0 0
      %2842 = vmatpush.bf16.msra.mxu0 0
      %2843 = vmatpush.bf16.msra.mxu0 0
      %2844 = vmatpush.bf16.msra.mxu0 %v2781
      %2845 = vmatmul.bf16.gmra.mxu0 %v2769
      %v2846 = vpop.f32.mrf.mxu0
      %v2847 = vadd.f32 0.0, %v2846
      %v2848 = vpop.f32.mrf.mxu0
      %2849 = vdwg.mxu0
      %2850 = vmatpush.bf16.msra.mxu0 0
      %2851 = vmatpush.bf16.msra.mxu0 0
      %2852 = vmatpush.bf16.msra.mxu0 0
      %2853 = vmatpush.bf16.msra.mxu0 0
      %2854 = vmatpush.bf16.msra.mxu0 0
      %2855 = vmatpush.bf16.msra.mxu0 0
      %2856 = vmatpush.bf16.msra.mxu0 0
      %2857 = vmatpush.bf16.msra.mxu0 %v2784
      %2858 = vmatmul.bf16.gmra.mxu0 %v2769
      %v2859 = vpop.f32.mrf.mxu0
      %v2860 = vadd.f32 0.0, %v2859
      %v2861 = vpop.f32.mrf.mxu0
      %2862 = vdwg.mxu0
      %2863 = vmatpush.bf16.msra.mxu0 0
      %2864 = vmatpush.bf16.msra.mxu0 0
      %2865 = vmatpush.bf16.msra.mxu0 0
      %2866 = vmatpush.bf16.msra.mxu0 0
      %2867 = vmatpush.bf16.msra.mxu0 0
      %2868 = vmatpush.bf16.msra.mxu0 0
      %2869 = vmatpush.bf16.msra.mxu0 0
      %2870 = vmatpush.bf16.msra.mxu0 %v2787
      %2871 = vmatmul.bf16.gmra.mxu0 %v2769
      %v2872 = vpop.f32.mrf.mxu0
      %v2873 = vadd.f32 0.0, %v2872
      %v2874 = vpop.f32.mrf.mxu0
      %2875 = vdwg.mxu0
      %2876 = vmatpush.bf16.msra.mxu0 0
      %2877 = vmatpush.bf16.msra.mxu0 0
      %2878 = vmatpush.bf16.msra.mxu0 0
      %2879 = vmatpush.bf16.msra.mxu0 0
      %2880 = vmatpush.bf16.msra.mxu0 0
      %2881 = vmatpush.bf16.msra.mxu0 0
      %2882 = vmatpush.bf16.msra.mxu0 0
      %2883 = vmatpush.bf16.msra.mxu0 %v2790
      %2884 = vmatmul.bf16.gmra.mxu0 %v2769
      %v2885 = vpop.f32.mrf.mxu0
      %v2886 = vadd.f32 0.0, %v2885
      %v2887 = vpop.f32.mrf.mxu0
      %2888 = vdwg.mxu0
      %2889 = vmatpush.bf16.msra.mxu0 0
      %2890 = vmatpush.bf16.msra.mxu0 0
      %2891 = vmatpush.bf16.msra.mxu0 0
      %2892 = vmatpush.bf16.msra.mxu0 0
      %2893 = vmatpush.bf16.msra.mxu0 0
      %2894 = vmatpush.bf16.msra.mxu0 0
      %2895 = vmatpush.bf16.msra.mxu0 0
      %2896 = vmatpush.bf16.msra.mxu0 %v2793
      %2897 = vmatmul.bf16.gmra.mxu0 %v2769
      %v2898 = vpop.f32.mrf.mxu0
      %v2899 = vadd.f32 0.0, %v2898
      %v2900 = vpop.f32.mrf.mxu0
      %2901 = vdwg.mxu0
      %2902 = vmatpush.bf16.msra.mxu0 0
      %2903 = vmatpush.bf16.msra.mxu0 0
      %2904 = vmatpush.bf16.msra.mxu0 0
      %2905 = vmatpush.bf16.msra.mxu0 0
      %2906 = vmatpush.bf16.msra.mxu0 0
      %2907 = vmatpush.bf16.msra.mxu0 0
      %2908 = vmatpush.bf16.msra.mxu0 0
      %2909 = vmatpush.bf16.msra.mxu0 %v2796
      %2910 = vmatmul.bf16.gmra.mxu0 %v2769
      %v2911 = vpop.f32.mrf.mxu0
      %v2912 = vadd.f32 0.0, %v2911
      %v2913 = vpop.f32.mrf.mxu0
      %2914 = vdwg.mxu0
      %v2916 = vsel %vm417, %v2730, 0
      %v2919 = vsel %vm421, %v2721, 0
      %v2922 = vsel %vm421, %v2722, 0
      %v2925 = vsel %vm421, %v2723, 0
      %v2928 = vsel %vm421, %v2724, 0
      %v2931 = vsel %vm421, %v2725, 0
      %v2934 = vsel %vm421, %v2726, 0
      %v2937 = vsel %vm421, %v2727, 0
      %v2940 = vsel %vm421, %v2728, 0
      %v2943 = vsel %vm421, %v2729, 0
      %2945 = vmatpush.bf16.msra.mxu0 0
      %2946 = vmatpush.bf16.msra.mxu0 0
      %2947 = vmatpush.bf16.msra.mxu0 0
      %2948 = vmatpush.bf16.msra.mxu0 0
      %2949 = vmatpush.bf16.msra.mxu0 0
      %2950 = vmatpush.bf16.msra.mxu0 0
      %2951 = vmatpush.bf16.msra.mxu0 0
      %2952 = vmatpush.bf16.msra.mxu0 %v2919
      %2953 = vmatmul.bf16.gmra.mxu0 %v2916
      %v2954 = vpop.f32.mrf.mxu0
      %v2955 = vadd.f32 %v2808, %v2954
      %v2956 = vpop.f32.mrf.mxu0
      %2957 = vdwg.mxu0
      %2958 = vmatpush.bf16.msra.mxu0 0
      %2959 = vmatpush.bf16.msra.mxu0 0
      %2960 = vmatpush.bf16.msra.mxu0 0
      %2961 = vmatpush.bf16.msra.mxu0 0
      %2962 = vmatpush.bf16.msra.mxu0 0
      %2963 = vmatpush.bf16.msra.mxu0 0
      %2964 = vmatpush.bf16.msra.mxu0 0
      %2965 = vmatpush.bf16.msra.mxu0 %v2922
      %2966 = vmatmul.bf16.gmra.mxu0 %v2916
      %v2967 = vpop.f32.mrf.mxu0
      %v2968 = vadd.f32 %v2821, %v2967
      %v2969 = vpop.f32.mrf.mxu0
      %2970 = vdwg.mxu0
      %2971 = vmatpush.bf16.msra.mxu0 0
      %2972 = vmatpush.bf16.msra.mxu0 0
      %2973 = vmatpush.bf16.msra.mxu0 0
      %2974 = vmatpush.bf16.msra.mxu0 0
      %2975 = vmatpush.bf16.msra.mxu0 0
      %2976 = vmatpush.bf16.msra.mxu0 0
      %2977 = vmatpush.bf16.msra.mxu0 0
      %2978 = vmatpush.bf16.msra.mxu0 %v2925
      %2979 = vmatmul.bf16.gmra.mxu0 %v2916
      %v2980 = vpop.f32.mrf.mxu0
      %v2981 = vadd.f32 %v2834, %v2980
      %v2982 = vpop.f32.mrf.mxu0
      %2983 = vdwg.mxu0
      %2984 = vmatpush.bf16.msra.mxu0 0
      %2985 = vmatpush.bf16.msra.mxu0 0
      %2986 = vmatpush.bf16.msra.mxu0 0
      %2987 = vmatpush.bf16.msra.mxu0 0
      %2988 = vmatpush.bf16.msra.mxu0 0
      %2989 = vmatpush.bf16.msra.mxu0 0
      %2990 = vmatpush.bf16.msra.mxu0 0
      %2991 = vmatpush.bf16.msra.mxu0 %v2928
      %2992 = vmatmul.bf16.gmra.mxu0 %v2916
      %v2993 = vpop.f32.mrf.mxu0
      %v2994 = vadd.f32 %v2847, %v2993
      %v2995 = vpop.f32.mrf.mxu0
      %2996 = vdwg.mxu0
      %2997 = vmatpush.bf16.msra.mxu0 0
      %2998 = vmatpush.bf16.msra.mxu0 0
      %2999 = vmatpush.bf16.msra.mxu0 0
      %3000 = vmatpush.bf16.msra.mxu0 0
      %3001 = vmatpush.bf16.msra.mxu0 0
      %3002 = vmatpush.bf16.msra.mxu0 0
      %3003 = vmatpush.bf16.msra.mxu0 0
      %3004 = vmatpush.bf16.msra.mxu0 %v2931
      %3005 = vmatmul.bf16.gmra.mxu0 %v2916
      %v3006 = vpop.f32.mrf.mxu0
      %v3007 = vadd.f32 %v2860, %v3006
      %v3008 = vpop.f32.mrf.mxu0
      %3009 = vdwg.mxu0
      %3010 = vmatpush.bf16.msra.mxu0 0
      %3011 = vmatpush.bf16.msra.mxu0 0
      %3012 = vmatpush.bf16.msra.mxu0 0
      %3013 = vmatpush.bf16.msra.mxu0 0
      %3014 = vmatpush.bf16.msra.mxu0 0
      %3015 = vmatpush.bf16.msra.mxu0 0
      %3016 = vmatpush.bf16.msra.mxu0 0
      %3017 = vmatpush.bf16.msra.mxu0 %v2934
      %3018 = vmatmul.bf16.gmra.mxu0 %v2916
      %v3019 = vpop.f32.mrf.mxu0
      %v3020 = vadd.f32 %v2873, %v3019
      %v3021 = vpop.f32.mrf.mxu0
      %3022 = vdwg.mxu0
      %3023 = vmatpush.bf16.msra.mxu0 0
      %3024 = vmatpush.bf16.msra.mxu0 0
      %3025 = vmatpush.bf16.msra.mxu0 0
      %3026 = vmatpush.bf16.msra.mxu0 0
      %3027 = vmatpush.bf16.msra.mxu0 0
      %3028 = vmatpush.bf16.msra.mxu0 0
      %3029 = vmatpush.bf16.msra.mxu0 0
      %3030 = vmatpush.bf16.msra.mxu0 %v2937
      %3031 = vmatmul.bf16.gmra.mxu0 %v2916
      %v3032 = vpop.f32.mrf.mxu0
      %v3033 = vadd.f32 %v2886, %v3032
      %v3034 = vpop.f32.mrf.mxu0
      %3035 = vdwg.mxu0
      %3036 = vmatpush.bf16.msra.mxu0 0
      %3037 = vmatpush.bf16.msra.mxu0 0
      %3038 = vmatpush.bf16.msra.mxu0 0
      %3039 = vmatpush.bf16.msra.mxu0 0
      %3040 = vmatpush.bf16.msra.mxu0 0
      %3041 = vmatpush.bf16.msra.mxu0 0
      %3042 = vmatpush.bf16.msra.mxu0 0
      %3043 = vmatpush.bf16.msra.mxu0 %v2940
      %3044 = vmatmul.bf16.gmra.mxu0 %v2916
      %v3045 = vpop.f32.mrf.mxu0
      %v3046 = vadd.f32 %v2899, %v3045
      %v3047 = vpop.f32.mrf.mxu0
      %3048 = vdwg.mxu0
      %3049 = vmatpush.bf16.msra.mxu0 0
      %3050 = vmatpush.bf16.msra.mxu0 0
      %3051 = vmatpush.bf16.msra.mxu0 0
      %3052 = vmatpush.bf16.msra.mxu0 0
      %3053 = vmatpush.bf16.msra.mxu0 0
      %3054 = vmatpush.bf16.msra.mxu0 0
      %3055 = vmatpush.bf16.msra.mxu0 0
      %3056 = vmatpush.bf16.msra.mxu0 %v2943
      %3057 = vmatmul.bf16.gmra.mxu0 %v2916
      %v3058 = vpop.f32.mrf.mxu0
      %v3059 = vadd.f32 %v2912, %v3058
      %v3060 = vpop.f32.mrf.mxu0
      %3061 = vdwg.mxu0
      %s3062 = scalar_lea.vmem %s4, 8
      %v3063 = vld [vmem:[%s3062] sm:$0xf]
      %3064 = vrot.lane.b32.xlu0 %v2721, 126
      %v3065 = vpop.permute.xlu0 %3064
      %3066 = vrot.lane.b32.xlu0 %v2722, 126
      %v3067 = vpop.permute.xlu0 %3066
      %3068 = vrot.lane.b32.xlu0 %v2723, 126
      %v3069 = vpop.permute.xlu0 %3068
      %3070 = vrot.lane.b32.xlu0 %v2724, 126
      %v3071 = vpop.permute.xlu0 %3070
      %3072 = vrot.lane.b32.xlu0 %v2725, 126
      %v3073 = vpop.permute.xlu0 %3072
      %3074 = vrot.lane.b32.xlu0 %v2726, 126
      %v3075 = vpop.permute.xlu0 %3074
      %3076 = vrot.lane.b32.xlu0 %v2727, 126
      %v3077 = vpop.permute.xlu0 %3076
      %3078 = vrot.lane.b32.xlu0 %v2728, 126
      %v3079 = vpop.permute.xlu0 %3078
      %3080 = vrot.lane.b32.xlu0 %v2729, 126
      %v3081 = vpop.permute.xlu0 %3080
      %v3082 = vsel %vm1247, %v3065, %v3067
      %v3083 = vsel %vm1247, %v3067, %v3069
      %v3084 = vsel %vm1247, %v3069, %v3071
      %v3085 = vsel %vm1247, %v3071, %v3073
      %v3086 = vsel %vm1247, %v3073, %v3075
      %v3087 = vsel %vm1247, %v3075, %v3077
      %v3088 = vsel %vm1247, %v3077, %v3079
      %v3089 = vsel %vm1247, %v3079, %v3081
      %v3091 = vsel %vm417, %v3063, 0
      %v3094 = vsel %vm421, %v3082, 0
      %v3097 = vsel %vm421, %v3083, 0
      %v3100 = vsel %vm421, %v3084, 0
      %v3103 = vsel %vm421, %v3085, 0
      %v3106 = vsel %vm421, %v3086, 0
      %v3109 = vsel %vm421, %v3087, 0
      %v3112 = vsel %vm421, %v3088, 0
      %v3115 = vsel %vm421, %v3089, 0
      %v3118 = vsel %vm421, %v3081, 0
      %3120 = vmatpush.bf16.msra.mxu0 0
      %3121 = vmatpush.bf16.msra.mxu0 0
      %3122 = vmatpush.bf16.msra.mxu0 0
      %3123 = vmatpush.bf16.msra.mxu0 0
      %3124 = vmatpush.bf16.msra.mxu0 0
      %3125 = vmatpush.bf16.msra.mxu0 0
      %3126 = vmatpush.bf16.msra.mxu0 0
      %3127 = vmatpush.bf16.msra.mxu0 %v3094
      %3128 = vmatmul.bf16.gmra.mxu0 %v3091
      %v3129 = vpop.f32.mrf.mxu0
      %v3130 = vadd.f32 0.0, %v3129
      %v3131 = vpop.f32.mrf.mxu0
      %3132 = vdwg.mxu0
      %3133 = vmatpush.bf16.msra.mxu0 0
      %3134 = vmatpush.bf16.msra.mxu0 0
      %3135 = vmatpush.bf16.msra.mxu0 0
      %3136 = vmatpush.bf16.msra.mxu0 0
      %3137 = vmatpush.bf16.msra.mxu0 0
      %3138 = vmatpush.bf16.msra.mxu0 0
      %3139 = vmatpush.bf16.msra.mxu0 0
      %3140 = vmatpush.bf16.msra.mxu0 %v3097
      %3141 = vmatmul.bf16.gmra.mxu0 %v3091
      %v3142 = vpop.f32.mrf.mxu0
      %v3143 = vadd.f32 0.0, %v3142
      %v3144 = vpop.f32.mrf.mxu0
      %3145 = vdwg.mxu0
      %3146 = vmatpush.bf16.msra.mxu0 0
      %3147 = vmatpush.bf16.msra.mxu0 0
      %3148 = vmatpush.bf16.msra.mxu0 0
      %3149 = vmatpush.bf16.msra.mxu0 0
      %3150 = vmatpush.bf16.msra.mxu0 0
      %3151 = vmatpush.bf16.msra.mxu0 0
      %3152 = vmatpush.bf16.msra.mxu0 0
      %3153 = vmatpush.bf16.msra.mxu0 %v3100
      %3154 = vmatmul.bf16.gmra.mxu0 %v3091
      %v3155 = vpop.f32.mrf.mxu0
      %v3156 = vadd.f32 0.0, %v3155
      %v3157 = vpop.f32.mrf.mxu0
      %3158 = vdwg.mxu0
      %3159 = vmatpush.bf16.msra.mxu0 0
      %3160 = vmatpush.bf16.msra.mxu0 0
      %3161 = vmatpush.bf16.msra.mxu0 0
      %3162 = vmatpush.bf16.msra.mxu0 0
      %3163 = vmatpush.bf16.msra.mxu0 0
      %3164 = vmatpush.bf16.msra.mxu0 0
      %3165 = vmatpush.bf16.msra.mxu0 0
      %3166 = vmatpush.bf16.msra.mxu0 %v3103
      %3167 = vmatmul.bf16.gmra.mxu0 %v3091
      %v3168 = vpop.f32.mrf.mxu0
      %v3169 = vadd.f32 0.0, %v3168
      %v3170 = vpop.f32.mrf.mxu0
      %3171 = vdwg.mxu0
      %3172 = vmatpush.bf16.msra.mxu0 0
      %3173 = vmatpush.bf16.msra.mxu0 0
      %3174 = vmatpush.bf16.msra.mxu0 0
      %3175 = vmatpush.bf16.msra.mxu0 0
      %3176 = vmatpush.bf16.msra.mxu0 0
      %3177 = vmatpush.bf16.msra.mxu0 0
      %3178 = vmatpush.bf16.msra.mxu0 0
      %3179 = vmatpush.bf16.msra.mxu0 %v3106
      %3180 = vmatmul.bf16.gmra.mxu0 %v3091
      %v3181 = vpop.f32.mrf.mxu0
      %v3182 = vadd.f32 0.0, %v3181
      %v3183 = vpop.f32.mrf.mxu0
      %3184 = vdwg.mxu0
      %3185 = vmatpush.bf16.msra.mxu0 0
      %3186 = vmatpush.bf16.msra.mxu0 0
      %3187 = vmatpush.bf16.msra.mxu0 0
      %3188 = vmatpush.bf16.msra.mxu0 0
      %3189 = vmatpush.bf16.msra.mxu0 0
      %3190 = vmatpush.bf16.msra.mxu0 0
      %3191 = vmatpush.bf16.msra.mxu0 0
      %3192 = vmatpush.bf16.msra.mxu0 %v3109
      %3193 = vmatmul.bf16.gmra.mxu0 %v3091
      %v3194 = vpop.f32.mrf.mxu0
      %v3195 = vadd.f32 0.0, %v3194
      %v3196 = vpop.f32.mrf.mxu0
      %3197 = vdwg.mxu0
      %3198 = vmatpush.bf16.msra.mxu0 0
      %3199 = vmatpush.bf16.msra.mxu0 0
      %3200 = vmatpush.bf16.msra.mxu0 0
      %3201 = vmatpush.bf16.msra.mxu0 0
      %3202 = vmatpush.bf16.msra.mxu0 0
      %3203 = vmatpush.bf16.msra.mxu0 0
      %3204 = vmatpush.bf16.msra.mxu0 0
      %3205 = vmatpush.bf16.msra.mxu0 %v3112
      %3206 = vmatmul.bf16.gmra.mxu0 %v3091
      %v3207 = vpop.f32.mrf.mxu0
      %v3208 = vadd.f32 0.0, %v3207
      %v3209 = vpop.f32.mrf.mxu0
      %3210 = vdwg.mxu0
      %3211 = vmatpush.bf16.msra.mxu0 0
      %3212 = vmatpush.bf16.msra.mxu0 0
      %3213 = vmatpush.bf16.msra.mxu0 0
      %3214 = vmatpush.bf16.msra.mxu0 0
      %3215 = vmatpush.bf16.msra.mxu0 0
      %3216 = vmatpush.bf16.msra.mxu0 0
      %3217 = vmatpush.bf16.msra.mxu0 0
      %3218 = vmatpush.bf16.msra.mxu0 %v3115
      %3219 = vmatmul.bf16.gmra.mxu0 %v3091
      %v3220 = vpop.f32.mrf.mxu0
      %v3221 = vadd.f32 0.0, %v3220
      %v3222 = vpop.f32.mrf.mxu0
      %3223 = vdwg.mxu0
      %3224 = vmatpush.bf16.msra.mxu0 0
      %3225 = vmatpush.bf16.msra.mxu0 0
      %3226 = vmatpush.bf16.msra.mxu0 0
      %3227 = vmatpush.bf16.msra.mxu0 0
      %3228 = vmatpush.bf16.msra.mxu0 0
      %3229 = vmatpush.bf16.msra.mxu0 0
      %3230 = vmatpush.bf16.msra.mxu0 0
      %3231 = vmatpush.bf16.msra.mxu0 %v3118
      %3232 = vmatmul.bf16.gmra.mxu0 %v3091
      %v3233 = vpop.f32.mrf.mxu0
      %v3234 = vadd.f32 0.0, %v3233
      %v3235 = vpop.f32.mrf.mxu0
      %3236 = vdwg.mxu0
      %v3237 = vadd.f32 %v2955, %v3130
      %v3238 = vadd.f32 %v2968, %v3143
      %v3239 = vadd.f32 %v2981, %v3156
      %v3240 = vadd.f32 %v2994, %v3169
      %v3241 = vadd.f32 %v3007, %v3182
      %v3242 = vadd.f32 %v3020, %v3195
      %v3243 = vadd.f32 %v3033, %v3208
      %v3244 = vadd.f32 %v3046, %v3221
      %v3245 = vadd.f32 %v3059, %v3234
      %s3246 = scalar_lea.vmem %s4, 12
      %v3247 = vld [vmem:[%s3246] sm:$0xf]
      %3248 = vrot.lane.b32.xlu0 %v2721, 94
      %v3249 = vpop.permute.xlu0 %3248
      %3250 = vrot.lane.b32.xlu0 %v2722, 94
      %v3251 = vpop.permute.xlu0 %3250
      %3252 = vrot.lane.b32.xlu0 %v2723, 94
      %v3253 = vpop.permute.xlu0 %3252
      %3254 = vrot.lane.b32.xlu0 %v2724, 94
      %v3255 = vpop.permute.xlu0 %3254
      %3256 = vrot.lane.b32.xlu0 %v2725, 94
      %v3257 = vpop.permute.xlu0 %3256
      %3258 = vrot.lane.b32.xlu0 %v2726, 94
      %v3259 = vpop.permute.xlu0 %3258
      %3260 = vrot.lane.b32.xlu0 %v2727, 94
      %v3261 = vpop.permute.xlu0 %3260
      %3262 = vrot.lane.b32.xlu0 %v2728, 94
      %v3263 = vpop.permute.xlu0 %3262
      %3264 = vrot.lane.b32.xlu0 %v2729, 94
      %v3265 = vpop.permute.xlu0 %3264
      %v3266 = vsel %vm1414, %v3249, %v3251
      %v3267 = vsel %vm1414, %v3251, %v3253
      %v3268 = vsel %vm1414, %v3253, %v3255
      %v3269 = vsel %vm1414, %v3255, %v3257
      %v3270 = vsel %vm1414, %v3257, %v3259
      %v3271 = vsel %vm1414, %v3259, %v3261
      %v3272 = vsel %vm1414, %v3261, %v3263
      %v3273 = vsel %vm1414, %v3263, %v3265
      %v3275 = vsel %vm417, %v3247, 0
      %v3278 = vsel %vm421, %v3266, 0
      %v3281 = vsel %vm421, %v3267, 0
      %v3284 = vsel %vm421, %v3268, 0
      %v3287 = vsel %vm421, %v3269, 0
      %v3290 = vsel %vm421, %v3270, 0
      %v3293 = vsel %vm421, %v3271, 0
      %v3296 = vsel %vm421, %v3272, 0
      %v3299 = vsel %vm421, %v3273, 0
      %v3302 = vsel %vm421, %v3265, 0
      %3304 = vmatpush.bf16.msra.mxu0 0
      %3305 = vmatpush.bf16.msra.mxu0 0
      %3306 = vmatpush.bf16.msra.mxu0 0
      %3307 = vmatpush.bf16.msra.mxu0 0
      %3308 = vmatpush.bf16.msra.mxu0 0
      %3309 = vmatpush.bf16.msra.mxu0 0
      %3310 = vmatpush.bf16.msra.mxu0 0
      %3311 = vmatpush.bf16.msra.mxu0 %v3278
      %3312 = vmatmul.bf16.gmra.mxu0 %v3275
      %v3313 = vpop.f32.mrf.mxu0
      %v3314 = vadd.f32 0.0, %v3313
      %v3315 = vpop.f32.mrf.mxu0
      %3316 = vdwg.mxu0
      %3317 = vmatpush.bf16.msra.mxu0 0
      %3318 = vmatpush.bf16.msra.mxu0 0
      %3319 = vmatpush.bf16.msra.mxu0 0
      %3320 = vmatpush.bf16.msra.mxu0 0
      %3321 = vmatpush.bf16.msra.mxu0 0
      %3322 = vmatpush.bf16.msra.mxu0 0
      %3323 = vmatpush.bf16.msra.mxu0 0
      %3324 = vmatpush.bf16.msra.mxu0 %v3281
      %3325 = vmatmul.bf16.gmra.mxu0 %v3275
      %v3326 = vpop.f32.mrf.mxu0
      %v3327 = vadd.f32 0.0, %v3326
      %v3328 = vpop.f32.mrf.mxu0
      %3329 = vdwg.mxu0
      %3330 = vmatpush.bf16.msra.mxu0 0
      %3331 = vmatpush.bf16.msra.mxu0 0
      %3332 = vmatpush.bf16.msra.mxu0 0
      %3333 = vmatpush.bf16.msra.mxu0 0
      %3334 = vmatpush.bf16.msra.mxu0 0
      %3335 = vmatpush.bf16.msra.mxu0 0
      %3336 = vmatpush.bf16.msra.mxu0 0
      %3337 = vmatpush.bf16.msra.mxu0 %v3284
      %3338 = vmatmul.bf16.gmra.mxu0 %v3275
      %v3339 = vpop.f32.mrf.mxu0
      %v3340 = vadd.f32 0.0, %v3339
      %v3341 = vpop.f32.mrf.mxu0
      %3342 = vdwg.mxu0
      %3343 = vmatpush.bf16.msra.mxu0 0
      %3344 = vmatpush.bf16.msra.mxu0 0
      %3345 = vmatpush.bf16.msra.mxu0 0
      %3346 = vmatpush.bf16.msra.mxu0 0
      %3347 = vmatpush.bf16.msra.mxu0 0
      %3348 = vmatpush.bf16.msra.mxu0 0
      %3349 = vmatpush.bf16.msra.mxu0 0
      %3350 = vmatpush.bf16.msra.mxu0 %v3287
      %3351 = vmatmul.bf16.gmra.mxu0 %v3275
      %v3352 = vpop.f32.mrf.mxu0
      %v3353 = vadd.f32 0.0, %v3352
      %v3354 = vpop.f32.mrf.mxu0
      %3355 = vdwg.mxu0
      %3356 = vmatpush.bf16.msra.mxu0 0
      %3357 = vmatpush.bf16.msra.mxu0 0
      %3358 = vmatpush.bf16.msra.mxu0 0
      %3359 = vmatpush.bf16.msra.mxu0 0
      %3360 = vmatpush.bf16.msra.mxu0 0
      %3361 = vmatpush.bf16.msra.mxu0 0
      %3362 = vmatpush.bf16.msra.mxu0 0
      %3363 = vmatpush.bf16.msra.mxu0 %v3290
      %3364 = vmatmul.bf16.gmra.mxu0 %v3275
      %v3365 = vpop.f32.mrf.mxu0
      %v3366 = vadd.f32 0.0, %v3365
      %v3367 = vpop.f32.mrf.mxu0
      %3368 = vdwg.mxu0
      %3369 = vmatpush.bf16.msra.mxu0 0
      %3370 = vmatpush.bf16.msra.mxu0 0
      %3371 = vmatpush.bf16.msra.mxu0 0
      %3372 = vmatpush.bf16.msra.mxu0 0
      %3373 = vmatpush.bf16.msra.mxu0 0
      %3374 = vmatpush.bf16.msra.mxu0 0
      %3375 = vmatpush.bf16.msra.mxu0 0
      %3376 = vmatpush.bf16.msra.mxu0 %v3293
      %3377 = vmatmul.bf16.gmra.mxu0 %v3275
      %v3378 = vpop.f32.mrf.mxu0
      %v3379 = vadd.f32 0.0, %v3378
      %v3380 = vpop.f32.mrf.mxu0
      %3381 = vdwg.mxu0
      %3382 = vmatpush.bf16.msra.mxu0 0
      %3383 = vmatpush.bf16.msra.mxu0 0
      %3384 = vmatpush.bf16.msra.mxu0 0
      %3385 = vmatpush.bf16.msra.mxu0 0
      %3386 = vmatpush.bf16.msra.mxu0 0
      %3387 = vmatpush.bf16.msra.mxu0 0
      %3388 = vmatpush.bf16.msra.mxu0 0
      %3389 = vmatpush.bf16.msra.mxu0 %v3296
      %3390 = vmatmul.bf16.gmra.mxu0 %v3275
      %v3391 = vpop.f32.mrf.mxu0
      %v3392 = vadd.f32 0.0, %v3391
      %v3393 = vpop.f32.mrf.mxu0
      %3394 = vdwg.mxu0
      %3395 = vmatpush.bf16.msra.mxu0 0
      %3396 = vmatpush.bf16.msra.mxu0 0
      %3397 = vmatpush.bf16.msra.mxu0 0
      %3398 = vmatpush.bf16.msra.mxu0 0
      %3399 = vmatpush.bf16.msra.mxu0 0
      %3400 = vmatpush.bf16.msra.mxu0 0
      %3401 = vmatpush.bf16.msra.mxu0 0
      %3402 = vmatpush.bf16.msra.mxu0 %v3299
      %3403 = vmatmul.bf16.gmra.mxu0 %v3275
      %v3404 = vpop.f32.mrf.mxu0
      %v3405 = vadd.f32 0.0, %v3404
      %v3406 = vpop.f32.mrf.mxu0
      %3407 = vdwg.mxu0
      %3408 = vmatpush.bf16.msra.mxu0 0
      %3409 = vmatpush.bf16.msra.mxu0 0
      %3410 = vmatpush.bf16.msra.mxu0 0
      %3411 = vmatpush.bf16.msra.mxu0 0
      %3412 = vmatpush.bf16.msra.mxu0 0
      %3413 = vmatpush.bf16.msra.mxu0 0
      %3414 = vmatpush.bf16.msra.mxu0 0
      %3415 = vmatpush.bf16.msra.mxu0 %v3302
      %3416 = vmatmul.bf16.gmra.mxu0 %v3275
      %v3417 = vpop.f32.mrf.mxu0
      %v3418 = vadd.f32 0.0, %v3417
      %v3419 = vpop.f32.mrf.mxu0
      %3420 = vdwg.mxu0
      %v3421 = vadd.f32 %v3237, %v3314
      %v3422 = vadd.f32 %v3238, %v3327
      %v3423 = vadd.f32 %v3239, %v3340
      %v3424 = vadd.f32 %v3240, %v3353
      %v3425 = vadd.f32 %v3241, %v3366
      %v3426 = vadd.f32 %v3242, %v3379
      %v3427 = vadd.f32 %v3243, %v3392
      %v3428 = vadd.f32 %v3244, %v3405
      %v3429 = vadd.f32 %v3245, %v3418
      %s3430 = scalar_lea.vmem %s4, 16
      %v3431 = vld [vmem:[%s3430] sm:$0xf]
      %3432 = vrot.lane.b32.xlu0 %v2721, 93
      %v3433 = vpop.permute.xlu0 %3432
      %3434 = vrot.lane.b32.xlu0 %v2722, 93
      %v3435 = vpop.permute.xlu0 %3434
      %3436 = vrot.lane.b32.xlu0 %v2723, 93
      %v3437 = vpop.permute.xlu0 %3436
      %3438 = vrot.lane.b32.xlu0 %v2724, 93
      %v3439 = vpop.permute.xlu0 %3438
      %3440 = vrot.lane.b32.xlu0 %v2725, 93
      %v3441 = vpop.permute.xlu0 %3440
      %3442 = vrot.lane.b32.xlu0 %v2726, 93
      %v3443 = vpop.permute.xlu0 %3442
      %3444 = vrot.lane.b32.xlu0 %v2727, 93
      %v3445 = vpop.permute.xlu0 %3444
      %3446 = vrot.lane.b32.xlu0 %v2728, 93
      %v3447 = vpop.permute.xlu0 %3446
      %3448 = vrot.lane.b32.xlu0 %v2729, 93
      %v3449 = vpop.permute.xlu0 %3448
      %v3450 = vsel %vm1581, %v3433, %v3435
      %v3451 = vsel %vm1581, %v3435, %v3437
      %v3452 = vsel %vm1581, %v3437, %v3439
      %v3453 = vsel %vm1581, %v3439, %v3441
      %v3454 = vsel %vm1581, %v3441, %v3443
      %v3455 = vsel %vm1581, %v3443, %v3445
      %v3456 = vsel %vm1581, %v3445, %v3447
      %v3457 = vsel %vm1581, %v3447, %v3449
      %v3459 = vsel %vm417, %v3431, 0
      %v3462 = vsel %vm421, %v3450, 0
      %v3465 = vsel %vm421, %v3451, 0
      %v3468 = vsel %vm421, %v3452, 0
      %v3471 = vsel %vm421, %v3453, 0
      %v3474 = vsel %vm421, %v3454, 0
      %v3477 = vsel %vm421, %v3455, 0
      %v3480 = vsel %vm421, %v3456, 0
      %v3483 = vsel %vm421, %v3457, 0
      %v3486 = vsel %vm421, %v3449, 0
      %3488 = vmatpush.bf16.msra.mxu0 0
      %3489 = vmatpush.bf16.msra.mxu0 0
      %3490 = vmatpush.bf16.msra.mxu0 0
      %3491 = vmatpush.bf16.msra.mxu0 0
      %3492 = vmatpush.bf16.msra.mxu0 0
      %3493 = vmatpush.bf16.msra.mxu0 0
      %3494 = vmatpush.bf16.msra.mxu0 0
      %3495 = vmatpush.bf16.msra.mxu0 %v3462
      %3496 = vmatmul.bf16.gmra.mxu0 %v3459
      %v3497 = vpop.f32.mrf.mxu0
      %v3498 = vadd.f32 0.0, %v3497
      %v3499 = vpop.f32.mrf.mxu0
      %3500 = vdwg.mxu0
      %3501 = vmatpush.bf16.msra.mxu0 0
      %3502 = vmatpush.bf16.msra.mxu0 0
      %3503 = vmatpush.bf16.msra.mxu0 0
      %3504 = vmatpush.bf16.msra.mxu0 0
      %3505 = vmatpush.bf16.msra.mxu0 0
      %3506 = vmatpush.bf16.msra.mxu0 0
      %3507 = vmatpush.bf16.msra.mxu0 0
      %3508 = vmatpush.bf16.msra.mxu0 %v3465
      %3509 = vmatmul.bf16.gmra.mxu0 %v3459
      %v3510 = vpop.f32.mrf.mxu0
      %v3511 = vadd.f32 0.0, %v3510
      %v3512 = vpop.f32.mrf.mxu0
      %3513 = vdwg.mxu0
      %3514 = vmatpush.bf16.msra.mxu0 0
      %3515 = vmatpush.bf16.msra.mxu0 0
      %3516 = vmatpush.bf16.msra.mxu0 0
      %3517 = vmatpush.bf16.msra.mxu0 0
      %3518 = vmatpush.bf16.msra.mxu0 0
      %3519 = vmatpush.bf16.msra.mxu0 0
      %3520 = vmatpush.bf16.msra.mxu0 0
      %3521 = vmatpush.bf16.msra.mxu0 %v3468
      %3522 = vmatmul.bf16.gmra.mxu0 %v3459
      %v3523 = vpop.f32.mrf.mxu0
      %v3524 = vadd.f32 0.0, %v3523
      %v3525 = vpop.f32.mrf.mxu0
      %3526 = vdwg.mxu0
      %3527 = vmatpush.bf16.msra.mxu0 0
      %3528 = vmatpush.bf16.msra.mxu0 0
      %3529 = vmatpush.bf16.msra.mxu0 0
      %3530 = vmatpush.bf16.msra.mxu0 0
      %3531 = vmatpush.bf16.msra.mxu0 0
      %3532 = vmatpush.bf16.msra.mxu0 0
      %3533 = vmatpush.bf16.msra.mxu0 0
      %3534 = vmatpush.bf16.msra.mxu0 %v3471
      %3535 = vmatmul.bf16.gmra.mxu0 %v3459
      %v3536 = vpop.f32.mrf.mxu0
      %v3537 = vadd.f32 0.0, %v3536
      %v3538 = vpop.f32.mrf.mxu0
      %3539 = vdwg.mxu0
      %3540 = vmatpush.bf16.msra.mxu0 0
      %3541 = vmatpush.bf16.msra.mxu0 0
      %3542 = vmatpush.bf16.msra.mxu0 0
      %3543 = vmatpush.bf16.msra.mxu0 0
      %3544 = vmatpush.bf16.msra.mxu0 0
      %3545 = vmatpush.bf16.msra.mxu0 0
      %3546 = vmatpush.bf16.msra.mxu0 0
      %3547 = vmatpush.bf16.msra.mxu0 %v3474
      %3548 = vmatmul.bf16.gmra.mxu0 %v3459
      %v3549 = vpop.f32.mrf.mxu0
      %v3550 = vadd.f32 0.0, %v3549
      %v3551 = vpop.f32.mrf.mxu0
      %3552 = vdwg.mxu0
      %3553 = vmatpush.bf16.msra.mxu0 0
      %3554 = vmatpush.bf16.msra.mxu0 0
      %3555 = vmatpush.bf16.msra.mxu0 0
      %3556 = vmatpush.bf16.msra.mxu0 0
      %3557 = vmatpush.bf16.msra.mxu0 0
      %3558 = vmatpush.bf16.msra.mxu0 0
      %3559 = vmatpush.bf16.msra.mxu0 0
      %3560 = vmatpush.bf16.msra.mxu0 %v3477
      %3561 = vmatmul.bf16.gmra.mxu0 %v3459
      %v3562 = vpop.f32.mrf.mxu0
      %v3563 = vadd.f32 0.0, %v3562
      %v3564 = vpop.f32.mrf.mxu0
      %3565 = vdwg.mxu0
      %3566 = vmatpush.bf16.msra.mxu0 0
      %3567 = vmatpush.bf16.msra.mxu0 0
      %3568 = vmatpush.bf16.msra.mxu0 0
      %3569 = vmatpush.bf16.msra.mxu0 0
      %3570 = vmatpush.bf16.msra.mxu0 0
      %3571 = vmatpush.bf16.msra.mxu0 0
      %3572 = vmatpush.bf16.msra.mxu0 0
      %3573 = vmatpush.bf16.msra.mxu0 %v3480
      %3574 = vmatmul.bf16.gmra.mxu0 %v3459
      %v3575 = vpop.f32.mrf.mxu0
      %v3576 = vadd.f32 0.0, %v3575
      %v3577 = vpop.f32.mrf.mxu0
      %3578 = vdwg.mxu0
      %3579 = vmatpush.bf16.msra.mxu0 0
      %3580 = vmatpush.bf16.msra.mxu0 0
      %3581 = vmatpush.bf16.msra.mxu0 0
      %3582 = vmatpush.bf16.msra.mxu0 0
      %3583 = vmatpush.bf16.msra.mxu0 0
      %3584 = vmatpush.bf16.msra.mxu0 0
      %3585 = vmatpush.bf16.msra.mxu0 0
      %3586 = vmatpush.bf16.msra.mxu0 %v3483
      %3587 = vmatmul.bf16.gmra.mxu0 %v3459
      %v3588 = vpop.f32.mrf.mxu0
      %v3589 = vadd.f32 0.0, %v3588
      %v3590 = vpop.f32.mrf.mxu0
      %3591 = vdwg.mxu0
      %3592 = vmatpush.bf16.msra.mxu0 0
      %3593 = vmatpush.bf16.msra.mxu0 0
      %3594 = vmatpush.bf16.msra.mxu0 0
      %3595 = vmatpush.bf16.msra.mxu0 0
      %3596 = vmatpush.bf16.msra.mxu0 0
      %3597 = vmatpush.bf16.msra.mxu0 0
      %3598 = vmatpush.bf16.msra.mxu0 0
      %3599 = vmatpush.bf16.msra.mxu0 %v3486
      %3600 = vmatmul.bf16.gmra.mxu0 %v3459
      %v3601 = vpop.f32.mrf.mxu0
      %v3602 = vadd.f32 0.0, %v3601
      %v3603 = vpop.f32.mrf.mxu0
      %3604 = vdwg.mxu0
      %v3605 = vadd.f32 %v3421, %v3498
      %v3606 = vadd.f32 %v3422, %v3511
      %v3607 = vadd.f32 %v3423, %v3524
      %v3608 = vadd.f32 %v3424, %v3537
      %v3609 = vadd.f32 %v3425, %v3550
      %v3610 = vadd.f32 %v3426, %v3563
      %v3611 = vadd.f32 %v3427, %v3576
      %v3612 = vadd.f32 %v3428, %v3589
      %v3613 = vadd.f32 %v3429, %v3602
      %s3614 = scalar_lea.vmem %s4, 20
      %v3615 = vld [vmem:[%s3614] sm:$0xf]
      %3616 = vrot.lane.b32.xlu0 %v2721, 92
      %v3617 = vpop.permute.xlu0 %3616
      %3618 = vrot.lane.b32.xlu0 %v2722, 92
      %v3619 = vpop.permute.xlu0 %3618
      %3620 = vrot.lane.b32.xlu0 %v2723, 92
      %v3621 = vpop.permute.xlu0 %3620
      %3622 = vrot.lane.b32.xlu0 %v2724, 92
      %v3623 = vpop.permute.xlu0 %3622
      %3624 = vrot.lane.b32.xlu0 %v2725, 92
      %v3625 = vpop.permute.xlu0 %3624
      %3626 = vrot.lane.b32.xlu0 %v2726, 92
      %v3627 = vpop.permute.xlu0 %3626
      %3628 = vrot.lane.b32.xlu0 %v2727, 92
      %v3629 = vpop.permute.xlu0 %3628
      %3630 = vrot.lane.b32.xlu0 %v2728, 92
      %v3631 = vpop.permute.xlu0 %3630
      %3632 = vrot.lane.b32.xlu0 %v2729, 92
      %v3633 = vpop.permute.xlu0 %3632
      %v3634 = vsel %vm1748, %v3617, %v3619
      %v3635 = vsel %vm1748, %v3619, %v3621
      %v3636 = vsel %vm1748, %v3621, %v3623
      %v3637 = vsel %vm1748, %v3623, %v3625
      %v3638 = vsel %vm1748, %v3625, %v3627
      %v3639 = vsel %vm1748, %v3627, %v3629
      %v3640 = vsel %vm1748, %v3629, %v3631
      %v3641 = vsel %vm1748, %v3631, %v3633
      %v3643 = vsel %vm417, %v3615, 0
      %v3646 = vsel %vm421, %v3634, 0
      %v3649 = vsel %vm421, %v3635, 0
      %v3652 = vsel %vm421, %v3636, 0
      %v3655 = vsel %vm421, %v3637, 0
      %v3658 = vsel %vm421, %v3638, 0
      %v3661 = vsel %vm421, %v3639, 0
      %v3664 = vsel %vm421, %v3640, 0
      %v3667 = vsel %vm421, %v3641, 0
      %v3670 = vsel %vm421, %v3633, 0
      %3672 = vmatpush.bf16.msra.mxu0 0
      %3673 = vmatpush.bf16.msra.mxu0 0
      %3674 = vmatpush.bf16.msra.mxu0 0
      %3675 = vmatpush.bf16.msra.mxu0 0
      %3676 = vmatpush.bf16.msra.mxu0 0
      %3677 = vmatpush.bf16.msra.mxu0 0
      %3678 = vmatpush.bf16.msra.mxu0 0
      %3679 = vmatpush.bf16.msra.mxu0 %v3646
      %3680 = vmatmul.bf16.gmra.mxu0 %v3643
      %v3681 = vpop.f32.mrf.mxu0
      %v3682 = vadd.f32 0.0, %v3681
      %v3683 = vpop.f32.mrf.mxu0
      %3684 = vdwg.mxu0
      %3685 = vmatpush.bf16.msra.mxu0 0
      %3686 = vmatpush.bf16.msra.mxu0 0
      %3687 = vmatpush.bf16.msra.mxu0 0
      %3688 = vmatpush.bf16.msra.mxu0 0
      %3689 = vmatpush.bf16.msra.mxu0 0
      %3690 = vmatpush.bf16.msra.mxu0 0
      %3691 = vmatpush.bf16.msra.mxu0 0
      %3692 = vmatpush.bf16.msra.mxu0 %v3649
      %3693 = vmatmul.bf16.gmra.mxu0 %v3643
      %v3694 = vpop.f32.mrf.mxu0
      %v3695 = vadd.f32 0.0, %v3694
      %v3696 = vpop.f32.mrf.mxu0
      %3697 = vdwg.mxu0
      %3698 = vmatpush.bf16.msra.mxu0 0
      %3699 = vmatpush.bf16.msra.mxu0 0
      %3700 = vmatpush.bf16.msra.mxu0 0
      %3701 = vmatpush.bf16.msra.mxu0 0
      %3702 = vmatpush.bf16.msra.mxu0 0
      %3703 = vmatpush.bf16.msra.mxu0 0
      %3704 = vmatpush.bf16.msra.mxu0 0
      %3705 = vmatpush.bf16.msra.mxu0 %v3652
      %3706 = vmatmul.bf16.gmra.mxu0 %v3643
      %v3707 = vpop.f32.mrf.mxu0
      %v3708 = vadd.f32 0.0, %v3707
      %v3709 = vpop.f32.mrf.mxu0
      %3710 = vdwg.mxu0
      %3711 = vmatpush.bf16.msra.mxu0 0
      %3712 = vmatpush.bf16.msra.mxu0 0
      %3713 = vmatpush.bf16.msra.mxu0 0
      %3714 = vmatpush.bf16.msra.mxu0 0
      %3715 = vmatpush.bf16.msra.mxu0 0
      %3716 = vmatpush.bf16.msra.mxu0 0
      %3717 = vmatpush.bf16.msra.mxu0 0
      %3718 = vmatpush.bf16.msra.mxu0 %v3655
      %3719 = vmatmul.bf16.gmra.mxu0 %v3643
      %v3720 = vpop.f32.mrf.mxu0
      %v3721 = vadd.f32 0.0, %v3720
      %v3722 = vpop.f32.mrf.mxu0
      %3723 = vdwg.mxu0
      %3724 = vmatpush.bf16.msra.mxu0 0
      %3725 = vmatpush.bf16.msra.mxu0 0
      %3726 = vmatpush.bf16.msra.mxu0 0
      %3727 = vmatpush.bf16.msra.mxu0 0
      %3728 = vmatpush.bf16.msra.mxu0 0
      %3729 = vmatpush.bf16.msra.mxu0 0
      %3730 = vmatpush.bf16.msra.mxu0 0
      %3731 = vmatpush.bf16.msra.mxu0 %v3658
      %3732 = vmatmul.bf16.gmra.mxu0 %v3643
      %v3733 = vpop.f32.mrf.mxu0
      %v3734 = vadd.f32 0.0, %v3733
      %v3735 = vpop.f32.mrf.mxu0
      %3736 = vdwg.mxu0
      %3737 = vmatpush.bf16.msra.mxu0 0
      %3738 = vmatpush.bf16.msra.mxu0 0
      %3739 = vmatpush.bf16.msra.mxu0 0
      %3740 = vmatpush.bf16.msra.mxu0 0
      %3741 = vmatpush.bf16.msra.mxu0 0
      %3742 = vmatpush.bf16.msra.mxu0 0
      %3743 = vmatpush.bf16.msra.mxu0 0
      %3744 = vmatpush.bf16.msra.mxu0 %v3661
      %3745 = vmatmul.bf16.gmra.mxu0 %v3643
      %v3746 = vpop.f32.mrf.mxu0
      %v3747 = vadd.f32 0.0, %v3746
      %v3748 = vpop.f32.mrf.mxu0
      %3749 = vdwg.mxu0
      %3750 = vmatpush.bf16.msra.mxu0 0
      %3751 = vmatpush.bf16.msra.mxu0 0
      %3752 = vmatpush.bf16.msra.mxu0 0
      %3753 = vmatpush.bf16.msra.mxu0 0
      %3754 = vmatpush.bf16.msra.mxu0 0
      %3755 = vmatpush.bf16.msra.mxu0 0
      %3756 = vmatpush.bf16.msra.mxu0 0
      %3757 = vmatpush.bf16.msra.mxu0 %v3664
      %3758 = vmatmul.bf16.gmra.mxu0 %v3643
      %v3759 = vpop.f32.mrf.mxu0
      %v3760 = vadd.f32 0.0, %v3759
      %v3761 = vpop.f32.mrf.mxu0
      %3762 = vdwg.mxu0
      %3763 = vmatpush.bf16.msra.mxu0 0
      %3764 = vmatpush.bf16.msra.mxu0 0
      %3765 = vmatpush.bf16.msra.mxu0 0
      %3766 = vmatpush.bf16.msra.mxu0 0
      %3767 = vmatpush.bf16.msra.mxu0 0
      %3768 = vmatpush.bf16.msra.mxu0 0
      %3769 = vmatpush.bf16.msra.mxu0 0
      %3770 = vmatpush.bf16.msra.mxu0 %v3667
      %3771 = vmatmul.bf16.gmra.mxu0 %v3643
      %v3772 = vpop.f32.mrf.mxu0
      %v3773 = vadd.f32 0.0, %v3772
      %v3774 = vpop.f32.mrf.mxu0
      %3775 = vdwg.mxu0
      %3776 = vmatpush.bf16.msra.mxu0 0
      %3777 = vmatpush.bf16.msra.mxu0 0
      %3778 = vmatpush.bf16.msra.mxu0 0
      %3779 = vmatpush.bf16.msra.mxu0 0
      %3780 = vmatpush.bf16.msra.mxu0 0
      %3781 = vmatpush.bf16.msra.mxu0 0
      %3782 = vmatpush.bf16.msra.mxu0 0
      %3783 = vmatpush.bf16.msra.mxu0 %v3670
      %3784 = vmatmul.bf16.gmra.mxu0 %v3643
      %v3785 = vpop.f32.mrf.mxu0
      %v3786 = vadd.f32 0.0, %v3785
      %v3787 = vpop.f32.mrf.mxu0
      %3788 = vdwg.mxu0
      %v3789 = vadd.f32 %v3605, %v3682
      %v3790 = vadd.f32 %v3606, %v3695
      %v3791 = vadd.f32 %v3607, %v3708
      %v3792 = vadd.f32 %v3608, %v3721
      %v3793 = vadd.f32 %v3609, %v3734
      %v3794 = vadd.f32 %v3610, %v3747
      %v3795 = vadd.f32 %v3611, %v3760
      %v3796 = vadd.f32 %v3612, %v3773
      %v3797 = vadd.f32 %v3613, %v3786
      %v3798 = vld [vmem:[#allocation2] sm:$0xff]
      %v3799 = vld [vmem:[#allocation2 + $0x8] sm:$0xff]
      %v3800 = vld [vmem:[#allocation2 + $0x10] sm:$0xff]
      %v3801 = vld [vmem:[#allocation2 + $0x18] sm:$0xff]
      %v3802 = vld [vmem:[#allocation2 + $0x20] sm:$0xff]
      %v3803 = vld [vmem:[#allocation2 + $0x28] sm:$0xff]
      %v3804 = vld [vmem:[#allocation2 + $0x30] sm:$0xff]
      %v3805 = vld [vmem:[#allocation2 + $0x38] sm:$0xff]
      %v3806 = vld [vmem:[#allocation2 + $0x40] sm:$0xff]
      %v3807 = vld [vmem:[#allocation2 + $0x48] sm:$0xff]
      %v3808 = vpack.c.bf16 %v3798, %v3798
      %v3809 = vpack.c.bf16 %v3799, %v3799
      %v3810 = vpack.c.bf16 %v3800, %v3800
      %v3811 = vpack.c.bf16 %v3801, %v3801
      %v3812 = vpack.c.bf16 %v3802, %v3802
      %v3813 = vpack.c.bf16 %v3803, %v3803
      %v3814 = vpack.c.bf16 %v3804, %v3804
      %v3815 = vpack.c.bf16 %v3805, %v3805
      %v3816 = vpack.c.bf16 %v3806, %v3806
      %v3817 = vpack.c.bf16 %v3807, %v3807
      %s3818 = scalar_lea.vmem %s4, 24
      %v3819 = vld [vmem:[%s3818] sm:$0xf]
      %3830 = vrot.lane.b32.xlu0 %v3808, 60
      %v3831 = vpop.permute.xlu0 %3830
      %3832 = vrot.lane.b32.xlu0 %v3809, 60
      %v3833 = vpop.permute.xlu0 %3832
      %3834 = vrot.lane.b32.xlu0 %v3810, 60
      %v3835 = vpop.permute.xlu0 %3834
      %3836 = vrot.lane.b32.xlu0 %v3811, 60
      %v3837 = vpop.permute.xlu0 %3836
      %3838 = vrot.lane.b32.xlu0 %v3812, 60
      %v3839 = vpop.permute.xlu0 %3838
      %3840 = vrot.lane.b32.xlu0 %v3813, 60
      %v3841 = vpop.permute.xlu0 %3840
      %3842 = vrot.lane.b32.xlu0 %v3814, 60
      %v3843 = vpop.permute.xlu0 %3842
      %3844 = vrot.lane.b32.xlu0 %v3815, 60
      %v3845 = vpop.permute.xlu0 %3844
      %3846 = vrot.lane.b32.xlu0 %v3816, 60
      %v3847 = vpop.permute.xlu0 %3846
      %3848 = vrot.lane.b32.xlu0 %v3817, 60
      %v3849 = vpop.permute.xlu0 %3848
      %v3850 = vsel %vm1957, %v3831, %v3833
      %v3851 = vsel %vm1957, %v3833, %v3835
      %v3852 = vsel %vm1957, %v3835, %v3837
      %v3853 = vsel %vm1957, %v3837, %v3839
      %v3854 = vsel %vm1957, %v3839, %v3841
      %v3855 = vsel %vm1957, %v3841, %v3843
      %v3856 = vsel %vm1957, %v3843, %v3845
      %v3857 = vsel %vm1957, %v3845, %v3847
      %v3858 = vsel %vm1957, %v3847, %v3849
      %v3860 = vsel %vm417, %v3819, 0
      %v3863 = vsel %vm421, %v3850, 0
      %v3866 = vsel %vm421, %v3851, 0
      %v3869 = vsel %vm421, %v3852, 0
      %v3872 = vsel %vm421, %v3853, 0
      %v3875 = vsel %vm421, %v3854, 0
      %v3878 = vsel %vm421, %v3855, 0
      %v3881 = vsel %vm421, %v3856, 0
      %v3884 = vsel %vm421, %v3857, 0
      %v3887 = vsel %vm421, %v3858, 0
      %3889 = vmatpush.bf16.msra.mxu0 0
      %3890 = vmatpush.bf16.msra.mxu0 0
      %3891 = vmatpush.bf16.msra.mxu0 0
      %3892 = vmatpush.bf16.msra.mxu0 0
      %3893 = vmatpush.bf16.msra.mxu0 0
      %3894 = vmatpush.bf16.msra.mxu0 0
      %3895 = vmatpush.bf16.msra.mxu0 0
      %3896 = vmatpush.bf16.msra.mxu0 %v3863
      %3897 = vmatmul.bf16.gmra.mxu0 %v3860
      %v3898 = vpop.f32.mrf.mxu0
      %v3899 = vadd.f32 0.0, %v3898
      %v3900 = vpop.f32.mrf.mxu0
      %3901 = vdwg.mxu0
      %3902 = vmatpush.bf16.msra.mxu0 0
      %3903 = vmatpush.bf16.msra.mxu0 0
      %3904 = vmatpush.bf16.msra.mxu0 0
      %3905 = vmatpush.bf16.msra.mxu0 0
      %3906 = vmatpush.bf16.msra.mxu0 0
      %3907 = vmatpush.bf16.msra.mxu0 0
      %3908 = vmatpush.bf16.msra.mxu0 0
      %3909 = vmatpush.bf16.msra.mxu0 %v3866
      %3910 = vmatmul.bf16.gmra.mxu0 %v3860
      %v3911 = vpop.f32.mrf.mxu0
      %v3912 = vadd.f32 0.0, %v3911
      %v3913 = vpop.f32.mrf.mxu0
      %3914 = vdwg.mxu0
      %3915 = vmatpush.bf16.msra.mxu0 0
      %3916 = vmatpush.bf16.msra.mxu0 0
      %3917 = vmatpush.bf16.msra.mxu0 0
      %3918 = vmatpush.bf16.msra.mxu0 0
      %3919 = vmatpush.bf16.msra.mxu0 0
      %3920 = vmatpush.bf16.msra.mxu0 0
      %3921 = vmatpush.bf16.msra.mxu0 0
      %3922 = vmatpush.bf16.msra.mxu0 %v3869
      %3923 = vmatmul.bf16.gmra.mxu0 %v3860
      %v3924 = vpop.f32.mrf.mxu0
      %v3925 = vadd.f32 0.0, %v3924
      %v3926 = vpop.f32.mrf.mxu0
      %3927 = vdwg.mxu0
      %3928 = vmatpush.bf16.msra.mxu0 0
      %3929 = vmatpush.bf16.msra.mxu0 0
      %3930 = vmatpush.bf16.msra.mxu0 0
      %3931 = vmatpush.bf16.msra.mxu0 0
      %3932 = vmatpush.bf16.msra.mxu0 0
      %3933 = vmatpush.bf16.msra.mxu0 0
      %3934 = vmatpush.bf16.msra.mxu0 0
      %3935 = vmatpush.bf16.msra.mxu0 %v3872
      %3936 = vmatmul.bf16.gmra.mxu0 %v3860
      %v3937 = vpop.f32.mrf.mxu0
      %v3938 = vadd.f32 0.0, %v3937
      %v3939 = vpop.f32.mrf.mxu0
      %3940 = vdwg.mxu0
      %3941 = vmatpush.bf16.msra.mxu0 0
      %3942 = vmatpush.bf16.msra.mxu0 0
      %3943 = vmatpush.bf16.msra.mxu0 0
      %3944 = vmatpush.bf16.msra.mxu0 0
      %3945 = vmatpush.bf16.msra.mxu0 0
      %3946 = vmatpush.bf16.msra.mxu0 0
      %3947 = vmatpush.bf16.msra.mxu0 0
      %3948 = vmatpush.bf16.msra.mxu0 %v3875
      %3949 = vmatmul.bf16.gmra.mxu0 %v3860
      %v3950 = vpop.f32.mrf.mxu0
      %v3951 = vadd.f32 0.0, %v3950
      %v3952 = vpop.f32.mrf.mxu0
      %3953 = vdwg.mxu0
      %3954 = vmatpush.bf16.msra.mxu0 0
      %3955 = vmatpush.bf16.msra.mxu0 0
      %3956 = vmatpush.bf16.msra.mxu0 0
      %3957 = vmatpush.bf16.msra.mxu0 0
      %3958 = vmatpush.bf16.msra.mxu0 0
      %3959 = vmatpush.bf16.msra.mxu0 0
      %3960 = vmatpush.bf16.msra.mxu0 0
      %3961 = vmatpush.bf16.msra.mxu0 %v3878
      %3962 = vmatmul.bf16.gmra.mxu0 %v3860
      %v3963 = vpop.f32.mrf.mxu0
      %v3964 = vadd.f32 0.0, %v3963
      %v3965 = vpop.f32.mrf.mxu0
      %3966 = vdwg.mxu0
      %3967 = vmatpush.bf16.msra.mxu0 0
      %3968 = vmatpush.bf16.msra.mxu0 0
      %3969 = vmatpush.bf16.msra.mxu0 0
      %3970 = vmatpush.bf16.msra.mxu0 0
      %3971 = vmatpush.bf16.msra.mxu0 0
      %3972 = vmatpush.bf16.msra.mxu0 0
      %3973 = vmatpush.bf16.msra.mxu0 0
      %3974 = vmatpush.bf16.msra.mxu0 %v3881
      %3975 = vmatmul.bf16.gmra.mxu0 %v3860
      %v3976 = vpop.f32.mrf.mxu0
      %v3977 = vadd.f32 0.0, %v3976
      %v3978 = vpop.f32.mrf.mxu0
      %3979 = vdwg.mxu0
      %3980 = vmatpush.bf16.msra.mxu0 0
      %3981 = vmatpush.bf16.msra.mxu0 0
      %3982 = vmatpush.bf16.msra.mxu0 0
      %3983 = vmatpush.bf16.msra.mxu0 0
      %3984 = vmatpush.bf16.msra.mxu0 0
      %3985 = vmatpush.bf16.msra.mxu0 0
      %3986 = vmatpush.bf16.msra.mxu0 0
      %3987 = vmatpush.bf16.msra.mxu0 %v3884
      %3988 = vmatmul.bf16.gmra.mxu0 %v3860
      %v3989 = vpop.f32.mrf.mxu0
      %v3990 = vadd.f32 0.0, %v3989
      %v3991 = vpop.f32.mrf.mxu0
      %3992 = vdwg.mxu0
      %3993 = vmatpush.bf16.msra.mxu0 0
      %3994 = vmatpush.bf16.msra.mxu0 0
      %3995 = vmatpush.bf16.msra.mxu0 0
      %3996 = vmatpush.bf16.msra.mxu0 0
      %3997 = vmatpush.bf16.msra.mxu0 0
      %3998 = vmatpush.bf16.msra.mxu0 0
      %3999 = vmatpush.bf16.msra.mxu0 0
      %4000 = vmatpush.bf16.msra.mxu0 %v3887
      %4001 = vmatmul.bf16.gmra.mxu0 %v3860
      %v4002 = vpop.f32.mrf.mxu0
      %v4003 = vadd.f32 0.0, %v4002
      %v4004 = vpop.f32.mrf.mxu0
      %4005 = vdwg.mxu0
      %v4006 = vadd.f32 %v3789, %v3899
      %v4007 = vadd.f32 %v3790, %v3912
      %v4008 = vadd.f32 %v3791, %v3925
      %v4009 = vadd.f32 %v3792, %v3938
      %v4010 = vadd.f32 %v3793, %v3951
      %v4011 = vadd.f32 %v3794, %v3964
      %v4012 = vadd.f32 %v3795, %v3977
      %v4013 = vadd.f32 %v3796, %v3990
      %v4014 = vadd.f32 %v3797, %v4003
      %s4015 = scalar_lea.vmem %s4, 28
      %v4016 = vld [vmem:[%s4015] sm:$0xf]
      %4017 = vrot.lane.b32.xlu0 %v3808, 59
      %v4018 = vpop.permute.xlu0 %4017
      %4019 = vrot.lane.b32.xlu0 %v3809, 59
      %v4020 = vpop.permute.xlu0 %4019
      %4021 = vrot.lane.b32.xlu0 %v3810, 59
      %v4022 = vpop.permute.xlu0 %4021
      %4023 = vrot.lane.b32.xlu0 %v3811, 59
      %v4024 = vpop.permute.xlu0 %4023
      %4025 = vrot.lane.b32.xlu0 %v3812, 59
      %v4026 = vpop.permute.xlu0 %4025
      %4027 = vrot.lane.b32.xlu0 %v3813, 59
      %v4028 = vpop.permute.xlu0 %4027
      %4029 = vrot.lane.b32.xlu0 %v3814, 59
      %v4030 = vpop.permute.xlu0 %4029
      %4031 = vrot.lane.b32.xlu0 %v3815, 59
      %v4032 = vpop.permute.xlu0 %4031
      %4033 = vrot.lane.b32.xlu0 %v3816, 59
      %v4034 = vpop.permute.xlu0 %4033
      %4035 = vrot.lane.b32.xlu0 %v3817, 59
      %v4036 = vpop.permute.xlu0 %4035
      %v4037 = vsel %vm2127, %v4018, %v4020
      %v4038 = vsel %vm2127, %v4020, %v4022
      %v4039 = vsel %vm2127, %v4022, %v4024
      %v4040 = vsel %vm2127, %v4024, %v4026
      %v4041 = vsel %vm2127, %v4026, %v4028
      %v4042 = vsel %vm2127, %v4028, %v4030
      %v4043 = vsel %vm2127, %v4030, %v4032
      %v4044 = vsel %vm2127, %v4032, %v4034
      %v4045 = vsel %vm2127, %v4034, %v4036
      %v4047 = vsel %vm417, %v4016, 0
      %v4050 = vsel %vm421, %v4037, 0
      %v4053 = vsel %vm421, %v4038, 0
      %v4056 = vsel %vm421, %v4039, 0
      %v4059 = vsel %vm421, %v4040, 0
      %v4062 = vsel %vm421, %v4041, 0
      %v4065 = vsel %vm421, %v4042, 0
      %v4068 = vsel %vm421, %v4043, 0
      %v4071 = vsel %vm421, %v4044, 0
      %v4074 = vsel %vm421, %v4045, 0
      %4076 = vmatpush.bf16.msra.mxu0 0
      %4077 = vmatpush.bf16.msra.mxu0 0
      %4078 = vmatpush.bf16.msra.mxu0 0
      %4079 = vmatpush.bf16.msra.mxu0 0
      %4080 = vmatpush.bf16.msra.mxu0 0
      %4081 = vmatpush.bf16.msra.mxu0 0
      %4082 = vmatpush.bf16.msra.mxu0 0
      %4083 = vmatpush.bf16.msra.mxu0 %v4050
      %4084 = vmatmul.bf16.gmra.mxu0 %v4047
      %v4085 = vpop.f32.mrf.mxu0
      %v4086 = vadd.f32 0.0, %v4085
      %v4087 = vpop.f32.mrf.mxu0
      %4088 = vdwg.mxu0
      %4089 = vmatpush.bf16.msra.mxu0 0
      %4090 = vmatpush.bf16.msra.mxu0 0
      %4091 = vmatpush.bf16.msra.mxu0 0
      %4092 = vmatpush.bf16.msra.mxu0 0
      %4093 = vmatpush.bf16.msra.mxu0 0
      %4094 = vmatpush.bf16.msra.mxu0 0
      %4095 = vmatpush.bf16.msra.mxu0 0
      %4096 = vmatpush.bf16.msra.mxu0 %v4053
      %4097 = vmatmul.bf16.gmra.mxu0 %v4047
      %v4098 = vpop.f32.mrf.mxu0
      %v4099 = vadd.f32 0.0, %v4098
      %v4100 = vpop.f32.mrf.mxu0
      %4101 = vdwg.mxu0
      %4102 = vmatpush.bf16.msra.mxu0 0
      %4103 = vmatpush.bf16.msra.mxu0 0
      %4104 = vmatpush.bf16.msra.mxu0 0
      %4105 = vmatpush.bf16.msra.mxu0 0
      %4106 = vmatpush.bf16.msra.mxu0 0
      %4107 = vmatpush.bf16.msra.mxu0 0
      %4108 = vmatpush.bf16.msra.mxu0 0
      %4109 = vmatpush.bf16.msra.mxu0 %v4056
      %4110 = vmatmul.bf16.gmra.mxu0 %v4047
      %v4111 = vpop.f32.mrf.mxu0
      %v4112 = vadd.f32 0.0, %v4111
      %v4113 = vpop.f32.mrf.mxu0
      %4114 = vdwg.mxu0
      %4115 = vmatpush.bf16.msra.mxu0 0
      %4116 = vmatpush.bf16.msra.mxu0 0
      %4117 = vmatpush.bf16.msra.mxu0 0
      %4118 = vmatpush.bf16.msra.mxu0 0
      %4119 = vmatpush.bf16.msra.mxu0 0
      %4120 = vmatpush.bf16.msra.mxu0 0
      %4121 = vmatpush.bf16.msra.mxu0 0
      %4122 = vmatpush.bf16.msra.mxu0 %v4059
      %4123 = vmatmul.bf16.gmra.mxu0 %v4047
      %v4124 = vpop.f32.mrf.mxu0
      %v4125 = vadd.f32 0.0, %v4124
      %v4126 = vpop.f32.mrf.mxu0
      %4127 = vdwg.mxu0
      %4128 = vmatpush.bf16.msra.mxu0 0
      %4129 = vmatpush.bf16.msra.mxu0 0
      %4130 = vmatpush.bf16.msra.mxu0 0
      %4131 = vmatpush.bf16.msra.mxu0 0
      %4132 = vmatpush.bf16.msra.mxu0 0
      %4133 = vmatpush.bf16.msra.mxu0 0
      %4134 = vmatpush.bf16.msra.mxu0 0
      %4135 = vmatpush.bf16.msra.mxu0 %v4062
      %4136 = vmatmul.bf16.gmra.mxu0 %v4047
      %v4137 = vpop.f32.mrf.mxu0
      %v4138 = vadd.f32 0.0, %v4137
      %v4139 = vpop.f32.mrf.mxu0
      %4140 = vdwg.mxu0
      %4141 = vmatpush.bf16.msra.mxu0 0
      %4142 = vmatpush.bf16.msra.mxu0 0
      %4143 = vmatpush.bf16.msra.mxu0 0
      %4144 = vmatpush.bf16.msra.mxu0 0
      %4145 = vmatpush.bf16.msra.mxu0 0
      %4146 = vmatpush.bf16.msra.mxu0 0
      %4147 = vmatpush.bf16.msra.mxu0 0
      %4148 = vmatpush.bf16.msra.mxu0 %v4065
      %4149 = vmatmul.bf16.gmra.mxu0 %v4047
      %v4150 = vpop.f32.mrf.mxu0
      %v4151 = vadd.f32 0.0, %v4150
      %v4152 = vpop.f32.mrf.mxu0
      %4153 = vdwg.mxu0
      %4154 = vmatpush.bf16.msra.mxu0 0
      %4155 = vmatpush.bf16.msra.mxu0 0
      %4156 = vmatpush.bf16.msra.mxu0 0
      %4157 = vmatpush.bf16.msra.mxu0 0
      %4158 = vmatpush.bf16.msra.mxu0 0
      %4159 = vmatpush.bf16.msra.mxu0 0
      %4160 = vmatpush.bf16.msra.mxu0 0
      %4161 = vmatpush.bf16.msra.mxu0 %v4068
      %4162 = vmatmul.bf16.gmra.mxu0 %v4047
      %v4163 = vpop.f32.mrf.mxu0
      %v4164 = vadd.f32 0.0, %v4163
      %v4165 = vpop.f32.mrf.mxu0
      %4166 = vdwg.mxu0
      %4167 = vmatpush.bf16.msra.mxu0 0
      %4168 = vmatpush.bf16.msra.mxu0 0
      %4169 = vmatpush.bf16.msra.mxu0 0
      %4170 = vmatpush.bf16.msra.mxu0 0
      %4171 = vmatpush.bf16.msra.mxu0 0
      %4172 = vmatpush.bf16.msra.mxu0 0
      %4173 = vmatpush.bf16.msra.mxu0 0
      %4174 = vmatpush.bf16.msra.mxu0 %v4071
      %4175 = vmatmul.bf16.gmra.mxu0 %v4047
      %v4176 = vpop.f32.mrf.mxu0
      %v4177 = vadd.f32 0.0, %v4176
      %v4178 = vpop.f32.mrf.mxu0
      %4179 = vdwg.mxu0
      %4180 = vmatpush.bf16.msra.mxu0 0
      %4181 = vmatpush.bf16.msra.mxu0 0
      %4182 = vmatpush.bf16.msra.mxu0 0
      %4183 = vmatpush.bf16.msra.mxu0 0
      %4184 = vmatpush.bf16.msra.mxu0 0
      %4185 = vmatpush.bf16.msra.mxu0 0
      %4186 = vmatpush.bf16.msra.mxu0 0
      %4187 = vmatpush.bf16.msra.mxu0 %v4074
      %4188 = vmatmul.bf16.gmra.mxu0 %v4047
      %v4189 = vpop.f32.mrf.mxu0
      %v4190 = vadd.f32 0.0, %v4189
      %v4191 = vpop.f32.mrf.mxu0
      %4192 = vdwg.mxu0
      %v4193 = vadd.f32 %v4006, %v4086
      %v4194 = vadd.f32 %v4007, %v4099
      %v4195 = vadd.f32 %v4008, %v4112
      %v4196 = vadd.f32 %v4009, %v4125
      %v4197 = vadd.f32 %v4010, %v4138
      %v4198 = vadd.f32 %v4011, %v4151
      %v4199 = vadd.f32 %v4012, %v4164
      %v4200 = vadd.f32 %v4013, %v4177
      %v4201 = vadd.f32 %v4014, %v4190
      %s4202 = scalar_lea.vmem %s4, 32
      %v4203 = vld [vmem:[%s4202] sm:$0xf]
      %4204 = vrot.lane.b32.xlu0 %v3808, 58
      %v4205 = vpop.permute.xlu0 %4204
      %4206 = vrot.lane.b32.xlu0 %v3809, 58
      %v4207 = vpop.permute.xlu0 %4206
      %4208 = vrot.lane.b32.xlu0 %v3810, 58
      %v4209 = vpop.permute.xlu0 %4208
      %4210 = vrot.lane.b32.xlu0 %v3811, 58
      %v4211 = vpop.permute.xlu0 %4210
      %4212 = vrot.lane.b32.xlu0 %v3812, 58
      %v4213 = vpop.permute.xlu0 %4212
      %4214 = vrot.lane.b32.xlu0 %v3813, 58
      %v4215 = vpop.permute.xlu0 %4214
      %4216 = vrot.lane.b32.xlu0 %v3814, 58
      %v4217 = vpop.permute.xlu0 %4216
      %4218 = vrot.lane.b32.xlu0 %v3815, 58
      %v4219 = vpop.permute.xlu0 %4218
      %4220 = vrot.lane.b32.xlu0 %v3816, 58
      %v4221 = vpop.permute.xlu0 %4220
      %4222 = vrot.lane.b32.xlu0 %v3817, 58
      %v4223 = vpop.permute.xlu0 %4222
      %v4224 = vsel %vm2297, %v4205, %v4207
      %v4225 = vsel %vm2297, %v4207, %v4209
      %v4226 = vsel %vm2297, %v4209, %v4211
      %v4227 = vsel %vm2297, %v4211, %v4213
      %v4228 = vsel %vm2297, %v4213, %v4215
      %v4229 = vsel %vm2297, %v4215, %v4217
      %v4230 = vsel %vm2297, %v4217, %v4219
      %v4231 = vsel %vm2297, %v4219, %v4221
      %v4232 = vsel %vm2297, %v4221, %v4223
      %v4234 = vsel %vm417, %v4203, 0
      %v4237 = vsel %vm421, %v4224, 0
      %v4240 = vsel %vm421, %v4225, 0
      %v4243 = vsel %vm421, %v4226, 0
      %v4246 = vsel %vm421, %v4227, 0
      %v4249 = vsel %vm421, %v4228, 0
      %v4252 = vsel %vm421, %v4229, 0
      %v4255 = vsel %vm421, %v4230, 0
      %v4258 = vsel %vm421, %v4231, 0
      %v4261 = vsel %vm421, %v4232, 0
      %4263 = vmatpush.bf16.msra.mxu0 0
      %4264 = vmatpush.bf16.msra.mxu0 0
      %4265 = vmatpush.bf16.msra.mxu0 0
      %4266 = vmatpush.bf16.msra.mxu0 0
      %4267 = vmatpush.bf16.msra.mxu0 0
      %4268 = vmatpush.bf16.msra.mxu0 0
      %4269 = vmatpush.bf16.msra.mxu0 0
      %4270 = vmatpush.bf16.msra.mxu0 %v4237
      %4271 = vmatmul.bf16.gmra.mxu0 %v4234
      %v4272 = vpop.f32.mrf.mxu0
      %v4273 = vadd.f32 0.0, %v4272
      %v4274 = vpop.f32.mrf.mxu0
      %4275 = vdwg.mxu0
      %4276 = vmatpush.bf16.msra.mxu0 0
      %4277 = vmatpush.bf16.msra.mxu0 0
      %4278 = vmatpush.bf16.msra.mxu0 0
      %4279 = vmatpush.bf16.msra.mxu0 0
      %4280 = vmatpush.bf16.msra.mxu0 0
      %4281 = vmatpush.bf16.msra.mxu0 0
      %4282 = vmatpush.bf16.msra.mxu0 0
      %4283 = vmatpush.bf16.msra.mxu0 %v4240
      %4284 = vmatmul.bf16.gmra.mxu0 %v4234
      %v4285 = vpop.f32.mrf.mxu0
      %v4286 = vadd.f32 0.0, %v4285
      %v4287 = vpop.f32.mrf.mxu0
      %4288 = vdwg.mxu0
      %4289 = vmatpush.bf16.msra.mxu0 0
      %4290 = vmatpush.bf16.msra.mxu0 0
      %4291 = vmatpush.bf16.msra.mxu0 0
      %4292 = vmatpush.bf16.msra.mxu0 0
      %4293 = vmatpush.bf16.msra.mxu0 0
      %4294 = vmatpush.bf16.msra.mxu0 0
      %4295 = vmatpush.bf16.msra.mxu0 0
      %4296 = vmatpush.bf16.msra.mxu0 %v4243
      %4297 = vmatmul.bf16.gmra.mxu0 %v4234
      %v4298 = vpop.f32.mrf.mxu0
      %v4299 = vadd.f32 0.0, %v4298
      %v4300 = vpop.f32.mrf.mxu0
      %4301 = vdwg.mxu0
      %4302 = vmatpush.bf16.msra.mxu0 0
      %4303 = vmatpush.bf16.msra.mxu0 0
      %4304 = vmatpush.bf16.msra.mxu0 0
      %4305 = vmatpush.bf16.msra.mxu0 0
      %4306 = vmatpush.bf16.msra.mxu0 0
      %4307 = vmatpush.bf16.msra.mxu0 0
      %4308 = vmatpush.bf16.msra.mxu0 0
      %4309 = vmatpush.bf16.msra.mxu0 %v4246
      %4310 = vmatmul.bf16.gmra.mxu0 %v4234
      %v4311 = vpop.f32.mrf.mxu0
      %v4312 = vadd.f32 0.0, %v4311
      %v4313 = vpop.f32.mrf.mxu0
      %4314 = vdwg.mxu0
      %4315 = vmatpush.bf16.msra.mxu0 0
      %4316 = vmatpush.bf16.msra.mxu0 0
      %4317 = vmatpush.bf16.msra.mxu0 0
      %4318 = vmatpush.bf16.msra.mxu0 0
      %4319 = vmatpush.bf16.msra.mxu0 0
      %4320 = vmatpush.bf16.msra.mxu0 0
      %4321 = vmatpush.bf16.msra.mxu0 0
      %4322 = vmatpush.bf16.msra.mxu0 %v4249
      %4323 = vmatmul.bf16.gmra.mxu0 %v4234
      %v4324 = vpop.f32.mrf.mxu0
      %v4325 = vadd.f32 0.0, %v4324
      %v4326 = vpop.f32.mrf.mxu0
      %4327 = vdwg.mxu0
      %4328 = vmatpush.bf16.msra.mxu0 0
      %4329 = vmatpush.bf16.msra.mxu0 0
      %4330 = vmatpush.bf16.msra.mxu0 0
      %4331 = vmatpush.bf16.msra.mxu0 0
      %4332 = vmatpush.bf16.msra.mxu0 0
      %4333 = vmatpush.bf16.msra.mxu0 0
      %4334 = vmatpush.bf16.msra.mxu0 0
      %4335 = vmatpush.bf16.msra.mxu0 %v4252
      %4336 = vmatmul.bf16.gmra.mxu0 %v4234
      %v4337 = vpop.f32.mrf.mxu0
      %v4338 = vadd.f32 0.0, %v4337
      %v4339 = vpop.f32.mrf.mxu0
      %4340 = vdwg.mxu0
      %4341 = vmatpush.bf16.msra.mxu0 0
      %4342 = vmatpush.bf16.msra.mxu0 0
      %4343 = vmatpush.bf16.msra.mxu0 0
      %4344 = vmatpush.bf16.msra.mxu0 0
      %4345 = vmatpush.bf16.msra.mxu0 0
      %4346 = vmatpush.bf16.msra.mxu0 0
      %4347 = vmatpush.bf16.msra.mxu0 0
      %4348 = vmatpush.bf16.msra.mxu0 %v4255
      %4349 = vmatmul.bf16.gmra.mxu0 %v4234
      %v4350 = vpop.f32.mrf.mxu0
      %v4351 = vadd.f32 0.0, %v4350
      %v4352 = vpop.f32.mrf.mxu0
      %4353 = vdwg.mxu0
      %4354 = vmatpush.bf16.msra.mxu0 0
      %4355 = vmatpush.bf16.msra.mxu0 0
      %4356 = vmatpush.bf16.msra.mxu0 0
      %4357 = vmatpush.bf16.msra.mxu0 0
      %4358 = vmatpush.bf16.msra.mxu0 0
      %4359 = vmatpush.bf16.msra.mxu0 0
      %4360 = vmatpush.bf16.msra.mxu0 0
      %4361 = vmatpush.bf16.msra.mxu0 %v4258
      %4362 = vmatmul.bf16.gmra.mxu0 %v4234
      %v4363 = vpop.f32.mrf.mxu0
      %v4364 = vadd.f32 0.0, %v4363
      %v4365 = vpop.f32.mrf.mxu0
      %4366 = vdwg.mxu0
      %4367 = vmatpush.bf16.msra.mxu0 0
      %4368 = vmatpush.bf16.msra.mxu0 0
      %4369 = vmatpush.bf16.msra.mxu0 0
      %4370 = vmatpush.bf16.msra.mxu0 0
      %4371 = vmatpush.bf16.msra.mxu0 0
      %4372 = vmatpush.bf16.msra.mxu0 0
      %4373 = vmatpush.bf16.msra.mxu0 0
      %4374 = vmatpush.bf16.msra.mxu0 %v4261
      %4375 = vmatmul.bf16.gmra.mxu0 %v4234
      %v4376 = vpop.f32.mrf.mxu0
      %v4377 = vadd.f32 0.0, %v4376
      %v4378 = vpop.f32.mrf.mxu0
      %4379 = vdwg.mxu0
      %v4380 = vadd.f32 %v4193, %v4273
      %v4381 = vadd.f32 %v4194, %v4286
      %v4382 = vadd.f32 %v4195, %v4299
      %v4383 = vadd.f32 %v4196, %v4312
      %v4384 = vadd.f32 %v4197, %v4325
      %v4385 = vadd.f32 %v4198, %v4338
      %v4386 = vadd.f32 %v4199, %v4351
      %v4387 = vadd.f32 %v4200, %v4364
      %v4388 = vadd.f32 %v4201, %v4377
      %s4389 = scalar_lea.vmem %s6, 48
      %v4390 = vld [vmem:[%s4389] sm:$0xff]
      %s4391 = scalar_lea.vmem %s6, 56
      %v4392 = vld [vmem:[%s4391] sm:$0xff]
      %s4393 = scalar_lea.vmem %s6, 64
      %v4394 = vld [vmem:[%s4393] sm:$0xff]
      %4396 = vset.pattern.permute.xlu0 0
      %4397 = vperm.xlu0 %4396, %v4390
      %v4398 = vpop.permute.xlu0 %4397
      %v4400 = vadd.f32 %v4380, %v4398
      %v4401 = vadd.f32 %v4381, %v4398
      %v4402 = vadd.f32 %v4382, %v4398
      %v4403 = vadd.f32 %v4383, %v4398
      %v4404 = vadd.f32 %v4384, %v4398
      %v4405 = vadd.f32 %v4385, %v4398
      %v4406 = vadd.f32 %v4386, %v4398
      %v4407 = vadd.f32 %v4387, %v4398
      %v4408 = vadd.f32 %v4388, %v4398
      %v4409 = vmul.f32 %v4400, %v568
      %v4410 = vmul.f32 %v4401, %v569
      %v4411 = vmul.f32 %v4402, %v570
      %v4412 = vmul.f32 %v4403, %v571
      %v4413 = vmul.f32 %v4404, %v572
      %v4414 = vmul.f32 %v4405, %v573
      %v4415 = vmul.f32 %v4406, %v574
      %v4416 = vmul.f32 %v4407, %v575
      %v4417 = vmul.f32 %v4408, %v576
      %v4418 = vadd.f32 %v4409, %v4410
      %v4419 = vadd.f32 %v4418, %v4411
      %v4420 = vadd.f32 %v4419, %v4412
      %v4421 = vadd.f32 %v4420, %v4413
      %v4422 = vadd.f32 %v4421, %v4414
      %v4423 = vadd.f32 %v4422, %v4415
      %v4424 = vadd.f32 %v4423, %v4416
      %v4425 = vsel %vm602, %v4417, 0.0
      %v4426 = vadd.f32 %v4424, %v4425
      %4427 = vadd.xlane.f32.xlu0 %v4426
      %v4428 = vpop.xlane.xlu0 %4427
      %4429 = vmatpush.msra.mxu0 0.0
      %4430 = vmatpush.msra.mxu0 0.0
      %4431 = vmatpush.msra.mxu0 0.0
      %4432 = vmatpush.msra.mxu0 0.0
      %4433 = vmatpush.msra.mxu0 0.0
      %4434 = vmatpush.msra.mxu0 0.0
      %4435 = vmatpush.msra.mxu0 0.0
      %4436 = vmatpush.msra.mxu0 0.0
      %4437 = vmatpush.msra.mxu0 0.0
      %4438 = vmatpush.msra.mxu0 0.0
      %4439 = vmatpush.msra.mxu0 0.0
      %4440 = vmatpush.msra.mxu0 0.0
      %4441 = vmatpush.msra.mxu0 0.0
      %4442 = vmatpush.msra.mxu0 0.0
      %4443 = vmatpush.msra.mxu0 0.0
      %4444 = vmatpush.msra.mxu0 %v4428
      %4445 = vmatmul.f32.gmra.mxu0 %v608
      %v4446 = vpop.f32.mrf.mxu0
      %v4447 = vadd.f32 0.0, %v4446
      %4448 = vdwg.mxu0
      %v4449 = vmul.f32 %v4447, 0.00024414063
      %4451 = vset.pattern.permute.xlu0 0
      %4452 = vperm.xlu0 %4451, %v4449
      %v4453 = vpop.permute.xlu0 %4452
      %v4455 = vsub.f32 %v4400, %v4453
      %v4456 = vsub.f32 %v4401, %v4453
      %v4457 = vsub.f32 %v4402, %v4453
      %v4458 = vsub.f32 %v4403, %v4453
      %v4459 = vsub.f32 %v4404, %v4453
      %v4460 = vsub.f32 %v4405, %v4453
      %v4461 = vsub.f32 %v4406, %v4453
      %v4462 = vsub.f32 %v4407, %v4453
      %v4463 = vsub.f32 %v4408, %v4453
      %v4464 = vmul.f32 %v4455, %v568
      %v4465 = vmul.f32 %v4456, %v569
      %v4466 = vmul.f32 %v4457, %v570
      %v4467 = vmul.f32 %v4458, %v571
      %v4468 = vmul.f32 %v4459, %v572
      %v4469 = vmul.f32 %v4460, %v573
      %v4470 = vmul.f32 %v4461, %v574
      %v4471 = vmul.f32 %v4462, %v575
      %v4472 = vmul.f32 %v4463, %v576
      %v4473 = vmul.f32 %v4464, %v4464
      %v4474 = vmul.f32 %v4465, %v4465
      %v4475 = vmul.f32 %v4466, %v4466
      %v4476 = vmul.f32 %v4467, %v4467
      %v4477 = vmul.f32 %v4468, %v4468
      %v4478 = vmul.f32 %v4469, %v4469
      %v4479 = vmul.f32 %v4470, %v4470
      %v4480 = vmul.f32 %v4471, %v4471
      %v4481 = vmul.f32 %v4472, %v4472
      %v4482 = vadd.f32 %v4473, %v4474
      %v4483 = vadd.f32 %v4482, %v4475
      %v4484 = vadd.f32 %v4483, %v4476
      %v4485 = vadd.f32 %v4484, %v4477
      %v4486 = vadd.f32 %v4485, %v4478
      %v4487 = vadd.f32 %v4486, %v4479
      %v4488 = vadd.f32 %v4487, %v4480
      %v4489 = vsel %vm602, %v4481, 0.0
      %v4490 = vadd.f32 %v4488, %v4489
      %4491 = vadd.xlane.f32.xlu0 %v4490
      %v4492 = vpop.xlane.xlu0 %4491
      %4493 = vmatpush.msra.mxu0 0.0
      %4494 = vmatpush.msra.mxu0 0.0
      %4495 = vmatpush.msra.mxu0 0.0
      %4496 = vmatpush.msra.mxu0 0.0
      %4497 = vmatpush.msra.mxu0 0.0
      %4498 = vmatpush.msra.mxu0 0.0
      %4499 = vmatpush.msra.mxu0 0.0
      %4500 = vmatpush.msra.mxu0 0.0
      %4501 = vmatpush.msra.mxu0 0.0
      %4502 = vmatpush.msra.mxu0 0.0
      %4503 = vmatpush.msra.mxu0 0.0
      %4504 = vmatpush.msra.mxu0 0.0
      %4505 = vmatpush.msra.mxu0 0.0
      %4506 = vmatpush.msra.mxu0 0.0
      %4507 = vmatpush.msra.mxu0 0.0
      %4508 = vmatpush.msra.mxu0 %v4492
      %4509 = vmatmul.f32.gmra.mxu0 %v608
      %v4510 = vpop.f32.mrf.mxu0
      %v4511 = vadd.f32 0.0, %v4510
      %4512 = vdwg.mxu0
      %v4513 = vmul.f32 %v4511, 0.00024414063
      %v4514 = vadd.f32 %v4513, 1e-05
      %v4515 = vrsqrt.pop %v4514
      %v4516 = vmul.f32 %v4515, %v4514
      %v4517 = vmul.f32 %v4516, %v4515
      %v4518 = vmul.f32 0.5, %v4517
      %v4519 = vsub.f32 1.5, %v4518
      %v4520 = vmul.f32 %v4515, %v4519
      %vm4521 = vweird.f32 %v4514
      %vm4522 = vweird.f32 %v4515
      %vm4523 = vmor %vm4521, %vm4522
      %v4524 = vsel %vm4523, %v4515, %v4520
      %4526 = vset.pattern.permute.xlu0 0
      %4527 = vperm.xlu0 %4526, %v4524
      %v4528 = vpop.permute.xlu0 %4527
      %v4530 = vmul.f32 %v4464, %v4528
      %v4531 = vmul.f32 %v4465, %v4528
      %v4532 = vmul.f32 %v4466, %v4528
      %v4533 = vmul.f32 %v4467, %v4528
      %v4534 = vmul.f32 %v4468, %v4528
      %v4535 = vmul.f32 %v4469, %v4528
      %v4536 = vmul.f32 %v4470, %v4528
      %v4537 = vmul.f32 %v4471, %v4528
      %v4538 = vmul.f32 %v4472, %v4528
      %4540 = vset.pattern.permute.xlu0 0
      %4541 = vperm.xlu0 %4540, %v4392
      %v4542 = vpop.permute.xlu0 %4541
      %v4544 = vmul.f32 %v4530, %v4542
      %v4545 = vmul.f32 %v4531, %v4542
      %v4546 = vmul.f32 %v4532, %v4542
      %v4547 = vmul.f32 %v4533, %v4542
      %v4548 = vmul.f32 %v4534, %v4542
      %v4549 = vmul.f32 %v4535, %v4542
      %v4550 = vmul.f32 %v4536, %v4542
      %v4551 = vmul.f32 %v4537, %v4542
      %v4552 = vmul.f32 %v4538, %v4542
      %4554 = vset.pattern.permute.xlu0 0
      %4555 = vperm.xlu0 %4554, %v4394
      %v4556 = vpop.permute.xlu0 %4555
      %v4558 = vadd.f32 %v4544, %v4556
      %v4559 = vadd.f32 %v4545, %v4556
      %v4560 = vadd.f32 %v4546, %v4556
      %v4561 = vadd.f32 %v4547, %v4556
      %v4562 = vadd.f32 %v4548, %v4556
      %v4563 = vadd.f32 %v4549, %v4556
      %v4564 = vadd.f32 %v4550, %v4556
      %v4565 = vadd.f32 %v4551, %v4556
      %v4566 = vadd.f32 %v4552, %v4556
      %vm4567 = vcmp.ge.f32.partialorder %v4558, 0.0
      %vm4568 = vcmp.ge.f32.partialorder %v4559, 0.0
      %vm4569 = vcmp.ge.f32.partialorder %v4560, 0.0
      %vm4570 = vcmp.ge.f32.partialorder %v4561, 0.0
      %vm4571 = vcmp.ge.f32.partialorder %v4562, 0.0
      %vm4572 = vcmp.ge.f32.partialorder %v4563, 0.0
      %vm4573 = vcmp.ge.f32.partialorder %v4564, 0.0
      %vm4574 = vcmp.ge.f32.partialorder %v4565, 0.0
      %vm4575 = vcmp.ge.f32.partialorder %v4566, 0.0
      %v4576 = vmul.f32 %v4558, 0.01
      %v4577 = vmul.f32 %v4559, 0.01
      %v4578 = vmul.f32 %v4560, 0.01
      %v4579 = vmul.f32 %v4561, 0.01
      %v4580 = vmul.f32 %v4562, 0.01
      %v4581 = vmul.f32 %v4563, 0.01
      %v4582 = vmul.f32 %v4564, 0.01
      %v4583 = vmul.f32 %v4565, 0.01
      %v4584 = vmul.f32 %v4566, 0.01
      %v4585 = vsel %vm4567, %v4558, %v4576
      %v4586 = vsel %vm4568, %v4559, %v4577
      %v4587 = vsel %vm4569, %v4560, %v4578
      %v4588 = vsel %vm4570, %v4561, %v4579
      %v4589 = vsel %vm4571, %v4562, %v4580
      %v4590 = vsel %vm4572, %v4563, %v4581
      %v4591 = vsel %vm4573, %v4564, %v4582
      %v4592 = vsel %vm4574, %v4565, %v4583
      %v4593 = vsel %vm4575, %v4566, %v4584
      %v4594 = vmul.f32 %v4585, %v568
      %v4595 = vmul.f32 %v4586, %v569
      %v4596 = vmul.f32 %v4587, %v570
      %v4597 = vmul.f32 %v4588, %v571
      %v4598 = vmul.f32 %v4589, %v572
      %v4599 = vmul.f32 %v4590, %v573
      %v4600 = vmul.f32 %v4591, %v574
      %v4601 = vmul.f32 %v4592, %v575
      %v4602 = vmul.f32 %v4593, %v576
      %4612 = vrot.lane.b32.xlu0 %v4594, 35
      %v4613 = vpop.permute.xlu0 %4612
      %4614 = vrot.lane.b32.xlu0 %v4595, 35
      %v4615 = vpop.permute.xlu0 %4614
      %4616 = vrot.lane.b32.xlu0 %v4596, 35
      %v4617 = vpop.permute.xlu0 %4616
      %4618 = vrot.lane.b32.xlu0 %v4597, 35
      %v4619 = vpop.permute.xlu0 %4618
      %4620 = vrot.lane.b32.xlu0 %v4598, 35
      %v4621 = vpop.permute.xlu0 %4620
      %4622 = vrot.lane.b32.xlu0 %v4599, 35
      %v4623 = vpop.permute.xlu0 %4622
      %4624 = vrot.lane.b32.xlu0 %v4600, 35
      %v4625 = vpop.permute.xlu0 %4624
      %4626 = vrot.lane.b32.xlu0 %v4601, 35
      %v4627 = vpop.permute.xlu0 %4626
      %4628 = vrot.lane.b32.xlu0 %v4602, 35
      %v4629 = vpop.permute.xlu0 %4628
      %v4630 = vsel %vm811, %v4613, %v4615
      %v4631 = vsel %vm811, %v4615, %v4617
      %v4632 = vsel %vm811, %v4617, %v4619
      %v4633 = vsel %vm811, %v4619, %v4621
      %v4634 = vsel %vm811, %v4621, %v4623
      %v4635 = vsel %vm811, %v4623, %v4625
      %v4636 = vsel %vm811, %v4625, %v4627
      %v4637 = vsel %vm811, %v4627, %v4629
      %4647 = vst.msk [vmem:[#allocation2] sm:$0xff] %vm829, %v4613
      %4648 = vst [vmem:[#allocation2 + $0x8] sm:$0xff] %v4630
      %4649 = vst [vmem:[#allocation2 + $0x10] sm:$0xff] %v4631
      %4650 = vst [vmem:[#allocation2 + $0x18] sm:$0xff] %v4632
      %4651 = vst [vmem:[#allocation2 + $0x20] sm:$0xff] %v4633
      %4652 = vst [vmem:[#allocation2 + $0x28] sm:$0xff] %v4634
      %4653 = vst [vmem:[#allocation2 + $0x30] sm:$0xff] %v4635
      %4654 = vst [vmem:[#allocation2 + $0x38] sm:$0xff] %v4636
      %4655 = vst.msk [vmem:[#allocation2 + $0x40] sm:$0xff] %vm838, %v4637
      %v4656 = vld [vmem:[#allocation2] sm:$0xff]
      %v4657 = vld [vmem:[#allocation2 + $0x8] sm:$0xff]
      %v4658 = vld [vmem:[#allocation2 + $0x10] sm:$0xff]
      %v4659 = vld [vmem:[#allocation2 + $0x18] sm:$0xff]
      %v4660 = vld [vmem:[#allocation2 + $0x20] sm:$0xff]
      %v4661 = vld [vmem:[#allocation2 + $0x28] sm:$0xff]
      %v4662 = vld [vmem:[#allocation2 + $0x30] sm:$0xff]
      %v4663 = vld [vmem:[#allocation2 + $0x38] sm:$0xff]
      %v4664 = vld [vmem:[#allocation2 + $0x40] sm:$0xff]
      %v4665 = vpack.c.bf16 %v4656, %v4656
      %v4666 = vpack.c.bf16 %v4657, %v4657
      %v4667 = vpack.c.bf16 %v4658, %v4658
      %v4668 = vpack.c.bf16 %v4659, %v4659
      %v4669 = vpack.c.bf16 %v4660, %v4660
      %v4670 = vpack.c.bf16 %v4661, %v4661
      %v4671 = vpack.c.bf16 %v4662, %v4662
      %v4672 = vpack.c.bf16 %v4663, %v4663
      %v4673 = vpack.c.bf16 %v4664, %v4664
      %v4674 = vld [vmem:[%s5] sm:$0xf]
      %s4675 = scalar_lea.vmem %s5, 4
      %v4676 = vld [vmem:[%s4675] sm:$0xf]
      %4686 = vrot.lane.b32.xlu0 %v4665, 127
      %v4687 = vpop.permute.xlu0 %4686
      %4688 = vrot.lane.b32.xlu0 %v4666, 127
      %v4689 = vpop.permute.xlu0 %4688
      %4690 = vrot.lane.b32.xlu0 %v4667, 127
      %v4691 = vpop.permute.xlu0 %4690
      %4692 = vrot.lane.b32.xlu0 %v4668, 127
      %v4693 = vpop.permute.xlu0 %4692
      %4694 = vrot.lane.b32.xlu0 %v4669, 127
      %v4695 = vpop.permute.xlu0 %4694
      %4696 = vrot.lane.b32.xlu0 %v4670, 127
      %v4697 = vpop.permute.xlu0 %4696
      %4698 = vrot.lane.b32.xlu0 %v4671, 127
      %v4699 = vpop.permute.xlu0 %4698
      %4700 = vrot.lane.b32.xlu0 %v4672, 127
      %v4701 = vpop.permute.xlu0 %4700
      %4702 = vrot.lane.b32.xlu0 %v4673, 127
      %v4703 = vpop.permute.xlu0 %4702
      %v4704 = vsel %vm968, %v4687, %v4689
      %v4705 = vsel %vm968, %v4689, %v4691
      %v4706 = vsel %vm968, %v4691, %v4693
      %v4707 = vsel %vm968, %v4693, %v4695
      %v4708 = vsel %vm968, %v4695, %v4697
      %v4709 = vsel %vm968, %v4697, %v4699
      %v4710 = vsel %vm968, %v4699, %v4701
      %v4711 = vsel %vm968, %v4701, %v4703
      %v4713 = vsel %vm417, %v4676, 0
      %v4716 = vsel %vm421, %v4704, 0
      %v4719 = vsel %vm421, %v4705, 0
      %v4722 = vsel %vm421, %v4706, 0
      %v4725 = vsel %vm421, %v4707, 0
      %v4728 = vsel %vm421, %v4708, 0
      %v4731 = vsel %vm421, %v4709, 0
      %v4734 = vsel %vm421, %v4710, 0
      %v4737 = vsel %vm421, %v4711, 0
      %v4740 = vsel %vm421, %v4703, 0
      %4742 = vmatpush.bf16.msra.mxu0 0
      %4743 = vmatpush.bf16.msra.mxu0 0
      %4744 = vmatpush.bf16.msra.mxu0 0
      %4745 = vmatpush.bf16.msra.mxu0 0
      %4746 = vmatpush.bf16.msra.mxu0 0
      %4747 = vmatpush.bf16.msra.mxu0 0
      %4748 = vmatpush.bf16.msra.mxu0 0
      %4749 = vmatpush.bf16.msra.mxu0 %v4716
      %4750 = vmatmul.bf16.gmra.mxu0 %v4713
      %v4751 = vpop.f32.mrf.mxu0
      %v4752 = vadd.f32 0.0, %v4751
      %v4753 = vpop.f32.mrf.mxu0
      %4754 = vdwg.mxu0
      %4755 = vmatpush.bf16.msra.mxu0 0
      %4756 = vmatpush.bf16.msra.mxu0 0
      %4757 = vmatpush.bf16.msra.mxu0 0
      %4758 = vmatpush.bf16.msra.mxu0 0
      %4759 = vmatpush.bf16.msra.mxu0 0
      %4760 = vmatpush.bf16.msra.mxu0 0
      %4761 = vmatpush.bf16.msra.mxu0 0
      %4762 = vmatpush.bf16.msra.mxu0 %v4719
      %4763 = vmatmul.bf16.gmra.mxu0 %v4713
      %v4764 = vpop.f32.mrf.mxu0
      %v4765 = vadd.f32 0.0, %v4764
      %v4766 = vpop.f32.mrf.mxu0
      %4767 = vdwg.mxu0
      %4768 = vmatpush.bf16.msra.mxu0 0
      %4769 = vmatpush.bf16.msra.mxu0 0
      %4770 = vmatpush.bf16.msra.mxu0 0
      %4771 = vmatpush.bf16.msra.mxu0 0
      %4772 = vmatpush.bf16.msra.mxu0 0
      %4773 = vmatpush.bf16.msra.mxu0 0
      %4774 = vmatpush.bf16.msra.mxu0 0
      %4775 = vmatpush.bf16.msra.mxu0 %v4722
      %4776 = vmatmul.bf16.gmra.mxu0 %v4713
      %v4777 = vpop.f32.mrf.mxu0
      %v4778 = vadd.f32 0.0, %v4777
      %v4779 = vpop.f32.mrf.mxu0
      %4780 = vdwg.mxu0
      %4781 = vmatpush.bf16.msra.mxu0 0
      %4782 = vmatpush.bf16.msra.mxu0 0
      %4783 = vmatpush.bf16.msra.mxu0 0
      %4784 = vmatpush.bf16.msra.mxu0 0
      %4785 = vmatpush.bf16.msra.mxu0 0
      %4786 = vmatpush.bf16.msra.mxu0 0
      %4787 = vmatpush.bf16.msra.mxu0 0
      %4788 = vmatpush.bf16.msra.mxu0 %v4725
      %4789 = vmatmul.bf16.gmra.mxu0 %v4713
      %v4790 = vpop.f32.mrf.mxu0
      %v4791 = vadd.f32 0.0, %v4790
      %v4792 = vpop.f32.mrf.mxu0
      %4793 = vdwg.mxu0
      %4794 = vmatpush.bf16.msra.mxu0 0
      %4795 = vmatpush.bf16.msra.mxu0 0
      %4796 = vmatpush.bf16.msra.mxu0 0
      %4797 = vmatpush.bf16.msra.mxu0 0
      %4798 = vmatpush.bf16.msra.mxu0 0
      %4799 = vmatpush.bf16.msra.mxu0 0
      %4800 = vmatpush.bf16.msra.mxu0 0
      %4801 = vmatpush.bf16.msra.mxu0 %v4728
      %4802 = vmatmul.bf16.gmra.mxu0 %v4713
      %v4803 = vpop.f32.mrf.mxu0
      %v4804 = vadd.f32 0.0, %v4803
      %v4805 = vpop.f32.mrf.mxu0
      %4806 = vdwg.mxu0
      %4807 = vmatpush.bf16.msra.mxu0 0
      %4808 = vmatpush.bf16.msra.mxu0 0
      %4809 = vmatpush.bf16.msra.mxu0 0
      %4810 = vmatpush.bf16.msra.mxu0 0
      %4811 = vmatpush.bf16.msra.mxu0 0
      %4812 = vmatpush.bf16.msra.mxu0 0
      %4813 = vmatpush.bf16.msra.mxu0 0
      %4814 = vmatpush.bf16.msra.mxu0 %v4731
      %4815 = vmatmul.bf16.gmra.mxu0 %v4713
      %v4816 = vpop.f32.mrf.mxu0
      %v4817 = vadd.f32 0.0, %v4816
      %v4818 = vpop.f32.mrf.mxu0
      %4819 = vdwg.mxu0
      %4820 = vmatpush.bf16.msra.mxu0 0
      %4821 = vmatpush.bf16.msra.mxu0 0
      %4822 = vmatpush.bf16.msra.mxu0 0
      %4823 = vmatpush.bf16.msra.mxu0 0
      %4824 = vmatpush.bf16.msra.mxu0 0
      %4825 = vmatpush.bf16.msra.mxu0 0
      %4826 = vmatpush.bf16.msra.mxu0 0
      %4827 = vmatpush.bf16.msra.mxu0 %v4734
      %4828 = vmatmul.bf16.gmra.mxu0 %v4713
      %v4829 = vpop.f32.mrf.mxu0
      %v4830 = vadd.f32 0.0, %v4829
      %v4831 = vpop.f32.mrf.mxu0
      %4832 = vdwg.mxu0
      %4833 = vmatpush.bf16.msra.mxu0 0
      %4834 = vmatpush.bf16.msra.mxu0 0
      %4835 = vmatpush.bf16.msra.mxu0 0
      %4836 = vmatpush.bf16.msra.mxu0 0
      %4837 = vmatpush.bf16.msra.mxu0 0
      %4838 = vmatpush.bf16.msra.mxu0 0
      %4839 = vmatpush.bf16.msra.mxu0 0
      %4840 = vmatpush.bf16.msra.mxu0 %v4737
      %4841 = vmatmul.bf16.gmra.mxu0 %v4713
      %v4842 = vpop.f32.mrf.mxu0
      %v4843 = vadd.f32 0.0, %v4842
      %v4844 = vpop.f32.mrf.mxu0
      %4845 = vdwg.mxu0
      %4846 = vmatpush.bf16.msra.mxu0 0
      %4847 = vmatpush.bf16.msra.mxu0 0
      %4848 = vmatpush.bf16.msra.mxu0 0
      %4849 = vmatpush.bf16.msra.mxu0 0
      %4850 = vmatpush.bf16.msra.mxu0 0
      %4851 = vmatpush.bf16.msra.mxu0 0
      %4852 = vmatpush.bf16.msra.mxu0 0
      %4853 = vmatpush.bf16.msra.mxu0 %v4740
      %4854 = vmatmul.bf16.gmra.mxu0 %v4713
      %v4855 = vpop.f32.mrf.mxu0
      %v4856 = vadd.f32 0.0, %v4855
      %v4857 = vpop.f32.mrf.mxu0
      %4858 = vdwg.mxu0
      %v4860 = vsel %vm417, %v4674, 0
      %v4863 = vsel %vm421, %v4665, 0
      %v4866 = vsel %vm421, %v4666, 0
      %v4869 = vsel %vm421, %v4667, 0
      %v4872 = vsel %vm421, %v4668, 0
      %v4875 = vsel %vm421, %v4669, 0
      %v4878 = vsel %vm421, %v4670, 0
      %v4881 = vsel %vm421, %v4671, 0
      %v4884 = vsel %vm421, %v4672, 0
      %v4887 = vsel %vm421, %v4673, 0
      %4889 = vmatpush.bf16.msra.mxu0 0
      %4890 = vmatpush.bf16.msra.mxu0 0
      %4891 = vmatpush.bf16.msra.mxu0 0
      %4892 = vmatpush.bf16.msra.mxu0 0
      %4893 = vmatpush.bf16.msra.mxu0 0
      %4894 = vmatpush.bf16.msra.mxu0 0
      %4895 = vmatpush.bf16.msra.mxu0 0
      %4896 = vmatpush.bf16.msra.mxu0 %v4863
      %4897 = vmatmul.bf16.gmra.mxu0 %v4860
      %v4898 = vpop.f32.mrf.mxu0
      %v4899 = vadd.f32 %v4752, %v4898
      %v4900 = vpop.f32.mrf.mxu0
      %4901 = vdwg.mxu0
      %4902 = vmatpush.bf16.msra.mxu0 0
      %4903 = vmatpush.bf16.msra.mxu0 0
      %4904 = vmatpush.bf16.msra.mxu0 0
      %4905 = vmatpush.bf16.msra.mxu0 0
      %4906 = vmatpush.bf16.msra.mxu0 0
      %4907 = vmatpush.bf16.msra.mxu0 0
      %4908 = vmatpush.bf16.msra.mxu0 0
      %4909 = vmatpush.bf16.msra.mxu0 %v4866
      %4910 = vmatmul.bf16.gmra.mxu0 %v4860
      %v4911 = vpop.f32.mrf.mxu0
      %v4912 = vadd.f32 %v4765, %v4911
      %v4913 = vpop.f32.mrf.mxu0
      %4914 = vdwg.mxu0
      %4915 = vmatpush.bf16.msra.mxu0 0
      %4916 = vmatpush.bf16.msra.mxu0 0
      %4917 = vmatpush.bf16.msra.mxu0 0
      %4918 = vmatpush.bf16.msra.mxu0 0
      %4919 = vmatpush.bf16.msra.mxu0 0
      %4920 = vmatpush.bf16.msra.mxu0 0
      %4921 = vmatpush.bf16.msra.mxu0 0
      %4922 = vmatpush.bf16.msra.mxu0 %v4869
      %4923 = vmatmul.bf16.gmra.mxu0 %v4860
      %v4924 = vpop.f32.mrf.mxu0
      %v4925 = vadd.f32 %v4778, %v4924
      %v4926 = vpop.f32.mrf.mxu0
      %4927 = vdwg.mxu0
      %4928 = vmatpush.bf16.msra.mxu0 0
      %4929 = vmatpush.bf16.msra.mxu0 0
      %4930 = vmatpush.bf16.msra.mxu0 0
      %4931 = vmatpush.bf16.msra.mxu0 0
      %4932 = vmatpush.bf16.msra.mxu0 0
      %4933 = vmatpush.bf16.msra.mxu0 0
      %4934 = vmatpush.bf16.msra.mxu0 0
      %4935 = vmatpush.bf16.msra.mxu0 %v4872
      %4936 = vmatmul.bf16.gmra.mxu0 %v4860
      %v4937 = vpop.f32.mrf.mxu0
      %v4938 = vadd.f32 %v4791, %v4937
      %v4939 = vpop.f32.mrf.mxu0
      %4940 = vdwg.mxu0
      %4941 = vmatpush.bf16.msra.mxu0 0
      %4942 = vmatpush.bf16.msra.mxu0 0
      %4943 = vmatpush.bf16.msra.mxu0 0
      %4944 = vmatpush.bf16.msra.mxu0 0
      %4945 = vmatpush.bf16.msra.mxu0 0
      %4946 = vmatpush.bf16.msra.mxu0 0
      %4947 = vmatpush.bf16.msra.mxu0 0
      %4948 = vmatpush.bf16.msra.mxu0 %v4875
      %4949 = vmatmul.bf16.gmra.mxu0 %v4860
      %v4950 = vpop.f32.mrf.mxu0
      %v4951 = vadd.f32 %v4804, %v4950
      %v4952 = vpop.f32.mrf.mxu0
      %4953 = vdwg.mxu0
      %4954 = vmatpush.bf16.msra.mxu0 0
      %4955 = vmatpush.bf16.msra.mxu0 0
      %4956 = vmatpush.bf16.msra.mxu0 0
      %4957 = vmatpush.bf16.msra.mxu0 0
      %4958 = vmatpush.bf16.msra.mxu0 0
      %4959 = vmatpush.bf16.msra.mxu0 0
      %4960 = vmatpush.bf16.msra.mxu0 0
      %4961 = vmatpush.bf16.msra.mxu0 %v4878
      %4962 = vmatmul.bf16.gmra.mxu0 %v4860
      %v4963 = vpop.f32.mrf.mxu0
      %v4964 = vadd.f32 %v4817, %v4963
      %v4965 = vpop.f32.mrf.mxu0
      %4966 = vdwg.mxu0
      %4967 = vmatpush.bf16.msra.mxu0 0
      %4968 = vmatpush.bf16.msra.mxu0 0
      %4969 = vmatpush.bf16.msra.mxu0 0
      %4970 = vmatpush.bf16.msra.mxu0 0
      %4971 = vmatpush.bf16.msra.mxu0 0
      %4972 = vmatpush.bf16.msra.mxu0 0
      %4973 = vmatpush.bf16.msra.mxu0 0
      %4974 = vmatpush.bf16.msra.mxu0 %v4881
      %4975 = vmatmul.bf16.gmra.mxu0 %v4860
      %v4976 = vpop.f32.mrf.mxu0
      %v4977 = vadd.f32 %v4830, %v4976
      %v4978 = vpop.f32.mrf.mxu0
      %4979 = vdwg.mxu0
      %4980 = vmatpush.bf16.msra.mxu0 0
      %4981 = vmatpush.bf16.msra.mxu0 0
      %4982 = vmatpush.bf16.msra.mxu0 0
      %4983 = vmatpush.bf16.msra.mxu0 0
      %4984 = vmatpush.bf16.msra.mxu0 0
      %4985 = vmatpush.bf16.msra.mxu0 0
      %4986 = vmatpush.bf16.msra.mxu0 0
      %4987 = vmatpush.bf16.msra.mxu0 %v4884
      %4988 = vmatmul.bf16.gmra.mxu0 %v4860
      %v4989 = vpop.f32.mrf.mxu0
      %v4990 = vadd.f32 %v4843, %v4989
      %v4991 = vpop.f32.mrf.mxu0
      %4992 = vdwg.mxu0
      %4993 = vmatpush.bf16.msra.mxu0 0
      %4994 = vmatpush.bf16.msra.mxu0 0
      %4995 = vmatpush.bf16.msra.mxu0 0
      %4996 = vmatpush.bf16.msra.mxu0 0
      %4997 = vmatpush.bf16.msra.mxu0 0
      %4998 = vmatpush.bf16.msra.mxu0 0
      %4999 = vmatpush.bf16.msra.mxu0 0
      %5000 = vmatpush.bf16.msra.mxu0 %v4887
      %5001 = vmatmul.bf16.gmra.mxu0 %v4860
      %v5002 = vpop.f32.mrf.mxu0
      %v5003 = vadd.f32 %v4856, %v5002
      %v5004 = vpop.f32.mrf.mxu0
      %5005 = vdwg.mxu0
      %s5006 = scalar_lea.vmem %s5, 8
      %v5007 = vld [vmem:[%s5006] sm:$0xf]
      %5008 = vrot.lane.b32.xlu0 %v4665, 126
      %v5009 = vpop.permute.xlu0 %5008
      %5010 = vrot.lane.b32.xlu0 %v4666, 126
      %v5011 = vpop.permute.xlu0 %5010
      %5012 = vrot.lane.b32.xlu0 %v4667, 126
      %v5013 = vpop.permute.xlu0 %5012
      %5014 = vrot.lane.b32.xlu0 %v4668, 126
      %v5015 = vpop.permute.xlu0 %5014
      %5016 = vrot.lane.b32.xlu0 %v4669, 126
      %v5017 = vpop.permute.xlu0 %5016
      %5018 = vrot.lane.b32.xlu0 %v4670, 126
      %v5019 = vpop.permute.xlu0 %5018
      %5020 = vrot.lane.b32.xlu0 %v4671, 126
      %v5021 = vpop.permute.xlu0 %5020
      %5022 = vrot.lane.b32.xlu0 %v4672, 126
      %v5023 = vpop.permute.xlu0 %5022
      %5024 = vrot.lane.b32.xlu0 %v4673, 126
      %v5025 = vpop.permute.xlu0 %5024
      %v5026 = vsel %vm1247, %v5009, %v5011
      %v5027 = vsel %vm1247, %v5011, %v5013
      %v5028 = vsel %vm1247, %v5013, %v5015
      %v5029 = vsel %vm1247, %v5015, %v5017
      %v5030 = vsel %vm1247, %v5017, %v5019
      %v5031 = vsel %vm1247, %v5019, %v5021
      %v5032 = vsel %vm1247, %v5021, %v5023
      %v5033 = vsel %vm1247, %v5023, %v5025
      %v5035 = vsel %vm417, %v5007, 0
      %v5038 = vsel %vm421, %v5026, 0
      %v5041 = vsel %vm421, %v5027, 0
      %v5044 = vsel %vm421, %v5028, 0
      %v5047 = vsel %vm421, %v5029, 0
      %v5050 = vsel %vm421, %v5030, 0
      %v5053 = vsel %vm421, %v5031, 0
      %v5056 = vsel %vm421, %v5032, 0
      %v5059 = vsel %vm421, %v5033, 0
      %v5062 = vsel %vm421, %v5025, 0
      %5064 = vmatpush.bf16.msra.mxu0 0
      %5065 = vmatpush.bf16.msra.mxu0 0
      %5066 = vmatpush.bf16.msra.mxu0 0
      %5067 = vmatpush.bf16.msra.mxu0 0
      %5068 = vmatpush.bf16.msra.mxu0 0
      %5069 = vmatpush.bf16.msra.mxu0 0
      %5070 = vmatpush.bf16.msra.mxu0 0
      %5071 = vmatpush.bf16.msra.mxu0 %v5038
      %5072 = vmatmul.bf16.gmra.mxu0 %v5035
      %v5073 = vpop.f32.mrf.mxu0
      %v5074 = vadd.f32 0.0, %v5073
      %v5075 = vpop.f32.mrf.mxu0
      %5076 = vdwg.mxu0
      %5077 = vmatpush.bf16.msra.mxu0 0
      %5078 = vmatpush.bf16.msra.mxu0 0
      %5079 = vmatpush.bf16.msra.mxu0 0
      %5080 = vmatpush.bf16.msra.mxu0 0
      %5081 = vmatpush.bf16.msra.mxu0 0
      %5082 = vmatpush.bf16.msra.mxu0 0
      %5083 = vmatpush.bf16.msra.mxu0 0
      %5084 = vmatpush.bf16.msra.mxu0 %v5041
      %5085 = vmatmul.bf16.gmra.mxu0 %v5035
      %v5086 = vpop.f32.mrf.mxu0
      %v5087 = vadd.f32 0.0, %v5086
      %v5088 = vpop.f32.mrf.mxu0
      %5089 = vdwg.mxu0
      %5090 = vmatpush.bf16.msra.mxu0 0
      %5091 = vmatpush.bf16.msra.mxu0 0
      %5092 = vmatpush.bf16.msra.mxu0 0
      %5093 = vmatpush.bf16.msra.mxu0 0
      %5094 = vmatpush.bf16.msra.mxu0 0
      %5095 = vmatpush.bf16.msra.mxu0 0
      %5096 = vmatpush.bf16.msra.mxu0 0
      %5097 = vmatpush.bf16.msra.mxu0 %v5044
      %5098 = vmatmul.bf16.gmra.mxu0 %v5035
      %v5099 = vpop.f32.mrf.mxu0
      %v5100 = vadd.f32 0.0, %v5099
      %v5101 = vpop.f32.mrf.mxu0
      %5102 = vdwg.mxu0
      %5103 = vmatpush.bf16.msra.mxu0 0
      %5104 = vmatpush.bf16.msra.mxu0 0
      %5105 = vmatpush.bf16.msra.mxu0 0
      %5106 = vmatpush.bf16.msra.mxu0 0
      %5107 = vmatpush.bf16.msra.mxu0 0
      %5108 = vmatpush.bf16.msra.mxu0 0
      %5109 = vmatpush.bf16.msra.mxu0 0
      %5110 = vmatpush.bf16.msra.mxu0 %v5047
      %5111 = vmatmul.bf16.gmra.mxu0 %v5035
      %v5112 = vpop.f32.mrf.mxu0
      %v5113 = vadd.f32 0.0, %v5112
      %v5114 = vpop.f32.mrf.mxu0
      %5115 = vdwg.mxu0
      %5116 = vmatpush.bf16.msra.mxu0 0
      %5117 = vmatpush.bf16.msra.mxu0 0
      %5118 = vmatpush.bf16.msra.mxu0 0
      %5119 = vmatpush.bf16.msra.mxu0 0
      %5120 = vmatpush.bf16.msra.mxu0 0
      %5121 = vmatpush.bf16.msra.mxu0 0
      %5122 = vmatpush.bf16.msra.mxu0 0
      %5123 = vmatpush.bf16.msra.mxu0 %v5050
      %5124 = vmatmul.bf16.gmra.mxu0 %v5035
      %v5125 = vpop.f32.mrf.mxu0
      %v5126 = vadd.f32 0.0, %v5125
      %v5127 = vpop.f32.mrf.mxu0
      %5128 = vdwg.mxu0
      %5129 = vmatpush.bf16.msra.mxu0 0
      %5130 = vmatpush.bf16.msra.mxu0 0
      %5131 = vmatpush.bf16.msra.mxu0 0
      %5132 = vmatpush.bf16.msra.mxu0 0
      %5133 = vmatpush.bf16.msra.mxu0 0
      %5134 = vmatpush.bf16.msra.mxu0 0
      %5135 = vmatpush.bf16.msra.mxu0 0
      %5136 = vmatpush.bf16.msra.mxu0 %v5053
      %5137 = vmatmul.bf16.gmra.mxu0 %v5035
      %v5138 = vpop.f32.mrf.mxu0
      %v5139 = vadd.f32 0.0, %v5138
      %v5140 = vpop.f32.mrf.mxu0
      %5141 = vdwg.mxu0
      %5142 = vmatpush.bf16.msra.mxu0 0
      %5143 = vmatpush.bf16.msra.mxu0 0
      %5144 = vmatpush.bf16.msra.mxu0 0
      %5145 = vmatpush.bf16.msra.mxu0 0
      %5146 = vmatpush.bf16.msra.mxu0 0
      %5147 = vmatpush.bf16.msra.mxu0 0
      %5148 = vmatpush.bf16.msra.mxu0 0
      %5149 = vmatpush.bf16.msra.mxu0 %v5056
      %5150 = vmatmul.bf16.gmra.mxu0 %v5035
      %v5151 = vpop.f32.mrf.mxu0
      %v5152 = vadd.f32 0.0, %v5151
      %v5153 = vpop.f32.mrf.mxu0
      %5154 = vdwg.mxu0
      %5155 = vmatpush.bf16.msra.mxu0 0
      %5156 = vmatpush.bf16.msra.mxu0 0
      %5157 = vmatpush.bf16.msra.mxu0 0
      %5158 = vmatpush.bf16.msra.mxu0 0
      %5159 = vmatpush.bf16.msra.mxu0 0
      %5160 = vmatpush.bf16.msra.mxu0 0
      %5161 = vmatpush.bf16.msra.mxu0 0
      %5162 = vmatpush.bf16.msra.mxu0 %v5059
      %5163 = vmatmul.bf16.gmra.mxu0 %v5035
      %v5164 = vpop.f32.mrf.mxu0
      %v5165 = vadd.f32 0.0, %v5164
      %v5166 = vpop.f32.mrf.mxu0
      %5167 = vdwg.mxu0
      %5168 = vmatpush.bf16.msra.mxu0 0
      %5169 = vmatpush.bf16.msra.mxu0 0
      %5170 = vmatpush.bf16.msra.mxu0 0
      %5171 = vmatpush.bf16.msra.mxu0 0
      %5172 = vmatpush.bf16.msra.mxu0 0
      %5173 = vmatpush.bf16.msra.mxu0 0
      %5174 = vmatpush.bf16.msra.mxu0 0
      %5175 = vmatpush.bf16.msra.mxu0 %v5062
      %5176 = vmatmul.bf16.gmra.mxu0 %v5035
      %v5177 = vpop.f32.mrf.mxu0
      %v5178 = vadd.f32 0.0, %v5177
      %v5179 = vpop.f32.mrf.mxu0
      %5180 = vdwg.mxu0
      %v5181 = vadd.f32 %v4899, %v5074
      %v5182 = vadd.f32 %v4912, %v5087
      %v5183 = vadd.f32 %v4925, %v5100
      %v5184 = vadd.f32 %v4938, %v5113
      %v5185 = vadd.f32 %v4951, %v5126
      %v5186 = vadd.f32 %v4964, %v5139
      %v5187 = vadd.f32 %v4977, %v5152
      %v5188 = vadd.f32 %v4990, %v5165
      %v5189 = vadd.f32 %v5003, %v5178
      %s5190 = scalar_lea.vmem %s5, 12
      %v5191 = vld [vmem:[%s5190] sm:$0xf]
      %5192 = vrot.lane.b32.xlu0 %v4665, 94
      %v5193 = vpop.permute.xlu0 %5192
      %5194 = vrot.lane.b32.xlu0 %v4666, 94
      %v5195 = vpop.permute.xlu0 %5194
      %5196 = vrot.lane.b32.xlu0 %v4667, 94
      %v5197 = vpop.permute.xlu0 %5196
      %5198 = vrot.lane.b32.xlu0 %v4668, 94
      %v5199 = vpop.permute.xlu0 %5198
      %5200 = vrot.lane.b32.xlu0 %v4669, 94
      %v5201 = vpop.permute.xlu0 %5200
      %5202 = vrot.lane.b32.xlu0 %v4670, 94
      %v5203 = vpop.permute.xlu0 %5202
      %5204 = vrot.lane.b32.xlu0 %v4671, 94
      %v5205 = vpop.permute.xlu0 %5204
      %5206 = vrot.lane.b32.xlu0 %v4672, 94
      %v5207 = vpop.permute.xlu0 %5206
      %5208 = vrot.lane.b32.xlu0 %v4673, 94
      %v5209 = vpop.permute.xlu0 %5208
      %v5210 = vsel %vm1414, %v5193, %v5195
      %v5211 = vsel %vm1414, %v5195, %v5197
      %v5212 = vsel %vm1414, %v5197, %v5199
      %v5213 = vsel %vm1414, %v5199, %v5201
      %v5214 = vsel %vm1414, %v5201, %v5203
      %v5215 = vsel %vm1414, %v5203, %v5205
      %v5216 = vsel %vm1414, %v5205, %v5207
      %v5217 = vsel %vm1414, %v5207, %v5209
      %v5219 = vsel %vm417, %v5191, 0
      %v5222 = vsel %vm421, %v5210, 0
      %v5225 = vsel %vm421, %v5211, 0
      %v5228 = vsel %vm421, %v5212, 0
      %v5231 = vsel %vm421, %v5213, 0
      %v5234 = vsel %vm421, %v5214, 0
      %v5237 = vsel %vm421, %v5215, 0
      %v5240 = vsel %vm421, %v5216, 0
      %v5243 = vsel %vm421, %v5217, 0
      %v5246 = vsel %vm421, %v5209, 0
      %5248 = vmatpush.bf16.msra.mxu0 0
      %5249 = vmatpush.bf16.msra.mxu0 0
      %5250 = vmatpush.bf16.msra.mxu0 0
      %5251 = vmatpush.bf16.msra.mxu0 0
      %5252 = vmatpush.bf16.msra.mxu0 0
      %5253 = vmatpush.bf16.msra.mxu0 0
      %5254 = vmatpush.bf16.msra.mxu0 0
      %5255 = vmatpush.bf16.msra.mxu0 %v5222
      %5256 = vmatmul.bf16.gmra.mxu0 %v5219
      %v5257 = vpop.f32.mrf.mxu0
      %v5258 = vadd.f32 0.0, %v5257
      %v5259 = vpop.f32.mrf.mxu0
      %5260 = vdwg.mxu0
      %5261 = vmatpush.bf16.msra.mxu0 0
      %5262 = vmatpush.bf16.msra.mxu0 0
      %5263 = vmatpush.bf16.msra.mxu0 0
      %5264 = vmatpush.bf16.msra.mxu0 0
      %5265 = vmatpush.bf16.msra.mxu0 0
      %5266 = vmatpush.bf16.msra.mxu0 0
      %5267 = vmatpush.bf16.msra.mxu0 0
      %5268 = vmatpush.bf16.msra.mxu0 %v5225
      %5269 = vmatmul.bf16.gmra.mxu0 %v5219
      %v5270 = vpop.f32.mrf.mxu0
      %v5271 = vadd.f32 0.0, %v5270
      %v5272 = vpop.f32.mrf.mxu0
      %5273 = vdwg.mxu0
      %5274 = vmatpush.bf16.msra.mxu0 0
      %5275 = vmatpush.bf16.msra.mxu0 0
      %5276 = vmatpush.bf16.msra.mxu0 0
      %5277 = vmatpush.bf16.msra.mxu0 0
      %5278 = vmatpush.bf16.msra.mxu0 0
      %5279 = vmatpush.bf16.msra.mxu0 0
      %5280 = vmatpush.bf16.msra.mxu0 0
      %5281 = vmatpush.bf16.msra.mxu0 %v5228
      %5282 = vmatmul.bf16.gmra.mxu0 %v5219
      %v5283 = vpop.f32.mrf.mxu0
      %v5284 = vadd.f32 0.0, %v5283
      %v5285 = vpop.f32.mrf.mxu0
      %5286 = vdwg.mxu0
      %5287 = vmatpush.bf16.msra.mxu0 0
      %5288 = vmatpush.bf16.msra.mxu0 0
      %5289 = vmatpush.bf16.msra.mxu0 0
      %5290 = vmatpush.bf16.msra.mxu0 0
      %5291 = vmatpush.bf16.msra.mxu0 0
      %5292 = vmatpush.bf16.msra.mxu0 0
      %5293 = vmatpush.bf16.msra.mxu0 0
      %5294 = vmatpush.bf16.msra.mxu0 %v5231
      %5295 = vmatmul.bf16.gmra.mxu0 %v5219
      %v5296 = vpop.f32.mrf.mxu0
      %v5297 = vadd.f32 0.0, %v5296
      %v5298 = vpop.f32.mrf.mxu0
      %5299 = vdwg.mxu0
      %5300 = vmatpush.bf16.msra.mxu0 0
      %5301 = vmatpush.bf16.msra.mxu0 0
      %5302 = vmatpush.bf16.msra.mxu0 0
      %5303 = vmatpush.bf16.msra.mxu0 0
      %5304 = vmatpush.bf16.msra.mxu0 0
      %5305 = vmatpush.bf16.msra.mxu0 0
      %5306 = vmatpush.bf16.msra.mxu0 0
      %5307 = vmatpush.bf16.msra.mxu0 %v5234
      %5308 = vmatmul.bf16.gmra.mxu0 %v5219
      %v5309 = vpop.f32.mrf.mxu0
      %v5310 = vadd.f32 0.0, %v5309
      %v5311 = vpop.f32.mrf.mxu0
      %5312 = vdwg.mxu0
      %5313 = vmatpush.bf16.msra.mxu0 0
      %5314 = vmatpush.bf16.msra.mxu0 0
      %5315 = vmatpush.bf16.msra.mxu0 0
      %5316 = vmatpush.bf16.msra.mxu0 0
      %5317 = vmatpush.bf16.msra.mxu0 0
      %5318 = vmatpush.bf16.msra.mxu0 0
      %5319 = vmatpush.bf16.msra.mxu0 0
      %5320 = vmatpush.bf16.msra.mxu0 %v5237
      %5321 = vmatmul.bf16.gmra.mxu0 %v5219
      %v5322 = vpop.f32.mrf.mxu0
      %v5323 = vadd.f32 0.0, %v5322
      %v5324 = vpop.f32.mrf.mxu0
      %5325 = vdwg.mxu0
      %5326 = vmatpush.bf16.msra.mxu0 0
      %5327 = vmatpush.bf16.msra.mxu0 0
      %5328 = vmatpush.bf16.msra.mxu0 0
      %5329 = vmatpush.bf16.msra.mxu0 0
      %5330 = vmatpush.bf16.msra.mxu0 0
      %5331 = vmatpush.bf16.msra.mxu0 0
      %5332 = vmatpush.bf16.msra.mxu0 0
      %5333 = vmatpush.bf16.msra.mxu0 %v5240
      %5334 = vmatmul.bf16.gmra.mxu0 %v5219
      %v5335 = vpop.f32.mrf.mxu0
      %v5336 = vadd.f32 0.0, %v5335
      %v5337 = vpop.f32.mrf.mxu0
      %5338 = vdwg.mxu0
      %5339 = vmatpush.bf16.msra.mxu0 0
      %5340 = vmatpush.bf16.msra.mxu0 0
      %5341 = vmatpush.bf16.msra.mxu0 0
      %5342 = vmatpush.bf16.msra.mxu0 0
      %5343 = vmatpush.bf16.msra.mxu0 0
      %5344 = vmatpush.bf16.msra.mxu0 0
      %5345 = vmatpush.bf16.msra.mxu0 0
      %5346 = vmatpush.bf16.msra.mxu0 %v5243
      %5347 = vmatmul.bf16.gmra.mxu0 %v5219
      %v5348 = vpop.f32.mrf.mxu0
      %v5349 = vadd.f32 0.0, %v5348
      %v5350 = vpop.f32.mrf.mxu0
      %5351 = vdwg.mxu0
      %5352 = vmatpush.bf16.msra.mxu0 0
      %5353 = vmatpush.bf16.msra.mxu0 0
      %5354 = vmatpush.bf16.msra.mxu0 0
      %5355 = vmatpush.bf16.msra.mxu0 0
      %5356 = vmatpush.bf16.msra.mxu0 0
      %5357 = vmatpush.bf16.msra.mxu0 0
      %5358 = vmatpush.bf16.msra.mxu0 0
      %5359 = vmatpush.bf16.msra.mxu0 %v5246
      %5360 = vmatmul.bf16.gmra.mxu0 %v5219
      %v5361 = vpop.f32.mrf.mxu0
      %v5362 = vadd.f32 0.0, %v5361
      %v5363 = vpop.f32.mrf.mxu0
      %5364 = vdwg.mxu0
      %v5365 = vadd.f32 %v5181, %v5258
      %v5366 = vadd.f32 %v5182, %v5271
      %v5367 = vadd.f32 %v5183, %v5284
      %v5368 = vadd.f32 %v5184, %v5297
      %v5369 = vadd.f32 %v5185, %v5310
      %v5370 = vadd.f32 %v5186, %v5323
      %v5371 = vadd.f32 %v5187, %v5336
      %v5372 = vadd.f32 %v5188, %v5349
      %v5373 = vadd.f32 %v5189, %v5362
      %s5374 = scalar_lea.vmem %s5, 16
      %v5375 = vld [vmem:[%s5374] sm:$0xf]
      %5376 = vrot.lane.b32.xlu0 %v4665, 93
      %v5377 = vpop.permute.xlu0 %5376
      %5378 = vrot.lane.b32.xlu0 %v4666, 93
      %v5379 = vpop.permute.xlu0 %5378
      %5380 = vrot.lane.b32.xlu0 %v4667, 93
      %v5381 = vpop.permute.xlu0 %5380
      %5382 = vrot.lane.b32.xlu0 %v4668, 93
      %v5383 = vpop.permute.xlu0 %5382
      %5384 = vrot.lane.b32.xlu0 %v4669, 93
      %v5385 = vpop.permute.xlu0 %5384
      %5386 = vrot.lane.b32.xlu0 %v4670, 93
      %v5387 = vpop.permute.xlu0 %5386
      %5388 = vrot.lane.b32.xlu0 %v4671, 93
      %v5389 = vpop.permute.xlu0 %5388
      %5390 = vrot.lane.b32.xlu0 %v4672, 93
      %v5391 = vpop.permute.xlu0 %5390
      %5392 = vrot.lane.b32.xlu0 %v4673, 93
      %v5393 = vpop.permute.xlu0 %5392
      %v5394 = vsel %vm1581, %v5377, %v5379
      %v5395 = vsel %vm1581, %v5379, %v5381
      %v5396 = vsel %vm1581, %v5381, %v5383
      %v5397 = vsel %vm1581, %v5383, %v5385
      %v5398 = vsel %vm1581, %v5385, %v5387
      %v5399 = vsel %vm1581, %v5387, %v5389
      %v5400 = vsel %vm1581, %v5389, %v5391
      %v5401 = vsel %vm1581, %v5391, %v5393
      %v5403 = vsel %vm417, %v5375, 0
      %v5406 = vsel %vm421, %v5394, 0
      %v5409 = vsel %vm421, %v5395, 0
      %v5412 = vsel %vm421, %v5396, 0
      %v5415 = vsel %vm421, %v5397, 0
      %v5418 = vsel %vm421, %v5398, 0
      %v5421 = vsel %vm421, %v5399, 0
      %v5424 = vsel %vm421, %v5400, 0
      %v5427 = vsel %vm421, %v5401, 0
      %v5430 = vsel %vm421, %v5393, 0
      %5432 = vmatpush.bf16.msra.mxu0 0
      %5433 = vmatpush.bf16.msra.mxu0 0
      %5434 = vmatpush.bf16.msra.mxu0 0
      %5435 = vmatpush.bf16.msra.mxu0 0
      %5436 = vmatpush.bf16.msra.mxu0 0
      %5437 = vmatpush.bf16.msra.mxu0 0
      %5438 = vmatpush.bf16.msra.mxu0 0
      %5439 = vmatpush.bf16.msra.mxu0 %v5406
      %5440 = vmatmul.bf16.gmra.mxu0 %v5403
      %v5441 = vpop.f32.mrf.mxu0
      %v5442 = vadd.f32 0.0, %v5441
      %v5443 = vpop.f32.mrf.mxu0
      %5444 = vdwg.mxu0
      %5445 = vmatpush.bf16.msra.mxu0 0
      %5446 = vmatpush.bf16.msra.mxu0 0
      %5447 = vmatpush.bf16.msra.mxu0 0
      %5448 = vmatpush.bf16.msra.mxu0 0
      %5449 = vmatpush.bf16.msra.mxu0 0
      %5450 = vmatpush.bf16.msra.mxu0 0
      %5451 = vmatpush.bf16.msra.mxu0 0
      %5452 = vmatpush.bf16.msra.mxu0 %v5409
      %5453 = vmatmul.bf16.gmra.mxu0 %v5403
      %v5454 = vpop.f32.mrf.mxu0
      %v5455 = vadd.f32 0.0, %v5454
      %v5456 = vpop.f32.mrf.mxu0
      %5457 = vdwg.mxu0
      %5458 = vmatpush.bf16.msra.mxu0 0
      %5459 = vmatpush.bf16.msra.mxu0 0
      %5460 = vmatpush.bf16.msra.mxu0 0
      %5461 = vmatpush.bf16.msra.mxu0 0
      %5462 = vmatpush.bf16.msra.mxu0 0
      %5463 = vmatpush.bf16.msra.mxu0 0
      %5464 = vmatpush.bf16.msra.mxu0 0
      %5465 = vmatpush.bf16.msra.mxu0 %v5412
      %5466 = vmatmul.bf16.gmra.mxu0 %v5403
      %v5467 = vpop.f32.mrf.mxu0
      %v5468 = vadd.f32 0.0, %v5467
      %v5469 = vpop.f32.mrf.mxu0
      %5470 = vdwg.mxu0
      %5471 = vmatpush.bf16.msra.mxu0 0
      %5472 = vmatpush.bf16.msra.mxu0 0
      %5473 = vmatpush.bf16.msra.mxu0 0
      %5474 = vmatpush.bf16.msra.mxu0 0
      %5475 = vmatpush.bf16.msra.mxu0 0
      %5476 = vmatpush.bf16.msra.mxu0 0
      %5477 = vmatpush.bf16.msra.mxu0 0
      %5478 = vmatpush.bf16.msra.mxu0 %v5415
      %5479 = vmatmul.bf16.gmra.mxu0 %v5403
      %v5480 = vpop.f32.mrf.mxu0
      %v5481 = vadd.f32 0.0, %v5480
      %v5482 = vpop.f32.mrf.mxu0
      %5483 = vdwg.mxu0
      %5484 = vmatpush.bf16.msra.mxu0 0
      %5485 = vmatpush.bf16.msra.mxu0 0
      %5486 = vmatpush.bf16.msra.mxu0 0
      %5487 = vmatpush.bf16.msra.mxu0 0
      %5488 = vmatpush.bf16.msra.mxu0 0
      %5489 = vmatpush.bf16.msra.mxu0 0
      %5490 = vmatpush.bf16.msra.mxu0 0
      %5491 = vmatpush.bf16.msra.mxu0 %v5418
      %5492 = vmatmul.bf16.gmra.mxu0 %v5403
      %v5493 = vpop.f32.mrf.mxu0
      %v5494 = vadd.f32 0.0, %v5493
      %v5495 = vpop.f32.mrf.mxu0
      %5496 = vdwg.mxu0
      %5497 = vmatpush.bf16.msra.mxu0 0
      %5498 = vmatpush.bf16.msra.mxu0 0
      %5499 = vmatpush.bf16.msra.mxu0 0
      %5500 = vmatpush.bf16.msra.mxu0 0
      %5501 = vmatpush.bf16.msra.mxu0 0
      %5502 = vmatpush.bf16.msra.mxu0 0
      %5503 = vmatpush.bf16.msra.mxu0 0
      %5504 = vmatpush.bf16.msra.mxu0 %v5421
      %5505 = vmatmul.bf16.gmra.mxu0 %v5403
      %v5506 = vpop.f32.mrf.mxu0
      %v5507 = vadd.f32 0.0, %v5506
      %v5508 = vpop.f32.mrf.mxu0
      %5509 = vdwg.mxu0
      %5510 = vmatpush.bf16.msra.mxu0 0
      %5511 = vmatpush.bf16.msra.mxu0 0
      %5512 = vmatpush.bf16.msra.mxu0 0
      %5513 = vmatpush.bf16.msra.mxu0 0
      %5514 = vmatpush.bf16.msra.mxu0 0
      %5515 = vmatpush.bf16.msra.mxu0 0
      %5516 = vmatpush.bf16.msra.mxu0 0
      %5517 = vmatpush.bf16.msra.mxu0 %v5424
      %5518 = vmatmul.bf16.gmra.mxu0 %v5403
      %v5519 = vpop.f32.mrf.mxu0
      %v5520 = vadd.f32 0.0, %v5519
      %v5521 = vpop.f32.mrf.mxu0
      %5522 = vdwg.mxu0
      %5523 = vmatpush.bf16.msra.mxu0 0
      %5524 = vmatpush.bf16.msra.mxu0 0
      %5525 = vmatpush.bf16.msra.mxu0 0
      %5526 = vmatpush.bf16.msra.mxu0 0
      %5527 = vmatpush.bf16.msra.mxu0 0
      %5528 = vmatpush.bf16.msra.mxu0 0
      %5529 = vmatpush.bf16.msra.mxu0 0
      %5530 = vmatpush.bf16.msra.mxu0 %v5427
      %5531 = vmatmul.bf16.gmra.mxu0 %v5403
      %v5532 = vpop.f32.mrf.mxu0
      %v5533 = vadd.f32 0.0, %v5532
      %v5534 = vpop.f32.mrf.mxu0
      %5535 = vdwg.mxu0
      %5536 = vmatpush.bf16.msra.mxu0 0
      %5537 = vmatpush.bf16.msra.mxu0 0
      %5538 = vmatpush.bf16.msra.mxu0 0
      %5539 = vmatpush.bf16.msra.mxu0 0
      %5540 = vmatpush.bf16.msra.mxu0 0
      %5541 = vmatpush.bf16.msra.mxu0 0
      %5542 = vmatpush.bf16.msra.mxu0 0
      %5543 = vmatpush.bf16.msra.mxu0 %v5430
      %5544 = vmatmul.bf16.gmra.mxu0 %v5403
      %v5545 = vpop.f32.mrf.mxu0
      %v5546 = vadd.f32 0.0, %v5545
      %v5547 = vpop.f32.mrf.mxu0
      %5548 = vdwg.mxu0
      %v5549 = vadd.f32 %v5365, %v5442
      %v5550 = vadd.f32 %v5366, %v5455
      %v5551 = vadd.f32 %v5367, %v5468
      %v5552 = vadd.f32 %v5368, %v5481
      %v5553 = vadd.f32 %v5369, %v5494
      %v5554 = vadd.f32 %v5370, %v5507
      %v5555 = vadd.f32 %v5371, %v5520
      %v5556 = vadd.f32 %v5372, %v5533
      %v5557 = vadd.f32 %v5373, %v5546
      %s5558 = scalar_lea.vmem %s5, 20
      %v5559 = vld [vmem:[%s5558] sm:$0xf]
      %5560 = vrot.lane.b32.xlu0 %v4665, 92
      %v5561 = vpop.permute.xlu0 %5560
      %5562 = vrot.lane.b32.xlu0 %v4666, 92
      %v5563 = vpop.permute.xlu0 %5562
      %5564 = vrot.lane.b32.xlu0 %v4667, 92
      %v5565 = vpop.permute.xlu0 %5564
      %5566 = vrot.lane.b32.xlu0 %v4668, 92
      %v5567 = vpop.permute.xlu0 %5566
      %5568 = vrot.lane.b32.xlu0 %v4669, 92
      %v5569 = vpop.permute.xlu0 %5568
      %5570 = vrot.lane.b32.xlu0 %v4670, 92
      %v5571 = vpop.permute.xlu0 %5570
      %5572 = vrot.lane.b32.xlu0 %v4671, 92
      %v5573 = vpop.permute.xlu0 %5572
      %5574 = vrot.lane.b32.xlu0 %v4672, 92
      %v5575 = vpop.permute.xlu0 %5574
      %5576 = vrot.lane.b32.xlu0 %v4673, 92
      %v5577 = vpop.permute.xlu0 %5576
      %v5578 = vsel %vm1748, %v5561, %v5563
      %v5579 = vsel %vm1748, %v5563, %v5565
      %v5580 = vsel %vm1748, %v5565, %v5567
      %v5581 = vsel %vm1748, %v5567, %v5569
      %v5582 = vsel %vm1748, %v5569, %v5571
      %v5583 = vsel %vm1748, %v5571, %v5573
      %v5584 = vsel %vm1748, %v5573, %v5575
      %v5585 = vsel %vm1748, %v5575, %v5577
      %v5587 = vsel %vm417, %v5559, 0
      %v5590 = vsel %vm421, %v5578, 0
      %v5593 = vsel %vm421, %v5579, 0
      %v5596 = vsel %vm421, %v5580, 0
      %v5599 = vsel %vm421, %v5581, 0
      %v5602 = vsel %vm421, %v5582, 0
      %v5605 = vsel %vm421, %v5583, 0
      %v5608 = vsel %vm421, %v5584, 0
      %v5611 = vsel %vm421, %v5585, 0
      %v5614 = vsel %vm421, %v5577, 0
      %5616 = vmatpush.bf16.msra.mxu0 0
      %5617 = vmatpush.bf16.msra.mxu0 0
      %5618 = vmatpush.bf16.msra.mxu0 0
      %5619 = vmatpush.bf16.msra.mxu0 0
      %5620 = vmatpush.bf16.msra.mxu0 0
      %5621 = vmatpush.bf16.msra.mxu0 0
      %5622 = vmatpush.bf16.msra.mxu0 0
      %5623 = vmatpush.bf16.msra.mxu0 %v5590
      %5624 = vmatmul.bf16.gmra.mxu0 %v5587
      %v5625 = vpop.f32.mrf.mxu0
      %v5626 = vadd.f32 0.0, %v5625
      %v5627 = vpop.f32.mrf.mxu0
      %5628 = vdwg.mxu0
      %5629 = vmatpush.bf16.msra.mxu0 0
      %5630 = vmatpush.bf16.msra.mxu0 0
      %5631 = vmatpush.bf16.msra.mxu0 0
      %5632 = vmatpush.bf16.msra.mxu0 0
      %5633 = vmatpush.bf16.msra.mxu0 0
      %5634 = vmatpush.bf16.msra.mxu0 0
      %5635 = vmatpush.bf16.msra.mxu0 0
      %5636 = vmatpush.bf16.msra.mxu0 %v5593
      %5637 = vmatmul.bf16.gmra.mxu0 %v5587
      %v5638 = vpop.f32.mrf.mxu0
      %v5639 = vadd.f32 0.0, %v5638
      %v5640 = vpop.f32.mrf.mxu0
      %5641 = vdwg.mxu0
      %5642 = vmatpush.bf16.msra.mxu0 0
      %5643 = vmatpush.bf16.msra.mxu0 0
      %5644 = vmatpush.bf16.msra.mxu0 0
      %5645 = vmatpush.bf16.msra.mxu0 0
      %5646 = vmatpush.bf16.msra.mxu0 0
      %5647 = vmatpush.bf16.msra.mxu0 0
      %5648 = vmatpush.bf16.msra.mxu0 0
      %5649 = vmatpush.bf16.msra.mxu0 %v5596
      %5650 = vmatmul.bf16.gmra.mxu0 %v5587
      %v5651 = vpop.f32.mrf.mxu0
      %v5652 = vadd.f32 0.0, %v5651
      %v5653 = vpop.f32.mrf.mxu0
      %5654 = vdwg.mxu0
      %5655 = vmatpush.bf16.msra.mxu0 0
      %5656 = vmatpush.bf16.msra.mxu0 0
      %5657 = vmatpush.bf16.msra.mxu0 0
      %5658 = vmatpush.bf16.msra.mxu0 0
      %5659 = vmatpush.bf16.msra.mxu0 0
      %5660 = vmatpush.bf16.msra.mxu0 0
      %5661 = vmatpush.bf16.msra.mxu0 0
      %5662 = vmatpush.bf16.msra.mxu0 %v5599
      %5663 = vmatmul.bf16.gmra.mxu0 %v5587
      %v5664 = vpop.f32.mrf.mxu0
      %v5665 = vadd.f32 0.0, %v5664
      %v5666 = vpop.f32.mrf.mxu0
      %5667 = vdwg.mxu0
      %5668 = vmatpush.bf16.msra.mxu0 0
      %5669 = vmatpush.bf16.msra.mxu0 0
      %5670 = vmatpush.bf16.msra.mxu0 0
      %5671 = vmatpush.bf16.msra.mxu0 0
      %5672 = vmatpush.bf16.msra.mxu0 0
      %5673 = vmatpush.bf16.msra.mxu0 0
      %5674 = vmatpush.bf16.msra.mxu0 0
      %5675 = vmatpush.bf16.msra.mxu0 %v5602
      %5676 = vmatmul.bf16.gmra.mxu0 %v5587
      %v5677 = vpop.f32.mrf.mxu0
      %v5678 = vadd.f32 0.0, %v5677
      %v5679 = vpop.f32.mrf.mxu0
      %5680 = vdwg.mxu0
      %5681 = vmatpush.bf16.msra.mxu0 0
      %5682 = vmatpush.bf16.msra.mxu0 0
      %5683 = vmatpush.bf16.msra.mxu0 0
      %5684 = vmatpush.bf16.msra.mxu0 0
      %5685 = vmatpush.bf16.msra.mxu0 0
      %5686 = vmatpush.bf16.msra.mxu0 0
      %5687 = vmatpush.bf16.msra.mxu0 0
      %5688 = vmatpush.bf16.msra.mxu0 %v5605
      %5689 = vmatmul.bf16.gmra.mxu0 %v5587
      %v5690 = vpop.f32.mrf.mxu0
      %v5691 = vadd.f32 0.0, %v5690
      %v5692 = vpop.f32.mrf.mxu0
      %5693 = vdwg.mxu0
      %5694 = vmatpush.bf16.msra.mxu0 0
      %5695 = vmatpush.bf16.msra.mxu0 0
      %5696 = vmatpush.bf16.msra.mxu0 0
      %5697 = vmatpush.bf16.msra.mxu0 0
      %5698 = vmatpush.bf16.msra.mxu0 0
      %5699 = vmatpush.bf16.msra.mxu0 0
      %5700 = vmatpush.bf16.msra.mxu0 0
      %5701 = vmatpush.bf16.msra.mxu0 %v5608
      %5702 = vmatmul.bf16.gmra.mxu0 %v5587
      %v5703 = vpop.f32.mrf.mxu0
      %v5704 = vadd.f32 0.0, %v5703
      %v5705 = vpop.f32.mrf.mxu0
      %5706 = vdwg.mxu0
      %5707 = vmatpush.bf16.msra.mxu0 0
      %5708 = vmatpush.bf16.msra.mxu0 0
      %5709 = vmatpush.bf16.msra.mxu0 0
      %5710 = vmatpush.bf16.msra.mxu0 0
      %5711 = vmatpush.bf16.msra.mxu0 0
      %5712 = vmatpush.bf16.msra.mxu0 0
      %5713 = vmatpush.bf16.msra.mxu0 0
      %5714 = vmatpush.bf16.msra.mxu0 %v5611
      %5715 = vmatmul.bf16.gmra.mxu0 %v5587
      %v5716 = vpop.f32.mrf.mxu0
      %v5717 = vadd.f32 0.0, %v5716
      %v5718 = vpop.f32.mrf.mxu0
      %5719 = vdwg.mxu0
      %5720 = vmatpush.bf16.msra.mxu0 0
      %5721 = vmatpush.bf16.msra.mxu0 0
      %5722 = vmatpush.bf16.msra.mxu0 0
      %5723 = vmatpush.bf16.msra.mxu0 0
      %5724 = vmatpush.bf16.msra.mxu0 0
      %5725 = vmatpush.bf16.msra.mxu0 0
      %5726 = vmatpush.bf16.msra.mxu0 0
      %5727 = vmatpush.bf16.msra.mxu0 %v5614
      %5728 = vmatmul.bf16.gmra.mxu0 %v5587
      %v5729 = vpop.f32.mrf.mxu0
      %v5730 = vadd.f32 0.0, %v5729
      %v5731 = vpop.f32.mrf.mxu0
      %5732 = vdwg.mxu0
      %v5733 = vadd.f32 %v5549, %v5626
      %v5734 = vadd.f32 %v5550, %v5639
      %v5735 = vadd.f32 %v5551, %v5652
      %v5736 = vadd.f32 %v5552, %v5665
      %v5737 = vadd.f32 %v5553, %v5678
      %v5738 = vadd.f32 %v5554, %v5691
      %v5739 = vadd.f32 %v5555, %v5704
      %v5740 = vadd.f32 %v5556, %v5717
      %v5741 = vadd.f32 %v5557, %v5730
      %v5742 = vld [vmem:[#allocation2] sm:$0xff]
      %v5743 = vld [vmem:[#allocation2 + $0x8] sm:$0xff]
      %v5744 = vld [vmem:[#allocation2 + $0x10] sm:$0xff]
      %v5745 = vld [vmem:[#allocation2 + $0x18] sm:$0xff]
      %v5746 = vld [vmem:[#allocation2 + $0x20] sm:$0xff]
      %v5747 = vld [vmem:[#allocation2 + $0x28] sm:$0xff]
      %v5748 = vld [vmem:[#allocation2 + $0x30] sm:$0xff]
      %v5749 = vld [vmem:[#allocation2 + $0x38] sm:$0xff]
      %v5750 = vld [vmem:[#allocation2 + $0x40] sm:$0xff]
      %v5751 = vld [vmem:[#allocation2 + $0x48] sm:$0xff]
      %v5752 = vpack.c.bf16 %v5742, %v5742
      %v5753 = vpack.c.bf16 %v5743, %v5743
      %v5754 = vpack.c.bf16 %v5744, %v5744
      %v5755 = vpack.c.bf16 %v5745, %v5745
      %v5756 = vpack.c.bf16 %v5746, %v5746
      %v5757 = vpack.c.bf16 %v5747, %v5747
      %v5758 = vpack.c.bf16 %v5748, %v5748
      %v5759 = vpack.c.bf16 %v5749, %v5749
      %v5760 = vpack.c.bf16 %v5750, %v5750
      %v5761 = vpack.c.bf16 %v5751, %v5751
      %s5762 = scalar_lea.vmem %s5, 24
      %v5763 = vld [vmem:[%s5762] sm:$0xf]
      %5774 = vrot.lane.b32.xlu0 %v5752, 60
      %v5775 = vpop.permute.xlu0 %5774
      %5776 = vrot.lane.b32.xlu0 %v5753, 60
      %v5777 = vpop.permute.xlu0 %5776
      %5778 = vrot.lane.b32.xlu0 %v5754, 60
      %v5779 = vpop.permute.xlu0 %5778
      %5780 = vrot.lane.b32.xlu0 %v5755, 60
      %v5781 = vpop.permute.xlu0 %5780
      %5782 = vrot.lane.b32.xlu0 %v5756, 60
      %v5783 = vpop.permute.xlu0 %5782
      %5784 = vrot.lane.b32.xlu0 %v5757, 60
      %v5785 = vpop.permute.xlu0 %5784
      %5786 = vrot.lane.b32.xlu0 %v5758, 60
      %v5787 = vpop.permute.xlu0 %5786
      %5788 = vrot.lane.b32.xlu0 %v5759, 60
      %v5789 = vpop.permute.xlu0 %5788
      %5790 = vrot.lane.b32.xlu0 %v5760, 60
      %v5791 = vpop.permute.xlu0 %5790
      %5792 = vrot.lane.b32.xlu0 %v5761, 60
      %v5793 = vpop.permute.xlu0 %5792
      %v5794 = vsel %vm1957, %v5775, %v5777
      %v5795 = vsel %vm1957, %v5777, %v5779
      %v5796 = vsel %vm1957, %v5779, %v5781
      %v5797 = vsel %vm1957, %v5781, %v5783
      %v5798 = vsel %vm1957, %v5783, %v5785
      %v5799 = vsel %vm1957, %v5785, %v5787
      %v5800 = vsel %vm1957, %v5787, %v5789
      %v5801 = vsel %vm1957, %v5789, %v5791
      %v5802 = vsel %vm1957, %v5791, %v5793
      %v5804 = vsel %vm417, %v5763, 0
      %v5807 = vsel %vm421, %v5794, 0
      %v5810 = vsel %vm421, %v5795, 0
      %v5813 = vsel %vm421, %v5796, 0
      %v5816 = vsel %vm421, %v5797, 0
      %v5819 = vsel %vm421, %v5798, 0
      %v5822 = vsel %vm421, %v5799, 0
      %v5825 = vsel %vm421, %v5800, 0
      %v5828 = vsel %vm421, %v5801, 0
      %v5831 = vsel %vm421, %v5802, 0
      %5833 = vmatpush.bf16.msra.mxu0 0
      %5834 = vmatpush.bf16.msra.mxu0 0
      %5835 = vmatpush.bf16.msra.mxu0 0
      %5836 = vmatpush.bf16.msra.mxu0 0
      %5837 = vmatpush.bf16.msra.mxu0 0
      %5838 = vmatpush.bf16.msra.mxu0 0
      %5839 = vmatpush.bf16.msra.mxu0 0
      %5840 = vmatpush.bf16.msra.mxu0 %v5807
      %5841 = vmatmul.bf16.gmra.mxu0 %v5804
      %v5842 = vpop.f32.mrf.mxu0
      %v5843 = vadd.f32 0.0, %v5842
      %v5844 = vpop.f32.mrf.mxu0
      %5845 = vdwg.mxu0
      %5846 = vmatpush.bf16.msra.mxu0 0
      %5847 = vmatpush.bf16.msra.mxu0 0
      %5848 = vmatpush.bf16.msra.mxu0 0
      %5849 = vmatpush.bf16.msra.mxu0 0
      %5850 = vmatpush.bf16.msra.mxu0 0
      %5851 = vmatpush.bf16.msra.mxu0 0
      %5852 = vmatpush.bf16.msra.mxu0 0
      %5853 = vmatpush.bf16.msra.mxu0 %v5810
      %5854 = vmatmul.bf16.gmra.mxu0 %v5804
      %v5855 = vpop.f32.mrf.mxu0
      %v5856 = vadd.f32 0.0, %v5855
      %v5857 = vpop.f32.mrf.mxu0
      %5858 = vdwg.mxu0
      %5859 = vmatpush.bf16.msra.mxu0 0
      %5860 = vmatpush.bf16.msra.mxu0 0
      %5861 = vmatpush.bf16.msra.mxu0 0
      %5862 = vmatpush.bf16.msra.mxu0 0
      %5863 = vmatpush.bf16.msra.mxu0 0
      %5864 = vmatpush.bf16.msra.mxu0 0
      %5865 = vmatpush.bf16.msra.mxu0 0
      %5866 = vmatpush.bf16.msra.mxu0 %v5813
      %5867 = vmatmul.bf16.gmra.mxu0 %v5804
      %v5868 = vpop.f32.mrf.mxu0
      %v5869 = vadd.f32 0.0, %v5868
      %v5870 = vpop.f32.mrf.mxu0
      %5871 = vdwg.mxu0
      %5872 = vmatpush.bf16.msra.mxu0 0
      %5873 = vmatpush.bf16.msra.mxu0 0
      %5874 = vmatpush.bf16.msra.mxu0 0
      %5875 = vmatpush.bf16.msra.mxu0 0
      %5876 = vmatpush.bf16.msra.mxu0 0
      %5877 = vmatpush.bf16.msra.mxu0 0
      %5878 = vmatpush.bf16.msra.mxu0 0
      %5879 = vmatpush.bf16.msra.mxu0 %v5816
      %5880 = vmatmul.bf16.gmra.mxu0 %v5804
      %v5881 = vpop.f32.mrf.mxu0
      %v5882 = vadd.f32 0.0, %v5881
      %v5883 = vpop.f32.mrf.mxu0
      %5884 = vdwg.mxu0
      %5885 = vmatpush.bf16.msra.mxu0 0
      %5886 = vmatpush.bf16.msra.mxu0 0
      %5887 = vmatpush.bf16.msra.mxu0 0
      %5888 = vmatpush.bf16.msra.mxu0 0
      %5889 = vmatpush.bf16.msra.mxu0 0
      %5890 = vmatpush.bf16.msra.mxu0 0
      %5891 = vmatpush.bf16.msra.mxu0 0
      %5892 = vmatpush.bf16.msra.mxu0 %v5819
      %5893 = vmatmul.bf16.gmra.mxu0 %v5804
      %v5894 = vpop.f32.mrf.mxu0
      %v5895 = vadd.f32 0.0, %v5894
      %v5896 = vpop.f32.mrf.mxu0
      %5897 = vdwg.mxu0
      %5898 = vmatpush.bf16.msra.mxu0 0
      %5899 = vmatpush.bf16.msra.mxu0 0
      %5900 = vmatpush.bf16.msra.mxu0 0
      %5901 = vmatpush.bf16.msra.mxu0 0
      %5902 = vmatpush.bf16.msra.mxu0 0
      %5903 = vmatpush.bf16.msra.mxu0 0
      %5904 = vmatpush.bf16.msra.mxu0 0
      %5905 = vmatpush.bf16.msra.mxu0 %v5822
      %5906 = vmatmul.bf16.gmra.mxu0 %v5804
      %v5907 = vpop.f32.mrf.mxu0
      %v5908 = vadd.f32 0.0, %v5907
      %v5909 = vpop.f32.mrf.mxu0
      %5910 = vdwg.mxu0
      %5911 = vmatpush.bf16.msra.mxu0 0
      %5912 = vmatpush.bf16.msra.mxu0 0
      %5913 = vmatpush.bf16.msra.mxu0 0
      %5914 = vmatpush.bf16.msra.mxu0 0
      %5915 = vmatpush.bf16.msra.mxu0 0
      %5916 = vmatpush.bf16.msra.mxu0 0
      %5917 = vmatpush.bf16.msra.mxu0 0
      %5918 = vmatpush.bf16.msra.mxu0 %v5825
      %5919 = vmatmul.bf16.gmra.mxu0 %v5804
      %v5920 = vpop.f32.mrf.mxu0
      %v5921 = vadd.f32 0.0, %v5920
      %v5922 = vpop.f32.mrf.mxu0
      %5923 = vdwg.mxu0
      %5924 = vmatpush.bf16.msra.mxu0 0
      %5925 = vmatpush.bf16.msra.mxu0 0
      %5926 = vmatpush.bf16.msra.mxu0 0
      %5927 = vmatpush.bf16.msra.mxu0 0
      %5928 = vmatpush.bf16.msra.mxu0 0
      %5929 = vmatpush.bf16.msra.mxu0 0
      %5930 = vmatpush.bf16.msra.mxu0 0
      %5931 = vmatpush.bf16.msra.mxu0 %v5828
      %5932 = vmatmul.bf16.gmra.mxu0 %v5804
      %v5933 = vpop.f32.mrf.mxu0
      %v5934 = vadd.f32 0.0, %v5933
      %v5935 = vpop.f32.mrf.mxu0
      %5936 = vdwg.mxu0
      %5937 = vmatpush.bf16.msra.mxu0 0
      %5938 = vmatpush.bf16.msra.mxu0 0
      %5939 = vmatpush.bf16.msra.mxu0 0
      %5940 = vmatpush.bf16.msra.mxu0 0
      %5941 = vmatpush.bf16.msra.mxu0 0
      %5942 = vmatpush.bf16.msra.mxu0 0
      %5943 = vmatpush.bf16.msra.mxu0 0
      %5944 = vmatpush.bf16.msra.mxu0 %v5831
      %5945 = vmatmul.bf16.gmra.mxu0 %v5804
      %v5946 = vpop.f32.mrf.mxu0
      %v5947 = vadd.f32 0.0, %v5946
      %v5948 = vpop.f32.mrf.mxu0
      %5949 = vdwg.mxu0
      %v5950 = vadd.f32 %v5733, %v5843
      %v5951 = vadd.f32 %v5734, %v5856
      %v5952 = vadd.f32 %v5735, %v5869
      %v5953 = vadd.f32 %v5736, %v5882
      %v5954 = vadd.f32 %v5737, %v5895
      %v5955 = vadd.f32 %v5738, %v5908
      %v5956 = vadd.f32 %v5739, %v5921
      %v5957 = vadd.f32 %v5740, %v5934
      %v5958 = vadd.f32 %v5741, %v5947
      %s5959 = scalar_lea.vmem %s5, 28
      %v5960 = vld [vmem:[%s5959] sm:$0xf]
      %5961 = vrot.lane.b32.xlu0 %v5752, 59
      %v5962 = vpop.permute.xlu0 %5961
      %5963 = vrot.lane.b32.xlu0 %v5753, 59
      %v5964 = vpop.permute.xlu0 %5963
      %5965 = vrot.lane.b32.xlu0 %v5754, 59
      %v5966 = vpop.permute.xlu0 %5965
      %5967 = vrot.lane.b32.xlu0 %v5755, 59
      %v5968 = vpop.permute.xlu0 %5967
      %5969 = vrot.lane.b32.xlu0 %v5756, 59
      %v5970 = vpop.permute.xlu0 %5969
      %5971 = vrot.lane.b32.xlu0 %v5757, 59
      %v5972 = vpop.permute.xlu0 %5971
      %5973 = vrot.lane.b32.xlu0 %v5758, 59
      %v5974 = vpop.permute.xlu0 %5973
      %5975 = vrot.lane.b32.xlu0 %v5759, 59
      %v5976 = vpop.permute.xlu0 %5975
      %5977 = vrot.lane.b32.xlu0 %v5760, 59
      %v5978 = vpop.permute.xlu0 %5977
      %5979 = vrot.lane.b32.xlu0 %v5761, 59
      %v5980 = vpop.permute.xlu0 %5979
      %v5981 = vsel %vm2127, %v5962, %v5964
      %v5982 = vsel %vm2127, %v5964, %v5966
      %v5983 = vsel %vm2127, %v5966, %v5968
      %v5984 = vsel %vm2127, %v5968, %v5970
      %v5985 = vsel %vm2127, %v5970, %v5972
      %v5986 = vsel %vm2127, %v5972, %v5974
      %v5987 = vsel %vm2127, %v5974, %v5976
      %v5988 = vsel %vm2127, %v5976, %v5978
      %v5989 = vsel %vm2127, %v5978, %v5980
      %v5991 = vsel %vm417, %v5960, 0
      %v5994 = vsel %vm421, %v5981, 0
      %v5997 = vsel %vm421, %v5982, 0
      %v6000 = vsel %vm421, %v5983, 0
      %v6003 = vsel %vm421, %v5984, 0
      %v6006 = vsel %vm421, %v5985, 0
      %v6009 = vsel %vm421, %v5986, 0
      %v6012 = vsel %vm421, %v5987, 0
      %v6015 = vsel %vm421, %v5988, 0
      %v6018 = vsel %vm421, %v5989, 0
      %6020 = vmatpush.bf16.msra.mxu0 0
      %6021 = vmatpush.bf16.msra.mxu0 0
      %6022 = vmatpush.bf16.msra.mxu0 0
      %6023 = vmatpush.bf16.msra.mxu0 0
      %6024 = vmatpush.bf16.msra.mxu0 0
      %6025 = vmatpush.bf16.msra.mxu0 0
      %6026 = vmatpush.bf16.msra.mxu0 0
      %6027 = vmatpush.bf16.msra.mxu0 %v5994
      %6028 = vmatmul.bf16.gmra.mxu0 %v5991
      %v6029 = vpop.f32.mrf.mxu0
      %v6030 = vadd.f32 0.0, %v6029
      %v6031 = vpop.f32.mrf.mxu0
      %6032 = vdwg.mxu0
      %6033 = vmatpush.bf16.msra.mxu0 0
      %6034 = vmatpush.bf16.msra.mxu0 0
      %6035 = vmatpush.bf16.msra.mxu0 0
      %6036 = vmatpush.bf16.msra.mxu0 0
      %6037 = vmatpush.bf16.msra.mxu0 0
      %6038 = vmatpush.bf16.msra.mxu0 0
      %6039 = vmatpush.bf16.msra.mxu0 0
      %6040 = vmatpush.bf16.msra.mxu0 %v5997
      %6041 = vmatmul.bf16.gmra.mxu0 %v5991
      %v6042 = vpop.f32.mrf.mxu0
      %v6043 = vadd.f32 0.0, %v6042
      %v6044 = vpop.f32.mrf.mxu0
      %6045 = vdwg.mxu0
      %6046 = vmatpush.bf16.msra.mxu0 0
      %6047 = vmatpush.bf16.msra.mxu0 0
      %6048 = vmatpush.bf16.msra.mxu0 0
      %6049 = vmatpush.bf16.msra.mxu0 0
      %6050 = vmatpush.bf16.msra.mxu0 0
      %6051 = vmatpush.bf16.msra.mxu0 0
      %6052 = vmatpush.bf16.msra.mxu0 0
      %6053 = vmatpush.bf16.msra.mxu0 %v6000
      %6054 = vmatmul.bf16.gmra.mxu0 %v5991
      %v6055 = vpop.f32.mrf.mxu0
      %v6056 = vadd.f32 0.0, %v6055
      %v6057 = vpop.f32.mrf.mxu0
      %6058 = vdwg.mxu0
      %6059 = vmatpush.bf16.msra.mxu0 0
      %6060 = vmatpush.bf16.msra.mxu0 0
      %6061 = vmatpush.bf16.msra.mxu0 0
      %6062 = vmatpush.bf16.msra.mxu0 0
      %6063 = vmatpush.bf16.msra.mxu0 0
      %6064 = vmatpush.bf16.msra.mxu0 0
      %6065 = vmatpush.bf16.msra.mxu0 0
      %6066 = vmatpush.bf16.msra.mxu0 %v6003
      %6067 = vmatmul.bf16.gmra.mxu0 %v5991
      %v6068 = vpop.f32.mrf.mxu0
      %v6069 = vadd.f32 0.0, %v6068
      %v6070 = vpop.f32.mrf.mxu0
      %6071 = vdwg.mxu0
      %6072 = vmatpush.bf16.msra.mxu0 0
      %6073 = vmatpush.bf16.msra.mxu0 0
      %6074 = vmatpush.bf16.msra.mxu0 0
      %6075 = vmatpush.bf16.msra.mxu0 0
      %6076 = vmatpush.bf16.msra.mxu0 0
      %6077 = vmatpush.bf16.msra.mxu0 0
      %6078 = vmatpush.bf16.msra.mxu0 0
      %6079 = vmatpush.bf16.msra.mxu0 %v6006
      %6080 = vmatmul.bf16.gmra.mxu0 %v5991
      %v6081 = vpop.f32.mrf.mxu0
      %v6082 = vadd.f32 0.0, %v6081
      %v6083 = vpop.f32.mrf.mxu0
      %6084 = vdwg.mxu0
      %6085 = vmatpush.bf16.msra.mxu0 0
      %6086 = vmatpush.bf16.msra.mxu0 0
      %6087 = vmatpush.bf16.msra.mxu0 0
      %6088 = vmatpush.bf16.msra.mxu0 0
      %6089 = vmatpush.bf16.msra.mxu0 0
      %6090 = vmatpush.bf16.msra.mxu0 0
      %6091 = vmatpush.bf16.msra.mxu0 0
      %6092 = vmatpush.bf16.msra.mxu0 %v6009
      %6093 = vmatmul.bf16.gmra.mxu0 %v5991
      %v6094 = vpop.f32.mrf.mxu0
      %v6095 = vadd.f32 0.0, %v6094
      %v6096 = vpop.f32.mrf.mxu0
      %6097 = vdwg.mxu0
      %6098 = vmatpush.bf16.msra.mxu0 0
      %6099 = vmatpush.bf16.msra.mxu0 0
      %6100 = vmatpush.bf16.msra.mxu0 0
      %6101 = vmatpush.bf16.msra.mxu0 0
      %6102 = vmatpush.bf16.msra.mxu0 0
      %6103 = vmatpush.bf16.msra.mxu0 0
      %6104 = vmatpush.bf16.msra.mxu0 0
      %6105 = vmatpush.bf16.msra.mxu0 %v6012
      %6106 = vmatmul.bf16.gmra.mxu0 %v5991
      %v6107 = vpop.f32.mrf.mxu0
      %v6108 = vadd.f32 0.0, %v6107
      %v6109 = vpop.f32.mrf.mxu0
      %6110 = vdwg.mxu0
      %6111 = vmatpush.bf16.msra.mxu0 0
      %6112 = vmatpush.bf16.msra.mxu0 0
      %6113 = vmatpush.bf16.msra.mxu0 0
      %6114 = vmatpush.bf16.msra.mxu0 0
      %6115 = vmatpush.bf16.msra.mxu0 0
      %6116 = vmatpush.bf16.msra.mxu0 0
      %6117 = vmatpush.bf16.msra.mxu0 0
      %6118 = vmatpush.bf16.msra.mxu0 %v6015
      %6119 = vmatmul.bf16.gmra.mxu0 %v5991
      %v6120 = vpop.f32.mrf.mxu0
      %v6121 = vadd.f32 0.0, %v6120
      %v6122 = vpop.f32.mrf.mxu0
      %6123 = vdwg.mxu0
      %6124 = vmatpush.bf16.msra.mxu0 0
      %6125 = vmatpush.bf16.msra.mxu0 0
      %6126 = vmatpush.bf16.msra.mxu0 0
      %6127 = vmatpush.bf16.msra.mxu0 0
      %6128 = vmatpush.bf16.msra.mxu0 0
      %6129 = vmatpush.bf16.msra.mxu0 0
      %6130 = vmatpush.bf16.msra.mxu0 0
      %6131 = vmatpush.bf16.msra.mxu0 %v6018
      %6132 = vmatmul.bf16.gmra.mxu0 %v5991
      %v6133 = vpop.f32.mrf.mxu0
      %v6134 = vadd.f32 0.0, %v6133
      %v6135 = vpop.f32.mrf.mxu0
      %6136 = vdwg.mxu0
      %v6137 = vadd.f32 %v5950, %v6030
      %v6138 = vadd.f32 %v5951, %v6043
      %v6139 = vadd.f32 %v5952, %v6056
      %v6140 = vadd.f32 %v5953, %v6069
      %v6141 = vadd.f32 %v5954, %v6082
      %v6142 = vadd.f32 %v5955, %v6095
      %v6143 = vadd.f32 %v5956, %v6108
      %v6144 = vadd.f32 %v5957, %v6121
      %v6145 = vadd.f32 %v5958, %v6134
      %s6146 = scalar_lea.vmem %s5, 32
      %v6147 = vld [vmem:[%s6146] sm:$0xf]
      %6148 = vrot.lane.b32.xlu0 %v5752, 58
      %v6149 = vpop.permute.xlu0 %6148
      %6150 = vrot.lane.b32.xlu0 %v5753, 58
      %v6151 = vpop.permute.xlu0 %6150
      %6152 = vrot.lane.b32.xlu0 %v5754, 58
      %v6153 = vpop.permute.xlu0 %6152
      %6154 = vrot.lane.b32.xlu0 %v5755, 58
      %v6155 = vpop.permute.xlu0 %6154
      %6156 = vrot.lane.b32.xlu0 %v5756, 58
      %v6157 = vpop.permute.xlu0 %6156
      %6158 = vrot.lane.b32.xlu0 %v5757, 58
      %v6159 = vpop.permute.xlu0 %6158
      %6160 = vrot.lane.b32.xlu0 %v5758, 58
      %v6161 = vpop.permute.xlu0 %6160
      %6162 = vrot.lane.b32.xlu0 %v5759, 58
      %v6163 = vpop.permute.xlu0 %6162
      %6164 = vrot.lane.b32.xlu0 %v5760, 58
      %v6165 = vpop.permute.xlu0 %6164
      %6166 = vrot.lane.b32.xlu0 %v5761, 58
      %v6167 = vpop.permute.xlu0 %6166
      %v6168 = vsel %vm2297, %v6149, %v6151
      %v6169 = vsel %vm2297, %v6151, %v6153
      %v6170 = vsel %vm2297, %v6153, %v6155
      %v6171 = vsel %vm2297, %v6155, %v6157
      %v6172 = vsel %vm2297, %v6157, %v6159
      %v6173 = vsel %vm2297, %v6159, %v6161
      %v6174 = vsel %vm2297, %v6161, %v6163
      %v6175 = vsel %vm2297, %v6163, %v6165
      %v6176 = vsel %vm2297, %v6165, %v6167
      %v6178 = vsel %vm417, %v6147, 0
      %v6181 = vsel %vm421, %v6168, 0
      %v6184 = vsel %vm421, %v6169, 0
      %v6187 = vsel %vm421, %v6170, 0
      %v6190 = vsel %vm421, %v6171, 0
      %v6193 = vsel %vm421, %v6172, 0
      %v6196 = vsel %vm421, %v6173, 0
      %v6199 = vsel %vm421, %v6174, 0
      %v6202 = vsel %vm421, %v6175, 0
      %v6205 = vsel %vm421, %v6176, 0
      %6207 = vmatpush.bf16.msra.mxu0 0
      %6208 = vmatpush.bf16.msra.mxu0 0
      %6209 = vmatpush.bf16.msra.mxu0 0
      %6210 = vmatpush.bf16.msra.mxu0 0
      %6211 = vmatpush.bf16.msra.mxu0 0
      %6212 = vmatpush.bf16.msra.mxu0 0
      %6213 = vmatpush.bf16.msra.mxu0 0
      %6214 = vmatpush.bf16.msra.mxu0 %v6181
      %6215 = vmatmul.bf16.gmra.mxu0 %v6178
      %v6216 = vpop.f32.mrf.mxu0
      %v6217 = vadd.f32 0.0, %v6216
      %v6218 = vpop.f32.mrf.mxu0
      %6219 = vdwg.mxu0
      %6220 = vmatpush.bf16.msra.mxu0 0
      %6221 = vmatpush.bf16.msra.mxu0 0
      %6222 = vmatpush.bf16.msra.mxu0 0
      %6223 = vmatpush.bf16.msra.mxu0 0
      %6224 = vmatpush.bf16.msra.mxu0 0
      %6225 = vmatpush.bf16.msra.mxu0 0
      %6226 = vmatpush.bf16.msra.mxu0 0
      %6227 = vmatpush.bf16.msra.mxu0 %v6184
      %6228 = vmatmul.bf16.gmra.mxu0 %v6178
      %v6229 = vpop.f32.mrf.mxu0
      %v6230 = vadd.f32 0.0, %v6229
      %v6231 = vpop.f32.mrf.mxu0
      %6232 = vdwg.mxu0
      %6233 = vmatpush.bf16.msra.mxu0 0
      %6234 = vmatpush.bf16.msra.mxu0 0
      %6235 = vmatpush.bf16.msra.mxu0 0
      %6236 = vmatpush.bf16.msra.mxu0 0
      %6237 = vmatpush.bf16.msra.mxu0 0
      %6238 = vmatpush.bf16.msra.mxu0 0
      %6239 = vmatpush.bf16.msra.mxu0 0
      %6240 = vmatpush.bf16.msra.mxu0 %v6187
      %6241 = vmatmul.bf16.gmra.mxu0 %v6178
      %v6242 = vpop.f32.mrf.mxu0
      %v6243 = vadd.f32 0.0, %v6242
      %v6244 = vpop.f32.mrf.mxu0
      %6245 = vdwg.mxu0
      %6246 = vmatpush.bf16.msra.mxu0 0
      %6247 = vmatpush.bf16.msra.mxu0 0
      %6248 = vmatpush.bf16.msra.mxu0 0
      %6249 = vmatpush.bf16.msra.mxu0 0
      %6250 = vmatpush.bf16.msra.mxu0 0
      %6251 = vmatpush.bf16.msra.mxu0 0
      %6252 = vmatpush.bf16.msra.mxu0 0
      %6253 = vmatpush.bf16.msra.mxu0 %v6190
      %6254 = vmatmul.bf16.gmra.mxu0 %v6178
      %v6255 = vpop.f32.mrf.mxu0
      %v6256 = vadd.f32 0.0, %v6255
      %v6257 = vpop.f32.mrf.mxu0
      %6258 = vdwg.mxu0
      %6259 = vmatpush.bf16.msra.mxu0 0
      %6260 = vmatpush.bf16.msra.mxu0 0
      %6261 = vmatpush.bf16.msra.mxu0 0
      %6262 = vmatpush.bf16.msra.mxu0 0
      %6263 = vmatpush.bf16.msra.mxu0 0
      %6264 = vmatpush.bf16.msra.mxu0 0
      %6265 = vmatpush.bf16.msra.mxu0 0
      %6266 = vmatpush.bf16.msra.mxu0 %v6193
      %6267 = vmatmul.bf16.gmra.mxu0 %v6178
      %v6268 = vpop.f32.mrf.mxu0
      %v6269 = vadd.f32 0.0, %v6268
      %v6270 = vpop.f32.mrf.mxu0
      %6271 = vdwg.mxu0
      %6272 = vmatpush.bf16.msra.mxu0 0
      %6273 = vmatpush.bf16.msra.mxu0 0
      %6274 = vmatpush.bf16.msra.mxu0 0
      %6275 = vmatpush.bf16.msra.mxu0 0
      %6276 = vmatpush.bf16.msra.mxu0 0
      %6277 = vmatpush.bf16.msra.mxu0 0
      %6278 = vmatpush.bf16.msra.mxu0 0
      %6279 = vmatpush.bf16.msra.mxu0 %v6196
      %6280 = vmatmul.bf16.gmra.mxu0 %v6178
      %v6281 = vpop.f32.mrf.mxu0
      %v6282 = vadd.f32 0.0, %v6281
      %v6283 = vpop.f32.mrf.mxu0
      %6284 = vdwg.mxu0
      %6285 = vmatpush.bf16.msra.mxu0 0
      %6286 = vmatpush.bf16.msra.mxu0 0
      %6287 = vmatpush.bf16.msra.mxu0 0
      %6288 = vmatpush.bf16.msra.mxu0 0
      %6289 = vmatpush.bf16.msra.mxu0 0
      %6290 = vmatpush.bf16.msra.mxu0 0
      %6291 = vmatpush.bf16.msra.mxu0 0
      %6292 = vmatpush.bf16.msra.mxu0 %v6199
      %6293 = vmatmul.bf16.gmra.mxu0 %v6178
      %v6294 = vpop.f32.mrf.mxu0
      %v6295 = vadd.f32 0.0, %v6294
      %v6296 = vpop.f32.mrf.mxu0
      %6297 = vdwg.mxu0
      %6298 = vmatpush.bf16.msra.mxu0 0
      %6299 = vmatpush.bf16.msra.mxu0 0
      %6300 = vmatpush.bf16.msra.mxu0 0
      %6301 = vmatpush.bf16.msra.mxu0 0
      %6302 = vmatpush.bf16.msra.mxu0 0
      %6303 = vmatpush.bf16.msra.mxu0 0
      %6304 = vmatpush.bf16.msra.mxu0 0
      %6305 = vmatpush.bf16.msra.mxu0 %v6202
      %6306 = vmatmul.bf16.gmra.mxu0 %v6178
      %v6307 = vpop.f32.mrf.mxu0
      %v6308 = vadd.f32 0.0, %v6307
      %v6309 = vpop.f32.mrf.mxu0
      %6310 = vdwg.mxu0
      %6311 = vmatpush.bf16.msra.mxu0 0
      %6312 = vmatpush.bf16.msra.mxu0 0
      %6313 = vmatpush.bf16.msra.mxu0 0
      %6314 = vmatpush.bf16.msra.mxu0 0
      %6315 = vmatpush.bf16.msra.mxu0 0
      %6316 = vmatpush.bf16.msra.mxu0 0
      %6317 = vmatpush.bf16.msra.mxu0 0
      %6318 = vmatpush.bf16.msra.mxu0 %v6205
      %6319 = vmatmul.bf16.gmra.mxu0 %v6178
      %v6320 = vpop.f32.mrf.mxu0
      %v6321 = vadd.f32 0.0, %v6320
      %v6322 = vpop.f32.mrf.mxu0
      %6323 = vdwg.mxu0
      %v6324 = vadd.f32 %v6137, %v6217
      %v6325 = vadd.f32 %v6138, %v6230
      %v6326 = vadd.f32 %v6139, %v6243
      %v6327 = vadd.f32 %v6140, %v6256
      %v6328 = vadd.f32 %v6141, %v6269
      %v6329 = vadd.f32 %v6142, %v6282
      %v6330 = vadd.f32 %v6143, %v6295
      %v6331 = vadd.f32 %v6144, %v6308
      %v6332 = vadd.f32 %v6145, %v6321
      %s6333 = scalar_lea.vmem %s6, 72
      %v6334 = vld [vmem:[%s6333] sm:$0xff]
      %s6335 = scalar_lea.vmem %s6, 80
      %v6336 = vld [vmem:[%s6335] sm:$0xff]
      %s6337 = scalar_lea.vmem %s6, 88
      %v6338 = vld [vmem:[%s6337] sm:$0xff]
      %6340 = vset.pattern.permute.xlu0 0
      %6341 = vperm.xlu0 %6340, %v6334
      %v6342 = vpop.permute.xlu0 %6341
      %v6344 = vadd.f32 %v6324, %v6342
      %v6345 = vadd.f32 %v6325, %v6342
      %v6346 = vadd.f32 %v6326, %v6342
      %v6347 = vadd.f32 %v6327, %v6342
      %v6348 = vadd.f32 %v6328, %v6342
      %v6349 = vadd.f32 %v6329, %v6342
      %v6350 = vadd.f32 %v6330, %v6342
      %v6351 = vadd.f32 %v6331, %v6342
      %v6352 = vadd.f32 %v6332, %v6342
      %v6353 = vmul.f32 %v6344, %v568
      %v6354 = vmul.f32 %v6345, %v569
      %v6355 = vmul.f32 %v6346, %v570
      %v6356 = vmul.f32 %v6347, %v571
      %v6357 = vmul.f32 %v6348, %v572
      %v6358 = vmul.f32 %v6349, %v573
      %v6359 = vmul.f32 %v6350, %v574
      %v6360 = vmul.f32 %v6351, %v575
      %v6361 = vmul.f32 %v6352, %v576
      %v6362 = vadd.f32 %v6353, %v6354
      %v6363 = vadd.f32 %v6362, %v6355
      %v6364 = vadd.f32 %v6363, %v6356
      %v6365 = vadd.f32 %v6364, %v6357
      %v6366 = vadd.f32 %v6365, %v6358
      %v6367 = vadd.f32 %v6366, %v6359
      %v6368 = vadd.f32 %v6367, %v6360
      %v6369 = vsel %vm602, %v6361, 0.0
      %v6370 = vadd.f32 %v6368, %v6369
      %6371 = vadd.xlane.f32.xlu0 %v6370
      %v6372 = vpop.xlane.xlu0 %6371
      %6373 = vmatpush.msra.mxu0 0.0
      %6374 = vmatpush.msra.mxu0 0.0
      %6375 = vmatpush.msra.mxu0 0.0
      %6376 = vmatpush.msra.mxu0 0.0
      %6377 = vmatpush.msra.mxu0 0.0
      %6378 = vmatpush.msra.mxu0 0.0
      %6379 = vmatpush.msra.mxu0 0.0
      %6380 = vmatpush.msra.mxu0 0.0
      %6381 = vmatpush.msra.mxu0 0.0
      %6382 = vmatpush.msra.mxu0 0.0
      %6383 = vmatpush.msra.mxu0 0.0
      %6384 = vmatpush.msra.mxu0 0.0
      %6385 = vmatpush.msra.mxu0 0.0
      %6386 = vmatpush.msra.mxu0 0.0
      %6387 = vmatpush.msra.mxu0 0.0
      %6388 = vmatpush.msra.mxu0 %v6372
      %6389 = vmatmul.f32.gmra.mxu0 %v608
      %v6390 = vpop.f32.mrf.mxu0
      %v6391 = vadd.f32 0.0, %v6390
      %6392 = vdwg.mxu0
      %v6393 = vmul.f32 %v6391, 0.00024414063
      %6395 = vset.pattern.permute.xlu0 0
      %6396 = vperm.xlu0 %6395, %v6393
      %v6397 = vpop.permute.xlu0 %6396
      %v6399 = vsub.f32 %v6344, %v6397
      %v6400 = vsub.f32 %v6345, %v6397
      %v6401 = vsub.f32 %v6346, %v6397
      %v6402 = vsub.f32 %v6347, %v6397
      %v6403 = vsub.f32 %v6348, %v6397
      %v6404 = vsub.f32 %v6349, %v6397
      %v6405 = vsub.f32 %v6350, %v6397
      %v6406 = vsub.f32 %v6351, %v6397
      %v6407 = vsub.f32 %v6352, %v6397
      %v6408 = vmul.f32 %v6399, %v568
      %v6409 = vmul.f32 %v6400, %v569
      %v6410 = vmul.f32 %v6401, %v570
      %v6411 = vmul.f32 %v6402, %v571
      %v6412 = vmul.f32 %v6403, %v572
      %v6413 = vmul.f32 %v6404, %v573
      %v6414 = vmul.f32 %v6405, %v574
      %v6415 = vmul.f32 %v6406, %v575
      %v6416 = vmul.f32 %v6407, %v576
      %v6417 = vmul.f32 %v6408, %v6408
      %v6418 = vmul.f32 %v6409, %v6409
      %v6419 = vmul.f32 %v6410, %v6410
      %v6420 = vmul.f32 %v6411, %v6411
      %v6421 = vmul.f32 %v6412, %v6412
      %v6422 = vmul.f32 %v6413, %v6413
      %v6423 = vmul.f32 %v6414, %v6414
      %v6424 = vmul.f32 %v6415, %v6415
      %v6425 = vmul.f32 %v6416, %v6416
      %v6426 = vadd.f32 %v6417, %v6418
      %v6427 = vadd.f32 %v6426, %v6419
      %v6428 = vadd.f32 %v6427, %v6420
      %v6429 = vadd.f32 %v6428, %v6421
      %v6430 = vadd.f32 %v6429, %v6422
      %v6431 = vadd.f32 %v6430, %v6423
      %v6432 = vadd.f32 %v6431, %v6424
      %v6433 = vsel %vm602, %v6425, 0.0
      %v6434 = vadd.f32 %v6432, %v6433
      %6435 = vadd.xlane.f32.xlu0 %v6434
      %v6436 = vpop.xlane.xlu0 %6435
      %6437 = vmatpush.msra.mxu0 0.0
      %6438 = vmatpush.msra.mxu0 0.0
      %6439 = vmatpush.msra.mxu0 0.0
      %6440 = vmatpush.msra.mxu0 0.0
      %6441 = vmatpush.msra.mxu0 0.0
      %6442 = vmatpush.msra.mxu0 0.0
      %6443 = vmatpush.msra.mxu0 0.0
      %6444 = vmatpush.msra.mxu0 0.0
      %6445 = vmatpush.msra.mxu0 0.0
      %6446 = vmatpush.msra.mxu0 0.0
      %6447 = vmatpush.msra.mxu0 0.0
      %6448 = vmatpush.msra.mxu0 0.0
      %6449 = vmatpush.msra.mxu0 0.0
      %6450 = vmatpush.msra.mxu0 0.0
      %6451 = vmatpush.msra.mxu0 0.0
      %6452 = vmatpush.msra.mxu0 %v6436
      %6453 = vmatmul.f32.gmra.mxu0 %v608
      %v6454 = vpop.f32.mrf.mxu0
      %v6455 = vadd.f32 0.0, %v6454
      %6456 = vdwg.mxu0
      %v6457 = vmul.f32 %v6455, 0.00024414063
      %v6458 = vadd.f32 %v6457, 1e-05
      %v6459 = vrsqrt.pop %v6458
      %v6460 = vmul.f32 %v6459, %v6458
      %v6461 = vmul.f32 %v6460, %v6459
      %v6462 = vmul.f32 0.5, %v6461
      %v6463 = vsub.f32 1.5, %v6462
      %v6464 = vmul.f32 %v6459, %v6463
      %vm6465 = vweird.f32 %v6458
      %vm6466 = vweird.f32 %v6459
      %vm6467 = vmor %vm6465, %vm6466
      %v6468 = vsel %vm6467, %v6459, %v6464
      %6470 = vset.pattern.permute.xlu0 0
      %6471 = vperm.xlu0 %6470, %v6468
      %v6472 = vpop.permute.xlu0 %6471
      %v6474 = vmul.f32 %v6408, %v6472
      %v6475 = vmul.f32 %v6409, %v6472
      %v6476 = vmul.f32 %v6410, %v6472
      %v6477 = vmul.f32 %v6411, %v6472
      %v6478 = vmul.f32 %v6412, %v6472
      %v6479 = vmul.f32 %v6413, %v6472
      %v6480 = vmul.f32 %v6414, %v6472
      %v6481 = vmul.f32 %v6415, %v6472
      %v6482 = vmul.f32 %v6416, %v6472
      %6484 = vset.pattern.permute.xlu0 0
      %6485 = vperm.xlu0 %6484, %v6336
      %v6486 = vpop.permute.xlu0 %6485
      %v6488 = vmul.f32 %v6474, %v6486
      %v6489 = vmul.f32 %v6475, %v6486
      %v6490 = vmul.f32 %v6476, %v6486
      %v6491 = vmul.f32 %v6477, %v6486
      %v6492 = vmul.f32 %v6478, %v6486
      %v6493 = vmul.f32 %v6479, %v6486
      %v6494 = vmul.f32 %v6480, %v6486
      %v6495 = vmul.f32 %v6481, %v6486
      %v6496 = vmul.f32 %v6482, %v6486
      %6498 = vset.pattern.permute.xlu0 0
      %6499 = vperm.xlu0 %6498, %v6338
      %v6500 = vpop.permute.xlu0 %6499
      %v6502 = vadd.f32 %v6488, %v6500
      %v6503 = vadd.f32 %v6489, %v6500
      %v6504 = vadd.f32 %v6490, %v6500
      %v6505 = vadd.f32 %v6491, %v6500
      %v6506 = vadd.f32 %v6492, %v6500
      %v6507 = vadd.f32 %v6493, %v6500
      %v6508 = vadd.f32 %v6494, %v6500
      %v6509 = vadd.f32 %v6495, %v6500
      %v6510 = vadd.f32 %v6496, %v6500
      %vm6511 = vcmp.ge.f32.partialorder %v6502, 0.0
      %vm6512 = vcmp.ge.f32.partialorder %v6503, 0.0
      %vm6513 = vcmp.ge.f32.partialorder %v6504, 0.0
      %vm6514 = vcmp.ge.f32.partialorder %v6505, 0.0
      %vm6515 = vcmp.ge.f32.partialorder %v6506, 0.0
      %vm6516 = vcmp.ge.f32.partialorder %v6507, 0.0
      %vm6517 = vcmp.ge.f32.partialorder %v6508, 0.0
      %vm6518 = vcmp.ge.f32.partialorder %v6509, 0.0
      %vm6519 = vcmp.ge.f32.partialorder %v6510, 0.0
      %v6520 = vmul.f32 %v6502, 0.01
      %v6521 = vmul.f32 %v6503, 0.01
      %v6522 = vmul.f32 %v6504, 0.01
      %v6523 = vmul.f32 %v6505, 0.01
      %v6524 = vmul.f32 %v6506, 0.01
      %v6525 = vmul.f32 %v6507, 0.01
      %v6526 = vmul.f32 %v6508, 0.01
      %v6527 = vmul.f32 %v6509, 0.01
      %v6528 = vmul.f32 %v6510, 0.01
      %v6529 = vsel %vm6511, %v6502, %v6520
      %v6530 = vsel %vm6512, %v6503, %v6521
      %v6531 = vsel %vm6513, %v6504, %v6522
      %v6532 = vsel %vm6514, %v6505, %v6523
      %v6533 = vsel %vm6515, %v6506, %v6524
      %v6534 = vsel %vm6516, %v6507, %v6525
      %v6535 = vsel %vm6517, %v6508, %v6526
      %v6536 = vsel %vm6518, %v6509, %v6527
      %v6537 = vsel %vm6519, %v6510, %v6528
      %v6538 = vmul.f32 %v6529, %v568
      %v6539 = vmul.f32 %v6530, %v569
      %v6540 = vmul.f32 %v6531, %v570
      %v6541 = vmul.f32 %v6532, %v571
      %v6542 = vmul.f32 %v6533, %v572
      %v6543 = vmul.f32 %v6534, %v573
      %v6544 = vmul.f32 %v6535, %v574
      %v6545 = vmul.f32 %v6536, %v575
      %v6546 = vmul.f32 %v6537, %v576
      %v6547 = vadd.f32 %v6538, %v2650
      %v6548 = vadd.f32 %v6539, %v2651
      %v6549 = vadd.f32 %v6540, %v2652
      %v6550 = vadd.f32 %v6541, %v2653
      %v6551 = vadd.f32 %v6542, %v2654
      %v6552 = vadd.f32 %v6543, %v2655
      %v6553 = vadd.f32 %v6544, %v2656
      %v6554 = vadd.f32 %v6545, %v2657
      %v6555 = vadd.f32 %v6546, %v2658
      %6556 = vst [vmem:[%s352] sm:$0xff] %v6547
      %6557 = vst [vmem:[%s352 + $0x8] sm:$0xff] %v6548
      %6558 = vst [vmem:[%s352 + $0x10] sm:$0xff] %v6549
      %6559 = vst [vmem:[%s352 + $0x18] sm:$0xff] %v6550
      %6560 = vst [vmem:[%s352 + $0x20] sm:$0xff] %v6551
      %6561 = vst [vmem:[%s352 + $0x28] sm:$0xff] %v6552
      %6562 = vst [vmem:[%s352 + $0x30] sm:$0xff] %v6553
      %6563 = vst [vmem:[%s352 + $0x38] sm:$0xff] %v6554
      %6564 = vst.msk [vmem:[%s352 + $0x40] sm:$0xff] %vm602, %v6555
      %p6565 = scmp.lt.s32.totalorder %s20, 1
      %s6566 = scalar_select %p6565, %s20, 1
      %s6567 = smul.addr %s6566, 9
      %s6568 = smul.addr %s6567, 8
      %s6569 = scalar_lea.vmem %s9, %s6568
      // Predicated region
      $region57: #{up_convolution_block_forward.3} parent=55 // pred_check
        %p6570 = pneg %p237
      $region58: #{up_convolution_block_forward.3} parent=55 // pred_check_branch
        %6572 = sbr.rel (%p6570) target = $region60
      $region59: #{up_convolution_block_forward.3} parent=55 // pred_region
        _
      $region60: #{up_convolution_block_forward.3} parent=55 // pred_fallthru
        _
    $region56: #{up_convolution_block_forward.3} parent=5 // pred_fallthru
      _
    %p6573 = scmp.le.s32.totalorder 2, %s15
    // Predicated region
    $region61: #{up_convolution_block_forward.3} parent=5 // pred_check
      %p6574 = pneg %p6573
    $region62: #{up_convolution_block_forward.3} parent=5 // pred_check_branch
      %6576 = sbr.rel (%p6574) target = $region64
    $region63: #{up_convolution_block_forward.3} parent=5 // pred_region
      %s6577 = ssub.s32 %s15, 2
      // Predicated region
      $region65: #{up_convolution_block_forward.3} parent=63 // pred_check
        %p6578 = pneg %p243
      $region66: #{up_convolution_block_forward.3} parent=63 // pred_check_branch
        %6580 = sbr.rel (%p6578) target = $region68
      $region67: #{up_convolution_block_forward.3} parent=63 // pred_region
        %p6581 = scmp.lt.s32.totalorder %s21, 1
        %s6582 = scalar_select %p6581, %s21, 1
        %s6583 = smul.addr %s6582, 9
        %s6584 = smul.addr %s6583, 8
        %s6585 = scalar_lea.vmem %s9, %s6584
      $region68: #{up_convolution_block_forward.3} parent=63 // pred_fallthru
        _
    $region64: #{up_convolution_block_forward.3} parent=5 // pred_fallthru
      _
  $region6: #{up_convolution_block_forward.3} parent=0 // loop_footer
    %s19 = sadd.s32 1, %s15
  $region7: #{up_convolution_block_forward.3} parent=0 // loop_footer_branch
    %14 = sbr.rel target = $region3
  $region8: #{up_convolution_block_forward.3} parent=0 // loop_exit
    _

</llo_original>
